<compile_context>
chip_gen: v5e
topology: v5e:2x2
jax: 0.10.0
libtpu: 0.0.40
codegen_flags: <defaults>
</compile_context>

<pallas_src>
import functools

import jax
import jax.numpy as jnp
from jax import lax
from jax.experimental import pallas as pl
from jax.experimental.pallas import tpu as pltpu


def _round_up(x, m):
    return (x + m - 1) // m * m


def _pick_tile_rows(H, W, target_rows=128):
    """Largest divisor R of H with R*W <= target_rows (fallback 1)."""
    r = 1
    for cand in range(1, H + 1):
        if H % cand == 0 and cand * W <= target_rows:
            r = cand
    return r


def _resblock_kernel(x_ref, w1_ref, s1_ref, t1_ref, w2_ref, s2_ref, t2_ref,
                     out_ref, mid_ref):
    """One batch element per grid step (batch axis is 'parallel').

    x_ref   : (H+2, W+2, CP) f32   input, zero-padded by 1 in H and W,
                                   channels zero-padded to CP (lane dense)
    w*_ref  : (3, 3*CP, CP)  bf16  conv weights, K-axis = (kx, Cin)
    s*_ref  : (1, CP)        f32   BN scale  = gamma / sqrt(var+eps)
    t*_ref  : (1, CP)        f32   folded BN+conv bias = beta + s*(b - mean)
    out_ref : (H, W, CP)     f32
    mid_ref : (H+2, W+2, CP) bf16  scratch (padded conv2 input)
    """
    Hp2, Wp2, CP = x_ref.shape
    H, W = Hp2 - 2, Wp2 - 2
    f32, bf16 = jnp.float32, jnp.bfloat16

    R = _pick_tile_rows(H, W)          # rows of H per tile (static)
    NT = H // R                        # number of tiles (static)

    # ---- zero the halo of the conv2-input scratch (interior is fully
    # overwritten below, so the 'parallel' batch axis stays safe) -----------
    zrow = jnp.zeros((1, Wp2, CP), bf16)
    zcol = jnp.zeros((Hp2, 1, CP), bf16)
    mid_ref[0:1, :, :] = zrow
    mid_ref[H + 1:H + 2, :, :] = zrow
    mid_ref[:, 0:1, :] = zcol
    mid_ref[:, W + 1:W + 2, :] = zcol

    def conv_tile(src_ref, w_ref, h0, cast_src):
        """3x3 conv for output rows [h0, h0+R): 3 MXU matmuls with K=3*CP,
        f32 accumulation held in vregs."""
        acc = jnp.zeros((R * W, CP), f32)
        for dy in range(3):
            taps = []
            for dx in range(3):
                p = src_ref[h0 + dy:h0 + dy + R, dx:dx + W, :]
                if cast_src:
                    p = p.astype(bf16)
                taps.append(p)
            strip = jnp.concatenate(taps, axis=-1).reshape(R * W, 3 * CP)
            acc = acc + jnp.dot(strip, w_ref[dy], preferred_element_type=f32)
        return acc

    # ---- conv1 -> BN -> ReLU -> mid (bf16, single cast) -------------------
    for t in range(NT):
        h0 = t * R
        acc = conv_tile(x_ref, w1_ref, h0, cast_src=True)
        y = jnp.maximum(acc * s1_ref[...] + t1_ref[...], 0.0)
        mid_ref[h0 + 1:h0 + 1 + R, 1:W + 1, :] = y.astype(bf16).reshape(R, W, CP)

    # ---- conv2 -> BN -> + residual -> out ----------------------------------
    for t in range(NT):
        h0 = t * R
        acc = conv_tile(mid_ref, w2_ref, h0, cast_src=False)
        res = x_ref[h0 + 1:h0 + 1 + R, 1:W + 1, :].reshape(R * W, CP)
        z = acc * s2_ref[...] + t2_ref[...] + res
        out_ref[h0:h0 + R, :, :] = z.reshape(R, W, CP).astype(out_ref.dtype)


@functools.partial(jax.jit, static_argnames=("eps",))
def resblock_pallas(x_nchw, params, eps=1e-5):
    """x_nchw: (N, C, H, W) float32, PyTorch layout.  Returns (N, C, H, W)."""
    (w1, b1, g1, be1, m1, v1, w2, b2, g2, be2, m2, v2) = params
    N, C, H, W = x_nchw.shape
    CP = _round_up(C, 128)                       # lane-dense channel count

    # NCHW -> NHWC; the 1-pixel H/W halo and the channel pad ride along with
    # this (already required) layout-transform copy -- no in-kernel copy.
    x = jnp.transpose(x_nchw, (0, 2, 3, 1))
    x = jnp.pad(x, ((0, 0), (1, 1), (1, 1), (0, CP - C)))

    def fold(w, b, g, be, m, v):
        # eval-mode BN folded to per-channel scale/bias; conv bias folded into
        # the bias term.  Weights packed as (ky, kx*Cin, Cout) for the
        # per-dy K=3*CP matmuls.
        s = g / jnp.sqrt(v + eps)
        t = be + s * (b - m)
        wk = jnp.transpose(w, (2, 3, 1, 0))      # OIHW -> (ky, kx, Cin, Cout)
        wk = jnp.pad(wk, ((0, 0), (0, 0), (0, CP - C), (0, CP - C)))
        wk = wk.reshape(3, 3 * CP, CP).astype(jnp.bfloat16)
        s = jnp.pad(s, (0, CP - C)).reshape(1, CP).astype(jnp.float32)
        t = jnp.pad(t, (0, CP - C)).reshape(1, CP).astype(jnp.float32)
        return wk, s, t

    w1k, s1, t1 = fold(w1, b1, g1, be1, m1, v1)
    w2k, s2, t2 = fold(w2, b2, g2, be2, m2, v2)

    w_map = lambda n: (0, 0, 0)
    v_map = lambda n: (0, 0)

    out = pl.pallas_call(
        _resblock_kernel,
        out_shape=jax.ShapeDtypeStruct((N, H, W, CP), x_nchw.dtype),
        grid_spec=pltpu.PrefetchScalarGridSpec(
            num_scalar_prefetch=0,
            grid=(N,),
            in_specs=[
                pl.BlockSpec((None, H + 2, W + 2, CP),
                             lambda n: (n, 0, 0, 0)),                 # x
                pl.BlockSpec((3, 3 * CP, CP), w_map),                 # w1
                pl.BlockSpec((1, CP), v_map),                         # s1
                pl.BlockSpec((1, CP), v_map),                         # t1
                pl.BlockSpec((3, 3 * CP, CP), w_map),                 # w2
                pl.BlockSpec((1, CP), v_map),                         # s2
                pl.BlockSpec((1, CP), v_map),                         # t2
            ],
            out_specs=pl.BlockSpec((None, H, W, CP), lambda n: (n, 0, 0, 0)),
            scratch_shapes=[
                pltpu.VMEM((H + 2, W + 2, CP), jnp.bfloat16),   # padded mid
            ],
        ),
        compiler_params=pltpu.CompilerParams(
            dimension_semantics=("parallel",)),
    )(x, w1k, s1, t1, w2k, s2, t2)

    # drop padded channels, NHWC -> NCHW
    return jnp.transpose(out[..., :C], (0, 3, 1, 2))


def _ref_resblock(x, params, eps=1e-5):
    """Pure-JAX NCHW reference (eval-mode BN), mirroring the kernel's
    bf16 matmul operands with f32 accumulation."""
    (w1, b1, g1, be1, m1, v1, w2, b2, g2, be2, m2, v2) = params
    dn = ("NCHW", "OIHW", "NCHW")

    def bn(y, g, be, m, v):
        sh = (1, -1, 1, 1)
        return (y - m.reshape(sh)) / jnp.sqrt(v.reshape(sh) + eps) * \
            g.reshape(sh) + be.reshape(sh)

    def conv(a, w):
        return lax.conv_general_dilated(
            a.astype(jnp.bfloat16), w.astype(jnp.bfloat16), (1, 1), "SAME",
            dimension_numbers=dn, preferred_element_type=jnp.float32)

    y = conv(x, w1) + b1.reshape(1, -1, 1, 1)
    y = jnp.maximum(bn(y, g1, be1, m1, v1), 0.0)
    z = conv(y, w2) + b2.reshape(1, -1, 1, 1)
    z = bn(z, g2, be2, m2, v2)
    return z + x


def _make_params(key, C):
    ks = jax.random.split(key, 12)
    scale = 0.1
    w1 = scale * jax.random.normal(ks[0], (C, C, 3, 3), jnp.float32)
    b1 = scale * jax.random.normal(ks[1], (C,), jnp.float32)
    g1 = 1.0 + 0.1 * jax.random.normal(ks[2], (C,), jnp.float32)
    be1 = 0.1 * jax.random.normal(ks[3], (C,), jnp.float32)
    m1 = 0.1 * jax.random.normal(ks[4], (C,), jnp.float32)
    v1 = 1.0 + 0.1 * jax.nn.softplus(jax.random.normal(ks[5], (C,), jnp.float32))
    w2 = scale * jax.random.normal(ks[6], (C, C, 3, 3), jnp.float32)
    b2 = scale * jax.random.normal(ks[7], (C,), jnp.float32)
    g2 = 1.0 + 0.1 * jax.random.normal(ks[8], (C,), jnp.float32)
    be2 = 0.1 * jax.random.normal(ks[9], (C,), jnp.float32)
    m2 = 0.1 * jax.random.normal(ks[10], (C,), jnp.float32)
    v2 = 1.0 + 0.1 * jax.nn.softplus(jax.random.normal(ks[11], (C,), jnp.float32))
    return (w1, b1, g1, be1, m1, v1, w2, b2, g2, be2, m2, v2)


if __name__ == "__main__":
    key = jax.random.PRNGKey(0)
    kx, kp = jax.random.split(key)

    N, C, H, W = 2, 32, 16, 16
    x = jax.random.normal(kx, (N, C, H, W), jnp.float32)
    params = _make_params(kp, C)

    out = jax.block_until_ready(resblock_pallas(x, params))
    ref = _ref_resblock(x, params)

    assert out.shape == (N, C, H, W)
    err = jnp.max(jnp.abs(out - ref))
    assert jnp.allclose(out, ref, atol=2e-3, rtol=2e-3), f"max abs err {err}"

    print("KERNEL_OK")
</pallas_src>

<mosaic_0001>
module attributes {stable_mosaic.version = 11 : i64} {
  func.func @_resblock_kernel(%arg0: i32, %arg1: memref<1x18x18x128xf32, #tpu.memory_space<vmem>>, %arg2: memref<3x384x128xbf16, #tpu.memory_space<vmem>>, %arg3: memref<1x128xf32, #tpu.memory_space<vmem>>, %arg4: memref<1x128xf32, #tpu.memory_space<vmem>>, %arg5: memref<3x384x128xbf16, #tpu.memory_space<vmem>>, %arg6: memref<1x128xf32, #tpu.memory_space<vmem>>, %arg7: memref<1x128xf32, #tpu.memory_space<vmem>>, %arg8: memref<1x16x16x128xf32, #tpu.memory_space<vmem>>, %arg9: memref<18x18x128xbf16, #tpu.memory_space<vmem>>) attributes {dimension_semantics = [#tpu.dimension_semantics<parallel>], iteration_bounds = array<i64: 2>, scalar_prefetch = 0 : i64, scratch_operands = 1 : i64, tpu.core_type = #tpu.core_type<tc>, window_params = [{transform_indices = @transform_0, window_bounds = array<i64: 1, 18, 18, 128>}, {pipeline_mode = #tpu.pipeline_mode<synchronous>, transform_indices = @transform_1, window_bounds = array<i64: 3, 384, 128>}, {pipeline_mode = #tpu.pipeline_mode<synchronous>, transform_indices = @transform_2, window_bounds = array<i64: 1, 128>}, {pipeline_mode = #tpu.pipeline_mode<synchronous>, transform_indices = @transform_3, window_bounds = array<i64: 1, 128>}, {pipeline_mode = #tpu.pipeline_mode<synchronous>, transform_indices = @transform_4, window_bounds = array<i64: 3, 384, 128>}, {pipeline_mode = #tpu.pipeline_mode<synchronous>, transform_indices = @transform_5, window_bounds = array<i64: 1, 128>}, {pipeline_mode = #tpu.pipeline_mode<synchronous>, transform_indices = @transform_6, window_bounds = array<i64: 1, 128>}, {transform_indices = @transform_7, window_bounds = array<i64: 1, 16, 16, 128>}]} {
    %cst = arith.constant 0.000000e+00 : bf16
    %0 = vector.broadcast %cst : bf16 to vector<1x18x128xbf16>
    %cst_0 = arith.constant 0.000000e+00 : bf16
    %1 = vector.broadcast %cst_0 : bf16 to vector<18x1x128xbf16>
    %c0 = arith.constant 0 : index
    %c0_1 = arith.constant 0 : index
    %c0_2 = arith.constant 0 : index
    %2 = vector.load %arg9[%c0, %c0_1, %c0_2] : memref<18x18x128xbf16, #tpu.memory_space<vmem>>, vector<1x18x128xbf16>
    tpu.vector_store %arg9[%c0, %c0_1, %c0_2], %0 {strides = array<i32>} : memref<18x18x128xbf16, #tpu.memory_space<vmem>>, vector<1x18x128xbf16>,
    %c17 = arith.constant 17 : index
    %c0_3 = arith.constant 0 : index
    %c0_4 = arith.constant 0 : index
    %3 = vector.load %arg9[%c17, %c0_3, %c0_4] : memref<18x18x128xbf16, #tpu.memory_space<vmem>>, vector<1x18x128xbf16>
    tpu.vector_store %arg9[%c17, %c0_3, %c0_4], %0 {strides = array<i32>} : memref<18x18x128xbf16, #tpu.memory_space<vmem>>, vector<1x18x128xbf16>,
    %c0_5 = arith.constant 0 : index
    %c0_6 = arith.constant 0 : index
    %c0_7 = arith.constant 0 : index
    %4 = vector.load %arg9[%c0_5, %c0_6, %c0_7] : memref<18x18x128xbf16, #tpu.memory_space<vmem>>, vector<18x1x128xbf16>
    tpu.vector_store %arg9[%c0_5, %c0_6, %c0_7], %1 {strides = array<i32>} : memref<18x18x128xbf16, #tpu.memory_space<vmem>>, vector<18x1x128xbf16>,
    %c0_8 = arith.constant 0 : index
    %c17_9 = arith.constant 17 : index
    %c0_10 = arith.constant 0 : index
    %5 = vector.load %arg9[%c0_8, %c17_9, %c0_10] : memref<18x18x128xbf16, #tpu.memory_space<vmem>>, vector<18x1x128xbf16>
    tpu.vector_store %arg9[%c0_8, %c17_9, %c0_10], %1 {strides = array<i32>} : memref<18x18x128xbf16, #tpu.memory_space<vmem>>, vector<18x1x128xbf16>,
    %cst_11 = arith.constant 0.000000e+00 : f32
    %6 = vector.broadcast %cst_11 : f32 to vector<128x128xf32>
    %c0_12 = arith.constant 0 : index
    %c0_13 = arith.constant 0 : index
    %c0_14 = arith.constant 0 : index
    %c0_15 = arith.constant 0 : index
    %7 = vector.load %arg1[%c0_12, %c0_13, %c0_14, %c0_15] : memref<1x18x18x128xf32, #tpu.memory_space<vmem>>, vector<1x8x16x128xf32>
    %8 = vector.shape_cast %7 : vector<1x8x16x128xf32> to vector<8x16x128xf32>
    %9 = arith.truncf %8 : vector<8x16x128xf32> to vector<8x16x128xbf16>
    %c0_16 = arith.constant 0 : index
    %c0_17 = arith.constant 0 : index
    %c1 = arith.constant 1 : index
    %c0_18 = arith.constant 0 : index
    %10 = vector.load %arg1[%c0_16, %c0_17, %c1, %c0_18] : memref<1x18x18x128xf32, #tpu.memory_space<vmem>>, vector<1x8x16x128xf32>
    %11 = vector.shape_cast %10 : vector<1x8x16x128xf32> to vector<8x16x128xf32>
    %12 = arith.truncf %11 : vector<8x16x128xf32> to vector<8x16x128xbf16>
    %c0_19 = arith.constant 0 : index
    %c0_20 = arith.constant 0 : index
    %c2 = arith.constant 2 : index
    %c0_21 = arith.constant 0 : index
    %13 = vector.load %arg1[%c0_19, %c0_20, %c2, %c0_21] : memref<1x18x18x128xf32, #tpu.memory_space<vmem>>, vector<1x8x16x128xf32>
    %14 = vector.shape_cast %13 : vector<1x8x16x128xf32> to vector<8x16x128xf32>
    %15 = arith.truncf %14 : vector<8x16x128xf32> to vector<8x16x128xbf16>
    %16 = tpu.concatenate %9, %12, %15 in 2 : vector<8x16x128xbf16>, vector<8x16x128xbf16>, vector<8x16x128xbf16> -> vector<8x16x384xbf16>
    %17 = vector.shape_cast %16 : vector<8x16x384xbf16> to vector<128x384xbf16>
    %c0_22 = arith.constant 0 : index
    %c0_23 = arith.constant 0 : index
    %c0_24 = arith.constant 0 : index
    %18 = vector.load %arg2[%c0_22, %c0_23, %c0_24] : memref<3x384x128xbf16, #tpu.memory_space<vmem>>, vector<1x384x128xbf16>
    %19 = vector.shape_cast %18 : vector<1x384x128xbf16> to vector<384x128xbf16>
    %cst_25 = arith.constant dense<0.000000e+00> : vector<128x128xf32>
    %20 = tpu.matmul %17, %19, %cst_25 {dimension_numbers = #tpu.dot_dimension_numbers<[1], [0], [0], [1], [0, 0, 1, 1], [], []>} : vector<128x384xbf16>, vector<384x128xbf16>, vector<128x128xf32> -> vector<128x128xf32>
    %21 = arith.addf %6, %20 : vector<128x128xf32>
    %c0_26 = arith.constant 0 : index
    %c1_27 = arith.constant 1 : index
    %c0_28 = arith.constant 0 : index
    %c0_29 = arith.constant 0 : index
    %22 = vector.load %arg1[%c0_26, %c1_27, %c0_28, %c0_29] : memref<1x18x18x128xf32, #tpu.memory_space<vmem>>, vector<1x8x16x128xf32>
    %23 = vector.shape_cast %22 : vector<1x8x16x128xf32> to vector<8x16x128xf32>
    %24 = arith.truncf %23 : vector<8x16x128xf32> to vector<8x16x128xbf16>
    %c0_30 = arith.constant 0 : index
    %c1_31 = arith.constant 1 : index
    %c1_32 = arith.constant 1 : index
    %c0_33 = arith.constant 0 : index
    %25 = vector.load %arg1[%c0_30, %c1_31, %c1_32, %c0_33] : memref<1x18x18x128xf32, #tpu.memory_space<vmem>>, vector<1x8x16x128xf32>
    %26 = vector.shape_cast %25 : vector<1x8x16x128xf32> to vector<8x16x128xf32>
    %27 = arith.truncf %26 : vector<8x16x128xf32> to vector<8x16x128xbf16>
    %c0_34 = arith.constant 0 : index
    %c1_35 = arith.constant 1 : index
    %c2_36 = arith.constant 2 : index
    %c0_37 = arith.constant 0 : index
    %28 = vector.load %arg1[%c0_34, %c1_35, %c2_36, %c0_37] : memref<1x18x18x128xf32, #tpu.memory_space<vmem>>, vector<1x8x16x128xf32>
    %29 = vector.shape_cast %28 : vector<1x8x16x128xf32> to vector<8x16x128xf32>
    %30 = arith.truncf %29 : vector<8x16x128xf32> to vector<8x16x128xbf16>
    %31 = tpu.concatenate %24, %27, %30 in 2 : vector<8x16x128xbf16>, vector<8x16x128xbf16>, vector<8x16x128xbf16> -> vector<8x16x384xbf16>
    %32 = vector.shape_cast %31 : vector<8x16x384xbf16> to vector<128x384xbf16>
    %c1_38 = arith.constant 1 : index
    %c0_39 = arith.constant 0 : index
    %c0_40 = arith.constant 0 : index
    %33 = vector.load %arg2[%c1_38, %c0_39, %c0_40] : memref<3x384x128xbf16, #tpu.memory_space<vmem>>, vector<1x384x128xbf16>
    %34 = vector.shape_cast %33 : vector<1x384x128xbf16> to vector<384x128xbf16>
    %cst_41 = arith.constant dense<0.000000e+00> : vector<128x128xf32>
    %35 = tpu.matmul %32, %34, %cst_41 {dimension_numbers = #tpu.dot_dimension_numbers<[1], [0], [0], [1], [0, 0, 1, 1], [], []>} : vector<128x384xbf16>, vector<384x128xbf16>, vector<128x128xf32> -> vector<128x128xf32>
    %36 = arith.addf %21, %35 : vector<128x128xf32>
    %c0_42 = arith.constant 0 : index
    %c2_43 = arith.constant 2 : index
    %c0_44 = arith.constant 0 : index
    %c0_45 = arith.constant 0 : index
    %37 = vector.load %arg1[%c0_42, %c2_43, %c0_44, %c0_45] : memref<1x18x18x128xf32, #tpu.memory_space<vmem>>, vector<1x8x16x128xf32>
    %38 = vector.shape_cast %37 : vector<1x8x16x128xf32> to vector<8x16x128xf32>
    %39 = arith.truncf %38 : vector<8x16x128xf32> to vector<8x16x128xbf16>
    %c0_46 = arith.constant 0 : index
    %c2_47 = arith.constant 2 : index
    %c1_48 = arith.constant 1 : index
    %c0_49 = arith.constant 0 : index
    %40 = vector.load %arg1[%c0_46, %c2_47, %c1_48, %c0_49] : memref<1x18x18x128xf32, #tpu.memory_space<vmem>>, vector<1x8x16x128xf32>
    %41 = vector.shape_cast %40 : vector<1x8x16x128xf32> to vector<8x16x128xf32>
    %42 = arith.truncf %41 : vector<8x16x128xf32> to vector<8x16x128xbf16>
    %c0_50 = arith.constant 0 : index
    %c2_51 = arith.constant 2 : index
    %c2_52 = arith.constant 2 : index
    %c0_53 = arith.constant 0 : index
    %43 = vector.load %arg1[%c0_50, %c2_51, %c2_52, %c0_53] : memref<1x18x18x128xf32, #tpu.memory_space<vmem>>, vector<1x8x16x128xf32>
    %44 = vector.shape_cast %43 : vector<1x8x16x128xf32> to vector<8x16x128xf32>
    %45 = arith.truncf %44 : vector<8x16x128xf32> to vector<8x16x128xbf16>
    %46 = tpu.concatenate %39, %42, %45 in 2 : vector<8x16x128xbf16>, vector<8x16x128xbf16>, vector<8x16x128xbf16> -> vector<8x16x384xbf16>
    %47 = vector.shape_cast %46 : vector<8x16x384xbf16> to vector<128x384xbf16>
    %c2_54 = arith.constant 2 : index
    %c0_55 = arith.constant 0 : index
    %c0_56 = arith.constant 0 : index
    %48 = vector.load %arg2[%c2_54, %c0_55, %c0_56] : memref<3x384x128xbf16, #tpu.memory_space<vmem>>, vector<1x384x128xbf16>
    %49 = vector.shape_cast %48 : vector<1x384x128xbf16> to vector<384x128xbf16>
    %cst_57 = arith.constant dense<0.000000e+00> : vector<128x128xf32>
    %50 = tpu.matmul %47, %49, %cst_57 {dimension_numbers = #tpu.dot_dimension_numbers<[1], [0], [0], [1], [0, 0, 1, 1], [], []>} : vector<128x384xbf16>, vector<384x128xbf16>, vector<128x128xf32> -> vector<128x128xf32>
    %51 = arith.addf %36, %50 : vector<128x128xf32>
    %c0_58 = arith.constant 0 : index
    %c0_59 = arith.constant 0 : index
    %52 = vector.load %arg3[%c0_58, %c0_59] : memref<1x128xf32, #tpu.memory_space<vmem>>, vector<1x128xf32>
    %53 = vector.broadcast %52 : vector<1x128xf32> to vector<128x128xf32>
    %54 = arith.mulf %51, %53 : vector<128x128xf32>
    %c0_60 = arith.constant 0 : index
    %c0_61 = arith.constant 0 : index
    %55 = vector.load %arg4[%c0_60, %c0_61] : memref<1x128xf32, #tpu.memory_space<vmem>>, vector<1x128xf32>
    %56 = vector.broadcast %55 : vector<1x128xf32> to vector<128x128xf32>
    %57 = arith.addf %54, %56 : vector<128x128xf32>
    %cst_62 = arith.constant 0.000000e+00 : f32
    %58 = vector.broadcast %cst_62 : f32 to vector<128x128xf32>
    %59 = arith.maximumf %57, %58 : vector<128x128xf32>
    %60 = arith.truncf %59 : vector<128x128xf32> to vector<128x128xbf16>
    %61 = vector.shape_cast %60 : vector<128x128xbf16> to vector<8x16x128xbf16>
    %c1_63 = arith.constant 1 : index
    %c1_64 = arith.constant 1 : index
    %c0_65 = arith.constant 0 : index
    %62 = vector.load %arg9[%c1_63, %c1_64, %c0_65] : memref<18x18x128xbf16, #tpu.memory_space<vmem>>, vector<8x16x128xbf16>
    tpu.vector_store %arg9[%c1_63, %c1_64, %c0_65], %61 {strides = array<i32>} : memref<18x18x128xbf16, #tpu.memory_space<vmem>>, vector<8x16x128xbf16>,
    %cst_66 = arith.constant 0.000000e+00 : f32
    %63 = vector.broadcast %cst_66 : f32 to vector<128x128xf32>
    %c0_67 = arith.constant 0 : index
    %c8 = arith.constant 8 : index
    %c0_68 = arith.constant 0 : index
    %c0_69 = arith.constant 0 : index
    %64 = vector.load %arg1[%c0_67, %c8, %c0_68, %c0_69] : memref<1x18x18x128xf32, #tpu.memory_space<vmem>>, vector<1x8x16x128xf32>
    %65 = vector.shape_cast %64 : vector<1x8x16x128xf32> to vector<8x16x128xf32>
    %66 = arith.truncf %65 : vector<8x16x128xf32> to vector<8x16x128xbf16>
    %c0_70 = arith.constant 0 : index
    %c8_71 = arith.constant 8 : index
    %c1_72 = arith.constant 1 : index
    %c0_73 = arith.constant 0 : index
    %67 = vector.load %arg1[%c0_70, %c8_71, %c1_72, %c0_73] : memref<1x18x18x128xf32, #tpu.memory_space<vmem>>, vector<1x8x16x128xf32>
    %68 = vector.shape_cast %67 : vector<1x8x16x128xf32> to vector<8x16x128xf32>
    %69 = arith.truncf %68 : vector<8x16x128xf32> to vector<8x16x128xbf16>
    %c0_74 = arith.constant 0 : index
    %c8_75 = arith.constant 8 : index
    %c2_76 = arith.constant 2 : index
    %c0_77 = arith.constant 0 : index
    %70 = vector.load %arg1[%c0_74, %c8_75, %c2_76, %c0_77] : memref<1x18x18x128xf32, #tpu.memory_space<vmem>>, vector<1x8x16x128xf32>
    %71 = vector.shape_cast %70 : vector<1x8x16x128xf32> to vector<8x16x128xf32>
    %72 = arith.truncf %71 : vector<8x16x128xf32> to vector<8x16x128xbf16>
    %73 = tpu.concatenate %66, %69, %72 in 2 : vector<8x16x128xbf16>, vector<8x16x128xbf16>, vector<8x16x128xbf16> -> vector<8x16x384xbf16>
    %74 = vector.shape_cast %73 : vector<8x16x384xbf16> to vector<128x384xbf16>
    %c0_78 = arith.constant 0 : index
    %c0_79 = arith.constant 0 : index
    %c0_80 = arith.constant 0 : index
    %75 = vector.load %arg2[%c0_78, %c0_79, %c0_80] : memref<3x384x128xbf16, #tpu.memory_space<vmem>>, vector<1x384x128xbf16>
    %76 = vector.shape_cast %75 : vector<1x384x128xbf16> to vector<384x128xbf16>
    %cst_81 = arith.constant dense<0.000000e+00> : vector<128x128xf32>
    %77 = tpu.matmul %74, %76, %cst_81 {dimension_numbers = #tpu.dot_dimension_numbers<[1], [0], [0], [1], [0, 0, 1, 1], [], []>} : vector<128x384xbf16>, vector<384x128xbf16>, vector<128x128xf32> -> vector<128x128xf32>
    %78 = arith.addf %63, %77 : vector<128x128xf32>
    %c0_82 = arith.constant 0 : index
    %c9 = arith.constant 9 : index
    %c0_83 = arith.constant 0 : index
    %c0_84 = arith.constant 0 : index
    %79 = vector.load %arg1[%c0_82, %c9, %c0_83, %c0_84] : memref<1x18x18x128xf32, #tpu.memory_space<vmem>>, vector<1x8x16x128xf32>
    %80 = vector.shape_cast %79 : vector<1x8x16x128xf32> to vector<8x16x128xf32>
    %81 = arith.truncf %80 : vector<8x16x128xf32> to vector<8x16x128xbf16>
    %c0_85 = arith.constant 0 : index
    %c9_86 = arith.constant 9 : index
    %c1_87 = arith.constant 1 : index
    %c0_88 = arith.constant 0 : index
    %82 = vector.load %arg1[%c0_85, %c9_86, %c1_87, %c0_88] : memref<1x18x18x128xf32, #tpu.memory_space<vmem>>, vector<1x8x16x128xf32>
    %83 = vector.shape_cast %82 : vector<1x8x16x128xf32> to vector<8x16x128xf32>
    %84 = arith.truncf %83 : vector<8x16x128xf32> to vector<8x16x128xbf16>
    %c0_89 = arith.constant 0 : index
    %c9_90 = arith.constant 9 : index
    %c2_91 = arith.constant 2 : index
    %c0_92 = arith.constant 0 : index
    %85 = vector.load %arg1[%c0_89, %c9_90, %c2_91, %c0_92] : memref<1x18x18x128xf32, #tpu.memory_space<vmem>>, vector<1x8x16x128xf32>
    %86 = vector.shape_cast %85 : vector<1x8x16x128xf32> to vector<8x16x128xf32>
    %87 = arith.truncf %86 : vector<8x16x128xf32> to vector<8x16x128xbf16>
    %88 = tpu.concatenate %81, %84, %87 in 2 : vector<8x16x128xbf16>, vector<8x16x128xbf16>, vector<8x16x128xbf16> -> vector<8x16x384xbf16>
    %89 = vector.shape_cast %88 : vector<8x16x384xbf16> to vector<128x384xbf16>
    %c1_93 = arith.constant 1 : index
    %c0_94 = arith.constant 0 : index
    %c0_95 = arith.constant 0 : index
    %90 = vector.load %arg2[%c1_93, %c0_94, %c0_95] : memref<3x384x128xbf16, #tpu.memory_space<vmem>>, vector<1x384x128xbf16>
    %91 = vector.shape_cast %90 : vector<1x384x128xbf16> to vector<384x128xbf16>
    %cst_96 = arith.constant dense<0.000000e+00> : vector<128x128xf32>
    %92 = tpu.matmul %89, %91, %cst_96 {dimension_numbers = #tpu.dot_dimension_numbers<[1], [0], [0], [1], [0, 0, 1, 1], [], []>} : vector<128x384xbf16>, vector<384x128xbf16>, vector<128x128xf32> -> vector<128x128xf32>
    %93 = arith.addf %78, %92 : vector<128x128xf32>
    %c0_97 = arith.constant 0 : index
    %c10 = arith.constant 10 : index
    %c0_98 = arith.constant 0 : index
    %c0_99 = arith.constant 0 : index
    %94 = vector.load %arg1[%c0_97, %c10, %c0_98, %c0_99] : memref<1x18x18x128xf32, #tpu.memory_space<vmem>>, vector<1x8x16x128xf32>
    %95 = vector.shape_cast %94 : vector<1x8x16x128xf32> to vector<8x16x128xf32>
    %96 = arith.truncf %95 : vector<8x16x128xf32> to vector<8x16x128xbf16>
    %c0_100 = arith.constant 0 : index
    %c10_101 = arith.constant 10 : index
    %c1_102 = arith.constant 1 : index
    %c0_103 = arith.constant 0 : index
    %97 = vector.load %arg1[%c0_100, %c10_101, %c1_102, %c0_103] : memref<1x18x18x128xf32, #tpu.memory_space<vmem>>, vector<1x8x16x128xf32>
    %98 = vector.shape_cast %97 : vector<1x8x16x128xf32> to vector<8x16x128xf32>
    %99 = arith.truncf %98 : vector<8x16x128xf32> to vector<8x16x128xbf16>
    %c0_104 = arith.constant 0 : index
    %c10_105 = arith.constant 10 : index
    %c2_106 = arith.constant 2 : index
    %c0_107 = arith.constant 0 : index
    %100 = vector.load %arg1[%c0_104, %c10_105, %c2_106, %c0_107] : memref<1x18x18x128xf32, #tpu.memory_space<vmem>>, vector<1x8x16x128xf32>
    %101 = vector.shape_cast %100 : vector<1x8x16x128xf32> to vector<8x16x128xf32>
    %102 = arith.truncf %101 : vector<8x16x128xf32> to vector<8x16x128xbf16>
    %103 = tpu.concatenate %96, %99, %102 in 2 : vector<8x16x128xbf16>, vector<8x16x128xbf16>, vector<8x16x128xbf16> -> vector<8x16x384xbf16>
    %104 = vector.shape_cast %103 : vector<8x16x384xbf16> to vector<128x384xbf16>
    %c2_108 = arith.constant 2 : index
    %c0_109 = arith.constant 0 : index
    %c0_110 = arith.constant 0 : index
    %105 = vector.load %arg2[%c2_108, %c0_109, %c0_110] : memref<3x384x128xbf16, #tpu.memory_space<vmem>>, vector<1x384x128xbf16>
    %106 = vector.shape_cast %105 : vector<1x384x128xbf16> to vector<384x128xbf16>
    %cst_111 = arith.constant dense<0.000000e+00> : vector<128x128xf32>
    %107 = tpu.matmul %104, %106, %cst_111 {dimension_numbers = #tpu.dot_dimension_numbers<[1], [0], [0], [1], [0, 0, 1, 1], [], []>} : vector<128x384xbf16>, vector<384x128xbf16>, vector<128x128xf32> -> vector<128x128xf32>
    %108 = arith.addf %93, %107 : vector<128x128xf32>
    %c0_112 = arith.constant 0 : index
    %c0_113 = arith.constant 0 : index
    %109 = vector.load %arg3[%c0_112, %c0_113] : memref<1x128xf32, #tpu.memory_space<vmem>>, vector<1x128xf32>
    %110 = vector.broadcast %109 : vector<1x128xf32> to vector<128x128xf32>
    %111 = arith.mulf %108, %110 : vector<128x128xf32>
    %c0_114 = arith.constant 0 : index
    %c0_115 = arith.constant 0 : index
    %112 = vector.load %arg4[%c0_114, %c0_115] : memref<1x128xf32, #tpu.memory_space<vmem>>, vector<1x128xf32>
    %113 = vector.broadcast %112 : vector<1x128xf32> to vector<128x128xf32>
    %114 = arith.addf %111, %113 : vector<128x128xf32>
    %cst_116 = arith.constant 0.000000e+00 : f32
    %115 = vector.broadcast %cst_116 : f32 to vector<128x128xf32>
    %116 = arith.maximumf %114, %115 : vector<128x128xf32>
    %117 = arith.truncf %116 : vector<128x128xf32> to vector<128x128xbf16>
    %118 = vector.shape_cast %117 : vector<128x128xbf16> to vector<8x16x128xbf16>
    %c9_117 = arith.constant 9 : index
    %c1_118 = arith.constant 1 : index
    %c0_119 = arith.constant 0 : index
    %119 = vector.load %arg9[%c9_117, %c1_118, %c0_119] : memref<18x18x128xbf16, #tpu.memory_space<vmem>>, vector<8x16x128xbf16>
    tpu.vector_store %arg9[%c9_117, %c1_118, %c0_119], %118 {strides = array<i32>} : memref<18x18x128xbf16, #tpu.memory_space<vmem>>, vector<8x16x128xbf16>,
    %cst_120 = arith.constant 0.000000e+00 : f32
    %120 = vector.broadcast %cst_120 : f32 to vector<128x128xf32>
    %c0_121 = arith.constant 0 : index
    %c0_122 = arith.constant 0 : index
    %c0_123 = arith.constant 0 : index
    %121 = vector.load %arg9[%c0_121, %c0_122, %c0_123] : memref<18x18x128xbf16, #tpu.memory_space<vmem>>, vector<8x16x128xbf16>
    %c0_124 = arith.constant 0 : index
    %c1_125 = arith.constant 1 : index
    %c0_126 = arith.constant 0 : index
    %122 = vector.load %arg9[%c0_124, %c1_125, %c0_126] : memref<18x18x128xbf16, #tpu.memory_space<vmem>>, vector<8x16x128xbf16>
    %c0_127 = arith.constant 0 : index
    %c2_128 = arith.constant 2 : index
    %c0_129 = arith.constant 0 : index
    %123 = vector.load %arg9[%c0_127, %c2_128, %c0_129] : memref<18x18x128xbf16, #tpu.memory_space<vmem>>, vector<8x16x128xbf16>
    %124 = tpu.concatenate %121, %122, %123 in 2 : vector<8x16x128xbf16>, vector<8x16x128xbf16>, vector<8x16x128xbf16> -> vector<8x16x384xbf16>
    %125 = vector.shape_cast %124 : vector<8x16x384xbf16> to vector<128x384xbf16>
    %c0_130 = arith.constant 0 : index
    %c0_131 = arith.constant 0 : index
    %c0_132 = arith.constant 0 : index
    %126 = vector.load %arg5[%c0_130, %c0_131, %c0_132] : memref<3x384x128xbf16, #tpu.memory_space<vmem>>, vector<1x384x128xbf16>
    %127 = vector.shape_cast %126 : vector<1x384x128xbf16> to vector<384x128xbf16>
    %cst_133 = arith.constant dense<0.000000e+00> : vector<128x128xf32>
    %128 = tpu.matmul %125, %127, %cst_133 {dimension_numbers = #tpu.dot_dimension_numbers<[1], [0], [0], [1], [0, 0, 1, 1], [], []>} : vector<128x384xbf16>, vector<384x128xbf16>, vector<128x128xf32> -> vector<128x128xf32>
    %129 = arith.addf %120, %128 : vector<128x128xf32>
    %c1_134 = arith.constant 1 : index
    %c0_135 = arith.constant 0 : index
    %c0_136 = arith.constant 0 : index
    %130 = vector.load %arg9[%c1_134, %c0_135, %c0_136] : memref<18x18x128xbf16, #tpu.memory_space<vmem>>, vector<8x16x128xbf16>
    %c1_137 = arith.constant 1 : index
    %c1_138 = arith.constant 1 : index
    %c0_139 = arith.constant 0 : index
    %131 = vector.load %arg9[%c1_137, %c1_138, %c0_139] : memref<18x18x128xbf16, #tpu.memory_space<vmem>>, vector<8x16x128xbf16>
    %c1_140 = arith.constant 1 : index
    %c2_141 = arith.constant 2 : index
    %c0_142 = arith.constant 0 : index
    %132 = vector.load %arg9[%c1_140, %c2_141, %c0_142] : memref<18x18x128xbf16, #tpu.memory_space<vmem>>, vector<8x16x128xbf16>
    %133 = tpu.concatenate %130, %131, %132 in 2 : vector<8x16x128xbf16>, vector<8x16x128xbf16>, vector<8x16x128xbf16> -> vector<8x16x384xbf16>
    %134 = vector.shape_cast %133 : vector<8x16x384xbf16> to vector<128x384xbf16>
    %c1_143 = arith.constant 1 : index
    %c0_144 = arith.constant 0 : index
    %c0_145 = arith.constant 0 : index
    %135 = vector.load %arg5[%c1_143, %c0_144, %c0_145] : memref<3x384x128xbf16, #tpu.memory_space<vmem>>, vector<1x384x128xbf16>
    %136 = vector.shape_cast %135 : vector<1x384x128xbf16> to vector<384x128xbf16>
    %cst_146 = arith.constant dense<0.000000e+00> : vector<128x128xf32>
    %137 = tpu.matmul %134, %136, %cst_146 {dimension_numbers = #tpu.dot_dimension_numbers<[1], [0], [0], [1], [0, 0, 1, 1], [], []>} : vector<128x384xbf16>, vector<384x128xbf16>, vector<128x128xf32> -> vector<128x128xf32>
    %138 = arith.addf %129, %137 : vector<128x128xf32>
    %c2_147 = arith.constant 2 : index
    %c0_148 = arith.constant 0 : index
    %c0_149 = arith.constant 0 : index
    %139 = vector.load %arg9[%c2_147, %c0_148, %c0_149] : memref<18x18x128xbf16, #tpu.memory_space<vmem>>, vector<8x16x128xbf16>
    %c2_150 = arith.constant 2 : index
    %c1_151 = arith.constant 1 : index
    %c0_152 = arith.constant 0 : index
    %140 = vector.load %arg9[%c2_150, %c1_151, %c0_152] : memref<18x18x128xbf16, #tpu.memory_space<vmem>>, vector<8x16x128xbf16>
    %c2_153 = arith.constant 2 : index
    %c2_154 = arith.constant 2 : index
    %c0_155 = arith.constant 0 : index
    %141 = vector.load %arg9[%c2_153, %c2_154, %c0_155] : memref<18x18x128xbf16, #tpu.memory_space<vmem>>, vector<8x16x128xbf16>
    %142 = tpu.concatenate %139, %140, %141 in 2 : vector<8x16x128xbf16>, vector<8x16x128xbf16>, vector<8x16x128xbf16> -> vector<8x16x384xbf16>
    %143 = vector.shape_cast %142 : vector<8x16x384xbf16> to vector<128x384xbf16>
    %c2_156 = arith.constant 2 : index
    %c0_157 = arith.constant 0 : index
    %c0_158 = arith.constant 0 : index
    %144 = vector.load %arg5[%c2_156, %c0_157, %c0_158] : memref<3x384x128xbf16, #tpu.memory_space<vmem>>, vector<1x384x128xbf16>
    %145 = vector.shape_cast %144 : vector<1x384x128xbf16> to vector<384x128xbf16>
    %cst_159 = arith.constant dense<0.000000e+00> : vector<128x128xf32>
    %146 = tpu.matmul %143, %145, %cst_159 {dimension_numbers = #tpu.dot_dimension_numbers<[1], [0], [0], [1], [0, 0, 1, 1], [], []>} : vector<128x384xbf16>, vector<384x128xbf16>, vector<128x128xf32> -> vector<128x128xf32>
    %147 = arith.addf %138, %146 : vector<128x128xf32>
    %c0_160 = arith.constant 0 : index
    %c1_161 = arith.constant 1 : index
    %c1_162 = arith.constant 1 : index
    %c0_163 = arith.constant 0 : index
    %148 = vector.load %arg1[%c0_160, %c1_161, %c1_162, %c0_163] : memref<1x18x18x128xf32, #tpu.memory_space<vmem>>, vector<1x8x16x128xf32>
    %149 = vector.shape_cast %148 : vector<1x8x16x128xf32> to vector<8x16x128xf32>
    %150 = vector.shape_cast %149 : vector<8x16x128xf32> to vector<128x128xf32>
    %c0_164 = arith.constant 0 : index
    %c0_165 = arith.constant 0 : index
    %151 = vector.load %arg6[%c0_164, %c0_165] : memref<1x128xf32, #tpu.memory_space<vmem>>, vector<1x128xf32>
    %152 = vector.broadcast %151 : vector<1x128xf32> to vector<128x128xf32>
    %153 = arith.mulf %147, %152 : vector<128x128xf32>
    %c0_166 = arith.constant 0 : index
    %c0_167 = arith.constant 0 : index
    %154 = vector.load %arg7[%c0_166, %c0_167] : memref<1x128xf32, #tpu.memory_space<vmem>>, vector<1x128xf32>
    %155 = vector.broadcast %154 : vector<1x128xf32> to vector<128x128xf32>
    %156 = arith.addf %153, %155 : vector<128x128xf32>
    %157 = arith.addf %156, %150 : vector<128x128xf32>
    %158 = vector.shape_cast %157 : vector<128x128xf32> to vector<8x16x128xf32>
    %c0_168 = arith.constant 0 : index
    %c0_169 = arith.constant 0 : index
    %c0_170 = arith.constant 0 : index
    %c0_171 = arith.constant 0 : index
    %159 = vector.load %arg8[%c0_168, %c0_169, %c0_170, %c0_171] : memref<1x16x16x128xf32, #tpu.memory_space<vmem>>, vector<1x8x16x128xf32>
    %160 = vector.shape_cast %159 : vector<1x8x16x128xf32> to vector<8x16x128xf32>
    %161 = vector.shape_cast %158 : vector<8x16x128xf32> to vector<1x8x16x128xf32>
    tpu.vector_store %arg8[%c0_168, %c0_169, %c0_170, %c0_171], %161 {strides = array<i32>} : memref<1x16x16x128xf32, #tpu.memory_space<vmem>>, vector<1x8x16x128xf32>,
    %cst_172 = arith.constant 0.000000e+00 : f32
    %162 = vector.broadcast %cst_172 : f32 to vector<128x128xf32>
    %c8_173 = arith.constant 8 : index
    %c0_174 = arith.constant 0 : index
    %c0_175 = arith.constant 0 : index
    %163 = vector.load %arg9[%c8_173, %c0_174, %c0_175] : memref<18x18x128xbf16, #tpu.memory_space<vmem>>, vector<8x16x128xbf16>
    %c8_176 = arith.constant 8 : index
    %c1_177 = arith.constant 1 : index
    %c0_178 = arith.constant 0 : index
    %164 = vector.load %arg9[%c8_176, %c1_177, %c0_178] : memref<18x18x128xbf16, #tpu.memory_space<vmem>>, vector<8x16x128xbf16>
    %c8_179 = arith.constant 8 : index
    %c2_180 = arith.constant 2 : index
    %c0_181 = arith.constant 0 : index
    %165 = vector.load %arg9[%c8_179, %c2_180, %c0_181] : memref<18x18x128xbf16, #tpu.memory_space<vmem>>, vector<8x16x128xbf16>
    %166 = tpu.concatenate %163, %164, %165 in 2 : vector<8x16x128xbf16>, vector<8x16x128xbf16>, vector<8x16x128xbf16> -> vector<8x16x384xbf16>
    %167 = vector.shape_cast %166 : vector<8x16x384xbf16> to vector<128x384xbf16>
    %c0_182 = arith.constant 0 : index
    %c0_183 = arith.constant 0 : index
    %c0_184 = arith.constant 0 : index
    %168 = vector.load %arg5[%c0_182, %c0_183, %c0_184] : memref<3x384x128xbf16, #tpu.memory_space<vmem>>, vector<1x384x128xbf16>
    %169 = vector.shape_cast %168 : vector<1x384x128xbf16> to vector<384x128xbf16>
    %cst_185 = arith.constant dense<0.000000e+00> : vector<128x128xf32>
    %170 = tpu.matmul %167, %169, %cst_185 {dimension_numbers = #tpu.dot_dimension_numbers<[1], [0], [0], [1], [0, 0, 1, 1], [], []>} : vector<128x384xbf16>, vector<384x128xbf16>, vector<128x128xf32> -> vector<128x128xf32>
    %171 = arith.addf %162, %170 : vector<128x128xf32>
    %c9_186 = arith.constant 9 : index
    %c0_187 = arith.constant 0 : index
    %c0_188 = arith.constant 0 : index
    %172 = vector.load %arg9[%c9_186, %c0_187, %c0_188] : memref<18x18x128xbf16, #tpu.memory_space<vmem>>, vector<8x16x128xbf16>
    %c9_189 = arith.constant 9 : index
    %c1_190 = arith.constant 1 : index
    %c0_191 = arith.constant 0 : index
    %173 = vector.load %arg9[%c9_189, %c1_190, %c0_191] : memref<18x18x128xbf16, #tpu.memory_space<vmem>>, vector<8x16x128xbf16>
    %c9_192 = arith.constant 9 : index
    %c2_193 = arith.constant 2 : index
    %c0_194 = arith.constant 0 : index
    %174 = vector.load %arg9[%c9_192, %c2_193, %c0_194] : memref<18x18x128xbf16, #tpu.memory_space<vmem>>, vector<8x16x128xbf16>
    %175 = tpu.concatenate %172, %173, %174 in 2 : vector<8x16x128xbf16>, vector<8x16x128xbf16>, vector<8x16x128xbf16> -> vector<8x16x384xbf16>
    %176 = vector.shape_cast %175 : vector<8x16x384xbf16> to vector<128x384xbf16>
    %c1_195 = arith.constant 1 : index
    %c0_196 = arith.constant 0 : index
    %c0_197 = arith.constant 0 : index
    %177 = vector.load %arg5[%c1_195, %c0_196, %c0_197] : memref<3x384x128xbf16, #tpu.memory_space<vmem>>, vector<1x384x128xbf16>
    %178 = vector.shape_cast %177 : vector<1x384x128xbf16> to vector<384x128xbf16>
    %cst_198 = arith.constant dense<0.000000e+00> : vector<128x128xf32>
    %179 = tpu.matmul %176, %178, %cst_198 {dimension_numbers = #tpu.dot_dimension_numbers<[1], [0], [0], [1], [0, 0, 1, 1], [], []>} : vector<128x384xbf16>, vector<384x128xbf16>, vector<128x128xf32> -> vector<128x128xf32>
    %180 = arith.addf %171, %179 : vector<128x128xf32>
    %c10_199 = arith.constant 10 : index
    %c0_200 = arith.constant 0 : index
    %c0_201 = arith.constant 0 : index
    %181 = vector.load %arg9[%c10_199, %c0_200, %c0_201] : memref<18x18x128xbf16, #tpu.memory_space<vmem>>, vector<8x16x128xbf16>
    %c10_202 = arith.constant 10 : index
    %c1_203 = arith.constant 1 : index
    %c0_204 = arith.constant 0 : index
    %182 = vector.load %arg9[%c10_202, %c1_203, %c0_204] : memref<18x18x128xbf16, #tpu.memory_space<vmem>>, vector<8x16x128xbf16>
    %c10_205 = arith.constant 10 : index
    %c2_206 = arith.constant 2 : index
    %c0_207 = arith.constant 0 : index
    %183 = vector.load %arg9[%c10_205, %c2_206, %c0_207] : memref<18x18x128xbf16, #tpu.memory_space<vmem>>, vector<8x16x128xbf16>
    %184 = tpu.concatenate %181, %182, %183 in 2 : vector<8x16x128xbf16>, vector<8x16x128xbf16>, vector<8x16x128xbf16> -> vector<8x16x384xbf16>
    %185 = vector.shape_cast %184 : vector<8x16x384xbf16> to vector<128x384xbf16>
    %c2_208 = arith.constant 2 : index
    %c0_209 = arith.constant 0 : index
    %c0_210 = arith.constant 0 : index
    %186 = vector.load %arg5[%c2_208, %c0_209, %c0_210] : memref<3x384x128xbf16, #tpu.memory_space<vmem>>, vector<1x384x128xbf16>
    %187 = vector.shape_cast %186 : vector<1x384x128xbf16> to vector<384x128xbf16>
    %cst_211 = arith.constant dense<0.000000e+00> : vector<128x128xf32>
    %188 = tpu.matmul %185, %187, %cst_211 {dimension_numbers = #tpu.dot_dimension_numbers<[1], [0], [0], [1], [0, 0, 1, 1], [], []>} : vector<128x384xbf16>, vector<384x128xbf16>, vector<128x128xf32> -> vector<128x128xf32>
    %189 = arith.addf %180, %188 : vector<128x128xf32>
    %c0_212 = arith.constant 0 : index
    %c9_213 = arith.constant 9 : index
    %c1_214 = arith.constant 1 : index
    %c0_215 = arith.constant 0 : index
    %190 = vector.load %arg1[%c0_212, %c9_213, %c1_214, %c0_215] : memref<1x18x18x128xf32, #tpu.memory_space<vmem>>, vector<1x8x16x128xf32>
    %191 = vector.shape_cast %190 : vector<1x8x16x128xf32> to vector<8x16x128xf32>
    %192 = vector.shape_cast %191 : vector<8x16x128xf32> to vector<128x128xf32>
    %c0_216 = arith.constant 0 : index
    %c0_217 = arith.constant 0 : index
    %193 = vector.load %arg6[%c0_216, %c0_217] : memref<1x128xf32, #tpu.memory_space<vmem>>, vector<1x128xf32>
    %194 = vector.broadcast %193 : vector<1x128xf32> to vector<128x128xf32>
    %195 = arith.mulf %189, %194 : vector<128x128xf32>
    %c0_218 = arith.constant 0 : index
    %c0_219 = arith.constant 0 : index
    %196 = vector.load %arg7[%c0_218, %c0_219] : memref<1x128xf32, #tpu.memory_space<vmem>>, vector<1x128xf32>
    %197 = vector.broadcast %196 : vector<1x128xf32> to vector<128x128xf32>
    %198 = arith.addf %195, %197 : vector<128x128xf32>
    %199 = arith.addf %198, %192 : vector<128x128xf32>
    %200 = vector.shape_cast %199 : vector<128x128xf32> to vector<8x16x128xf32>
    %c0_220 = arith.constant 0 : index
    %c8_221 = arith.constant 8 : index
    %c0_222 = arith.constant 0 : index
    %c0_223 = arith.constant 0 : index
    %201 = vector.load %arg8[%c0_220, %c8_221, %c0_222, %c0_223] : memref<1x16x16x128xf32, #tpu.memory_space<vmem>>, vector<1x8x16x128xf32>
    %202 = vector.shape_cast %201 : vector<1x8x16x128xf32> to vector<8x16x128xf32>
    %203 = vector.shape_cast %200 : vector<8x16x128xf32> to vector<1x8x16x128xf32>
    tpu.vector_store %arg8[%c0_220, %c8_221, %c0_222, %c0_223], %203 {strides = array<i32>} : memref<1x16x16x128xf32, #tpu.memory_space<vmem>>, vector<1x8x16x128xf32>,
    return
  }
  func.func @transform_0(%arg0: i32) -> (i32, i32, i32, i32) {
    %c0_i32 = arith.constant 0 : i32
    %c0_i32_0 = arith.constant 0 : i32
    %c0_i32_1 = arith.constant 0 : i32
    %c0_i32_2 = arith.constant 0 : i32
    return %arg0, %c0_i32, %c0_i32_0, %c0_i32_1 : i32, i32, i32, i32
  }
  func.func @transform_1(%arg0: i32) -> (i32, i32, i32) {
    %c0_i32 = arith.constant 0 : i32
    %c0_i32_0 = arith.constant 0 : i32
    %c0_i32_1 = arith.constant 0 : i32
    %c0_i32_2 = arith.constant 0 : i32
    return %c0_i32, %c0_i32_0, %c0_i32_1 : i32, i32, i32
  }
  func.func @transform_2(%arg0: i32) -> (i32, i32) {
    %c0_i32 = arith.constant 0 : i32
    %c0_i32_0 = arith.constant 0 : i32
    %c0_i32_1 = arith.constant 0 : i32
    return %c0_i32, %c0_i32_0 : i32, i32
  }
  func.func @transform_3(%arg0: i32) -> (i32, i32) {
    %c0_i32 = arith.constant 0 : i32
    %c0_i32_0 = arith.constant 0 : i32
    %c0_i32_1 = arith.constant 0 : i32
    return %c0_i32, %c0_i32_0 : i32, i32
  }
  func.func @transform_4(%arg0: i32) -> (i32, i32, i32) {
    %c0_i32 = arith.constant 0 : i32
    %c0_i32_0 = arith.constant 0 : i32
    %c0_i32_1 = arith.constant 0 : i32
    %c0_i32_2 = arith.constant 0 : i32
    return %c0_i32, %c0_i32_0, %c0_i32_1 : i32, i32, i32
  }
  func.func @transform_5(%arg0: i32) -> (i32, i32) {
    %c0_i32 = arith.constant 0 : i32
    %c0_i32_0 = arith.constant 0 : i32
    %c0_i32_1 = arith.constant 0 : i32
    return %c0_i32, %c0_i32_0 : i32, i32
  }
  func.func @transform_6(%arg0: i32) -> (i32, i32) {
    %c0_i32 = arith.constant 0 : i32
    %c0_i32_0 = arith.constant 0 : i32
    %c0_i32_1 = arith.constant 0 : i32
    return %c0_i32, %c0_i32_0 : i32, i32
  }
  func.func @transform_7(%arg0: i32) -> (i32, i32, i32, i32) {
    %c0_i32 = arith.constant 0 : i32
    %c0_i32_0 = arith.constant 0 : i32
    %c0_i32_1 = arith.constant 0 : i32
    %c0_i32_2 = arith.constant 0 : i32
    return %arg0, %c0_i32, %c0_i32_0, %c0_i32_1 : i32, i32, i32, i32
  }
}

</mosaic_0001>

<llo_original>
// kernel: resblock_pallas.1
$region0: #{resblock_pallas.1}
  #allocation0 [shape = 'u32[]', space=smem, size = 0x4, offset = 0x4, fixed_abs, tag = 'smem constant byte address 0x4 - core index']
  #allocation1 [shape = 'u32[72,128]{1,0:T(1,128)}', space=vmem, size = 0x9000, scoped, tag = 'internal scratch']
  #allocation2 [shape = 'bf16[18,18,128]{2,1,0:T(8,128)(2,1)}', space=vmem, size = 0x1b000, scoped, tag = 'scratch operand']
  %s0 = inlined_call_operand.vmem [shape: f32[2,18,18,128], index: 0, kind: input, shape index: {}]
  %s1 = inlined_call_operand.vmem [shape: bf16[3,384,128], index: 1, kind: input, shape index: {}]
  %s2 = inlined_call_operand.vmem [shape: f32[1,128], index: 2, kind: input, shape index: {}]
  %s3 = inlined_call_operand.vmem [shape: f32[1,128], index: 3, kind: input, shape index: {}]
  %s4 = inlined_call_operand.vmem [shape: bf16[3,384,128], index: 4, kind: input, shape index: {}]
  %s5 = inlined_call_operand.vmem [shape: f32[1,128], index: 5, kind: input, shape index: {}]
  %s6 = inlined_call_operand.vmem [shape: f32[1,128], index: 6, kind: input, shape index: {}]
  %s7 = inlined_call_operand.vmem [shape: f32[2,16,16,128], index: 7, kind: output, shape index: {}]
  %s8 = sld [smem:[#allocation0]]
  $region61: #{resblock_pallas.1} parent=0
    _
  %s10 = ssub.s32 1, %s8
  %s11 = scalar_select 0, %s10, %s8
  loop: start=0, step=1, limit=4
  $region2: #{resblock_pallas.1} parent=0 // loop_pre_header
    _
  $region3: #{resblock_pallas.1} parent=0 // loop_header
    %s13 = sphi 0, %s17
    %p14 = scmp.ge.s32.totalorder %s13, 4
    %s23 = sphi 0, %s25
    %s26 = sphi 0, %s23
    %s27 = sphi 0, %s26
    %s43 = sphi 0, %s27
    %s47 = sphi 0, %s47
    %s49 = sphi 0, %s47
    %s50 = sphi 0, %s49
    %s64 = sphi 0, %s50
    %s68 = sphi 0, %s68
    %s70 = sphi 0, %s68
    %s71 = sphi 0, %s70
    %s85 = sphi 0, %s71
    %s89 = sphi 0, %s89
    %s91 = sphi 0, %s89
    %s92 = sphi 0, %s91
    %s106 = sphi 0, %s92
    %s110 = sphi 0, %s110
    %s112 = sphi 0, %s110
    %s113 = sphi 0, %s112
    %s127 = sphi 0, %s113
    %s131 = sphi 0, %s131
    %s133 = sphi 0, %s131
    %s134 = sphi 0, %s133
    %s148 = sphi 0, %s134
    %s152 = sphi 0, %s152
    %s154 = sphi 0, %s152
    %s155 = sphi 0, %s154
    %s169 = sphi 0, %s155
    %s175 = sphi 0, %s177
    %s178 = sphi 0, %s175
    %s179 = sphi 0, %s178
    %s195 = sphi 0, %s179
  $region4: #{resblock_pallas.1} parent=0 // loop_header_branch
    %16 = sbr.rel (%p14) target = $region8
  $region5: #{resblock_pallas.1} parent=0 // loop_body
    %s18 = ssub.s32 %s13, 1
    %s19 = ssub.s32 %s13, 2
    %s20 = sadd.s32 %s13, 1
    %s21 = ssub.s32 %s13, %s20
    %p22 = scmp.eq.s32.totalorder %s21, 0
    %s24 = sadd.s32 %s23, 1
    %s25 = scalar_select %p22, %s23, %s24
    %p28 = pneg %p22
    %p29 = scmp.eq.s32.totalorder %s13, 1
    %p30 = por %p28, %p29
    %p31 = scmp.ne.s32.totalorder %s23, %s26
    %p32 = scmp.eq.s32.totalorder %s13, 0
    %p33 = por %p31, %p32
    %p34 = scmp.ne.s32.totalorder %s23, %s26
    %p35 = scmp.eq.s32.totalorder %s18, 1
    %p36 = por %p34, %p35
    %p37 = scmp.ne.s32.totalorder %s26, %s27
    %p38 = scmp.eq.s32.totalorder %s18, 0
    %p39 = por %p37, %p38
    %p40 = scmp.ne.s32.totalorder %s26, %s27
    %p41 = scmp.eq.s32.totalorder %s19, 1
    %p42 = por %p40, %p41
    %p44 = scmp.ne.s32.totalorder %s27, %s43
    %p45 = scmp.eq.s32.totalorder %s19, 0
    %p46 = por %p44, %p45
    %s48 = sadd.s32 %s47, 1
    %p51 = scmp.eq.s32.totalorder %s13, 1
    %p52 = scmp.ne.s32.totalorder %s47, %s49
    %p53 = scmp.eq.s32.totalorder %s13, 0
    %p54 = por %p52, %p53
    %p55 = scmp.ne.s32.totalorder %s47, %s49
    %p56 = scmp.eq.s32.totalorder %s18, 1
    %p57 = por %p55, %p56
    %p58 = scmp.ne.s32.totalorder %s49, %s50
    %p59 = scmp.eq.s32.totalorder %s18, 0
    %p60 = por %p58, %p59
    %p61 = scmp.ne.s32.totalorder %s49, %s50
    %p62 = scmp.eq.s32.totalorder %s19, 1
    %p63 = por %p61, %p62
    %p65 = scmp.ne.s32.totalorder %s50, %s64
    %p66 = scmp.eq.s32.totalorder %s19, 0
    %p67 = por %p65, %p66
    %s69 = sadd.s32 %s68, 1
    %p72 = scmp.eq.s32.totalorder %s13, 1
    %p73 = scmp.ne.s32.totalorder %s68, %s70
    %p74 = scmp.eq.s32.totalorder %s13, 0
    %p75 = por %p73, %p74
    %p76 = scmp.ne.s32.totalorder %s68, %s70
    %p77 = scmp.eq.s32.totalorder %s18, 1
    %p78 = por %p76, %p77
    %p79 = scmp.ne.s32.totalorder %s70, %s71
    %p80 = scmp.eq.s32.totalorder %s18, 0
    %p81 = por %p79, %p80
    %p82 = scmp.ne.s32.totalorder %s70, %s71
    %p83 = scmp.eq.s32.totalorder %s19, 1
    %p84 = por %p82, %p83
    %p86 = scmp.ne.s32.totalorder %s71, %s85
    %p87 = scmp.eq.s32.totalorder %s19, 0
    %p88 = por %p86, %p87
    %s90 = sadd.s32 %s89, 1
    %p93 = scmp.eq.s32.totalorder %s13, 1
    %p94 = scmp.ne.s32.totalorder %s89, %s91
    %p95 = scmp.eq.s32.totalorder %s13, 0
    %p96 = por %p94, %p95
    %p97 = scmp.ne.s32.totalorder %s89, %s91
    %p98 = scmp.eq.s32.totalorder %s18, 1
    %p99 = por %p97, %p98
    %p100 = scmp.ne.s32.totalorder %s91, %s92
    %p101 = scmp.eq.s32.totalorder %s18, 0
    %p102 = por %p100, %p101
    %p103 = scmp.ne.s32.totalorder %s91, %s92
    %p104 = scmp.eq.s32.totalorder %s19, 1
    %p105 = por %p103, %p104
    %p107 = scmp.ne.s32.totalorder %s92, %s106
    %p108 = scmp.eq.s32.totalorder %s19, 0
    %p109 = por %p107, %p108
    %s111 = sadd.s32 %s110, 1
    %p114 = scmp.eq.s32.totalorder %s13, 1
    %p115 = scmp.ne.s32.totalorder %s110, %s112
    %p116 = scmp.eq.s32.totalorder %s13, 0
    %p117 = por %p115, %p116
    %p118 = scmp.ne.s32.totalorder %s110, %s112
    %p119 = scmp.eq.s32.totalorder %s18, 1
    %p120 = por %p118, %p119
    %p121 = scmp.ne.s32.totalorder %s112, %s113
    %p122 = scmp.eq.s32.totalorder %s18, 0
    %p123 = por %p121, %p122
    %p124 = scmp.ne.s32.totalorder %s112, %s113
    %p125 = scmp.eq.s32.totalorder %s19, 1
    %p126 = por %p124, %p125
    %p128 = scmp.ne.s32.totalorder %s113, %s127
    %p129 = scmp.eq.s32.totalorder %s19, 0
    %p130 = por %p128, %p129
    %s132 = sadd.s32 %s131, 1
    %p135 = scmp.eq.s32.totalorder %s13, 1
    %p136 = scmp.ne.s32.totalorder %s131, %s133
    %p137 = scmp.eq.s32.totalorder %s13, 0
    %p138 = por %p136, %p137
    %p139 = scmp.ne.s32.totalorder %s131, %s133
    %p140 = scmp.eq.s32.totalorder %s18, 1
    %p141 = por %p139, %p140
    %p142 = scmp.ne.s32.totalorder %s133, %s134
    %p143 = scmp.eq.s32.totalorder %s18, 0
    %p144 = por %p142, %p143
    %p145 = scmp.ne.s32.totalorder %s133, %s134
    %p146 = scmp.eq.s32.totalorder %s19, 1
    %p147 = por %p145, %p146
    %p149 = scmp.ne.s32.totalorder %s134, %s148
    %p150 = scmp.eq.s32.totalorder %s19, 0
    %p151 = por %p149, %p150
    %s153 = sadd.s32 %s152, 1
    %p156 = scmp.eq.s32.totalorder %s13, 1
    %p157 = scmp.ne.s32.totalorder %s152, %s154
    %p158 = scmp.eq.s32.totalorder %s13, 0
    %p159 = por %p157, %p158
    %p160 = scmp.ne.s32.totalorder %s152, %s154
    %p161 = scmp.eq.s32.totalorder %s18, 1
    %p162 = por %p160, %p161
    %p163 = scmp.ne.s32.totalorder %s154, %s155
    %p164 = scmp.eq.s32.totalorder %s18, 0
    %p165 = por %p163, %p164
    %p166 = scmp.ne.s32.totalorder %s154, %s155
    %p167 = scmp.eq.s32.totalorder %s19, 1
    %p168 = por %p166, %p167
    %p170 = scmp.ne.s32.totalorder %s155, %s169
    %p171 = scmp.eq.s32.totalorder %s19, 0
    %p172 = por %p170, %p171
    %s173 = ssub.s32 %s13, %s20
    %p174 = scmp.eq.s32.totalorder %s173, 0
    %s176 = sadd.s32 %s175, 1
    %s177 = scalar_select %p174, %s175, %s176
    %p180 = pneg %p174
    %p181 = scmp.eq.s32.totalorder %s13, 1
    %p182 = por %p180, %p181
    %p183 = scmp.ne.s32.totalorder %s175, %s178
    %p184 = scmp.eq.s32.totalorder %s13, 0
    %p185 = por %p183, %p184
    %p186 = scmp.ne.s32.totalorder %s175, %s178
    %p187 = scmp.eq.s32.totalorder %s18, 1
    %p188 = por %p186, %p187
    %p189 = scmp.ne.s32.totalorder %s178, %s179
    %p190 = scmp.eq.s32.totalorder %s18, 0
    %p191 = por %p189, %p190
    %p192 = scmp.ne.s32.totalorder %s178, %s179
    %p193 = scmp.eq.s32.totalorder %s19, 1
    %p194 = por %p192, %p193
    %p196 = scmp.ne.s32.totalorder %s179, %s195
    %p197 = scmp.eq.s32.totalorder %s19, 0
    %p198 = por %p196, %p197
    %p199 = scmp.le.s32.totalorder 1, %s13
    %p200 = scmp.lt.s32.totalorder %s13, 3
    %p201 = pnand %p199, %p200
    %p202 = pneg %p201
    // Predicated region
    $region9: #{resblock_pallas.1} parent=5 // pred_check
      _
    $region10: #{resblock_pallas.1} parent=5 // pred_check_branch
      %204 = sbr.rel (%p201) target = $region12
    $region11: #{resblock_pallas.1} parent=5 // pred_region
      %s205 = ssub.s32 %s13, 1
      // Predicated region
      $region13: #{resblock_pallas.1} parent=11 // pred_check
        %p206 = pneg %p60
      $region14: #{resblock_pallas.1} parent=11 // pred_check_branch
        %208 = sbr.rel (%p206) target = $region16
      $region15: #{resblock_pallas.1} parent=11 // pred_region
        _
      $region16: #{resblock_pallas.1} parent=11 // pred_fallthru
        _
      // Predicated region
      $region17: #{resblock_pallas.1} parent=11 // pred_check
        %p209 = pneg %p81
      $region18: #{resblock_pallas.1} parent=11 // pred_check_branch
        %211 = sbr.rel (%p209) target = $region20
      $region19: #{resblock_pallas.1} parent=11 // pred_region
        _
      $region20: #{resblock_pallas.1} parent=11 // pred_fallthru
        _
      // Predicated region
      $region21: #{resblock_pallas.1} parent=11 // pred_check
        %p212 = pneg %p102
      $region22: #{resblock_pallas.1} parent=11 // pred_check_branch
        %214 = sbr.rel (%p212) target = $region24
      $region23: #{resblock_pallas.1} parent=11 // pred_region
        _
      $region24: #{resblock_pallas.1} parent=11 // pred_fallthru
        _
      // Predicated region
      $region25: #{resblock_pallas.1} parent=11 // pred_check
        %p215 = pneg %p123
      $region26: #{resblock_pallas.1} parent=11 // pred_check_branch
        %217 = sbr.rel (%p215) target = $region28
      $region27: #{resblock_pallas.1} parent=11 // pred_region
        _
      $region28: #{resblock_pallas.1} parent=11 // pred_fallthru
        _
      // Predicated region
      $region29: #{resblock_pallas.1} parent=11 // pred_check
        %p218 = pneg %p144
      $region30: #{resblock_pallas.1} parent=11 // pred_check_branch
        %220 = sbr.rel (%p218) target = $region32
      $region31: #{resblock_pallas.1} parent=11 // pred_region
        _
      $region32: #{resblock_pallas.1} parent=11 // pred_fallthru
        _
      // Predicated region
      $region33: #{resblock_pallas.1} parent=11 // pred_check
        %p221 = pneg %p165
      $region34: #{resblock_pallas.1} parent=11 // pred_check_branch
        %223 = sbr.rel (%p221) target = $region36
      $region35: #{resblock_pallas.1} parent=11 // pred_region
        _
      $region36: #{resblock_pallas.1} parent=11 // pred_fallthru
        _
    $region12: #{resblock_pallas.1} parent=5 // pred_fallthru
      _
    %p224 = scmp.lt.s32.totalorder %s13, 2
    // Predicated region
    $region37: #{resblock_pallas.1} parent=5 // pred_check
      %p225 = pneg %p224
    $region38: #{resblock_pallas.1} parent=5 // pred_check_branch
      %227 = sbr.rel (%p225) target = $region40
    $region39: #{resblock_pallas.1} parent=5 // pred_region
      // Predicated region
      $region41: #{resblock_pallas.1} parent=39 // pred_check
        %p228 = pneg %p33
      $region42: #{resblock_pallas.1} parent=39 // pred_check_branch
        %230 = sbr.rel (%p228) target = $region44
      $region43: #{resblock_pallas.1} parent=39 // pred_region
        %p231 = scmp.lt.s32.totalorder %s13, 1
        %s232 = scalar_select %p231, %s13, 1
        %s233 = smul.addr %s232, 54
        %s234 = smul.addr %s233, 8
        %s235 = scalar_lea.vmem %s0, %s234
      $region44: #{resblock_pallas.1} parent=39 // pred_fallthru
        _
    $region40: #{resblock_pallas.1} parent=5 // pred_fallthru
      _
    %p236 = scmp.le.s32.totalorder 1, %s13
    %p237 = scmp.lt.s32.totalorder %s13, 3
    %p238 = pnand %p236, %p237
    %p239 = pneg %p238
    // Predicated region
    $region45: #{resblock_pallas.1} parent=5 // pred_check
      _
    $region46: #{resblock_pallas.1} parent=5 // pred_check_branch
      %241 = sbr.rel (%p238) target = $region48
    $region47: #{resblock_pallas.1} parent=5 // pred_region
      %s242 = ssub.s32 %s13, 1
      %p243 = scmp.lt.s32.totalorder %s18, 1
      %s244 = scalar_select %p243, %s18, 1
      %s245 = smul.addr %s244, 54
      %s246 = smul.addr %s245, 8
      %s247 = scalar_lea.vmem %s0, %s246
      %p248 = pneg %p39
      %p249 = pneg %p36
      %p250 = pneg %p60
      %p251 = pneg %p57
      %p252 = pneg %p81
      %p253 = pneg %p78
      %p254 = pneg %p102
      %p255 = pneg %p99
      %p256 = pneg %p123
      %p257 = pneg %p120
      %p258 = pneg %p144
      %p259 = pneg %p141
      %p260 = pneg %p165
      %p261 = pneg %p162
      %p262 = pneg %p191
      %p263 = pneg %p188
      %p264 = scmp.lt.s32.totalorder %s18, 1
      %s265 = scalar_select %p264, %s18, 1
      %s266 = smul.addr %s265, 32
      %s267 = smul.addr %s266, 8
      %s268 = scalar_lea.vmem %s7, %s267
      %p269 = scmp.lt.s32.totalorder %s18, 1
      %s270 = scalar_select %p269, %s18, 1
      %s271 = smul.addr %s270, 54
      %s272 = smul.addr %s271, 8
      %s273 = scalar_lea.vmem %s0, %s272
      %p274 = scmp.lt.s32.totalorder %s18, 1
      %s275 = scalar_select %p274, %s18, 1
      %s276 = smul.addr %s275, 32
      %s277 = smul.addr %s276, 8
      %s278 = scalar_lea.vmem %s7, %s277
      %280 = vst [vmem:[#allocation2] sm:$0xf] 0
      %281 = vst [vmem:[#allocation2 + $0x4] sm:$0xf] 0
      %282 = vst [vmem:[#allocation2 + $0x8] sm:$0x1] 0
      %s283 = scalar_lea.vmem [#allocation2], 204
      %284 = vst [vmem:[%s283] sm:$0xf] 0
      %285 = vst [vmem:[%s283 + $0x4] sm:$0xf] 0
      %286 = vst [vmem:[%s283 + $0x8] sm:$0x1] 0
      %vm287 = vcmask 1040384
      %vm288 = vsmask.f32 256
      %vm289 = vmand %vm287, %vm288
      %v290 = vld [vmem:[#allocation2] sm:$0x1]
      %v291 = vsel %vm289, 0, %v290
      %292 = vst [vmem:[#allocation2] sm:$0x1] %v291
      %v293 = vld [vmem:[#allocation2 + $0xc] sm:$0x1]
      %v294 = vsel %vm289, 0, %v293
      %295 = vst [vmem:[#allocation2 + $0xc] sm:$0x1] %v294
      %v296 = vld [vmem:[#allocation2 + $0x18] sm:$0x1]
      %v297 = vsel %vm289, 0, %v296
      %298 = vst [vmem:[#allocation2 + $0x18] sm:$0x1] %v297
      %v299 = vld [vmem:[#allocation2 + $0x24] sm:$0x1]
      %v300 = vsel %vm289, 0, %v299
      %301 = vst [vmem:[#allocation2 + $0x24] sm:$0x1] %v300
      %v302 = vld [vmem:[#allocation2 + $0x30] sm:$0x1]
      %v303 = vsel %vm289, 0, %v302
      %304 = vst [vmem:[#allocation2 + $0x30] sm:$0x1] %v303
      %v305 = vld [vmem:[#allocation2 + $0x3c] sm:$0x1]
      %v306 = vsel %vm289, 0, %v305
      %307 = vst [vmem:[#allocation2 + $0x3c] sm:$0x1] %v306
      %v308 = vld [vmem:[#allocation2 + $0x48] sm:$0x1]
      %v309 = vsel %vm289, 0, %v308
      %310 = vst [vmem:[#allocation2 + $0x48] sm:$0x1] %v309
      %v311 = vld [vmem:[#allocation2 + $0x54] sm:$0x1]
      %v312 = vsel %vm289, 0, %v311
      %313 = vst [vmem:[#allocation2 + $0x54] sm:$0x1] %v312
      %v314 = vld [vmem:[#allocation2 + $0x60] sm:$0x1]
      %v315 = vsel %vm289, 0, %v314
      %316 = vst [vmem:[#allocation2 + $0x60] sm:$0x1] %v315
      %v317 = vld [vmem:[#allocation2 + $0x6c] sm:$0x1]
      %v318 = vsel %vm289, 0, %v317
      %319 = vst [vmem:[#allocation2 + $0x6c] sm:$0x1] %v318
      %v320 = vld [vmem:[#allocation2 + $0x78] sm:$0x1]
      %v321 = vsel %vm289, 0, %v320
      %322 = vst [vmem:[#allocation2 + $0x78] sm:$0x1] %v321
      %v323 = vld [vmem:[#allocation2 + $0x84] sm:$0x1]
      %v324 = vsel %vm289, 0, %v323
      %325 = vst [vmem:[#allocation2 + $0x84] sm:$0x1] %v324
      %v326 = vld [vmem:[#allocation2 + $0x90] sm:$0x1]
      %v327 = vsel %vm289, 0, %v326
      %328 = vst [vmem:[#allocation2 + $0x90] sm:$0x1] %v327
      %v329 = vld [vmem:[#allocation2 + $0x9c] sm:$0x1]
      %v330 = vsel %vm289, 0, %v329
      %331 = vst [vmem:[#allocation2 + $0x9c] sm:$0x1] %v330
      %v332 = vld [vmem:[#allocation2 + $0xa8] sm:$0x1]
      %v333 = vsel %vm289, 0, %v332
      %334 = vst [vmem:[#allocation2 + $0xa8] sm:$0x1] %v333
      %v335 = vld [vmem:[#allocation2 + $0xb4] sm:$0x1]
      %v336 = vsel %vm289, 0, %v335
      %337 = vst [vmem:[#allocation2 + $0xb4] sm:$0x1] %v336
      %v338 = vld [vmem:[#allocation2 + $0xc0] sm:$0x1]
      %v339 = vsel %vm289, 0, %v338
      %340 = vst [vmem:[#allocation2 + $0xc0] sm:$0x1] %v339
      %v341 = vld [vmem:[#allocation2 + $0xcc] sm:$0x1]
      %v342 = vsel %vm289, 0, %v341
      %343 = vst [vmem:[#allocation2 + $0xcc] sm:$0x1] %v342
      %vm344 = vsmask.f32 7938
      %vm345 = vmand %vm287, %vm344
      %v346 = vld [vmem:[#allocation2 + $0x8] sm:$0x1]
      %v347 = vsel %vm345, 0, %v346
      %348 = vst [vmem:[#allocation2 + $0x8] sm:$0x1] %v347
      %v349 = vld [vmem:[#allocation2 + $0x14] sm:$0x1]
      %v350 = vsel %vm345, 0, %v349
      %351 = vst [vmem:[#allocation2 + $0x14] sm:$0x1] %v350
      %v352 = vld [vmem:[#allocation2 + $0x20] sm:$0x1]
      %v353 = vsel %vm345, 0, %v352
      %354 = vst [vmem:[#allocation2 + $0x20] sm:$0x1] %v353
      %v355 = vld [vmem:[#allocation2 + $0x2c] sm:$0x1]
      %v356 = vsel %vm345, 0, %v355
      %357 = vst [vmem:[#allocation2 + $0x2c] sm:$0x1] %v356
      %v358 = vld [vmem:[#allocation2 + $0x38] sm:$0x1]
      %v359 = vsel %vm345, 0, %v358
      %360 = vst [vmem:[#allocation2 + $0x38] sm:$0x1] %v359
      %v361 = vld [vmem:[#allocation2 + $0x44] sm:$0x1]
      %v362 = vsel %vm345, 0, %v361
      %363 = vst [vmem:[#allocation2 + $0x44] sm:$0x1] %v362
      %v364 = vld [vmem:[#allocation2 + $0x50] sm:$0x1]
      %v365 = vsel %vm345, 0, %v364
      %366 = vst [vmem:[#allocation2 + $0x50] sm:$0x1] %v365
      %v367 = vld [vmem:[#allocation2 + $0x5c] sm:$0x1]
      %v368 = vsel %vm345, 0, %v367
      %369 = vst [vmem:[#allocation2 + $0x5c] sm:$0x1] %v368
      %v370 = vld [vmem:[#allocation2 + $0x68] sm:$0x1]
      %v371 = vsel %vm345, 0, %v370
      %372 = vst [vmem:[#allocation2 + $0x68] sm:$0x1] %v371
      %v373 = vld [vmem:[#allocation2 + $0x74] sm:$0x1]
      %v374 = vsel %vm345, 0, %v373
      %375 = vst [vmem:[#allocation2 + $0x74] sm:$0x1] %v374
      %v376 = vld [vmem:[#allocation2 + $0x80] sm:$0x1]
      %v377 = vsel %vm345, 0, %v376
      %378 = vst [vmem:[#allocation2 + $0x80] sm:$0x1] %v377
      %v379 = vld [vmem:[#allocation2 + $0x8c] sm:$0x1]
      %v380 = vsel %vm345, 0, %v379
      %381 = vst [vmem:[#allocation2 + $0x8c] sm:$0x1] %v380
      %v382 = vld [vmem:[#allocation2 + $0x98] sm:$0x1]
      %v383 = vsel %vm345, 0, %v382
      %384 = vst [vmem:[#allocation2 + $0x98] sm:$0x1] %v383
      %v385 = vld [vmem:[#allocation2 + $0xa4] sm:$0x1]
      %v386 = vsel %vm345, 0, %v385
      %387 = vst [vmem:[#allocation2 + $0xa4] sm:$0x1] %v386
      %v388 = vld [vmem:[#allocation2 + $0xb0] sm:$0x1]
      %v389 = vsel %vm345, 0, %v388
      %390 = vst [vmem:[#allocation2 + $0xb0] sm:$0x1] %v389
      %v391 = vld [vmem:[#allocation2 + $0xbc] sm:$0x1]
      %v392 = vsel %vm345, 0, %v391
      %393 = vst [vmem:[#allocation2 + $0xbc] sm:$0x1] %v392
      %v394 = vld [vmem:[#allocation2 + $0xc8] sm:$0x1]
      %v395 = vsel %vm345, 0, %v394
      %396 = vst [vmem:[#allocation2 + $0xc8] sm:$0x1] %v395
      %v397 = vld [vmem:[#allocation2 + $0xd4] sm:$0x1]
      %v398 = vsel %vm345, 0, %v397
      %399 = vst [vmem:[#allocation2 + $0xd4] sm:$0x1] %v398
      %v400 = vld [vmem:[%s273] sm:$0xff]
      %v401 = vld [vmem:[%s273 + $0x8] sm:$0xff]
      %v402 = vld [vmem:[%s273 + $0x18] sm:$0xff]
      %v403 = vld [vmem:[%s273 + $0x20] sm:$0xff]
      %v404 = vld [vmem:[%s273 + $0x30] sm:$0xff]
      %v405 = vld [vmem:[%s273 + $0x38] sm:$0xff]
      %v406 = vld [vmem:[%s273 + $0x48] sm:$0xff]
      %v407 = vld [vmem:[%s273 + $0x50] sm:$0xff]
      %v408 = vld [vmem:[%s273 + $0x60] sm:$0xff]
      %v409 = vld [vmem:[%s273 + $0x68] sm:$0xff]
      %v410 = vld [vmem:[%s273 + $0x78] sm:$0xff]
      %v411 = vld [vmem:[%s273 + $0x80] sm:$0xff]
      %v412 = vld [vmem:[%s273 + $0x90] sm:$0xff]
      %v413 = vld [vmem:[%s273 + $0x98] sm:$0xff]
      %v414 = vld [vmem:[%s273 + $0xa8] sm:$0xff]
      %v415 = vld [vmem:[%s273 + $0xb0] sm:$0xff]
      %v416 = vpack.c.bf16 %v400, %v400
      %v417 = vpack.c.bf16 %v401, %v401
      %v418 = vpack.c.bf16 %v402, %v402
      %v419 = vpack.c.bf16 %v403, %v403
      %v420 = vpack.c.bf16 %v404, %v404
      %v421 = vpack.c.bf16 %v405, %v405
      %v422 = vpack.c.bf16 %v406, %v406
      %v423 = vpack.c.bf16 %v407, %v407
      %v424 = vpack.c.bf16 %v408, %v408
      %v425 = vpack.c.bf16 %v409, %v409
      %v426 = vpack.c.bf16 %v410, %v410
      %v427 = vpack.c.bf16 %v411, %v411
      %v428 = vpack.c.bf16 %v412, %v412
      %v429 = vpack.c.bf16 %v413, %v413
      %v430 = vpack.c.bf16 %v414, %v414
      %v431 = vpack.c.bf16 %v415, %v415
      %v432 = vld [vmem:[%s273 + $0x1] sm:$0xff]
      %v433 = vld [vmem:[%s273 + $0x9] sm:$0xff]
      %v434 = vld [vmem:[%s273 + $0x19] sm:$0xff]
      %v435 = vld [vmem:[%s273 + $0x21] sm:$0xff]
      %v436 = vld [vmem:[%s273 + $0x31] sm:$0xff]
      %v437 = vld [vmem:[%s273 + $0x39] sm:$0xff]
      %v438 = vld [vmem:[%s273 + $0x49] sm:$0xff]
      %v439 = vld [vmem:[%s273 + $0x51] sm:$0xff]
      %v440 = vld [vmem:[%s273 + $0x61] sm:$0xff]
      %v441 = vld [vmem:[%s273 + $0x69] sm:$0xff]
      %v442 = vld [vmem:[%s273 + $0x79] sm:$0xff]
      %v443 = vld [vmem:[%s273 + $0x81] sm:$0xff]
      %v444 = vld [vmem:[%s273 + $0x91] sm:$0xff]
      %v445 = vld [vmem:[%s273 + $0x99] sm:$0xff]
      %v446 = vld [vmem:[%s273 + $0xa9] sm:$0xff]
      %v447 = vld [vmem:[%s273 + $0xb1] sm:$0xff]
      %v448 = vpack.c.bf16 %v432, %v432
      %v449 = vpack.c.bf16 %v433, %v433
      %v450 = vpack.c.bf16 %v434, %v434
      %v451 = vpack.c.bf16 %v435, %v435
      %v452 = vpack.c.bf16 %v436, %v436
      %v453 = vpack.c.bf16 %v437, %v437
      %v454 = vpack.c.bf16 %v438, %v438
      %v455 = vpack.c.bf16 %v439, %v439
      %v456 = vpack.c.bf16 %v440, %v440
      %v457 = vpack.c.bf16 %v441, %v441
      %v458 = vpack.c.bf16 %v442, %v442
      %v459 = vpack.c.bf16 %v443, %v443
      %v460 = vpack.c.bf16 %v444, %v444
      %v461 = vpack.c.bf16 %v445, %v445
      %v462 = vpack.c.bf16 %v446, %v446
      %v463 = vpack.c.bf16 %v447, %v447
      %v464 = vld [vmem:[%s273 + $0x2] sm:$0xff]
      %v465 = vld [vmem:[%s273 + $0xa] sm:$0xff]
      %v466 = vld [vmem:[%s273 + $0x1a] sm:$0xff]
      %v467 = vld [vmem:[%s273 + $0x22] sm:$0xff]
      %v468 = vld [vmem:[%s273 + $0x32] sm:$0xff]
      %v469 = vld [vmem:[%s273 + $0x3a] sm:$0xff]
      %v470 = vld [vmem:[%s273 + $0x4a] sm:$0xff]
      %v471 = vld [vmem:[%s273 + $0x52] sm:$0xff]
      %v472 = vld [vmem:[%s273 + $0x62] sm:$0xff]
      %v473 = vld [vmem:[%s273 + $0x6a] sm:$0xff]
      %v474 = vld [vmem:[%s273 + $0x7a] sm:$0xff]
      %v475 = vld [vmem:[%s273 + $0x82] sm:$0xff]
      %v476 = vld [vmem:[%s273 + $0x92] sm:$0xff]
      %v477 = vld [vmem:[%s273 + $0x9a] sm:$0xff]
      %v478 = vld [vmem:[%s273 + $0xaa] sm:$0xff]
      %v479 = vld [vmem:[%s273 + $0xb2] sm:$0xff]
      %v480 = vpack.c.bf16 %v464, %v464
      %v481 = vpack.c.bf16 %v465, %v465
      %v482 = vpack.c.bf16 %v466, %v466
      %v483 = vpack.c.bf16 %v467, %v467
      %v484 = vpack.c.bf16 %v468, %v468
      %v485 = vpack.c.bf16 %v469, %v469
      %v486 = vpack.c.bf16 %v470, %v470
      %v487 = vpack.c.bf16 %v471, %v471
      %v488 = vpack.c.bf16 %v472, %v472
      %v489 = vpack.c.bf16 %v473, %v473
      %v490 = vpack.c.bf16 %v474, %v474
      %v491 = vpack.c.bf16 %v475, %v475
      %v492 = vpack.c.bf16 %v476, %v476
      %v493 = vpack.c.bf16 %v477, %v477
      %v494 = vpack.c.bf16 %v478, %v478
      %v495 = vpack.c.bf16 %v479, %v479
      %v512 = vunpack.c.l.b16 %v416
      %v513 = vunpack.c.l.b16 %v417
      %v514 = vunpack.c.l.b16 %v418
      %v515 = vunpack.c.l.b16 %v419
      %v516 = vunpack.c.l.b16 %v420
      %v517 = vunpack.c.l.b16 %v421
      %v518 = vunpack.c.l.b16 %v422
      %v519 = vunpack.c.l.b16 %v423
      %v520 = vunpack.c.l.b16 %v424
      %v521 = vunpack.c.l.b16 %v425
      %v522 = vunpack.c.l.b16 %v426
      %v523 = vunpack.c.l.b16 %v427
      %v524 = vunpack.c.l.b16 %v428
      %v525 = vunpack.c.l.b16 %v429
      %v526 = vunpack.c.l.b16 %v430
      %v527 = vunpack.c.l.b16 %v431
      %v528 = vpack.c.b16 %v513, %v512
      %v529 = vpack.c.b16 %v515, %v514
      %v530 = vpack.c.b16 %v517, %v516
      %v531 = vpack.c.b16 %v519, %v518
      %v532 = vpack.c.b16 %v521, %v520
      %v533 = vpack.c.b16 %v523, %v522
      %v534 = vpack.c.b16 %v525, %v524
      %v535 = vpack.c.b16 %v527, %v526
      %v560 = vunpack.c.l.b16 %v448
      %v561 = vunpack.c.l.b16 %v449
      %v562 = vunpack.c.l.b16 %v450
      %v563 = vunpack.c.l.b16 %v451
      %v564 = vunpack.c.l.b16 %v452
      %v565 = vunpack.c.l.b16 %v453
      %v566 = vunpack.c.l.b16 %v454
      %v567 = vunpack.c.l.b16 %v455
      %v568 = vunpack.c.l.b16 %v456
      %v569 = vunpack.c.l.b16 %v457
      %v570 = vunpack.c.l.b16 %v458
      %v571 = vunpack.c.l.b16 %v459
      %v572 = vunpack.c.l.b16 %v460
      %v573 = vunpack.c.l.b16 %v461
      %v574 = vunpack.c.l.b16 %v462
      %v575 = vunpack.c.l.b16 %v463
      %v576 = vpack.c.b16 %v561, %v560
      %v577 = vpack.c.b16 %v563, %v562
      %v578 = vpack.c.b16 %v565, %v564
      %v579 = vpack.c.b16 %v567, %v566
      %v580 = vpack.c.b16 %v569, %v568
      %v581 = vpack.c.b16 %v571, %v570
      %v582 = vpack.c.b16 %v573, %v572
      %v583 = vpack.c.b16 %v575, %v574
      %v608 = vunpack.c.l.b16 %v480
      %v609 = vunpack.c.l.b16 %v481
      %v610 = vunpack.c.l.b16 %v482
      %v611 = vunpack.c.l.b16 %v483
      %v612 = vunpack.c.l.b16 %v484
      %v613 = vunpack.c.l.b16 %v485
      %v614 = vunpack.c.l.b16 %v486
      %v615 = vunpack.c.l.b16 %v487
      %v616 = vunpack.c.l.b16 %v488
      %v617 = vunpack.c.l.b16 %v489
      %v618 = vunpack.c.l.b16 %v490
      %v619 = vunpack.c.l.b16 %v491
      %v620 = vunpack.c.l.b16 %v492
      %v621 = vunpack.c.l.b16 %v493
      %v622 = vunpack.c.l.b16 %v494
      %v623 = vunpack.c.l.b16 %v495
      %v624 = vpack.c.b16 %v609, %v608
      %v625 = vpack.c.b16 %v611, %v610
      %v626 = vpack.c.b16 %v613, %v612
      %v627 = vpack.c.b16 %v615, %v614
      %v628 = vpack.c.b16 %v617, %v616
      %v629 = vpack.c.b16 %v619, %v618
      %v630 = vpack.c.b16 %v621, %v620
      %v631 = vpack.c.b16 %v623, %v622
      %v640 = vld [vmem:[%s1] sm:$0xf]
      %v641 = vld [vmem:[%s1 + $0x4] sm:$0xf]
      %v642 = vld [vmem:[%s1 + $0x8] sm:$0xf]
      %v643 = vld [vmem:[%s1 + $0xc] sm:$0xf]
      %v644 = vld [vmem:[%s1 + $0x10] sm:$0xf]
      %v645 = vld [vmem:[%s1 + $0x14] sm:$0xf]
      %v646 = vld [vmem:[%s1 + $0x18] sm:$0xf]
      %v647 = vld [vmem:[%s1 + $0x1c] sm:$0xf]
      %v648 = vld [vmem:[%s1 + $0x20] sm:$0xf]
      %v649 = vld [vmem:[%s1 + $0x24] sm:$0xf]
      %v650 = vld [vmem:[%s1 + $0x28] sm:$0xf]
      %v651 = vld [vmem:[%s1 + $0x2c] sm:$0xf]
      %v652 = vld [vmem:[%s1 + $0x30] sm:$0xf]
      %v653 = vld [vmem:[%s1 + $0x34] sm:$0xf]
      %v654 = vld [vmem:[%s1 + $0x38] sm:$0xf]
      %v655 = vld [vmem:[%s1 + $0x3c] sm:$0xf]
      %v656 = vld [vmem:[%s1 + $0x40] sm:$0xf]
      %v657 = vld [vmem:[%s1 + $0x44] sm:$0xf]
      %v658 = vld [vmem:[%s1 + $0x48] sm:$0xf]
      %v659 = vld [vmem:[%s1 + $0x4c] sm:$0xf]
      %v660 = vld [vmem:[%s1 + $0x50] sm:$0xf]
      %v661 = vld [vmem:[%s1 + $0x54] sm:$0xf]
      %v662 = vld [vmem:[%s1 + $0x58] sm:$0xf]
      %v663 = vld [vmem:[%s1 + $0x5c] sm:$0xf]
      %v664 = vld [vmem:[%s1 + $0x60] sm:$0xf]
      %v665 = vld [vmem:[%s1 + $0x64] sm:$0xf]
      %v666 = vld [vmem:[%s1 + $0x68] sm:$0xf]
      %v667 = vld [vmem:[%s1 + $0x6c] sm:$0xf]
      %v668 = vld [vmem:[%s1 + $0x70] sm:$0xf]
      %v669 = vld [vmem:[%s1 + $0x74] sm:$0xf]
      %v670 = vld [vmem:[%s1 + $0x78] sm:$0xf]
      %v671 = vld [vmem:[%s1 + $0x7c] sm:$0xf]
      %v672 = vld [vmem:[%s1 + $0x80] sm:$0xf]
      %v673 = vld [vmem:[%s1 + $0x84] sm:$0xf]
      %v674 = vld [vmem:[%s1 + $0x88] sm:$0xf]
      %v675 = vld [vmem:[%s1 + $0x8c] sm:$0xf]
      %v676 = vld [vmem:[%s1 + $0x90] sm:$0xf]
      %v677 = vld [vmem:[%s1 + $0x94] sm:$0xf]
      %v678 = vld [vmem:[%s1 + $0x98] sm:$0xf]
      %v679 = vld [vmem:[%s1 + $0x9c] sm:$0xf]
      %v680 = vld [vmem:[%s1 + $0xa0] sm:$0xf]
      %v681 = vld [vmem:[%s1 + $0xa4] sm:$0xf]
      %v682 = vld [vmem:[%s1 + $0xa8] sm:$0xf]
      %v683 = vld [vmem:[%s1 + $0xac] sm:$0xf]
      %v684 = vld [vmem:[%s1 + $0xb0] sm:$0xf]
      %v685 = vld [vmem:[%s1 + $0xb4] sm:$0xf]
      %v686 = vld [vmem:[%s1 + $0xb8] sm:$0xf]
      %v687 = vld [vmem:[%s1 + $0xbc] sm:$0xf]
      %s688 = scalar_lea.vmem %s273, 24
      %v689 = vld [vmem:[%s688] sm:$0xff]
      %v690 = vld [vmem:[%s688 + $0x8] sm:$0xff]
      %v691 = vld [vmem:[%s688 + $0x18] sm:$0xff]
      %v692 = vld [vmem:[%s688 + $0x20] sm:$0xff]
      %v693 = vld [vmem:[%s688 + $0x30] sm:$0xff]
      %v694 = vld [vmem:[%s688 + $0x38] sm:$0xff]
      %v695 = vld [vmem:[%s688 + $0x48] sm:$0xff]
      %v696 = vld [vmem:[%s688 + $0x50] sm:$0xff]
      %v697 = vld [vmem:[%s688 + $0x60] sm:$0xff]
      %v698 = vld [vmem:[%s688 + $0x68] sm:$0xff]
      %v699 = vld [vmem:[%s688 + $0x78] sm:$0xff]
      %v700 = vld [vmem:[%s688 + $0x80] sm:$0xff]
      %v701 = vld [vmem:[%s688 + $0x90] sm:$0xff]
      %v702 = vld [vmem:[%s688 + $0x98] sm:$0xff]
      %v703 = vld [vmem:[%s688 + $0xa8] sm:$0xff]
      %v704 = vld [vmem:[%s688 + $0xb0] sm:$0xff]
      %v705 = vpack.c.bf16 %v689, %v689
      %v706 = vpack.c.bf16 %v690, %v690
      %v707 = vpack.c.bf16 %v691, %v691
      %v708 = vpack.c.bf16 %v692, %v692
      %v709 = vpack.c.bf16 %v693, %v693
      %v710 = vpack.c.bf16 %v694, %v694
      %v711 = vpack.c.bf16 %v695, %v695
      %v712 = vpack.c.bf16 %v696, %v696
      %v713 = vpack.c.bf16 %v697, %v697
      %v714 = vpack.c.bf16 %v698, %v698
      %v715 = vpack.c.bf16 %v699, %v699
      %v716 = vpack.c.bf16 %v700, %v700
      %v717 = vpack.c.bf16 %v701, %v701
      %v718 = vpack.c.bf16 %v702, %v702
      %v719 = vpack.c.bf16 %v703, %v703
      %v720 = vpack.c.bf16 %v704, %v704
      %v721 = vld [vmem:[%s688 + $0x1] sm:$0xff]
      %v722 = vld [vmem:[%s688 + $0x9] sm:$0xff]
      %v723 = vld [vmem:[%s688 + $0x19] sm:$0xff]
      %v724 = vld [vmem:[%s688 + $0x21] sm:$0xff]
      %v725 = vld [vmem:[%s688 + $0x31] sm:$0xff]
      %v726 = vld [vmem:[%s688 + $0x39] sm:$0xff]
      %v727 = vld [vmem:[%s688 + $0x49] sm:$0xff]
      %v728 = vld [vmem:[%s688 + $0x51] sm:$0xff]
      %v729 = vld [vmem:[%s688 + $0x61] sm:$0xff]
      %v730 = vld [vmem:[%s688 + $0x69] sm:$0xff]
      %v731 = vld [vmem:[%s688 + $0x79] sm:$0xff]
      %v732 = vld [vmem:[%s688 + $0x81] sm:$0xff]
      %v733 = vld [vmem:[%s688 + $0x91] sm:$0xff]
      %v734 = vld [vmem:[%s688 + $0x99] sm:$0xff]
      %v735 = vld [vmem:[%s688 + $0xa9] sm:$0xff]
      %v736 = vld [vmem:[%s688 + $0xb1] sm:$0xff]
      %v737 = vpack.c.bf16 %v721, %v721
      %v738 = vpack.c.bf16 %v722, %v722
      %v739 = vpack.c.bf16 %v723, %v723
      %v740 = vpack.c.bf16 %v724, %v724
      %v741 = vpack.c.bf16 %v725, %v725
      %v742 = vpack.c.bf16 %v726, %v726
      %v743 = vpack.c.bf16 %v727, %v727
      %v744 = vpack.c.bf16 %v728, %v728
      %v745 = vpack.c.bf16 %v729, %v729
      %v746 = vpack.c.bf16 %v730, %v730
      %v747 = vpack.c.bf16 %v731, %v731
      %v748 = vpack.c.bf16 %v732, %v732
      %v749 = vpack.c.bf16 %v733, %v733
      %v750 = vpack.c.bf16 %v734, %v734
      %v751 = vpack.c.bf16 %v735, %v735
      %v752 = vpack.c.bf16 %v736, %v736
      %v753 = vld [vmem:[%s688 + $0x2] sm:$0xff]
      %v754 = vld [vmem:[%s688 + $0xa] sm:$0xff]
      %v755 = vld [vmem:[%s688 + $0x1a] sm:$0xff]
      %v756 = vld [vmem:[%s688 + $0x22] sm:$0xff]
      %v757 = vld [vmem:[%s688 + $0x32] sm:$0xff]
      %v758 = vld [vmem:[%s688 + $0x3a] sm:$0xff]
      %v759 = vld [vmem:[%s688 + $0x4a] sm:$0xff]
      %v760 = vld [vmem:[%s688 + $0x52] sm:$0xff]
      %v761 = vld [vmem:[%s688 + $0x62] sm:$0xff]
      %v762 = vld [vmem:[%s688 + $0x6a] sm:$0xff]
      %v763 = vld [vmem:[%s688 + $0x7a] sm:$0xff]
      %v764 = vld [vmem:[%s688 + $0x82] sm:$0xff]
      %v765 = vld [vmem:[%s688 + $0x92] sm:$0xff]
      %v766 = vld [vmem:[%s688 + $0x9a] sm:$0xff]
      %v767 = vld [vmem:[%s688 + $0xaa] sm:$0xff]
      %v768 = vld [vmem:[%s688 + $0xb2] sm:$0xff]
      %v769 = vpack.c.bf16 %v753, %v753
      %v770 = vpack.c.bf16 %v754, %v754
      %v771 = vpack.c.bf16 %v755, %v755
      %v772 = vpack.c.bf16 %v756, %v756
      %v773 = vpack.c.bf16 %v757, %v757
      %v774 = vpack.c.bf16 %v758, %v758
      %v775 = vpack.c.bf16 %v759, %v759
      %v776 = vpack.c.bf16 %v760, %v760
      %v777 = vpack.c.bf16 %v761, %v761
      %v778 = vpack.c.bf16 %v762, %v762
      %v779 = vpack.c.bf16 %v763, %v763
      %v780 = vpack.c.bf16 %v764, %v764
      %v781 = vpack.c.bf16 %v765, %v765
      %v782 = vpack.c.bf16 %v766, %v766
      %v783 = vpack.c.bf16 %v767, %v767
      %v784 = vpack.c.bf16 %v768, %v768
      %v801 = vunpack.c.l.b16 %v705
      %v802 = vunpack.c.l.b16 %v706
      %v803 = vunpack.c.l.b16 %v707
      %v804 = vunpack.c.l.b16 %v708
      %v805 = vunpack.c.l.b16 %v709
      %v806 = vunpack.c.l.b16 %v710
      %v807 = vunpack.c.l.b16 %v711
      %v808 = vunpack.c.l.b16 %v712
      %v809 = vunpack.c.l.b16 %v713
      %v810 = vunpack.c.l.b16 %v714
      %v811 = vunpack.c.l.b16 %v715
      %v812 = vunpack.c.l.b16 %v716
      %v813 = vunpack.c.l.b16 %v717
      %v814 = vunpack.c.l.b16 %v718
      %v815 = vunpack.c.l.b16 %v719
      %v816 = vunpack.c.l.b16 %v720
      %v817 = vpack.c.b16 %v802, %v801
      %v818 = vpack.c.b16 %v804, %v803
      %v819 = vpack.c.b16 %v806, %v805
      %v820 = vpack.c.b16 %v808, %v807
      %v821 = vpack.c.b16 %v810, %v809
      %v822 = vpack.c.b16 %v812, %v811
      %v823 = vpack.c.b16 %v814, %v813
      %v824 = vpack.c.b16 %v816, %v815
      %v849 = vunpack.c.l.b16 %v737
      %v850 = vunpack.c.l.b16 %v738
      %v851 = vunpack.c.l.b16 %v739
      %v852 = vunpack.c.l.b16 %v740
      %v853 = vunpack.c.l.b16 %v741
      %v854 = vunpack.c.l.b16 %v742
      %v855 = vunpack.c.l.b16 %v743
      %v856 = vunpack.c.l.b16 %v744
      %v857 = vunpack.c.l.b16 %v745
      %v858 = vunpack.c.l.b16 %v746
      %v859 = vunpack.c.l.b16 %v747
      %v860 = vunpack.c.l.b16 %v748
      %v861 = vunpack.c.l.b16 %v749
      %v862 = vunpack.c.l.b16 %v750
      %v863 = vunpack.c.l.b16 %v751
      %v864 = vunpack.c.l.b16 %v752
      %v865 = vpack.c.b16 %v850, %v849
      %v866 = vpack.c.b16 %v852, %v851
      %v867 = vpack.c.b16 %v854, %v853
      %v868 = vpack.c.b16 %v856, %v855
      %v869 = vpack.c.b16 %v858, %v857
      %v870 = vpack.c.b16 %v860, %v859
      %v871 = vpack.c.b16 %v862, %v861
      %v872 = vpack.c.b16 %v864, %v863
      %v897 = vunpack.c.l.b16 %v769
      %v898 = vunpack.c.l.b16 %v770
      %v899 = vunpack.c.l.b16 %v771
      %v900 = vunpack.c.l.b16 %v772
      %v901 = vunpack.c.l.b16 %v773
      %v902 = vunpack.c.l.b16 %v774
      %v903 = vunpack.c.l.b16 %v775
      %v904 = vunpack.c.l.b16 %v776
      %v905 = vunpack.c.l.b16 %v777
      %v906 = vunpack.c.l.b16 %v778
      %v907 = vunpack.c.l.b16 %v779
      %v908 = vunpack.c.l.b16 %v780
      %v909 = vunpack.c.l.b16 %v781
      %v910 = vunpack.c.l.b16 %v782
      %v911 = vunpack.c.l.b16 %v783
      %v912 = vunpack.c.l.b16 %v784
      %v913 = vpack.c.b16 %v898, %v897
      %v914 = vpack.c.b16 %v900, %v899
      %v915 = vpack.c.b16 %v902, %v901
      %v916 = vpack.c.b16 %v904, %v903
      %v917 = vpack.c.b16 %v906, %v905
      %v918 = vpack.c.b16 %v908, %v907
      %v919 = vpack.c.b16 %v910, %v909
      %v920 = vpack.c.b16 %v912, %v911
      %s929 = scalar_lea.vmem %s1, 192
      %v930 = vld [vmem:[%s929] sm:$0xf]
      %v931 = vld [vmem:[%s929 + $0x4] sm:$0xf]
      %v932 = vld [vmem:[%s929 + $0x8] sm:$0xf]
      %v933 = vld [vmem:[%s929 + $0xc] sm:$0xf]
      %v934 = vld [vmem:[%s929 + $0x10] sm:$0xf]
      %v935 = vld [vmem:[%s929 + $0x14] sm:$0xf]
      %v936 = vld [vmem:[%s929 + $0x18] sm:$0xf]
      %v937 = vld [vmem:[%s929 + $0x1c] sm:$0xf]
      %v938 = vld [vmem:[%s929 + $0x20] sm:$0xf]
      %v939 = vld [vmem:[%s929 + $0x24] sm:$0xf]
      %v940 = vld [vmem:[%s929 + $0x28] sm:$0xf]
      %v941 = vld [vmem:[%s929 + $0x2c] sm:$0xf]
      %v942 = vld [vmem:[%s929 + $0x30] sm:$0xf]
      %v943 = vld [vmem:[%s929 + $0x34] sm:$0xf]
      %v944 = vld [vmem:[%s929 + $0x38] sm:$0xf]
      %v945 = vld [vmem:[%s929 + $0x3c] sm:$0xf]
      %v946 = vld [vmem:[%s929 + $0x40] sm:$0xf]
      %v947 = vld [vmem:[%s929 + $0x44] sm:$0xf]
      %v948 = vld [vmem:[%s929 + $0x48] sm:$0xf]
      %v949 = vld [vmem:[%s929 + $0x4c] sm:$0xf]
      %v950 = vld [vmem:[%s929 + $0x50] sm:$0xf]
      %v951 = vld [vmem:[%s929 + $0x54] sm:$0xf]
      %v952 = vld [vmem:[%s929 + $0x58] sm:$0xf]
      %v953 = vld [vmem:[%s929 + $0x5c] sm:$0xf]
      %v954 = vld [vmem:[%s929 + $0x60] sm:$0xf]
      %v955 = vld [vmem:[%s929 + $0x64] sm:$0xf]
      %v956 = vld [vmem:[%s929 + $0x68] sm:$0xf]
      %v957 = vld [vmem:[%s929 + $0x6c] sm:$0xf]
      %v958 = vld [vmem:[%s929 + $0x70] sm:$0xf]
      %v959 = vld [vmem:[%s929 + $0x74] sm:$0xf]
      %v960 = vld [vmem:[%s929 + $0x78] sm:$0xf]
      %v961 = vld [vmem:[%s929 + $0x7c] sm:$0xf]
      %v962 = vld [vmem:[%s929 + $0x80] sm:$0xf]
      %v963 = vld [vmem:[%s929 + $0x84] sm:$0xf]
      %v964 = vld [vmem:[%s929 + $0x88] sm:$0xf]
      %v965 = vld [vmem:[%s929 + $0x8c] sm:$0xf]
      %v966 = vld [vmem:[%s929 + $0x90] sm:$0xf]
      %v967 = vld [vmem:[%s929 + $0x94] sm:$0xf]
      %v968 = vld [vmem:[%s929 + $0x98] sm:$0xf]
      %v969 = vld [vmem:[%s929 + $0x9c] sm:$0xf]
      %v970 = vld [vmem:[%s929 + $0xa0] sm:$0xf]
      %v971 = vld [vmem:[%s929 + $0xa4] sm:$0xf]
      %v972 = vld [vmem:[%s929 + $0xa8] sm:$0xf]
      %v973 = vld [vmem:[%s929 + $0xac] sm:$0xf]
      %v974 = vld [vmem:[%s929 + $0xb0] sm:$0xf]
      %v975 = vld [vmem:[%s929 + $0xb4] sm:$0xf]
      %v976 = vld [vmem:[%s929 + $0xb8] sm:$0xf]
      %v977 = vld [vmem:[%s929 + $0xbc] sm:$0xf]
      %v1026 = vunpack.c.l.b16 %v930
      %v1027 = vunpack.c.l.b16 %v931
      %v1028 = vunpack.c.l.b16 %v932
      %v1029 = vunpack.c.l.b16 %v933
      %v1030 = vunpack.c.l.b16 %v934
      %v1031 = vunpack.c.l.b16 %v935
      %v1032 = vunpack.c.l.b16 %v936
      %v1033 = vunpack.c.l.b16 %v937
      %v1034 = vunpack.c.l.b16 %v938
      %v1035 = vunpack.c.l.b16 %v939
      %v1036 = vunpack.c.l.b16 %v940
      %v1037 = vunpack.c.l.b16 %v941
      %v1038 = vunpack.c.l.b16 %v942
      %v1039 = vunpack.c.l.b16 %v943
      %v1040 = vunpack.c.l.b16 %v944
      %v1041 = vunpack.c.l.b16 %v945
      %v1042 = vunpack.c.l.b16 %v946
      %v1043 = vunpack.c.l.b16 %v947
      %v1044 = vunpack.c.l.b16 %v948
      %v1045 = vunpack.c.l.b16 %v949
      %v1046 = vunpack.c.l.b16 %v950
      %v1047 = vunpack.c.l.b16 %v951
      %v1048 = vunpack.c.l.b16 %v952
      %v1049 = vunpack.c.l.b16 %v953
      %v1050 = vunpack.c.l.b16 %v954
      %v1051 = vunpack.c.l.b16 %v955
      %v1052 = vunpack.c.l.b16 %v956
      %v1053 = vunpack.c.l.b16 %v957
      %v1054 = vunpack.c.l.b16 %v958
      %v1055 = vunpack.c.l.b16 %v959
      %v1056 = vunpack.c.l.b16 %v960
      %v1057 = vunpack.c.l.b16 %v961
      %v1058 = vunpack.c.l.b16 %v962
      %v1059 = vunpack.c.l.b16 %v963
      %v1060 = vunpack.c.l.b16 %v964
      %v1061 = vunpack.c.l.b16 %v965
      %v1062 = vunpack.c.l.b16 %v966
      %v1063 = vunpack.c.l.b16 %v967
      %v1064 = vunpack.c.l.b16 %v968
      %v1065 = vunpack.c.l.b16 %v969
      %v1066 = vunpack.c.l.b16 %v970
      %v1067 = vunpack.c.l.b16 %v971
      %v1068 = vunpack.c.l.b16 %v972
      %v1069 = vunpack.c.l.b16 %v973
      %v1070 = vunpack.c.l.b16 %v974
      %v1071 = vunpack.c.l.b16 %v975
      %v1072 = vunpack.c.l.b16 %v976
      %v1073 = vunpack.c.l.b16 %v977
      %v1074 = vpack.c.b16 %v1027, %v1026
      %v1075 = vpack.c.b16 %v1029, %v1028
      %v1076 = vpack.c.b16 %v1031, %v1030
      %v1077 = vpack.c.b16 %v1033, %v1032
      %v1078 = vpack.c.b16 %v1035, %v1034
      %v1079 = vpack.c.b16 %v1037, %v1036
      %v1080 = vpack.c.b16 %v1039, %v1038
      %v1081 = vpack.c.b16 %v1041, %v1040
      %v1082 = vpack.c.b16 %v1043, %v1042
      %v1083 = vpack.c.b16 %v1045, %v1044
      %v1084 = vpack.c.b16 %v1047, %v1046
      %v1085 = vpack.c.b16 %v1049, %v1048
      %v1086 = vpack.c.b16 %v1051, %v1050
      %v1087 = vpack.c.b16 %v1053, %v1052
      %v1088 = vpack.c.b16 %v1055, %v1054
      %v1089 = vpack.c.b16 %v1057, %v1056
      %v1090 = vpack.c.b16 %v1059, %v1058
      %v1091 = vpack.c.b16 %v1061, %v1060
      %v1092 = vpack.c.b16 %v1063, %v1062
      %v1093 = vpack.c.b16 %v1065, %v1064
      %v1094 = vpack.c.b16 %v1067, %v1066
      %v1095 = vpack.c.b16 %v1069, %v1068
      %v1096 = vpack.c.b16 %v1071, %v1070
      %v1097 = vpack.c.b16 %v1073, %v1072
      %1122 = vmatpush.bf16.msra.mxu0 %v1081
      %1123 = vmatpush.bf16.msra.mxu0 %v1080
      %1124 = vmatpush.bf16.msra.mxu0 %v1079
      %1125 = vmatpush.bf16.msra.mxu0 %v1078
      %1126 = vmatpush.bf16.msra.mxu0 %v1077
      %1127 = vmatpush.bf16.msra.mxu0 %v1076
      %1128 = vmatpush.bf16.msra.mxu0 %v1075
      %1129 = vmatpush.bf16.msra.mxu0 %v1074
      %1130 = vmatmul.bf16.gmra.mxu0 %v817
      %v1131 = vpop.f32.mrf.mxu0
      %v1132 = vadd.f32 0.0, %v1131
      %v1133 = vpop.f32.mrf.mxu0
      %v1134 = vadd.f32 0.0, %v1133
      %1135 = vmatmul.bf16.gmra.mxu0 %v818
      %v1136 = vpop.f32.mrf.mxu0
      %v1137 = vadd.f32 0.0, %v1136
      %v1138 = vpop.f32.mrf.mxu0
      %v1139 = vadd.f32 0.0, %v1138
      %1140 = vmatmul.bf16.gmra.mxu0 %v819
      %v1141 = vpop.f32.mrf.mxu0
      %v1142 = vadd.f32 0.0, %v1141
      %v1143 = vpop.f32.mrf.mxu0
      %v1144 = vadd.f32 0.0, %v1143
      %1145 = vmatmul.bf16.gmra.mxu0 %v820
      %v1146 = vpop.f32.mrf.mxu0
      %v1147 = vadd.f32 0.0, %v1146
      %v1148 = vpop.f32.mrf.mxu0
      %v1149 = vadd.f32 0.0, %v1148
      %1150 = vmatmul.bf16.gmra.mxu0 %v821
      %v1151 = vpop.f32.mrf.mxu0
      %v1152 = vadd.f32 0.0, %v1151
      %v1153 = vpop.f32.mrf.mxu0
      %v1154 = vadd.f32 0.0, %v1153
      %1155 = vmatmul.bf16.gmra.mxu0 %v822
      %v1156 = vpop.f32.mrf.mxu0
      %v1157 = vadd.f32 0.0, %v1156
      %v1158 = vpop.f32.mrf.mxu0
      %v1159 = vadd.f32 0.0, %v1158
      %1160 = vmatmul.bf16.gmra.mxu0 %v823
      %v1161 = vpop.f32.mrf.mxu0
      %v1162 = vadd.f32 0.0, %v1161
      %v1163 = vpop.f32.mrf.mxu0
      %v1164 = vadd.f32 0.0, %v1163
      %1165 = vmatmul.bf16.gmra.mxu0 %v824
      %v1166 = vpop.f32.mrf.mxu0
      %v1167 = vadd.f32 0.0, %v1166
      %v1168 = vpop.f32.mrf.mxu0
      %v1169 = vadd.f32 0.0, %v1168
      %1170 = vdwg.mxu0
      %1171 = vmatpush.bf16.msra.mxu0 %v1089
      %1172 = vmatpush.bf16.msra.mxu0 %v1088
      %1173 = vmatpush.bf16.msra.mxu0 %v1087
      %1174 = vmatpush.bf16.msra.mxu0 %v1086
      %1175 = vmatpush.bf16.msra.mxu0 %v1085
      %1176 = vmatpush.bf16.msra.mxu0 %v1084
      %1177 = vmatpush.bf16.msra.mxu0 %v1083
      %1178 = vmatpush.bf16.msra.mxu0 %v1082
      %1179 = vmatmul.bf16.gmra.mxu0 %v865
      %v1180 = vpop.f32.mrf.mxu0
      %v1181 = vadd.f32 %v1132, %v1180
      %v1182 = vpop.f32.mrf.mxu0
      %v1183 = vadd.f32 %v1134, %v1182
      %1184 = vmatmul.bf16.gmra.mxu0 %v866
      %v1185 = vpop.f32.mrf.mxu0
      %v1186 = vadd.f32 %v1137, %v1185
      %v1187 = vpop.f32.mrf.mxu0
      %v1188 = vadd.f32 %v1139, %v1187
      %1189 = vmatmul.bf16.gmra.mxu0 %v867
      %v1190 = vpop.f32.mrf.mxu0
      %v1191 = vadd.f32 %v1142, %v1190
      %v1192 = vpop.f32.mrf.mxu0
      %v1193 = vadd.f32 %v1144, %v1192
      %1194 = vmatmul.bf16.gmra.mxu0 %v868
      %v1195 = vpop.f32.mrf.mxu0
      %v1196 = vadd.f32 %v1147, %v1195
      %v1197 = vpop.f32.mrf.mxu0
      %v1198 = vadd.f32 %v1149, %v1197
      %1199 = vmatmul.bf16.gmra.mxu0 %v869
      %v1200 = vpop.f32.mrf.mxu0
      %v1201 = vadd.f32 %v1152, %v1200
      %v1202 = vpop.f32.mrf.mxu0
      %v1203 = vadd.f32 %v1154, %v1202
      %1204 = vmatmul.bf16.gmra.mxu0 %v870
      %v1205 = vpop.f32.mrf.mxu0
      %v1206 = vadd.f32 %v1157, %v1205
      %v1207 = vpop.f32.mrf.mxu0
      %v1208 = vadd.f32 %v1159, %v1207
      %1209 = vmatmul.bf16.gmra.mxu0 %v871
      %v1210 = vpop.f32.mrf.mxu0
      %v1211 = vadd.f32 %v1162, %v1210
      %v1212 = vpop.f32.mrf.mxu0
      %v1213 = vadd.f32 %v1164, %v1212
      %1214 = vmatmul.bf16.gmra.mxu0 %v872
      %v1215 = vpop.f32.mrf.mxu0
      %v1216 = vadd.f32 %v1167, %v1215
      %v1217 = vpop.f32.mrf.mxu0
      %v1218 = vadd.f32 %v1169, %v1217
      %1219 = vdwg.mxu0
      %1220 = vmatpush.bf16.msra.mxu0 %v1097
      %1221 = vmatpush.bf16.msra.mxu0 %v1096
      %1222 = vmatpush.bf16.msra.mxu0 %v1095
      %1223 = vmatpush.bf16.msra.mxu0 %v1094
      %1224 = vmatpush.bf16.msra.mxu0 %v1093
      %1225 = vmatpush.bf16.msra.mxu0 %v1092
      %1226 = vmatpush.bf16.msra.mxu0 %v1091
      %1227 = vmatpush.bf16.msra.mxu0 %v1090
      %1228 = vmatmul.bf16.gmra.mxu0 %v913
      %v1229 = vpop.f32.mrf.mxu0
      %v1230 = vadd.f32 %v1181, %v1229
      %v1231 = vpop.f32.mrf.mxu0
      %v1232 = vadd.f32 %v1183, %v1231
      %1233 = vmatmul.bf16.gmra.mxu0 %v914
      %v1234 = vpop.f32.mrf.mxu0
      %v1235 = vadd.f32 %v1186, %v1234
      %v1236 = vpop.f32.mrf.mxu0
      %v1237 = vadd.f32 %v1188, %v1236
      %1238 = vmatmul.bf16.gmra.mxu0 %v915
      %v1239 = vpop.f32.mrf.mxu0
      %v1240 = vadd.f32 %v1191, %v1239
      %v1241 = vpop.f32.mrf.mxu0
      %v1242 = vadd.f32 %v1193, %v1241
      %1243 = vmatmul.bf16.gmra.mxu0 %v916
      %v1244 = vpop.f32.mrf.mxu0
      %v1245 = vadd.f32 %v1196, %v1244
      %v1246 = vpop.f32.mrf.mxu0
      %v1247 = vadd.f32 %v1198, %v1246
      %1248 = vmatmul.bf16.gmra.mxu0 %v917
      %v1249 = vpop.f32.mrf.mxu0
      %v1250 = vadd.f32 %v1201, %v1249
      %v1251 = vpop.f32.mrf.mxu0
      %v1252 = vadd.f32 %v1203, %v1251
      %1253 = vmatmul.bf16.gmra.mxu0 %v918
      %v1254 = vpop.f32.mrf.mxu0
      %v1255 = vadd.f32 %v1206, %v1254
      %v1256 = vpop.f32.mrf.mxu0
      %v1257 = vadd.f32 %v1208, %v1256
      %1258 = vmatmul.bf16.gmra.mxu0 %v919
      %v1259 = vpop.f32.mrf.mxu0
      %v1260 = vadd.f32 %v1211, %v1259
      %v1261 = vpop.f32.mrf.mxu0
      %v1262 = vadd.f32 %v1213, %v1261
      %1263 = vmatmul.bf16.gmra.mxu0 %v920
      %v1264 = vpop.f32.mrf.mxu0
      %v1265 = vadd.f32 %v1216, %v1264
      %v1266 = vpop.f32.mrf.mxu0
      %v1267 = vadd.f32 %v1218, %v1266
      %1268 = vdwg.mxu0
      %v1317 = vunpack.c.l.b16 %v640
      %v1318 = vunpack.c.l.b16 %v641
      %v1319 = vunpack.c.l.b16 %v642
      %v1320 = vunpack.c.l.b16 %v643
      %v1321 = vunpack.c.l.b16 %v644
      %v1322 = vunpack.c.l.b16 %v645
      %v1323 = vunpack.c.l.b16 %v646
      %v1324 = vunpack.c.l.b16 %v647
      %v1325 = vunpack.c.l.b16 %v648
      %v1326 = vunpack.c.l.b16 %v649
      %v1327 = vunpack.c.l.b16 %v650
      %v1328 = vunpack.c.l.b16 %v651
      %v1329 = vunpack.c.l.b16 %v652
      %v1330 = vunpack.c.l.b16 %v653
      %v1331 = vunpack.c.l.b16 %v654
      %v1332 = vunpack.c.l.b16 %v655
      %v1333 = vunpack.c.l.b16 %v656
      %v1334 = vunpack.c.l.b16 %v657
      %v1335 = vunpack.c.l.b16 %v658
      %v1336 = vunpack.c.l.b16 %v659
      %v1337 = vunpack.c.l.b16 %v660
      %v1338 = vunpack.c.l.b16 %v661
      %v1339 = vunpack.c.l.b16 %v662
      %v1340 = vunpack.c.l.b16 %v663
      %v1341 = vunpack.c.l.b16 %v664
      %v1342 = vunpack.c.l.b16 %v665
      %v1343 = vunpack.c.l.b16 %v666
      %v1344 = vunpack.c.l.b16 %v667
      %v1345 = vunpack.c.l.b16 %v668
      %v1346 = vunpack.c.l.b16 %v669
      %v1347 = vunpack.c.l.b16 %v670
      %v1348 = vunpack.c.l.b16 %v671
      %v1349 = vunpack.c.l.b16 %v672
      %v1350 = vunpack.c.l.b16 %v673
      %v1351 = vunpack.c.l.b16 %v674
      %v1352 = vunpack.c.l.b16 %v675
      %v1353 = vunpack.c.l.b16 %v676
      %v1354 = vunpack.c.l.b16 %v677
      %v1355 = vunpack.c.l.b16 %v678
      %v1356 = vunpack.c.l.b16 %v679
      %v1357 = vunpack.c.l.b16 %v680
      %v1358 = vunpack.c.l.b16 %v681
      %v1359 = vunpack.c.l.b16 %v682
      %v1360 = vunpack.c.l.b16 %v683
      %v1361 = vunpack.c.l.b16 %v684
      %v1362 = vunpack.c.l.b16 %v685
      %v1363 = vunpack.c.l.b16 %v686
      %v1364 = vunpack.c.l.b16 %v687
      %v1365 = vpack.c.b16 %v1318, %v1317
      %v1366 = vpack.c.b16 %v1320, %v1319
      %v1367 = vpack.c.b16 %v1322, %v1321
      %v1368 = vpack.c.b16 %v1324, %v1323
      %v1369 = vpack.c.b16 %v1326, %v1325
      %v1370 = vpack.c.b16 %v1328, %v1327
      %v1371 = vpack.c.b16 %v1330, %v1329
      %v1372 = vpack.c.b16 %v1332, %v1331
      %v1373 = vpack.c.b16 %v1334, %v1333
      %v1374 = vpack.c.b16 %v1336, %v1335
      %v1375 = vpack.c.b16 %v1338, %v1337
      %v1376 = vpack.c.b16 %v1340, %v1339
      %v1377 = vpack.c.b16 %v1342, %v1341
      %v1378 = vpack.c.b16 %v1344, %v1343
      %v1379 = vpack.c.b16 %v1346, %v1345
      %v1380 = vpack.c.b16 %v1348, %v1347
      %v1381 = vpack.c.b16 %v1350, %v1349
      %v1382 = vpack.c.b16 %v1352, %v1351
      %v1383 = vpack.c.b16 %v1354, %v1353
      %v1384 = vpack.c.b16 %v1356, %v1355
      %v1385 = vpack.c.b16 %v1358, %v1357
      %v1386 = vpack.c.b16 %v1360, %v1359
      %v1387 = vpack.c.b16 %v1362, %v1361
      %v1388 = vpack.c.b16 %v1364, %v1363
      %1413 = vmatpush.bf16.msra.mxu0 %v1372
      %1414 = vmatpush.bf16.msra.mxu0 %v1371
      %1415 = vmatpush.bf16.msra.mxu0 %v1370
      %1416 = vmatpush.bf16.msra.mxu0 %v1369
      %1417 = vmatpush.bf16.msra.mxu0 %v1368
      %1418 = vmatpush.bf16.msra.mxu0 %v1367
      %1419 = vmatpush.bf16.msra.mxu0 %v1366
      %1420 = vmatpush.bf16.msra.mxu0 %v1365
      %1421 = vmatmul.bf16.gmra.mxu0 %v528
      %v1422 = vpop.f32.mrf.mxu0
      %v1423 = vadd.f32 %v1230, %v1422
      %v1424 = vpop.f32.mrf.mxu0
      %v1425 = vadd.f32 %v1232, %v1424
      %1426 = vmatmul.bf16.gmra.mxu0 %v529
      %v1427 = vpop.f32.mrf.mxu0
      %v1428 = vadd.f32 %v1235, %v1427
      %v1429 = vpop.f32.mrf.mxu0
      %v1430 = vadd.f32 %v1237, %v1429
      %1431 = vmatmul.bf16.gmra.mxu0 %v530
      %v1432 = vpop.f32.mrf.mxu0
      %v1433 = vadd.f32 %v1240, %v1432
      %v1434 = vpop.f32.mrf.mxu0
      %v1435 = vadd.f32 %v1242, %v1434
      %1436 = vmatmul.bf16.gmra.mxu0 %v531
      %v1437 = vpop.f32.mrf.mxu0
      %v1438 = vadd.f32 %v1245, %v1437
      %v1439 = vpop.f32.mrf.mxu0
      %v1440 = vadd.f32 %v1247, %v1439
      %1441 = vmatmul.bf16.gmra.mxu0 %v532
      %v1442 = vpop.f32.mrf.mxu0
      %v1443 = vadd.f32 %v1250, %v1442
      %v1444 = vpop.f32.mrf.mxu0
      %v1445 = vadd.f32 %v1252, %v1444
      %1446 = vmatmul.bf16.gmra.mxu0 %v533
      %v1447 = vpop.f32.mrf.mxu0
      %v1448 = vadd.f32 %v1255, %v1447
      %v1449 = vpop.f32.mrf.mxu0
      %v1450 = vadd.f32 %v1257, %v1449
      %1451 = vmatmul.bf16.gmra.mxu0 %v534
      %v1452 = vpop.f32.mrf.mxu0
      %v1453 = vadd.f32 %v1260, %v1452
      %v1454 = vpop.f32.mrf.mxu0
      %v1455 = vadd.f32 %v1262, %v1454
      %1456 = vmatmul.bf16.gmra.mxu0 %v535
      %v1457 = vpop.f32.mrf.mxu0
      %v1458 = vadd.f32 %v1265, %v1457
      %v1459 = vpop.f32.mrf.mxu0
      %v1460 = vadd.f32 %v1267, %v1459
      %1461 = vdwg.mxu0
      %1462 = vmatpush.bf16.msra.mxu0 %v1380
      %1463 = vmatpush.bf16.msra.mxu0 %v1379
      %1464 = vmatpush.bf16.msra.mxu0 %v1378
      %1465 = vmatpush.bf16.msra.mxu0 %v1377
      %1466 = vmatpush.bf16.msra.mxu0 %v1376
      %1467 = vmatpush.bf16.msra.mxu0 %v1375
      %1468 = vmatpush.bf16.msra.mxu0 %v1374
      %1469 = vmatpush.bf16.msra.mxu0 %v1373
      %1470 = vmatmul.bf16.gmra.mxu0 %v576
      %v1471 = vpop.f32.mrf.mxu0
      %v1472 = vadd.f32 %v1423, %v1471
      %v1473 = vpop.f32.mrf.mxu0
      %v1474 = vadd.f32 %v1425, %v1473
      %1475 = vmatmul.bf16.gmra.mxu0 %v577
      %v1476 = vpop.f32.mrf.mxu0
      %v1477 = vadd.f32 %v1428, %v1476
      %v1478 = vpop.f32.mrf.mxu0
      %v1479 = vadd.f32 %v1430, %v1478
      %1480 = vmatmul.bf16.gmra.mxu0 %v578
      %v1481 = vpop.f32.mrf.mxu0
      %v1482 = vadd.f32 %v1433, %v1481
      %v1483 = vpop.f32.mrf.mxu0
      %v1484 = vadd.f32 %v1435, %v1483
      %1485 = vmatmul.bf16.gmra.mxu0 %v579
      %v1486 = vpop.f32.mrf.mxu0
      %v1487 = vadd.f32 %v1438, %v1486
      %v1488 = vpop.f32.mrf.mxu0
      %v1489 = vadd.f32 %v1440, %v1488
      %1490 = vmatmul.bf16.gmra.mxu0 %v580
      %v1491 = vpop.f32.mrf.mxu0
      %v1492 = vadd.f32 %v1443, %v1491
      %v1493 = vpop.f32.mrf.mxu0
      %v1494 = vadd.f32 %v1445, %v1493
      %1495 = vmatmul.bf16.gmra.mxu0 %v581
      %v1496 = vpop.f32.mrf.mxu0
      %v1497 = vadd.f32 %v1448, %v1496
      %v1498 = vpop.f32.mrf.mxu0
      %v1499 = vadd.f32 %v1450, %v1498
      %1500 = vmatmul.bf16.gmra.mxu0 %v582
      %v1501 = vpop.f32.mrf.mxu0
      %v1502 = vadd.f32 %v1453, %v1501
      %v1503 = vpop.f32.mrf.mxu0
      %v1504 = vadd.f32 %v1455, %v1503
      %1505 = vmatmul.bf16.gmra.mxu0 %v583
      %v1506 = vpop.f32.mrf.mxu0
      %v1507 = vadd.f32 %v1458, %v1506
      %v1508 = vpop.f32.mrf.mxu0
      %v1509 = vadd.f32 %v1460, %v1508
      %1510 = vdwg.mxu0
      %1511 = vmatpush.bf16.msra.mxu0 %v1388
      %1512 = vmatpush.bf16.msra.mxu0 %v1387
      %1513 = vmatpush.bf16.msra.mxu0 %v1386
      %1514 = vmatpush.bf16.msra.mxu0 %v1385
      %1515 = vmatpush.bf16.msra.mxu0 %v1384
      %1516 = vmatpush.bf16.msra.mxu0 %v1383
      %1517 = vmatpush.bf16.msra.mxu0 %v1382
      %1518 = vmatpush.bf16.msra.mxu0 %v1381
      %1519 = vmatmul.bf16.gmra.mxu0 %v624
      %v1520 = vpop.f32.mrf.mxu0
      %v1521 = vadd.f32 %v1472, %v1520
      %v1522 = vpop.f32.mrf.mxu0
      %v1523 = vadd.f32 %v1474, %v1522
      %1524 = vmatmul.bf16.gmra.mxu0 %v625
      %v1525 = vpop.f32.mrf.mxu0
      %v1526 = vadd.f32 %v1477, %v1525
      %v1527 = vpop.f32.mrf.mxu0
      %v1528 = vadd.f32 %v1479, %v1527
      %1529 = vmatmul.bf16.gmra.mxu0 %v626
      %v1530 = vpop.f32.mrf.mxu0
      %v1531 = vadd.f32 %v1482, %v1530
      %v1532 = vpop.f32.mrf.mxu0
      %v1533 = vadd.f32 %v1484, %v1532
      %1534 = vmatmul.bf16.gmra.mxu0 %v627
      %v1535 = vpop.f32.mrf.mxu0
      %v1536 = vadd.f32 %v1487, %v1535
      %v1537 = vpop.f32.mrf.mxu0
      %v1538 = vadd.f32 %v1489, %v1537
      %1539 = vmatmul.bf16.gmra.mxu0 %v628
      %v1540 = vpop.f32.mrf.mxu0
      %v1541 = vadd.f32 %v1492, %v1540
      %v1542 = vpop.f32.mrf.mxu0
      %v1543 = vadd.f32 %v1494, %v1542
      %1544 = vmatmul.bf16.gmra.mxu0 %v629
      %v1545 = vpop.f32.mrf.mxu0
      %v1546 = vadd.f32 %v1497, %v1545
      %v1547 = vpop.f32.mrf.mxu0
      %v1548 = vadd.f32 %v1499, %v1547
      %1549 = vmatmul.bf16.gmra.mxu0 %v630
      %v1550 = vpop.f32.mrf.mxu0
      %v1551 = vadd.f32 %v1502, %v1550
      %v1552 = vpop.f32.mrf.mxu0
      %v1553 = vadd.f32 %v1504, %v1552
      %1554 = vmatmul.bf16.gmra.mxu0 %v631
      %v1555 = vpop.f32.mrf.mxu0
      %v1556 = vadd.f32 %v1507, %v1555
      %v1557 = vpop.f32.mrf.mxu0
      %v1558 = vadd.f32 %v1509, %v1557
      %1559 = vdwg.mxu0
      %s1560 = scalar_lea.vmem %s273, 48
      %v1561 = vld [vmem:[%s1560] sm:$0xff]
      %v1562 = vld [vmem:[%s1560 + $0x8] sm:$0xff]
      %v1563 = vld [vmem:[%s1560 + $0x18] sm:$0xff]
      %v1564 = vld [vmem:[%s1560 + $0x20] sm:$0xff]
      %v1565 = vld [vmem:[%s1560 + $0x30] sm:$0xff]
      %v1566 = vld [vmem:[%s1560 + $0x38] sm:$0xff]
      %v1567 = vld [vmem:[%s1560 + $0x48] sm:$0xff]
      %v1568 = vld [vmem:[%s1560 + $0x50] sm:$0xff]
      %v1569 = vld [vmem:[%s1560 + $0x60] sm:$0xff]
      %v1570 = vld [vmem:[%s1560 + $0x68] sm:$0xff]
      %v1571 = vld [vmem:[%s1560 + $0x78] sm:$0xff]
      %v1572 = vld [vmem:[%s1560 + $0x80] sm:$0xff]
      %v1573 = vld [vmem:[%s1560 + $0x90] sm:$0xff]
      %v1574 = vld [vmem:[%s1560 + $0x98] sm:$0xff]
      %v1575 = vld [vmem:[%s1560 + $0xa8] sm:$0xff]
      %v1576 = vld [vmem:[%s1560 + $0xb0] sm:$0xff]
      %v1577 = vpack.c.bf16 %v1561, %v1561
      %v1578 = vpack.c.bf16 %v1562, %v1562
      %v1579 = vpack.c.bf16 %v1563, %v1563
      %v1580 = vpack.c.bf16 %v1564, %v1564
      %v1581 = vpack.c.bf16 %v1565, %v1565
      %v1582 = vpack.c.bf16 %v1566, %v1566
      %v1583 = vpack.c.bf16 %v1567, %v1567
      %v1584 = vpack.c.bf16 %v1568, %v1568
      %v1585 = vpack.c.bf16 %v1569, %v1569
      %v1586 = vpack.c.bf16 %v1570, %v1570
      %v1587 = vpack.c.bf16 %v1571, %v1571
      %v1588 = vpack.c.bf16 %v1572, %v1572
      %v1589 = vpack.c.bf16 %v1573, %v1573
      %v1590 = vpack.c.bf16 %v1574, %v1574
      %v1591 = vpack.c.bf16 %v1575, %v1575
      %v1592 = vpack.c.bf16 %v1576, %v1576
      %v1593 = vld [vmem:[%s1560 + $0x1] sm:$0xff]
      %v1594 = vld [vmem:[%s1560 + $0x9] sm:$0xff]
      %v1595 = vld [vmem:[%s1560 + $0x19] sm:$0xff]
      %v1596 = vld [vmem:[%s1560 + $0x21] sm:$0xff]
      %v1597 = vld [vmem:[%s1560 + $0x31] sm:$0xff]
      %v1598 = vld [vmem:[%s1560 + $0x39] sm:$0xff]
      %v1599 = vld [vmem:[%s1560 + $0x49] sm:$0xff]
      %v1600 = vld [vmem:[%s1560 + $0x51] sm:$0xff]
      %v1601 = vld [vmem:[%s1560 + $0x61] sm:$0xff]
      %v1602 = vld [vmem:[%s1560 + $0x69] sm:$0xff]
      %v1603 = vld [vmem:[%s1560 + $0x79] sm:$0xff]
      %v1604 = vld [vmem:[%s1560 + $0x81] sm:$0xff]
      %v1605 = vld [vmem:[%s1560 + $0x91] sm:$0xff]
      %v1606 = vld [vmem:[%s1560 + $0x99] sm:$0xff]
      %v1607 = vld [vmem:[%s1560 + $0xa9] sm:$0xff]
      %v1608 = vld [vmem:[%s1560 + $0xb1] sm:$0xff]
      %v1609 = vpack.c.bf16 %v1593, %v1593
      %v1610 = vpack.c.bf16 %v1594, %v1594
      %v1611 = vpack.c.bf16 %v1595, %v1595
      %v1612 = vpack.c.bf16 %v1596, %v1596
      %v1613 = vpack.c.bf16 %v1597, %v1597
      %v1614 = vpack.c.bf16 %v1598, %v1598
      %v1615 = vpack.c.bf16 %v1599, %v1599
      %v1616 = vpack.c.bf16 %v1600, %v1600
      %v1617 = vpack.c.bf16 %v1601, %v1601
      %v1618 = vpack.c.bf16 %v1602, %v1602
      %v1619 = vpack.c.bf16 %v1603, %v1603
      %v1620 = vpack.c.bf16 %v1604, %v1604
      %v1621 = vpack.c.bf16 %v1605, %v1605
      %v1622 = vpack.c.bf16 %v1606, %v1606
      %v1623 = vpack.c.bf16 %v1607, %v1607
      %v1624 = vpack.c.bf16 %v1608, %v1608
      %v1625 = vld [vmem:[%s1560 + $0x2] sm:$0xff]
      %v1626 = vld [vmem:[%s1560 + $0xa] sm:$0xff]
      %v1627 = vld [vmem:[%s1560 + $0x1a] sm:$0xff]
      %v1628 = vld [vmem:[%s1560 + $0x22] sm:$0xff]
      %v1629 = vld [vmem:[%s1560 + $0x32] sm:$0xff]
      %v1630 = vld [vmem:[%s1560 + $0x3a] sm:$0xff]
      %v1631 = vld [vmem:[%s1560 + $0x4a] sm:$0xff]
      %v1632 = vld [vmem:[%s1560 + $0x52] sm:$0xff]
      %v1633 = vld [vmem:[%s1560 + $0x62] sm:$0xff]
      %v1634 = vld [vmem:[%s1560 + $0x6a] sm:$0xff]
      %v1635 = vld [vmem:[%s1560 + $0x7a] sm:$0xff]
      %v1636 = vld [vmem:[%s1560 + $0x82] sm:$0xff]
      %v1637 = vld [vmem:[%s1560 + $0x92] sm:$0xff]
      %v1638 = vld [vmem:[%s1560 + $0x9a] sm:$0xff]
      %v1639 = vld [vmem:[%s1560 + $0xaa] sm:$0xff]
      %v1640 = vld [vmem:[%s1560 + $0xb2] sm:$0xff]
      %v1641 = vpack.c.bf16 %v1625, %v1625
      %v1642 = vpack.c.bf16 %v1626, %v1626
      %v1643 = vpack.c.bf16 %v1627, %v1627
      %v1644 = vpack.c.bf16 %v1628, %v1628
      %v1645 = vpack.c.bf16 %v1629, %v1629
      %v1646 = vpack.c.bf16 %v1630, %v1630
      %v1647 = vpack.c.bf16 %v1631, %v1631
      %v1648 = vpack.c.bf16 %v1632, %v1632
      %v1649 = vpack.c.bf16 %v1633, %v1633
      %v1650 = vpack.c.bf16 %v1634, %v1634
      %v1651 = vpack.c.bf16 %v1635, %v1635
      %v1652 = vpack.c.bf16 %v1636, %v1636
      %v1653 = vpack.c.bf16 %v1637, %v1637
      %v1654 = vpack.c.bf16 %v1638, %v1638
      %v1655 = vpack.c.bf16 %v1639, %v1639
      %v1656 = vpack.c.bf16 %v1640, %v1640
      %v1673 = vunpack.c.l.b16 %v1577
      %v1674 = vunpack.c.l.b16 %v1578
      %v1675 = vunpack.c.l.b16 %v1579
      %v1676 = vunpack.c.l.b16 %v1580
      %v1677 = vunpack.c.l.b16 %v1581
      %v1678 = vunpack.c.l.b16 %v1582
      %v1679 = vunpack.c.l.b16 %v1583
      %v1680 = vunpack.c.l.b16 %v1584
      %v1681 = vunpack.c.l.b16 %v1585
      %v1682 = vunpack.c.l.b16 %v1586
      %v1683 = vunpack.c.l.b16 %v1587
      %v1684 = vunpack.c.l.b16 %v1588
      %v1685 = vunpack.c.l.b16 %v1589
      %v1686 = vunpack.c.l.b16 %v1590
      %v1687 = vunpack.c.l.b16 %v1591
      %v1688 = vunpack.c.l.b16 %v1592
      %v1689 = vpack.c.b16 %v1674, %v1673
      %v1690 = vpack.c.b16 %v1676, %v1675
      %v1691 = vpack.c.b16 %v1678, %v1677
      %v1692 = vpack.c.b16 %v1680, %v1679
      %v1693 = vpack.c.b16 %v1682, %v1681
      %v1694 = vpack.c.b16 %v1684, %v1683
      %v1695 = vpack.c.b16 %v1686, %v1685
      %v1696 = vpack.c.b16 %v1688, %v1687
      %v1721 = vunpack.c.l.b16 %v1609
      %v1722 = vunpack.c.l.b16 %v1610
      %v1723 = vunpack.c.l.b16 %v1611
      %v1724 = vunpack.c.l.b16 %v1612
      %v1725 = vunpack.c.l.b16 %v1613
      %v1726 = vunpack.c.l.b16 %v1614
      %v1727 = vunpack.c.l.b16 %v1615
      %v1728 = vunpack.c.l.b16 %v1616
      %v1729 = vunpack.c.l.b16 %v1617
      %v1730 = vunpack.c.l.b16 %v1618
      %v1731 = vunpack.c.l.b16 %v1619
      %v1732 = vunpack.c.l.b16 %v1620
      %v1733 = vunpack.c.l.b16 %v1621
      %v1734 = vunpack.c.l.b16 %v1622
      %v1735 = vunpack.c.l.b16 %v1623
      %v1736 = vunpack.c.l.b16 %v1624
      %v1737 = vpack.c.b16 %v1722, %v1721
      %v1738 = vpack.c.b16 %v1724, %v1723
      %v1739 = vpack.c.b16 %v1726, %v1725
      %v1740 = vpack.c.b16 %v1728, %v1727
      %v1741 = vpack.c.b16 %v1730, %v1729
      %v1742 = vpack.c.b16 %v1732, %v1731
      %v1743 = vpack.c.b16 %v1734, %v1733
      %v1744 = vpack.c.b16 %v1736, %v1735
      %v1769 = vunpack.c.l.b16 %v1641
      %v1770 = vunpack.c.l.b16 %v1642
      %v1771 = vunpack.c.l.b16 %v1643
      %v1772 = vunpack.c.l.b16 %v1644
      %v1773 = vunpack.c.l.b16 %v1645
      %v1774 = vunpack.c.l.b16 %v1646
      %v1775 = vunpack.c.l.b16 %v1647
      %v1776 = vunpack.c.l.b16 %v1648
      %v1777 = vunpack.c.l.b16 %v1649
      %v1778 = vunpack.c.l.b16 %v1650
      %v1779 = vunpack.c.l.b16 %v1651
      %v1780 = vunpack.c.l.b16 %v1652
      %v1781 = vunpack.c.l.b16 %v1653
      %v1782 = vunpack.c.l.b16 %v1654
      %v1783 = vunpack.c.l.b16 %v1655
      %v1784 = vunpack.c.l.b16 %v1656
      %v1785 = vpack.c.b16 %v1770, %v1769
      %v1786 = vpack.c.b16 %v1772, %v1771
      %v1787 = vpack.c.b16 %v1774, %v1773
      %v1788 = vpack.c.b16 %v1776, %v1775
      %v1789 = vpack.c.b16 %v1778, %v1777
      %v1790 = vpack.c.b16 %v1780, %v1779
      %v1791 = vpack.c.b16 %v1782, %v1781
      %v1792 = vpack.c.b16 %v1784, %v1783
      %s1801 = scalar_lea.vmem %s1, 384
      %v1802 = vld [vmem:[%s1801] sm:$0xf]
      %v1803 = vld [vmem:[%s1801 + $0x4] sm:$0xf]
      %v1804 = vld [vmem:[%s1801 + $0x8] sm:$0xf]
      %v1805 = vld [vmem:[%s1801 + $0xc] sm:$0xf]
      %v1806 = vld [vmem:[%s1801 + $0x10] sm:$0xf]
      %v1807 = vld [vmem:[%s1801 + $0x14] sm:$0xf]
      %v1808 = vld [vmem:[%s1801 + $0x18] sm:$0xf]
      %v1809 = vld [vmem:[%s1801 + $0x1c] sm:$0xf]
      %v1810 = vld [vmem:[%s1801 + $0x20] sm:$0xf]
      %v1811 = vld [vmem:[%s1801 + $0x24] sm:$0xf]
      %v1812 = vld [vmem:[%s1801 + $0x28] sm:$0xf]
      %v1813 = vld [vmem:[%s1801 + $0x2c] sm:$0xf]
      %v1814 = vld [vmem:[%s1801 + $0x30] sm:$0xf]
      %v1815 = vld [vmem:[%s1801 + $0x34] sm:$0xf]
      %v1816 = vld [vmem:[%s1801 + $0x38] sm:$0xf]
      %v1817 = vld [vmem:[%s1801 + $0x3c] sm:$0xf]
      %v1818 = vld [vmem:[%s1801 + $0x40] sm:$0xf]
      %v1819 = vld [vmem:[%s1801 + $0x44] sm:$0xf]
      %v1820 = vld [vmem:[%s1801 + $0x48] sm:$0xf]
      %v1821 = vld [vmem:[%s1801 + $0x4c] sm:$0xf]
      %v1822 = vld [vmem:[%s1801 + $0x50] sm:$0xf]
      %v1823 = vld [vmem:[%s1801 + $0x54] sm:$0xf]
      %v1824 = vld [vmem:[%s1801 + $0x58] sm:$0xf]
      %v1825 = vld [vmem:[%s1801 + $0x5c] sm:$0xf]
      %v1826 = vld [vmem:[%s1801 + $0x60] sm:$0xf]
      %v1827 = vld [vmem:[%s1801 + $0x64] sm:$0xf]
      %v1828 = vld [vmem:[%s1801 + $0x68] sm:$0xf]
      %v1829 = vld [vmem:[%s1801 + $0x6c] sm:$0xf]
      %v1830 = vld [vmem:[%s1801 + $0x70] sm:$0xf]
      %v1831 = vld [vmem:[%s1801 + $0x74] sm:$0xf]
      %v1832 = vld [vmem:[%s1801 + $0x78] sm:$0xf]
      %v1833 = vld [vmem:[%s1801 + $0x7c] sm:$0xf]
      %v1834 = vld [vmem:[%s1801 + $0x80] sm:$0xf]
      %v1835 = vld [vmem:[%s1801 + $0x84] sm:$0xf]
      %v1836 = vld [vmem:[%s1801 + $0x88] sm:$0xf]
      %v1837 = vld [vmem:[%s1801 + $0x8c] sm:$0xf]
      %v1838 = vld [vmem:[%s1801 + $0x90] sm:$0xf]
      %v1839 = vld [vmem:[%s1801 + $0x94] sm:$0xf]
      %v1840 = vld [vmem:[%s1801 + $0x98] sm:$0xf]
      %v1841 = vld [vmem:[%s1801 + $0x9c] sm:$0xf]
      %v1842 = vld [vmem:[%s1801 + $0xa0] sm:$0xf]
      %v1843 = vld [vmem:[%s1801 + $0xa4] sm:$0xf]
      %v1844 = vld [vmem:[%s1801 + $0xa8] sm:$0xf]
      %v1845 = vld [vmem:[%s1801 + $0xac] sm:$0xf]
      %v1846 = vld [vmem:[%s1801 + $0xb0] sm:$0xf]
      %v1847 = vld [vmem:[%s1801 + $0xb4] sm:$0xf]
      %v1848 = vld [vmem:[%s1801 + $0xb8] sm:$0xf]
      %v1849 = vld [vmem:[%s1801 + $0xbc] sm:$0xf]
      %v1898 = vunpack.c.l.b16 %v1802
      %v1899 = vunpack.c.l.b16 %v1803
      %v1900 = vunpack.c.l.b16 %v1804
      %v1901 = vunpack.c.l.b16 %v1805
      %v1902 = vunpack.c.l.b16 %v1806
      %v1903 = vunpack.c.l.b16 %v1807
      %v1904 = vunpack.c.l.b16 %v1808
      %v1905 = vunpack.c.l.b16 %v1809
      %v1906 = vunpack.c.l.b16 %v1810
      %v1907 = vunpack.c.l.b16 %v1811
      %v1908 = vunpack.c.l.b16 %v1812
      %v1909 = vunpack.c.l.b16 %v1813
      %v1910 = vunpack.c.l.b16 %v1814
      %v1911 = vunpack.c.l.b16 %v1815
      %v1912 = vunpack.c.l.b16 %v1816
      %v1913 = vunpack.c.l.b16 %v1817
      %v1914 = vunpack.c.l.b16 %v1818
      %v1915 = vunpack.c.l.b16 %v1819
      %v1916 = vunpack.c.l.b16 %v1820
      %v1917 = vunpack.c.l.b16 %v1821
      %v1918 = vunpack.c.l.b16 %v1822
      %v1919 = vunpack.c.l.b16 %v1823
      %v1920 = vunpack.c.l.b16 %v1824
      %v1921 = vunpack.c.l.b16 %v1825
      %v1922 = vunpack.c.l.b16 %v1826
      %v1923 = vunpack.c.l.b16 %v1827
      %v1924 = vunpack.c.l.b16 %v1828
      %v1925 = vunpack.c.l.b16 %v1829
      %v1926 = vunpack.c.l.b16 %v1830
      %v1927 = vunpack.c.l.b16 %v1831
      %v1928 = vunpack.c.l.b16 %v1832
      %v1929 = vunpack.c.l.b16 %v1833
      %v1930 = vunpack.c.l.b16 %v1834
      %v1931 = vunpack.c.l.b16 %v1835
      %v1932 = vunpack.c.l.b16 %v1836
      %v1933 = vunpack.c.l.b16 %v1837
      %v1934 = vunpack.c.l.b16 %v1838
      %v1935 = vunpack.c.l.b16 %v1839
      %v1936 = vunpack.c.l.b16 %v1840
      %v1937 = vunpack.c.l.b16 %v1841
      %v1938 = vunpack.c.l.b16 %v1842
      %v1939 = vunpack.c.l.b16 %v1843
      %v1940 = vunpack.c.l.b16 %v1844
      %v1941 = vunpack.c.l.b16 %v1845
      %v1942 = vunpack.c.l.b16 %v1846
      %v1943 = vunpack.c.l.b16 %v1847
      %v1944 = vunpack.c.l.b16 %v1848
      %v1945 = vunpack.c.l.b16 %v1849
      %v1946 = vpack.c.b16 %v1899, %v1898
      %v1947 = vpack.c.b16 %v1901, %v1900
      %v1948 = vpack.c.b16 %v1903, %v1902
      %v1949 = vpack.c.b16 %v1905, %v1904
      %v1950 = vpack.c.b16 %v1907, %v1906
      %v1951 = vpack.c.b16 %v1909, %v1908
      %v1952 = vpack.c.b16 %v1911, %v1910
      %v1953 = vpack.c.b16 %v1913, %v1912
      %v1954 = vpack.c.b16 %v1915, %v1914
      %v1955 = vpack.c.b16 %v1917, %v1916
      %v1956 = vpack.c.b16 %v1919, %v1918
      %v1957 = vpack.c.b16 %v1921, %v1920
      %v1958 = vpack.c.b16 %v1923, %v1922
      %v1959 = vpack.c.b16 %v1925, %v1924
      %v1960 = vpack.c.b16 %v1927, %v1926
      %v1961 = vpack.c.b16 %v1929, %v1928
      %v1962 = vpack.c.b16 %v1931, %v1930
      %v1963 = vpack.c.b16 %v1933, %v1932
      %v1964 = vpack.c.b16 %v1935, %v1934
      %v1965 = vpack.c.b16 %v1937, %v1936
      %v1966 = vpack.c.b16 %v1939, %v1938
      %v1967 = vpack.c.b16 %v1941, %v1940
      %v1968 = vpack.c.b16 %v1943, %v1942
      %v1969 = vpack.c.b16 %v1945, %v1944
      %1994 = vmatpush.bf16.msra.mxu0 %v1953
      %1995 = vmatpush.bf16.msra.mxu0 %v1952
      %1996 = vmatpush.bf16.msra.mxu0 %v1951
      %1997 = vmatpush.bf16.msra.mxu0 %v1950
      %1998 = vmatpush.bf16.msra.mxu0 %v1949
      %1999 = vmatpush.bf16.msra.mxu0 %v1948
      %2000 = vmatpush.bf16.msra.mxu0 %v1947
      %2001 = vmatpush.bf16.msra.mxu0 %v1946
      %2002 = vmatmul.bf16.gmra.mxu0 %v1689
      %v2003 = vpop.f32.mrf.mxu0
      %v2004 = vadd.f32 0.0, %v2003
      %v2005 = vpop.f32.mrf.mxu0
      %v2006 = vadd.f32 0.0, %v2005
      %2007 = vmatmul.bf16.gmra.mxu0 %v1690
      %v2008 = vpop.f32.mrf.mxu0
      %v2009 = vadd.f32 0.0, %v2008
      %v2010 = vpop.f32.mrf.mxu0
      %v2011 = vadd.f32 0.0, %v2010
      %2012 = vmatmul.bf16.gmra.mxu0 %v1691
      %v2013 = vpop.f32.mrf.mxu0
      %v2014 = vadd.f32 0.0, %v2013
      %v2015 = vpop.f32.mrf.mxu0
      %v2016 = vadd.f32 0.0, %v2015
      %2017 = vmatmul.bf16.gmra.mxu0 %v1692
      %v2018 = vpop.f32.mrf.mxu0
      %v2019 = vadd.f32 0.0, %v2018
      %v2020 = vpop.f32.mrf.mxu0
      %v2021 = vadd.f32 0.0, %v2020
      %2022 = vmatmul.bf16.gmra.mxu0 %v1693
      %v2023 = vpop.f32.mrf.mxu0
      %v2024 = vadd.f32 0.0, %v2023
      %v2025 = vpop.f32.mrf.mxu0
      %v2026 = vadd.f32 0.0, %v2025
      %2027 = vmatmul.bf16.gmra.mxu0 %v1694
      %v2028 = vpop.f32.mrf.mxu0
      %v2029 = vadd.f32 0.0, %v2028
      %v2030 = vpop.f32.mrf.mxu0
      %v2031 = vadd.f32 0.0, %v2030
      %2032 = vmatmul.bf16.gmra.mxu0 %v1695
      %v2033 = vpop.f32.mrf.mxu0
      %v2034 = vadd.f32 0.0, %v2033
      %v2035 = vpop.f32.mrf.mxu0
      %v2036 = vadd.f32 0.0, %v2035
      %2037 = vmatmul.bf16.gmra.mxu0 %v1696
      %v2038 = vpop.f32.mrf.mxu0
      %v2039 = vadd.f32 0.0, %v2038
      %v2040 = vpop.f32.mrf.mxu0
      %v2041 = vadd.f32 0.0, %v2040
      %2042 = vdwg.mxu0
      %2043 = vmatpush.bf16.msra.mxu0 %v1961
      %2044 = vmatpush.bf16.msra.mxu0 %v1960
      %2045 = vmatpush.bf16.msra.mxu0 %v1959
      %2046 = vmatpush.bf16.msra.mxu0 %v1958
      %2047 = vmatpush.bf16.msra.mxu0 %v1957
      %2048 = vmatpush.bf16.msra.mxu0 %v1956
      %2049 = vmatpush.bf16.msra.mxu0 %v1955
      %2050 = vmatpush.bf16.msra.mxu0 %v1954
      %2051 = vmatmul.bf16.gmra.mxu0 %v1737
      %v2052 = vpop.f32.mrf.mxu0
      %v2053 = vadd.f32 %v2004, %v2052
      %v2054 = vpop.f32.mrf.mxu0
      %v2055 = vadd.f32 %v2006, %v2054
      %2056 = vmatmul.bf16.gmra.mxu0 %v1738
      %v2057 = vpop.f32.mrf.mxu0
      %v2058 = vadd.f32 %v2009, %v2057
      %v2059 = vpop.f32.mrf.mxu0
      %v2060 = vadd.f32 %v2011, %v2059
      %2061 = vmatmul.bf16.gmra.mxu0 %v1739
      %v2062 = vpop.f32.mrf.mxu0
      %v2063 = vadd.f32 %v2014, %v2062
      %v2064 = vpop.f32.mrf.mxu0
      %v2065 = vadd.f32 %v2016, %v2064
      %2066 = vmatmul.bf16.gmra.mxu0 %v1740
      %v2067 = vpop.f32.mrf.mxu0
      %v2068 = vadd.f32 %v2019, %v2067
      %v2069 = vpop.f32.mrf.mxu0
      %v2070 = vadd.f32 %v2021, %v2069
      %2071 = vmatmul.bf16.gmra.mxu0 %v1741
      %v2072 = vpop.f32.mrf.mxu0
      %v2073 = vadd.f32 %v2024, %v2072
      %v2074 = vpop.f32.mrf.mxu0
      %v2075 = vadd.f32 %v2026, %v2074
      %2076 = vmatmul.bf16.gmra.mxu0 %v1742
      %v2077 = vpop.f32.mrf.mxu0
      %v2078 = vadd.f32 %v2029, %v2077
      %v2079 = vpop.f32.mrf.mxu0
      %v2080 = vadd.f32 %v2031, %v2079
      %2081 = vmatmul.bf16.gmra.mxu0 %v1743
      %v2082 = vpop.f32.mrf.mxu0
      %v2083 = vadd.f32 %v2034, %v2082
      %v2084 = vpop.f32.mrf.mxu0
      %v2085 = vadd.f32 %v2036, %v2084
      %2086 = vmatmul.bf16.gmra.mxu0 %v1744
      %v2087 = vpop.f32.mrf.mxu0
      %v2088 = vadd.f32 %v2039, %v2087
      %v2089 = vpop.f32.mrf.mxu0
      %v2090 = vadd.f32 %v2041, %v2089
      %2091 = vdwg.mxu0
      %2092 = vmatpush.bf16.msra.mxu0 %v1969
      %2093 = vmatpush.bf16.msra.mxu0 %v1968
      %2094 = vmatpush.bf16.msra.mxu0 %v1967
      %2095 = vmatpush.bf16.msra.mxu0 %v1966
      %2096 = vmatpush.bf16.msra.mxu0 %v1965
      %2097 = vmatpush.bf16.msra.mxu0 %v1964
      %2098 = vmatpush.bf16.msra.mxu0 %v1963
      %2099 = vmatpush.bf16.msra.mxu0 %v1962
      %2100 = vmatmul.bf16.gmra.mxu0 %v1785
      %v2101 = vpop.f32.mrf.mxu0
      %v2102 = vadd.f32 %v2053, %v2101
      %v2103 = vpop.f32.mrf.mxu0
      %v2104 = vadd.f32 %v2055, %v2103
      %2105 = vmatmul.bf16.gmra.mxu0 %v1786
      %v2106 = vpop.f32.mrf.mxu0
      %v2107 = vadd.f32 %v2058, %v2106
      %v2108 = vpop.f32.mrf.mxu0
      %v2109 = vadd.f32 %v2060, %v2108
      %2110 = vmatmul.bf16.gmra.mxu0 %v1787
      %v2111 = vpop.f32.mrf.mxu0
      %v2112 = vadd.f32 %v2063, %v2111
      %v2113 = vpop.f32.mrf.mxu0
      %v2114 = vadd.f32 %v2065, %v2113
      %2115 = vmatmul.bf16.gmra.mxu0 %v1788
      %v2116 = vpop.f32.mrf.mxu0
      %v2117 = vadd.f32 %v2068, %v2116
      %v2118 = vpop.f32.mrf.mxu0
      %v2119 = vadd.f32 %v2070, %v2118
      %2120 = vmatmul.bf16.gmra.mxu0 %v1789
      %v2121 = vpop.f32.mrf.mxu0
      %v2122 = vadd.f32 %v2073, %v2121
      %v2123 = vpop.f32.mrf.mxu0
      %v2124 = vadd.f32 %v2075, %v2123
      %2125 = vmatmul.bf16.gmra.mxu0 %v1790
      %v2126 = vpop.f32.mrf.mxu0
      %v2127 = vadd.f32 %v2078, %v2126
      %v2128 = vpop.f32.mrf.mxu0
      %v2129 = vadd.f32 %v2080, %v2128
      %2130 = vmatmul.bf16.gmra.mxu0 %v1791
      %v2131 = vpop.f32.mrf.mxu0
      %v2132 = vadd.f32 %v2083, %v2131
      %v2133 = vpop.f32.mrf.mxu0
      %v2134 = vadd.f32 %v2085, %v2133
      %2135 = vmatmul.bf16.gmra.mxu0 %v1792
      %v2136 = vpop.f32.mrf.mxu0
      %v2137 = vadd.f32 %v2088, %v2136
      %v2138 = vpop.f32.mrf.mxu0
      %v2139 = vadd.f32 %v2090, %v2138
      %2140 = vdwg.mxu0
      %v2141 = vadd.f32 %v1521, %v2102
      %v2142 = vadd.f32 %v1523, %v2104
      %v2143 = vadd.f32 %v1526, %v2107
      %v2144 = vadd.f32 %v1528, %v2109
      %v2145 = vadd.f32 %v1531, %v2112
      %v2146 = vadd.f32 %v1533, %v2114
      %v2147 = vadd.f32 %v1536, %v2117
      %v2148 = vadd.f32 %v1538, %v2119
      %v2149 = vadd.f32 %v1541, %v2122
      %v2150 = vadd.f32 %v1543, %v2124
      %v2151 = vadd.f32 %v1546, %v2127
      %v2152 = vadd.f32 %v1548, %v2129
      %v2153 = vadd.f32 %v1551, %v2132
      %v2154 = vadd.f32 %v1553, %v2134
      %v2155 = vadd.f32 %v1556, %v2137
      %v2156 = vadd.f32 %v1558, %v2139
      %v2157 = vld [vmem:[%s2] sm:$0x1]
      %v2159 = vperm.slane %v2157, 0
      %v2161 = vmul.f32 %v2141, %v2159
      %v2162 = vmul.f32 %v2142, %v2159
      %v2163 = vmul.f32 %v2143, %v2159
      %v2164 = vmul.f32 %v2144, %v2159
      %v2165 = vmul.f32 %v2145, %v2159
      %v2166 = vmul.f32 %v2146, %v2159
      %v2167 = vmul.f32 %v2147, %v2159
      %v2168 = vmul.f32 %v2148, %v2159
      %v2169 = vmul.f32 %v2149, %v2159
      %v2170 = vmul.f32 %v2150, %v2159
      %v2171 = vmul.f32 %v2151, %v2159
      %v2172 = vmul.f32 %v2152, %v2159
      %v2173 = vmul.f32 %v2153, %v2159
      %v2174 = vmul.f32 %v2154, %v2159
      %v2175 = vmul.f32 %v2155, %v2159
      %v2176 = vmul.f32 %v2156, %v2159
      %v2177 = vld [vmem:[%s3] sm:$0x1]
      %v2179 = vperm.slane %v2177, 0
      %v2181 = vadd.f32 %v2161, %v2179
      %v2182 = vadd.f32 %v2162, %v2179
      %v2183 = vadd.f32 %v2163, %v2179
      %v2184 = vadd.f32 %v2164, %v2179
      %v2185 = vadd.f32 %v2165, %v2179
      %v2186 = vadd.f32 %v2166, %v2179
      %v2187 = vadd.f32 %v2167, %v2179
      %v2188 = vadd.f32 %v2168, %v2179
      %v2189 = vadd.f32 %v2169, %v2179
      %v2190 = vadd.f32 %v2170, %v2179
      %v2191 = vadd.f32 %v2171, %v2179
      %v2192 = vadd.f32 %v2172, %v2179
      %v2193 = vadd.f32 %v2173, %v2179
      %v2194 = vadd.f32 %v2174, %v2179
      %v2195 = vadd.f32 %v2175, %v2179
      %v2196 = vadd.f32 %v2176, %v2179
      %v2197 = vmax.f32 %v2181, 0.0
      %v2198 = vmax.f32 %v2182, 0.0
      %v2199 = vmax.f32 %v2183, 0.0
      %v2200 = vmax.f32 %v2184, 0.0
      %v2201 = vmax.f32 %v2185, 0.0
      %v2202 = vmax.f32 %v2186, 0.0
      %v2203 = vmax.f32 %v2187, 0.0
      %v2204 = vmax.f32 %v2188, 0.0
      %v2205 = vmax.f32 %v2189, 0.0
      %v2206 = vmax.f32 %v2190, 0.0
      %v2207 = vmax.f32 %v2191, 0.0
      %v2208 = vmax.f32 %v2192, 0.0
      %v2209 = vmax.f32 %v2193, 0.0
      %v2210 = vmax.f32 %v2194, 0.0
      %v2211 = vmax.f32 %v2195, 0.0
      %v2212 = vmax.f32 %v2196, 0.0
      %v2213 = vpack.c.bf16 %v2197, %v2197
      %v2214 = vpack.c.bf16 %v2198, %v2198
      %v2215 = vpack.c.bf16 %v2199, %v2199
      %v2216 = vpack.c.bf16 %v2200, %v2200
      %v2217 = vpack.c.bf16 %v2201, %v2201
      %v2218 = vpack.c.bf16 %v2202, %v2202
      %v2219 = vpack.c.bf16 %v2203, %v2203
      %v2220 = vpack.c.bf16 %v2204, %v2204
      %v2221 = vpack.c.bf16 %v2205, %v2205
      %v2222 = vpack.c.bf16 %v2206, %v2206
      %v2223 = vpack.c.bf16 %v2207, %v2207
      %v2224 = vpack.c.bf16 %v2208, %v2208
      %v2225 = vpack.c.bf16 %v2209, %v2209
      %v2226 = vpack.c.bf16 %v2210, %v2210
      %v2227 = vpack.c.bf16 %v2211, %v2211
      %v2228 = vpack.c.bf16 %v2212, %v2212
      %vm2229 = vsmask.f32 4368
      %vm2230 = vmor %vm288, %vm2229
      %v2232 = vshrl.u32 %v2213, 16
      %v2234 = vrot.slane %v2232, 7
      %v2235 = vshll.u32 %v2213, 16
      %v2237 = vor.u32 %v2234, %v2235
      %v2238 = vrot.slane %v2234, 4
      %v2240 = vshrl.u32 %v2214, 16
      %v2242 = vrot.slane %v2240, 7
      %v2243 = vshll.u32 %v2214, 16
      %v2245 = vor.u32 %v2242, %v2243
      %v2246 = vsel %vm2230, %v2238, %v2245
      %v2247 = vrot.slane %v2242, 4
      %v2249 = vshrl.u32 %v2215, 16
      %v2251 = vrot.slane %v2249, 7
      %v2252 = vshll.u32 %v2215, 16
      %v2254 = vor.u32 %v2251, %v2252
      %v2255 = vrot.slane %v2251, 4
      %v2257 = vshrl.u32 %v2216, 16
      %v2259 = vrot.slane %v2257, 7
      %v2260 = vshll.u32 %v2216, 16
      %v2262 = vor.u32 %v2259, %v2260
      %v2263 = vsel %vm2230, %v2255, %v2262
      %v2264 = vrot.slane %v2259, 4
      %v2266 = vshrl.u32 %v2217, 16
      %v2268 = vrot.slane %v2266, 7
      %v2269 = vshll.u32 %v2217, 16
      %v2271 = vor.u32 %v2268, %v2269
      %v2272 = vrot.slane %v2268, 4
      %v2274 = vshrl.u32 %v2218, 16
      %v2276 = vrot.slane %v2274, 7
      %v2277 = vshll.u32 %v2218, 16
      %v2279 = vor.u32 %v2276, %v2277
      %v2280 = vsel %vm2230, %v2272, %v2279
      %v2281 = vrot.slane %v2276, 4
      %v2283 = vshrl.u32 %v2219, 16
      %v2285 = vrot.slane %v2283, 7
      %v2286 = vshll.u32 %v2219, 16
      %v2288 = vor.u32 %v2285, %v2286
      %v2289 = vrot.slane %v2285, 4
      %v2291 = vshrl.u32 %v2220, 16
      %v2293 = vrot.slane %v2291, 7
      %v2294 = vshll.u32 %v2220, 16
      %v2296 = vor.u32 %v2293, %v2294
      %v2297 = vsel %vm2230, %v2289, %v2296
      %v2298 = vrot.slane %v2293, 4
      %v2300 = vshrl.u32 %v2221, 16
      %v2302 = vrot.slane %v2300, 7
      %v2303 = vshll.u32 %v2221, 16
      %v2305 = vor.u32 %v2302, %v2303
      %v2306 = vrot.slane %v2302, 4
      %v2308 = vshrl.u32 %v2222, 16
      %v2310 = vrot.slane %v2308, 7
      %v2311 = vshll.u32 %v2222, 16
      %v2313 = vor.u32 %v2310, %v2311
      %v2314 = vsel %vm2230, %v2306, %v2313
      %v2315 = vrot.slane %v2310, 4
      %v2317 = vshrl.u32 %v2223, 16
      %v2319 = vrot.slane %v2317, 7
      %v2320 = vshll.u32 %v2223, 16
      %v2322 = vor.u32 %v2319, %v2320
      %v2323 = vrot.slane %v2319, 4
      %v2325 = vshrl.u32 %v2224, 16
      %v2327 = vrot.slane %v2325, 7
      %v2328 = vshll.u32 %v2224, 16
      %v2330 = vor.u32 %v2327, %v2328
      %v2331 = vsel %vm2230, %v2323, %v2330
      %v2332 = vrot.slane %v2327, 4
      %v2334 = vshrl.u32 %v2225, 16
      %v2336 = vrot.slane %v2334, 7
      %v2337 = vshll.u32 %v2225, 16
      %v2339 = vor.u32 %v2336, %v2337
      %v2340 = vrot.slane %v2336, 4
      %v2342 = vshrl.u32 %v2226, 16
      %v2344 = vrot.slane %v2342, 7
      %v2345 = vshll.u32 %v2226, 16
      %v2347 = vor.u32 %v2344, %v2345
      %v2348 = vsel %vm2230, %v2340, %v2347
      %v2349 = vrot.slane %v2344, 4
      %v2351 = vshrl.u32 %v2227, 16
      %v2353 = vrot.slane %v2351, 7
      %v2354 = vshll.u32 %v2227, 16
      %v2356 = vor.u32 %v2353, %v2354
      %v2357 = vrot.slane %v2353, 4
      %v2359 = vshrl.u32 %v2228, 16
      %v2361 = vrot.slane %v2359, 7
      %v2362 = vshll.u32 %v2228, 16
      %v2364 = vor.u32 %v2361, %v2362
      %v2365 = vsel %vm2230, %v2357, %v2364
      %v2366 = vrot.slane %v2361, 4
      %s2391 = scalar_lea.vmem [#allocation2], 12
      %vm2392 = vcmask 1043456
      %vm2393 = vmand %vm2392, %vm344
      %v2394 = vld [vmem:[%s2391] sm:$0xf]
      %v2395 = vsel %vm2393, %v2237, %v2394
      %2396 = vst [vmem:[%s2391] sm:$0xf] %v2395
      %2397 = vst [vmem:[%s2391 + $0x4] sm:$0xf] %v2246
      %v2398 = vld [vmem:[%s2391 + $0x8] sm:$0x1]
      %v2399 = vsel %vm289, %v2247, %v2398
      %2400 = vst [vmem:[%s2391 + $0x8] sm:$0x1] %v2399
      %v2401 = vld [vmem:[%s2391 + $0xc] sm:$0xf]
      %v2402 = vsel %vm2393, %v2254, %v2401
      %2403 = vst [vmem:[%s2391 + $0xc] sm:$0xf] %v2402
      %2404 = vst [vmem:[%s2391 + $0x10] sm:$0xf] %v2263
      %v2405 = vld [vmem:[%s2391 + $0x14] sm:$0x1]
      %v2406 = vsel %vm289, %v2264, %v2405
      %2407 = vst [vmem:[%s2391 + $0x14] sm:$0x1] %v2406
      %v2408 = vld [vmem:[%s2391 + $0x18] sm:$0xf]
      %v2409 = vsel %vm2393, %v2271, %v2408
      %2410 = vst [vmem:[%s2391 + $0x18] sm:$0xf] %v2409
      %2411 = vst [vmem:[%s2391 + $0x1c] sm:$0xf] %v2280
      %v2412 = vld [vmem:[%s2391 + $0x20] sm:$0x1]
      %v2413 = vsel %vm289, %v2281, %v2412
      %2414 = vst [vmem:[%s2391 + $0x20] sm:$0x1] %v2413
      %v2415 = vld [vmem:[%s2391 + $0x24] sm:$0xf]
      %v2416 = vsel %vm2393, %v2288, %v2415
      %2417 = vst [vmem:[%s2391 + $0x24] sm:$0xf] %v2416
      %2418 = vst [vmem:[%s2391 + $0x28] sm:$0xf] %v2297
      %v2419 = vld [vmem:[%s2391 + $0x2c] sm:$0x1]
      %v2420 = vsel %vm289, %v2298, %v2419
      %2421 = vst [vmem:[%s2391 + $0x2c] sm:$0x1] %v2420
      %v2422 = vld [vmem:[%s2391 + $0x30] sm:$0xf]
      %v2423 = vsel %vm2393, %v2305, %v2422
      %2424 = vst [vmem:[%s2391 + $0x30] sm:$0xf] %v2423
      %2425 = vst [vmem:[%s2391 + $0x34] sm:$0xf] %v2314
      %v2426 = vld [vmem:[%s2391 + $0x38] sm:$0x1]
      %v2427 = vsel %vm289, %v2315, %v2426
      %2428 = vst [vmem:[%s2391 + $0x38] sm:$0x1] %v2427
      %v2429 = vld [vmem:[%s2391 + $0x3c] sm:$0xf]
      %v2430 = vsel %vm2393, %v2322, %v2429
      %2431 = vst [vmem:[%s2391 + $0x3c] sm:$0xf] %v2430
      %2432 = vst [vmem:[%s2391 + $0x40] sm:$0xf] %v2331
      %v2433 = vld [vmem:[%s2391 + $0x44] sm:$0x1]
      %v2434 = vsel %vm289, %v2332, %v2433
      %2435 = vst [vmem:[%s2391 + $0x44] sm:$0x1] %v2434
      %v2436 = vld [vmem:[%s2391 + $0x48] sm:$0xf]
      %v2437 = vsel %vm2393, %v2339, %v2436
      %2438 = vst [vmem:[%s2391 + $0x48] sm:$0xf] %v2437
      %2439 = vst [vmem:[%s2391 + $0x4c] sm:$0xf] %v2348
      %v2440 = vld [vmem:[%s2391 + $0x50] sm:$0x1]
      %v2441 = vsel %vm289, %v2349, %v2440
      %2442 = vst [vmem:[%s2391 + $0x50] sm:$0x1] %v2441
      %v2443 = vld [vmem:[%s2391 + $0x54] sm:$0xf]
      %v2444 = vsel %vm2393, %v2356, %v2443
      %2445 = vst [vmem:[%s2391 + $0x54] sm:$0xf] %v2444
      %2446 = vst [vmem:[%s2391 + $0x58] sm:$0xf] %v2365
      %v2447 = vld [vmem:[%s2391 + $0x5c] sm:$0x1]
      %v2448 = vsel %vm289, %v2366, %v2447
      %2449 = vst [vmem:[%s2391 + $0x5c] sm:$0x1] %v2448
      %s2450 = scalar_lea.vmem %s273, 192
      %v2451 = vld [vmem:[%s2450] sm:$0xff]
      %v2452 = vld [vmem:[%s2450 + $0x8] sm:$0xff]
      %v2453 = vld [vmem:[%s2450 + $0x18] sm:$0xff]
      %v2454 = vld [vmem:[%s2450 + $0x20] sm:$0xff]
      %v2455 = vld [vmem:[%s2450 + $0x30] sm:$0xff]
      %v2456 = vld [vmem:[%s2450 + $0x38] sm:$0xff]
      %v2457 = vld [vmem:[%s2450 + $0x48] sm:$0xff]
      %v2458 = vld [vmem:[%s2450 + $0x50] sm:$0xff]
      %v2459 = vld [vmem:[%s2450 + $0x60] sm:$0xff]
      %v2460 = vld [vmem:[%s2450 + $0x68] sm:$0xff]
      %v2461 = vld [vmem:[%s2450 + $0x78] sm:$0xff]
      %v2462 = vld [vmem:[%s2450 + $0x80] sm:$0xff]
      %v2463 = vld [vmem:[%s2450 + $0x90] sm:$0xff]
      %v2464 = vld [vmem:[%s2450 + $0x98] sm:$0xff]
      %v2465 = vld [vmem:[%s2450 + $0xa8] sm:$0xff]
      %v2466 = vld [vmem:[%s2450 + $0xb0] sm:$0xff]
      %v2467 = vpack.c.bf16 %v2451, %v2451
      %v2468 = vpack.c.bf16 %v2452, %v2452
      %v2469 = vpack.c.bf16 %v2453, %v2453
      %v2470 = vpack.c.bf16 %v2454, %v2454
      %v2471 = vpack.c.bf16 %v2455, %v2455
      %v2472 = vpack.c.bf16 %v2456, %v2456
      %v2473 = vpack.c.bf16 %v2457, %v2457
      %v2474 = vpack.c.bf16 %v2458, %v2458
      %v2475 = vpack.c.bf16 %v2459, %v2459
      %v2476 = vpack.c.bf16 %v2460, %v2460
      %v2477 = vpack.c.bf16 %v2461, %v2461
      %v2478 = vpack.c.bf16 %v2462, %v2462
      %v2479 = vpack.c.bf16 %v2463, %v2463
      %v2480 = vpack.c.bf16 %v2464, %v2464
      %v2481 = vpack.c.bf16 %v2465, %v2465
      %v2482 = vpack.c.bf16 %v2466, %v2466
      %v2483 = vld [vmem:[%s2450 + $0x1] sm:$0xff]
      %v2484 = vld [vmem:[%s2450 + $0x9] sm:$0xff]
      %v2485 = vld [vmem:[%s2450 + $0x19] sm:$0xff]
      %v2486 = vld [vmem:[%s2450 + $0x21] sm:$0xff]
      %v2487 = vld [vmem:[%s2450 + $0x31] sm:$0xff]
      %v2488 = vld [vmem:[%s2450 + $0x39] sm:$0xff]
      %v2489 = vld [vmem:[%s2450 + $0x49] sm:$0xff]
      %v2490 = vld [vmem:[%s2450 + $0x51] sm:$0xff]
      %v2491 = vld [vmem:[%s2450 + $0x61] sm:$0xff]
      %v2492 = vld [vmem:[%s2450 + $0x69] sm:$0xff]
      %v2493 = vld [vmem:[%s2450 + $0x79] sm:$0xff]
      %v2494 = vld [vmem:[%s2450 + $0x81] sm:$0xff]
      %v2495 = vld [vmem:[%s2450 + $0x91] sm:$0xff]
      %v2496 = vld [vmem:[%s2450 + $0x99] sm:$0xff]
      %v2497 = vld [vmem:[%s2450 + $0xa9] sm:$0xff]
      %v2498 = vld [vmem:[%s2450 + $0xb1] sm:$0xff]
      %v2499 = vpack.c.bf16 %v2483, %v2483
      %v2500 = vpack.c.bf16 %v2484, %v2484
      %v2501 = vpack.c.bf16 %v2485, %v2485
      %v2502 = vpack.c.bf16 %v2486, %v2486
      %v2503 = vpack.c.bf16 %v2487, %v2487
      %v2504 = vpack.c.bf16 %v2488, %v2488
      %v2505 = vpack.c.bf16 %v2489, %v2489
      %v2506 = vpack.c.bf16 %v2490, %v2490
      %v2507 = vpack.c.bf16 %v2491, %v2491
      %v2508 = vpack.c.bf16 %v2492, %v2492
      %v2509 = vpack.c.bf16 %v2493, %v2493
      %v2510 = vpack.c.bf16 %v2494, %v2494
      %v2511 = vpack.c.bf16 %v2495, %v2495
      %v2512 = vpack.c.bf16 %v2496, %v2496
      %v2513 = vpack.c.bf16 %v2497, %v2497
      %v2514 = vpack.c.bf16 %v2498, %v2498
      %v2515 = vld [vmem:[%s2450 + $0x2] sm:$0xff]
      %v2516 = vld [vmem:[%s2450 + $0xa] sm:$0xff]
      %v2517 = vld [vmem:[%s2450 + $0x1a] sm:$0xff]
      %v2518 = vld [vmem:[%s2450 + $0x22] sm:$0xff]
      %v2519 = vld [vmem:[%s2450 + $0x32] sm:$0xff]
      %v2520 = vld [vmem:[%s2450 + $0x3a] sm:$0xff]
      %v2521 = vld [vmem:[%s2450 + $0x4a] sm:$0xff]
      %v2522 = vld [vmem:[%s2450 + $0x52] sm:$0xff]
      %v2523 = vld [vmem:[%s2450 + $0x62] sm:$0xff]
      %v2524 = vld [vmem:[%s2450 + $0x6a] sm:$0xff]
      %v2525 = vld [vmem:[%s2450 + $0x7a] sm:$0xff]
      %v2526 = vld [vmem:[%s2450 + $0x82] sm:$0xff]
      %v2527 = vld [vmem:[%s2450 + $0x92] sm:$0xff]
      %v2528 = vld [vmem:[%s2450 + $0x9a] sm:$0xff]
      %v2529 = vld [vmem:[%s2450 + $0xaa] sm:$0xff]
      %v2530 = vld [vmem:[%s2450 + $0xb2] sm:$0xff]
      %v2531 = vpack.c.bf16 %v2515, %v2515
      %v2532 = vpack.c.bf16 %v2516, %v2516
      %v2533 = vpack.c.bf16 %v2517, %v2517
      %v2534 = vpack.c.bf16 %v2518, %v2518
      %v2535 = vpack.c.bf16 %v2519, %v2519
      %v2536 = vpack.c.bf16 %v2520, %v2520
      %v2537 = vpack.c.bf16 %v2521, %v2521
      %v2538 = vpack.c.bf16 %v2522, %v2522
      %v2539 = vpack.c.bf16 %v2523, %v2523
      %v2540 = vpack.c.bf16 %v2524, %v2524
      %v2541 = vpack.c.bf16 %v2525, %v2525
      %v2542 = vpack.c.bf16 %v2526, %v2526
      %v2543 = vpack.c.bf16 %v2527, %v2527
      %v2544 = vpack.c.bf16 %v2528, %v2528
      %v2545 = vpack.c.bf16 %v2529, %v2529
      %v2546 = vpack.c.bf16 %v2530, %v2530
      %v2563 = vunpack.c.l.b16 %v2467
      %v2564 = vunpack.c.l.b16 %v2468
      %v2565 = vunpack.c.l.b16 %v2469
      %v2566 = vunpack.c.l.b16 %v2470
      %v2567 = vunpack.c.l.b16 %v2471
      %v2568 = vunpack.c.l.b16 %v2472
      %v2569 = vunpack.c.l.b16 %v2473
      %v2570 = vunpack.c.l.b16 %v2474
      %v2571 = vunpack.c.l.b16 %v2475
      %v2572 = vunpack.c.l.b16 %v2476
      %v2573 = vunpack.c.l.b16 %v2477
      %v2574 = vunpack.c.l.b16 %v2478
      %v2575 = vunpack.c.l.b16 %v2479
      %v2576 = vunpack.c.l.b16 %v2480
      %v2577 = vunpack.c.l.b16 %v2481
      %v2578 = vunpack.c.l.b16 %v2482
      %v2579 = vpack.c.b16 %v2564, %v2563
      %v2580 = vpack.c.b16 %v2566, %v2565
      %v2581 = vpack.c.b16 %v2568, %v2567
      %v2582 = vpack.c.b16 %v2570, %v2569
      %v2583 = vpack.c.b16 %v2572, %v2571
      %v2584 = vpack.c.b16 %v2574, %v2573
      %v2585 = vpack.c.b16 %v2576, %v2575
      %v2586 = vpack.c.b16 %v2578, %v2577
      %v2611 = vunpack.c.l.b16 %v2499
      %v2612 = vunpack.c.l.b16 %v2500
      %v2613 = vunpack.c.l.b16 %v2501
      %v2614 = vunpack.c.l.b16 %v2502
      %v2615 = vunpack.c.l.b16 %v2503
      %v2616 = vunpack.c.l.b16 %v2504
      %v2617 = vunpack.c.l.b16 %v2505
      %v2618 = vunpack.c.l.b16 %v2506
      %v2619 = vunpack.c.l.b16 %v2507
      %v2620 = vunpack.c.l.b16 %v2508
      %v2621 = vunpack.c.l.b16 %v2509
      %v2622 = vunpack.c.l.b16 %v2510
      %v2623 = vunpack.c.l.b16 %v2511
      %v2624 = vunpack.c.l.b16 %v2512
      %v2625 = vunpack.c.l.b16 %v2513
      %v2626 = vunpack.c.l.b16 %v2514
      %v2627 = vpack.c.b16 %v2612, %v2611
      %v2628 = vpack.c.b16 %v2614, %v2613
      %v2629 = vpack.c.b16 %v2616, %v2615
      %v2630 = vpack.c.b16 %v2618, %v2617
      %v2631 = vpack.c.b16 %v2620, %v2619
      %v2632 = vpack.c.b16 %v2622, %v2621
      %v2633 = vpack.c.b16 %v2624, %v2623
      %v2634 = vpack.c.b16 %v2626, %v2625
      %v2659 = vunpack.c.l.b16 %v2531
      %v2660 = vunpack.c.l.b16 %v2532
      %v2661 = vunpack.c.l.b16 %v2533
      %v2662 = vunpack.c.l.b16 %v2534
      %v2663 = vunpack.c.l.b16 %v2535
      %v2664 = vunpack.c.l.b16 %v2536
      %v2665 = vunpack.c.l.b16 %v2537
      %v2666 = vunpack.c.l.b16 %v2538
      %v2667 = vunpack.c.l.b16 %v2539
      %v2668 = vunpack.c.l.b16 %v2540
      %v2669 = vunpack.c.l.b16 %v2541
      %v2670 = vunpack.c.l.b16 %v2542
      %v2671 = vunpack.c.l.b16 %v2543
      %v2672 = vunpack.c.l.b16 %v2544
      %v2673 = vunpack.c.l.b16 %v2545
      %v2674 = vunpack.c.l.b16 %v2546
      %v2675 = vpack.c.b16 %v2660, %v2659
      %v2676 = vpack.c.b16 %v2662, %v2661
      %v2677 = vpack.c.b16 %v2664, %v2663
      %v2678 = vpack.c.b16 %v2666, %v2665
      %v2679 = vpack.c.b16 %v2668, %v2667
      %v2680 = vpack.c.b16 %v2670, %v2669
      %v2681 = vpack.c.b16 %v2672, %v2671
      %v2682 = vpack.c.b16 %v2674, %v2673
      %v2691 = vld [vmem:[%s1] sm:$0xf]
      %v2692 = vld [vmem:[%s1 + $0x4] sm:$0xf]
      %v2693 = vld [vmem:[%s1 + $0x8] sm:$0xf]
      %v2694 = vld [vmem:[%s1 + $0xc] sm:$0xf]
      %v2695 = vld [vmem:[%s1 + $0x10] sm:$0xf]
      %v2696 = vld [vmem:[%s1 + $0x14] sm:$0xf]
      %v2697 = vld [vmem:[%s1 + $0x18] sm:$0xf]
      %v2698 = vld [vmem:[%s1 + $0x1c] sm:$0xf]
      %v2699 = vld [vmem:[%s1 + $0x20] sm:$0xf]
      %v2700 = vld [vmem:[%s1 + $0x24] sm:$0xf]
      %v2701 = vld [vmem:[%s1 + $0x28] sm:$0xf]
      %v2702 = vld [vmem:[%s1 + $0x2c] sm:$0xf]
      %v2703 = vld [vmem:[%s1 + $0x30] sm:$0xf]
      %v2704 = vld [vmem:[%s1 + $0x34] sm:$0xf]
      %v2705 = vld [vmem:[%s1 + $0x38] sm:$0xf]
      %v2706 = vld [vmem:[%s1 + $0x3c] sm:$0xf]
      %v2707 = vld [vmem:[%s1 + $0x40] sm:$0xf]
      %v2708 = vld [vmem:[%s1 + $0x44] sm:$0xf]
      %v2709 = vld [vmem:[%s1 + $0x48] sm:$0xf]
      %v2710 = vld [vmem:[%s1 + $0x4c] sm:$0xf]
      %v2711 = vld [vmem:[%s1 + $0x50] sm:$0xf]
      %v2712 = vld [vmem:[%s1 + $0x54] sm:$0xf]
      %v2713 = vld [vmem:[%s1 + $0x58] sm:$0xf]
      %v2714 = vld [vmem:[%s1 + $0x5c] sm:$0xf]
      %v2715 = vld [vmem:[%s1 + $0x60] sm:$0xf]
      %v2716 = vld [vmem:[%s1 + $0x64] sm:$0xf]
      %v2717 = vld [vmem:[%s1 + $0x68] sm:$0xf]
      %v2718 = vld [vmem:[%s1 + $0x6c] sm:$0xf]
      %v2719 = vld [vmem:[%s1 + $0x70] sm:$0xf]
      %v2720 = vld [vmem:[%s1 + $0x74] sm:$0xf]
      %v2721 = vld [vmem:[%s1 + $0x78] sm:$0xf]
      %v2722 = vld [vmem:[%s1 + $0x7c] sm:$0xf]
      %v2723 = vld [vmem:[%s1 + $0x80] sm:$0xf]
      %v2724 = vld [vmem:[%s1 + $0x84] sm:$0xf]
      %v2725 = vld [vmem:[%s1 + $0x88] sm:$0xf]
      %v2726 = vld [vmem:[%s1 + $0x8c] sm:$0xf]
      %v2727 = vld [vmem:[%s1 + $0x90] sm:$0xf]
      %v2728 = vld [vmem:[%s1 + $0x94] sm:$0xf]
      %v2729 = vld [vmem:[%s1 + $0x98] sm:$0xf]
      %v2730 = vld [vmem:[%s1 + $0x9c] sm:$0xf]
      %v2731 = vld [vmem:[%s1 + $0xa0] sm:$0xf]
      %v2732 = vld [vmem:[%s1 + $0xa4] sm:$0xf]
      %v2733 = vld [vmem:[%s1 + $0xa8] sm:$0xf]
      %v2734 = vld [vmem:[%s1 + $0xac] sm:$0xf]
      %v2735 = vld [vmem:[%s1 + $0xb0] sm:$0xf]
      %v2736 = vld [vmem:[%s1 + $0xb4] sm:$0xf]
      %v2737 = vld [vmem:[%s1 + $0xb8] sm:$0xf]
      %v2738 = vld [vmem:[%s1 + $0xbc] sm:$0xf]
      %s2739 = scalar_lea.vmem %s273, 216
      %v2740 = vld [vmem:[%s2739] sm:$0xff]
      %v2741 = vld [vmem:[%s2739 + $0x8] sm:$0xff]
      %v2742 = vld [vmem:[%s2739 + $0x18] sm:$0xff]
      %v2743 = vld [vmem:[%s2739 + $0x20] sm:$0xff]
      %v2744 = vld [vmem:[%s2739 + $0x30] sm:$0xff]
      %v2745 = vld [vmem:[%s2739 + $0x38] sm:$0xff]
      %v2746 = vld [vmem:[%s2739 + $0x48] sm:$0xff]
      %v2747 = vld [vmem:[%s2739 + $0x50] sm:$0xff]
      %v2748 = vld [vmem:[%s2739 + $0x60] sm:$0xff]
      %v2749 = vld [vmem:[%s2739 + $0x68] sm:$0xff]
      %v2750 = vld [vmem:[%s2739 + $0x78] sm:$0xff]
      %v2751 = vld [vmem:[%s2739 + $0x80] sm:$0xff]
      %v2752 = vld [vmem:[%s2739 + $0x90] sm:$0xff]
      %v2753 = vld [vmem:[%s2739 + $0x98] sm:$0xff]
      %v2754 = vld [vmem:[%s2739 + $0xa8] sm:$0xff]
      %v2755 = vld [vmem:[%s2739 + $0xb0] sm:$0xff]
      %v2756 = vpack.c.bf16 %v2740, %v2740
      %v2757 = vpack.c.bf16 %v2741, %v2741
      %v2758 = vpack.c.bf16 %v2742, %v2742
      %v2759 = vpack.c.bf16 %v2743, %v2743
      %v2760 = vpack.c.bf16 %v2744, %v2744
      %v2761 = vpack.c.bf16 %v2745, %v2745
      %v2762 = vpack.c.bf16 %v2746, %v2746
      %v2763 = vpack.c.bf16 %v2747, %v2747
      %v2764 = vpack.c.bf16 %v2748, %v2748
      %v2765 = vpack.c.bf16 %v2749, %v2749
      %v2766 = vpack.c.bf16 %v2750, %v2750
      %v2767 = vpack.c.bf16 %v2751, %v2751
      %v2768 = vpack.c.bf16 %v2752, %v2752
      %v2769 = vpack.c.bf16 %v2753, %v2753
      %v2770 = vpack.c.bf16 %v2754, %v2754
      %v2771 = vpack.c.bf16 %v2755, %v2755
      %v2772 = vld [vmem:[%s2739 + $0x1] sm:$0xff]
      %v2773 = vld [vmem:[%s2739 + $0x9] sm:$0xff]
      %v2774 = vld [vmem:[%s2739 + $0x19] sm:$0xff]
      %v2775 = vld [vmem:[%s2739 + $0x21] sm:$0xff]
      %v2776 = vld [vmem:[%s2739 + $0x31] sm:$0xff]
      %v2777 = vld [vmem:[%s2739 + $0x39] sm:$0xff]
      %v2778 = vld [vmem:[%s2739 + $0x49] sm:$0xff]
      %v2779 = vld [vmem:[%s2739 + $0x51] sm:$0xff]
      %v2780 = vld [vmem:[%s2739 + $0x61] sm:$0xff]
      %v2781 = vld [vmem:[%s2739 + $0x69] sm:$0xff]
      %v2782 = vld [vmem:[%s2739 + $0x79] sm:$0xff]
      %v2783 = vld [vmem:[%s2739 + $0x81] sm:$0xff]
      %v2784 = vld [vmem:[%s2739 + $0x91] sm:$0xff]
      %v2785 = vld [vmem:[%s2739 + $0x99] sm:$0xff]
      %v2786 = vld [vmem:[%s2739 + $0xa9] sm:$0xff]
      %v2787 = vld [vmem:[%s2739 + $0xb1] sm:$0xff]
      %v2788 = vpack.c.bf16 %v2772, %v2772
      %v2789 = vpack.c.bf16 %v2773, %v2773
      %v2790 = vpack.c.bf16 %v2774, %v2774
      %v2791 = vpack.c.bf16 %v2775, %v2775
      %v2792 = vpack.c.bf16 %v2776, %v2776
      %v2793 = vpack.c.bf16 %v2777, %v2777
      %v2794 = vpack.c.bf16 %v2778, %v2778
      %v2795 = vpack.c.bf16 %v2779, %v2779
      %v2796 = vpack.c.bf16 %v2780, %v2780
      %v2797 = vpack.c.bf16 %v2781, %v2781
      %v2798 = vpack.c.bf16 %v2782, %v2782
      %v2799 = vpack.c.bf16 %v2783, %v2783
      %v2800 = vpack.c.bf16 %v2784, %v2784
      %v2801 = vpack.c.bf16 %v2785, %v2785
      %v2802 = vpack.c.bf16 %v2786, %v2786
      %v2803 = vpack.c.bf16 %v2787, %v2787
      %v2804 = vld [vmem:[%s2739 + $0x2] sm:$0xff]
      %v2805 = vld [vmem:[%s2739 + $0xa] sm:$0xff]
      %v2806 = vld [vmem:[%s2739 + $0x1a] sm:$0xff]
      %v2807 = vld [vmem:[%s2739 + $0x22] sm:$0xff]
      %v2808 = vld [vmem:[%s2739 + $0x32] sm:$0xff]
      %v2809 = vld [vmem:[%s2739 + $0x3a] sm:$0xff]
      %v2810 = vld [vmem:[%s2739 + $0x4a] sm:$0xff]
      %v2811 = vld [vmem:[%s2739 + $0x52] sm:$0xff]
      %v2812 = vld [vmem:[%s2739 + $0x62] sm:$0xff]
      %v2813 = vld [vmem:[%s2739 + $0x6a] sm:$0xff]
      %v2814 = vld [vmem:[%s2739 + $0x7a] sm:$0xff]
      %v2815 = vld [vmem:[%s2739 + $0x82] sm:$0xff]
      %v2816 = vld [vmem:[%s2739 + $0x92] sm:$0xff]
      %v2817 = vld [vmem:[%s2739 + $0x9a] sm:$0xff]
      %v2818 = vld [vmem:[%s2739 + $0xaa] sm:$0xff]
      %v2819 = vld [vmem:[%s2739 + $0xb2] sm:$0xff]
      %v2820 = vpack.c.bf16 %v2804, %v2804
      %v2821 = vpack.c.bf16 %v2805, %v2805
      %v2822 = vpack.c.bf16 %v2806, %v2806
      %v2823 = vpack.c.bf16 %v2807, %v2807
      %v2824 = vpack.c.bf16 %v2808, %v2808
      %v2825 = vpack.c.bf16 %v2809, %v2809
      %v2826 = vpack.c.bf16 %v2810, %v2810
      %v2827 = vpack.c.bf16 %v2811, %v2811
      %v2828 = vpack.c.bf16 %v2812, %v2812
      %v2829 = vpack.c.bf16 %v2813, %v2813
      %v2830 = vpack.c.bf16 %v2814, %v2814
      %v2831 = vpack.c.bf16 %v2815, %v2815
      %v2832 = vpack.c.bf16 %v2816, %v2816
      %v2833 = vpack.c.bf16 %v2817, %v2817
      %v2834 = vpack.c.bf16 %v2818, %v2818
      %v2835 = vpack.c.bf16 %v2819, %v2819
      %v2852 = vunpack.c.l.b16 %v2756
      %v2853 = vunpack.c.l.b16 %v2757
      %v2854 = vunpack.c.l.b16 %v2758
      %v2855 = vunpack.c.l.b16 %v2759
      %v2856 = vunpack.c.l.b16 %v2760
      %v2857 = vunpack.c.l.b16 %v2761
      %v2858 = vunpack.c.l.b16 %v2762
      %v2859 = vunpack.c.l.b16 %v2763
      %v2860 = vunpack.c.l.b16 %v2764
      %v2861 = vunpack.c.l.b16 %v2765
      %v2862 = vunpack.c.l.b16 %v2766
      %v2863 = vunpack.c.l.b16 %v2767
      %v2864 = vunpack.c.l.b16 %v2768
      %v2865 = vunpack.c.l.b16 %v2769
      %v2866 = vunpack.c.l.b16 %v2770
      %v2867 = vunpack.c.l.b16 %v2771
      %v2868 = vpack.c.b16 %v2853, %v2852
      %v2869 = vpack.c.b16 %v2855, %v2854
      %v2870 = vpack.c.b16 %v2857, %v2856
      %v2871 = vpack.c.b16 %v2859, %v2858
      %v2872 = vpack.c.b16 %v2861, %v2860
      %v2873 = vpack.c.b16 %v2863, %v2862
      %v2874 = vpack.c.b16 %v2865, %v2864
      %v2875 = vpack.c.b16 %v2867, %v2866
      %v2900 = vunpack.c.l.b16 %v2788
      %v2901 = vunpack.c.l.b16 %v2789
      %v2902 = vunpack.c.l.b16 %v2790
      %v2903 = vunpack.c.l.b16 %v2791
      %v2904 = vunpack.c.l.b16 %v2792
      %v2905 = vunpack.c.l.b16 %v2793
      %v2906 = vunpack.c.l.b16 %v2794
      %v2907 = vunpack.c.l.b16 %v2795
      %v2908 = vunpack.c.l.b16 %v2796
      %v2909 = vunpack.c.l.b16 %v2797
      %v2910 = vunpack.c.l.b16 %v2798
      %v2911 = vunpack.c.l.b16 %v2799
      %v2912 = vunpack.c.l.b16 %v2800
      %v2913 = vunpack.c.l.b16 %v2801
      %v2914 = vunpack.c.l.b16 %v2802
      %v2915 = vunpack.c.l.b16 %v2803
      %v2916 = vpack.c.b16 %v2901, %v2900
      %v2917 = vpack.c.b16 %v2903, %v2902
      %v2918 = vpack.c.b16 %v2905, %v2904
      %v2919 = vpack.c.b16 %v2907, %v2906
      %v2920 = vpack.c.b16 %v2909, %v2908
      %v2921 = vpack.c.b16 %v2911, %v2910
      %v2922 = vpack.c.b16 %v2913, %v2912
      %v2923 = vpack.c.b16 %v2915, %v2914
      %v2948 = vunpack.c.l.b16 %v2820
      %v2949 = vunpack.c.l.b16 %v2821
      %v2950 = vunpack.c.l.b16 %v2822
      %v2951 = vunpack.c.l.b16 %v2823
      %v2952 = vunpack.c.l.b16 %v2824
      %v2953 = vunpack.c.l.b16 %v2825
      %v2954 = vunpack.c.l.b16 %v2826
      %v2955 = vunpack.c.l.b16 %v2827
      %v2956 = vunpack.c.l.b16 %v2828
      %v2957 = vunpack.c.l.b16 %v2829
      %v2958 = vunpack.c.l.b16 %v2830
      %v2959 = vunpack.c.l.b16 %v2831
      %v2960 = vunpack.c.l.b16 %v2832
      %v2961 = vunpack.c.l.b16 %v2833
      %v2962 = vunpack.c.l.b16 %v2834
      %v2963 = vunpack.c.l.b16 %v2835
      %v2964 = vpack.c.b16 %v2949, %v2948
      %v2965 = vpack.c.b16 %v2951, %v2950
      %v2966 = vpack.c.b16 %v2953, %v2952
      %v2967 = vpack.c.b16 %v2955, %v2954
      %v2968 = vpack.c.b16 %v2957, %v2956
      %v2969 = vpack.c.b16 %v2959, %v2958
      %v2970 = vpack.c.b16 %v2961, %v2960
      %v2971 = vpack.c.b16 %v2963, %v2962
      %v2980 = vld [vmem:[%s929] sm:$0xf]
      %v2981 = vld [vmem:[%s929 + $0x4] sm:$0xf]
      %v2982 = vld [vmem:[%s929 + $0x8] sm:$0xf]
      %v2983 = vld [vmem:[%s929 + $0xc] sm:$0xf]
      %v2984 = vld [vmem:[%s929 + $0x10] sm:$0xf]
      %v2985 = vld [vmem:[%s929 + $0x14] sm:$0xf]
      %v2986 = vld [vmem:[%s929 + $0x18] sm:$0xf]
      %v2987 = vld [vmem:[%s929 + $0x1c] sm:$0xf]
      %v2988 = vld [vmem:[%s929 + $0x20] sm:$0xf]
      %v2989 = vld [vmem:[%s929 + $0x24] sm:$0xf]
      %v2990 = vld [vmem:[%s929 + $0x28] sm:$0xf]
      %v2991 = vld [vmem:[%s929 + $0x2c] sm:$0xf]
      %v2992 = vld [vmem:[%s929 + $0x30] sm:$0xf]
      %v2993 = vld [vmem:[%s929 + $0x34] sm:$0xf]
      %v2994 = vld [vmem:[%s929 + $0x38] sm:$0xf]
      %v2995 = vld [vmem:[%s929 + $0x3c] sm:$0xf]
      %v2996 = vld [vmem:[%s929 + $0x40] sm:$0xf]
      %v2997 = vld [vmem:[%s929 + $0x44] sm:$0xf]
      %v2998 = vld [vmem:[%s929 + $0x48] sm:$0xf]
      %v2999 = vld [vmem:[%s929 + $0x4c] sm:$0xf]
      %v3000 = vld [vmem:[%s929 + $0x50] sm:$0xf]
      %v3001 = vld [vmem:[%s929 + $0x54] sm:$0xf]
      %v3002 = vld [vmem:[%s929 + $0x58] sm:$0xf]
      %v3003 = vld [vmem:[%s929 + $0x5c] sm:$0xf]
      %v3004 = vld [vmem:[%s929 + $0x60] sm:$0xf]
      %v3005 = vld [vmem:[%s929 + $0x64] sm:$0xf]
      %v3006 = vld [vmem:[%s929 + $0x68] sm:$0xf]
      %v3007 = vld [vmem:[%s929 + $0x6c] sm:$0xf]
      %v3008 = vld [vmem:[%s929 + $0x70] sm:$0xf]
      %v3009 = vld [vmem:[%s929 + $0x74] sm:$0xf]
      %v3010 = vld [vmem:[%s929 + $0x78] sm:$0xf]
      %v3011 = vld [vmem:[%s929 + $0x7c] sm:$0xf]
      %v3012 = vld [vmem:[%s929 + $0x80] sm:$0xf]
      %v3013 = vld [vmem:[%s929 + $0x84] sm:$0xf]
      %v3014 = vld [vmem:[%s929 + $0x88] sm:$0xf]
      %v3015 = vld [vmem:[%s929 + $0x8c] sm:$0xf]
      %v3016 = vld [vmem:[%s929 + $0x90] sm:$0xf]
      %v3017 = vld [vmem:[%s929 + $0x94] sm:$0xf]
      %v3018 = vld [vmem:[%s929 + $0x98] sm:$0xf]
      %v3019 = vld [vmem:[%s929 + $0x9c] sm:$0xf]
      %v3020 = vld [vmem:[%s929 + $0xa0] sm:$0xf]
      %v3021 = vld [vmem:[%s929 + $0xa4] sm:$0xf]
      %v3022 = vld [vmem:[%s929 + $0xa8] sm:$0xf]
      %v3023 = vld [vmem:[%s929 + $0xac] sm:$0xf]
      %v3024 = vld [vmem:[%s929 + $0xb0] sm:$0xf]
      %v3025 = vld [vmem:[%s929 + $0xb4] sm:$0xf]
      %v3026 = vld [vmem:[%s929 + $0xb8] sm:$0xf]
      %v3027 = vld [vmem:[%s929 + $0xbc] sm:$0xf]
      %v3076 = vunpack.c.l.b16 %v2980
      %v3077 = vunpack.c.l.b16 %v2981
      %v3078 = vunpack.c.l.b16 %v2982
      %v3079 = vunpack.c.l.b16 %v2983
      %v3080 = vunpack.c.l.b16 %v2984
      %v3081 = vunpack.c.l.b16 %v2985
      %v3082 = vunpack.c.l.b16 %v2986
      %v3083 = vunpack.c.l.b16 %v2987
      %v3084 = vunpack.c.l.b16 %v2988
      %v3085 = vunpack.c.l.b16 %v2989
      %v3086 = vunpack.c.l.b16 %v2990
      %v3087 = vunpack.c.l.b16 %v2991
      %v3088 = vunpack.c.l.b16 %v2992
      %v3089 = vunpack.c.l.b16 %v2993
      %v3090 = vunpack.c.l.b16 %v2994
      %v3091 = vunpack.c.l.b16 %v2995
      %v3092 = vunpack.c.l.b16 %v2996
      %v3093 = vunpack.c.l.b16 %v2997
      %v3094 = vunpack.c.l.b16 %v2998
      %v3095 = vunpack.c.l.b16 %v2999
      %v3096 = vunpack.c.l.b16 %v3000
      %v3097 = vunpack.c.l.b16 %v3001
      %v3098 = vunpack.c.l.b16 %v3002
      %v3099 = vunpack.c.l.b16 %v3003
      %v3100 = vunpack.c.l.b16 %v3004
      %v3101 = vunpack.c.l.b16 %v3005
      %v3102 = vunpack.c.l.b16 %v3006
      %v3103 = vunpack.c.l.b16 %v3007
      %v3104 = vunpack.c.l.b16 %v3008
      %v3105 = vunpack.c.l.b16 %v3009
      %v3106 = vunpack.c.l.b16 %v3010
      %v3107 = vunpack.c.l.b16 %v3011
      %v3108 = vunpack.c.l.b16 %v3012
      %v3109 = vunpack.c.l.b16 %v3013
      %v3110 = vunpack.c.l.b16 %v3014
      %v3111 = vunpack.c.l.b16 %v3015
      %v3112 = vunpack.c.l.b16 %v3016
      %v3113 = vunpack.c.l.b16 %v3017
      %v3114 = vunpack.c.l.b16 %v3018
      %v3115 = vunpack.c.l.b16 %v3019
      %v3116 = vunpack.c.l.b16 %v3020
      %v3117 = vunpack.c.l.b16 %v3021
      %v3118 = vunpack.c.l.b16 %v3022
      %v3119 = vunpack.c.l.b16 %v3023
      %v3120 = vunpack.c.l.b16 %v3024
      %v3121 = vunpack.c.l.b16 %v3025
      %v3122 = vunpack.c.l.b16 %v3026
      %v3123 = vunpack.c.l.b16 %v3027
      %v3124 = vpack.c.b16 %v3077, %v3076
      %v3125 = vpack.c.b16 %v3079, %v3078
      %v3126 = vpack.c.b16 %v3081, %v3080
      %v3127 = vpack.c.b16 %v3083, %v3082
      %v3128 = vpack.c.b16 %v3085, %v3084
      %v3129 = vpack.c.b16 %v3087, %v3086
      %v3130 = vpack.c.b16 %v3089, %v3088
      %v3131 = vpack.c.b16 %v3091, %v3090
      %v3132 = vpack.c.b16 %v3093, %v3092
      %v3133 = vpack.c.b16 %v3095, %v3094
      %v3134 = vpack.c.b16 %v3097, %v3096
      %v3135 = vpack.c.b16 %v3099, %v3098
      %v3136 = vpack.c.b16 %v3101, %v3100
      %v3137 = vpack.c.b16 %v3103, %v3102
      %v3138 = vpack.c.b16 %v3105, %v3104
      %v3139 = vpack.c.b16 %v3107, %v3106
      %v3140 = vpack.c.b16 %v3109, %v3108
      %v3141 = vpack.c.b16 %v3111, %v3110
      %v3142 = vpack.c.b16 %v3113, %v3112
      %v3143 = vpack.c.b16 %v3115, %v3114
      %v3144 = vpack.c.b16 %v3117, %v3116
      %v3145 = vpack.c.b16 %v3119, %v3118
      %v3146 = vpack.c.b16 %v3121, %v3120
      %v3147 = vpack.c.b16 %v3123, %v3122
      %3172 = vmatpush.bf16.msra.mxu0 %v3131
      %3173 = vmatpush.bf16.msra.mxu0 %v3130
      %3174 = vmatpush.bf16.msra.mxu0 %v3129
      %3175 = vmatpush.bf16.msra.mxu0 %v3128
      %3176 = vmatpush.bf16.msra.mxu0 %v3127
      %3177 = vmatpush.bf16.msra.mxu0 %v3126
      %3178 = vmatpush.bf16.msra.mxu0 %v3125
      %3179 = vmatpush.bf16.msra.mxu0 %v3124
      %3180 = vmatmul.bf16.gmra.mxu0 %v2868
      %v3181 = vpop.f32.mrf.mxu0
      %v3182 = vadd.f32 0.0, %v3181
      %v3183 = vpop.f32.mrf.mxu0
      %v3184 = vadd.f32 0.0, %v3183
      %3185 = vmatmul.bf16.gmra.mxu0 %v2869
      %v3186 = vpop.f32.mrf.mxu0
      %v3187 = vadd.f32 0.0, %v3186
      %v3188 = vpop.f32.mrf.mxu0
      %v3189 = vadd.f32 0.0, %v3188
      %3190 = vmatmul.bf16.gmra.mxu0 %v2870
      %v3191 = vpop.f32.mrf.mxu0
      %v3192 = vadd.f32 0.0, %v3191
      %v3193 = vpop.f32.mrf.mxu0
      %v3194 = vadd.f32 0.0, %v3193
      %3195 = vmatmul.bf16.gmra.mxu0 %v2871
      %v3196 = vpop.f32.mrf.mxu0
      %v3197 = vadd.f32 0.0, %v3196
      %v3198 = vpop.f32.mrf.mxu0
      %v3199 = vadd.f32 0.0, %v3198
      %3200 = vmatmul.bf16.gmra.mxu0 %v2872
      %v3201 = vpop.f32.mrf.mxu0
      %v3202 = vadd.f32 0.0, %v3201
      %v3203 = vpop.f32.mrf.mxu0
      %v3204 = vadd.f32 0.0, %v3203
      %3205 = vmatmul.bf16.gmra.mxu0 %v2873
      %v3206 = vpop.f32.mrf.mxu0
      %v3207 = vadd.f32 0.0, %v3206
      %v3208 = vpop.f32.mrf.mxu0
      %v3209 = vadd.f32 0.0, %v3208
      %3210 = vmatmul.bf16.gmra.mxu0 %v2874
      %v3211 = vpop.f32.mrf.mxu0
      %v3212 = vadd.f32 0.0, %v3211
      %v3213 = vpop.f32.mrf.mxu0
      %v3214 = vadd.f32 0.0, %v3213
      %3215 = vmatmul.bf16.gmra.mxu0 %v2875
      %v3216 = vpop.f32.mrf.mxu0
      %v3217 = vadd.f32 0.0, %v3216
      %v3218 = vpop.f32.mrf.mxu0
      %v3219 = vadd.f32 0.0, %v3218
      %3220 = vdwg.mxu0
      %3221 = vmatpush.bf16.msra.mxu0 %v3139
      %3222 = vmatpush.bf16.msra.mxu0 %v3138
      %3223 = vmatpush.bf16.msra.mxu0 %v3137
      %3224 = vmatpush.bf16.msra.mxu0 %v3136
      %3225 = vmatpush.bf16.msra.mxu0 %v3135
      %3226 = vmatpush.bf16.msra.mxu0 %v3134
      %3227 = vmatpush.bf16.msra.mxu0 %v3133
      %3228 = vmatpush.bf16.msra.mxu0 %v3132
      %3229 = vmatmul.bf16.gmra.mxu0 %v2916
      %v3230 = vpop.f32.mrf.mxu0
      %v3231 = vadd.f32 %v3182, %v3230
      %v3232 = vpop.f32.mrf.mxu0
      %v3233 = vadd.f32 %v3184, %v3232
      %3234 = vmatmul.bf16.gmra.mxu0 %v2917
      %v3235 = vpop.f32.mrf.mxu0
      %v3236 = vadd.f32 %v3187, %v3235
      %v3237 = vpop.f32.mrf.mxu0
      %v3238 = vadd.f32 %v3189, %v3237
      %3239 = vmatmul.bf16.gmra.mxu0 %v2918
      %v3240 = vpop.f32.mrf.mxu0
      %v3241 = vadd.f32 %v3192, %v3240
      %v3242 = vpop.f32.mrf.mxu0
      %v3243 = vadd.f32 %v3194, %v3242
      %3244 = vmatmul.bf16.gmra.mxu0 %v2919
      %v3245 = vpop.f32.mrf.mxu0
      %v3246 = vadd.f32 %v3197, %v3245
      %v3247 = vpop.f32.mrf.mxu0
      %v3248 = vadd.f32 %v3199, %v3247
      %3249 = vmatmul.bf16.gmra.mxu0 %v2920
      %v3250 = vpop.f32.mrf.mxu0
      %v3251 = vadd.f32 %v3202, %v3250
      %v3252 = vpop.f32.mrf.mxu0
      %v3253 = vadd.f32 %v3204, %v3252
      %3254 = vmatmul.bf16.gmra.mxu0 %v2921
      %v3255 = vpop.f32.mrf.mxu0
      %v3256 = vadd.f32 %v3207, %v3255
      %v3257 = vpop.f32.mrf.mxu0
      %v3258 = vadd.f32 %v3209, %v3257
      %3259 = vmatmul.bf16.gmra.mxu0 %v2922
      %v3260 = vpop.f32.mrf.mxu0
      %v3261 = vadd.f32 %v3212, %v3260
      %v3262 = vpop.f32.mrf.mxu0
      %v3263 = vadd.f32 %v3214, %v3262
      %3264 = vmatmul.bf16.gmra.mxu0 %v2923
      %v3265 = vpop.f32.mrf.mxu0
      %v3266 = vadd.f32 %v3217, %v3265
      %v3267 = vpop.f32.mrf.mxu0
      %v3268 = vadd.f32 %v3219, %v3267
      %3269 = vdwg.mxu0
      %3270 = vmatpush.bf16.msra.mxu0 %v3147
      %3271 = vmatpush.bf16.msra.mxu0 %v3146
      %3272 = vmatpush.bf16.msra.mxu0 %v3145
      %3273 = vmatpush.bf16.msra.mxu0 %v3144
      %3274 = vmatpush.bf16.msra.mxu0 %v3143
      %3275 = vmatpush.bf16.msra.mxu0 %v3142
      %3276 = vmatpush.bf16.msra.mxu0 %v3141
      %3277 = vmatpush.bf16.msra.mxu0 %v3140
      %3278 = vmatmul.bf16.gmra.mxu0 %v2964
      %v3279 = vpop.f32.mrf.mxu0
      %v3280 = vadd.f32 %v3231, %v3279
      %v3281 = vpop.f32.mrf.mxu0
      %v3282 = vadd.f32 %v3233, %v3281
      %3283 = vmatmul.bf16.gmra.mxu0 %v2965
      %v3284 = vpop.f32.mrf.mxu0
      %v3285 = vadd.f32 %v3236, %v3284
      %v3286 = vpop.f32.mrf.mxu0
      %v3287 = vadd.f32 %v3238, %v3286
      %3288 = vmatmul.bf16.gmra.mxu0 %v2966
      %v3289 = vpop.f32.mrf.mxu0
      %v3290 = vadd.f32 %v3241, %v3289
      %v3291 = vpop.f32.mrf.mxu0
      %v3292 = vadd.f32 %v3243, %v3291
      %3293 = vmatmul.bf16.gmra.mxu0 %v2967
      %v3294 = vpop.f32.mrf.mxu0
      %v3295 = vadd.f32 %v3246, %v3294
      %v3296 = vpop.f32.mrf.mxu0
      %v3297 = vadd.f32 %v3248, %v3296
      %3298 = vmatmul.bf16.gmra.mxu0 %v2968
      %v3299 = vpop.f32.mrf.mxu0
      %v3300 = vadd.f32 %v3251, %v3299
      %v3301 = vpop.f32.mrf.mxu0
      %v3302 = vadd.f32 %v3253, %v3301
      %3303 = vmatmul.bf16.gmra.mxu0 %v2969
      %v3304 = vpop.f32.mrf.mxu0
      %v3305 = vadd.f32 %v3256, %v3304
      %v3306 = vpop.f32.mrf.mxu0
      %v3307 = vadd.f32 %v3258, %v3306
      %3308 = vmatmul.bf16.gmra.mxu0 %v2970
      %v3309 = vpop.f32.mrf.mxu0
      %v3310 = vadd.f32 %v3261, %v3309
      %v3311 = vpop.f32.mrf.mxu0
      %v3312 = vadd.f32 %v3263, %v3311
      %3313 = vmatmul.bf16.gmra.mxu0 %v2971
      %v3314 = vpop.f32.mrf.mxu0
      %v3315 = vadd.f32 %v3266, %v3314
      %v3316 = vpop.f32.mrf.mxu0
      %v3317 = vadd.f32 %v3268, %v3316
      %3318 = vdwg.mxu0
      %v3367 = vunpack.c.l.b16 %v2691
      %v3368 = vunpack.c.l.b16 %v2692
      %v3369 = vunpack.c.l.b16 %v2693
      %v3370 = vunpack.c.l.b16 %v2694
      %v3371 = vunpack.c.l.b16 %v2695
      %v3372 = vunpack.c.l.b16 %v2696
      %v3373 = vunpack.c.l.b16 %v2697
      %v3374 = vunpack.c.l.b16 %v2698
      %v3375 = vunpack.c.l.b16 %v2699
      %v3376 = vunpack.c.l.b16 %v2700
      %v3377 = vunpack.c.l.b16 %v2701
      %v3378 = vunpack.c.l.b16 %v2702
      %v3379 = vunpack.c.l.b16 %v2703
      %v3380 = vunpack.c.l.b16 %v2704
      %v3381 = vunpack.c.l.b16 %v2705
      %v3382 = vunpack.c.l.b16 %v2706
      %v3383 = vunpack.c.l.b16 %v2707
      %v3384 = vunpack.c.l.b16 %v2708
      %v3385 = vunpack.c.l.b16 %v2709
      %v3386 = vunpack.c.l.b16 %v2710
      %v3387 = vunpack.c.l.b16 %v2711
      %v3388 = vunpack.c.l.b16 %v2712
      %v3389 = vunpack.c.l.b16 %v2713
      %v3390 = vunpack.c.l.b16 %v2714
      %v3391 = vunpack.c.l.b16 %v2715
      %v3392 = vunpack.c.l.b16 %v2716
      %v3393 = vunpack.c.l.b16 %v2717
      %v3394 = vunpack.c.l.b16 %v2718
      %v3395 = vunpack.c.l.b16 %v2719
      %v3396 = vunpack.c.l.b16 %v2720
      %v3397 = vunpack.c.l.b16 %v2721
      %v3398 = vunpack.c.l.b16 %v2722
      %v3399 = vunpack.c.l.b16 %v2723
      %v3400 = vunpack.c.l.b16 %v2724
      %v3401 = vunpack.c.l.b16 %v2725
      %v3402 = vunpack.c.l.b16 %v2726
      %v3403 = vunpack.c.l.b16 %v2727
      %v3404 = vunpack.c.l.b16 %v2728
      %v3405 = vunpack.c.l.b16 %v2729
      %v3406 = vunpack.c.l.b16 %v2730
      %v3407 = vunpack.c.l.b16 %v2731
      %v3408 = vunpack.c.l.b16 %v2732
      %v3409 = vunpack.c.l.b16 %v2733
      %v3410 = vunpack.c.l.b16 %v2734
      %v3411 = vunpack.c.l.b16 %v2735
      %v3412 = vunpack.c.l.b16 %v2736
      %v3413 = vunpack.c.l.b16 %v2737
      %v3414 = vunpack.c.l.b16 %v2738
      %v3415 = vpack.c.b16 %v3368, %v3367
      %v3416 = vpack.c.b16 %v3370, %v3369
      %v3417 = vpack.c.b16 %v3372, %v3371
      %v3418 = vpack.c.b16 %v3374, %v3373
      %v3419 = vpack.c.b16 %v3376, %v3375
      %v3420 = vpack.c.b16 %v3378, %v3377
      %v3421 = vpack.c.b16 %v3380, %v3379
      %v3422 = vpack.c.b16 %v3382, %v3381
      %v3423 = vpack.c.b16 %v3384, %v3383
      %v3424 = vpack.c.b16 %v3386, %v3385
      %v3425 = vpack.c.b16 %v3388, %v3387
      %v3426 = vpack.c.b16 %v3390, %v3389
      %v3427 = vpack.c.b16 %v3392, %v3391
      %v3428 = vpack.c.b16 %v3394, %v3393
      %v3429 = vpack.c.b16 %v3396, %v3395
      %v3430 = vpack.c.b16 %v3398, %v3397
      %v3431 = vpack.c.b16 %v3400, %v3399
      %v3432 = vpack.c.b16 %v3402, %v3401
      %v3433 = vpack.c.b16 %v3404, %v3403
      %v3434 = vpack.c.b16 %v3406, %v3405
      %v3435 = vpack.c.b16 %v3408, %v3407
      %v3436 = vpack.c.b16 %v3410, %v3409
      %v3437 = vpack.c.b16 %v3412, %v3411
      %v3438 = vpack.c.b16 %v3414, %v3413
      %3463 = vmatpush.bf16.msra.mxu0 %v3422
      %3464 = vmatpush.bf16.msra.mxu0 %v3421
      %3465 = vmatpush.bf16.msra.mxu0 %v3420
      %3466 = vmatpush.bf16.msra.mxu0 %v3419
      %3467 = vmatpush.bf16.msra.mxu0 %v3418
      %3468 = vmatpush.bf16.msra.mxu0 %v3417
      %3469 = vmatpush.bf16.msra.mxu0 %v3416
      %3470 = vmatpush.bf16.msra.mxu0 %v3415
      %3471 = vmatmul.bf16.gmra.mxu0 %v2579
      %v3472 = vpop.f32.mrf.mxu0
      %v3473 = vadd.f32 %v3280, %v3472
      %v3474 = vpop.f32.mrf.mxu0
      %v3475 = vadd.f32 %v3282, %v3474
      %3476 = vmatmul.bf16.gmra.mxu0 %v2580
      %v3477 = vpop.f32.mrf.mxu0
      %v3478 = vadd.f32 %v3285, %v3477
      %v3479 = vpop.f32.mrf.mxu0
      %v3480 = vadd.f32 %v3287, %v3479
      %3481 = vmatmul.bf16.gmra.mxu0 %v2581
      %v3482 = vpop.f32.mrf.mxu0
      %v3483 = vadd.f32 %v3290, %v3482
      %v3484 = vpop.f32.mrf.mxu0
      %v3485 = vadd.f32 %v3292, %v3484
      %3486 = vmatmul.bf16.gmra.mxu0 %v2582
      %v3487 = vpop.f32.mrf.mxu0
      %v3488 = vadd.f32 %v3295, %v3487
      %v3489 = vpop.f32.mrf.mxu0
      %v3490 = vadd.f32 %v3297, %v3489
      %3491 = vmatmul.bf16.gmra.mxu0 %v2583
      %v3492 = vpop.f32.mrf.mxu0
      %v3493 = vadd.f32 %v3300, %v3492
      %v3494 = vpop.f32.mrf.mxu0
      %v3495 = vadd.f32 %v3302, %v3494
      %3496 = vmatmul.bf16.gmra.mxu0 %v2584
      %v3497 = vpop.f32.mrf.mxu0
      %v3498 = vadd.f32 %v3305, %v3497
      %v3499 = vpop.f32.mrf.mxu0
      %v3500 = vadd.f32 %v3307, %v3499
      %3501 = vmatmul.bf16.gmra.mxu0 %v2585
      %v3502 = vpop.f32.mrf.mxu0
      %v3503 = vadd.f32 %v3310, %v3502
      %v3504 = vpop.f32.mrf.mxu0
      %v3505 = vadd.f32 %v3312, %v3504
      %3506 = vmatmul.bf16.gmra.mxu0 %v2586
      %v3507 = vpop.f32.mrf.mxu0
      %v3508 = vadd.f32 %v3315, %v3507
      %v3509 = vpop.f32.mrf.mxu0
      %v3510 = vadd.f32 %v3317, %v3509
      %3511 = vdwg.mxu0
      %3512 = vmatpush.bf16.msra.mxu0 %v3430
      %3513 = vmatpush.bf16.msra.mxu0 %v3429
      %3514 = vmatpush.bf16.msra.mxu0 %v3428
      %3515 = vmatpush.bf16.msra.mxu0 %v3427
      %3516 = vmatpush.bf16.msra.mxu0 %v3426
      %3517 = vmatpush.bf16.msra.mxu0 %v3425
      %3518 = vmatpush.bf16.msra.mxu0 %v3424
      %3519 = vmatpush.bf16.msra.mxu0 %v3423
      %3520 = vmatmul.bf16.gmra.mxu0 %v2627
      %v3521 = vpop.f32.mrf.mxu0
      %v3522 = vadd.f32 %v3473, %v3521
      %v3523 = vpop.f32.mrf.mxu0
      %v3524 = vadd.f32 %v3475, %v3523
      %3525 = vmatmul.bf16.gmra.mxu0 %v2628
      %v3526 = vpop.f32.mrf.mxu0
      %v3527 = vadd.f32 %v3478, %v3526
      %v3528 = vpop.f32.mrf.mxu0
      %v3529 = vadd.f32 %v3480, %v3528
      %3530 = vmatmul.bf16.gmra.mxu0 %v2629
      %v3531 = vpop.f32.mrf.mxu0
      %v3532 = vadd.f32 %v3483, %v3531
      %v3533 = vpop.f32.mrf.mxu0
      %v3534 = vadd.f32 %v3485, %v3533
      %3535 = vmatmul.bf16.gmra.mxu0 %v2630
      %v3536 = vpop.f32.mrf.mxu0
      %v3537 = vadd.f32 %v3488, %v3536
      %v3538 = vpop.f32.mrf.mxu0
      %v3539 = vadd.f32 %v3490, %v3538
      %3540 = vmatmul.bf16.gmra.mxu0 %v2631
      %v3541 = vpop.f32.mrf.mxu0
      %v3542 = vadd.f32 %v3493, %v3541
      %v3543 = vpop.f32.mrf.mxu0
      %v3544 = vadd.f32 %v3495, %v3543
      %3545 = vmatmul.bf16.gmra.mxu0 %v2632
      %v3546 = vpop.f32.mrf.mxu0
      %v3547 = vadd.f32 %v3498, %v3546
      %v3548 = vpop.f32.mrf.mxu0
      %v3549 = vadd.f32 %v3500, %v3548
      %3550 = vmatmul.bf16.gmra.mxu0 %v2633
      %v3551 = vpop.f32.mrf.mxu0
      %v3552 = vadd.f32 %v3503, %v3551
      %v3553 = vpop.f32.mrf.mxu0
      %v3554 = vadd.f32 %v3505, %v3553
      %3555 = vmatmul.bf16.gmra.mxu0 %v2634
      %v3556 = vpop.f32.mrf.mxu0
      %v3557 = vadd.f32 %v3508, %v3556
      %v3558 = vpop.f32.mrf.mxu0
      %v3559 = vadd.f32 %v3510, %v3558
      %3560 = vdwg.mxu0
      %3561 = vmatpush.bf16.msra.mxu0 %v3438
      %3562 = vmatpush.bf16.msra.mxu0 %v3437
      %3563 = vmatpush.bf16.msra.mxu0 %v3436
      %3564 = vmatpush.bf16.msra.mxu0 %v3435
      %3565 = vmatpush.bf16.msra.mxu0 %v3434
      %3566 = vmatpush.bf16.msra.mxu0 %v3433
      %3567 = vmatpush.bf16.msra.mxu0 %v3432
      %3568 = vmatpush.bf16.msra.mxu0 %v3431
      %3569 = vmatmul.bf16.gmra.mxu0 %v2675
      %v3570 = vpop.f32.mrf.mxu0
      %v3571 = vadd.f32 %v3522, %v3570
      %v3572 = vpop.f32.mrf.mxu0
      %v3573 = vadd.f32 %v3524, %v3572
      %3574 = vmatmul.bf16.gmra.mxu0 %v2676
      %v3575 = vpop.f32.mrf.mxu0
      %v3576 = vadd.f32 %v3527, %v3575
      %v3577 = vpop.f32.mrf.mxu0
      %v3578 = vadd.f32 %v3529, %v3577
      %3579 = vmatmul.bf16.gmra.mxu0 %v2677
      %v3580 = vpop.f32.mrf.mxu0
      %v3581 = vadd.f32 %v3532, %v3580
      %v3582 = vpop.f32.mrf.mxu0
      %v3583 = vadd.f32 %v3534, %v3582
      %3584 = vmatmul.bf16.gmra.mxu0 %v2678
      %v3585 = vpop.f32.mrf.mxu0
      %v3586 = vadd.f32 %v3537, %v3585
      %v3587 = vpop.f32.mrf.mxu0
      %v3588 = vadd.f32 %v3539, %v3587
      %3589 = vmatmul.bf16.gmra.mxu0 %v2679
      %v3590 = vpop.f32.mrf.mxu0
      %v3591 = vadd.f32 %v3542, %v3590
      %v3592 = vpop.f32.mrf.mxu0
      %v3593 = vadd.f32 %v3544, %v3592
      %3594 = vmatmul.bf16.gmra.mxu0 %v2680
      %v3595 = vpop.f32.mrf.mxu0
      %v3596 = vadd.f32 %v3547, %v3595
      %v3597 = vpop.f32.mrf.mxu0
      %v3598 = vadd.f32 %v3549, %v3597
      %3599 = vmatmul.bf16.gmra.mxu0 %v2681
      %v3600 = vpop.f32.mrf.mxu0
      %v3601 = vadd.f32 %v3552, %v3600
      %v3602 = vpop.f32.mrf.mxu0
      %v3603 = vadd.f32 %v3554, %v3602
      %3604 = vmatmul.bf16.gmra.mxu0 %v2682
      %v3605 = vpop.f32.mrf.mxu0
      %v3606 = vadd.f32 %v3557, %v3605
      %v3607 = vpop.f32.mrf.mxu0
      %v3608 = vadd.f32 %v3559, %v3607
      %3609 = vdwg.mxu0
      %s3610 = scalar_lea.vmem %s273, 240
      %v3611 = vld [vmem:[%s3610] sm:$0xff]
      %v3612 = vld [vmem:[%s3610 + $0x8] sm:$0xff]
      %v3613 = vld [vmem:[%s3610 + $0x18] sm:$0xff]
      %v3614 = vld [vmem:[%s3610 + $0x20] sm:$0xff]
      %v3615 = vld [vmem:[%s3610 + $0x30] sm:$0xff]
      %v3616 = vld [vmem:[%s3610 + $0x38] sm:$0xff]
      %v3617 = vld [vmem:[%s3610 + $0x48] sm:$0xff]
      %v3618 = vld [vmem:[%s3610 + $0x50] sm:$0xff]
      %v3619 = vld [vmem:[%s3610 + $0x60] sm:$0xff]
      %v3620 = vld [vmem:[%s3610 + $0x68] sm:$0xff]
      %v3621 = vld [vmem:[%s3610 + $0x78] sm:$0xff]
      %v3622 = vld [vmem:[%s3610 + $0x80] sm:$0xff]
      %v3623 = vld [vmem:[%s3610 + $0x90] sm:$0xff]
      %v3624 = vld [vmem:[%s3610 + $0x98] sm:$0xff]
      %v3625 = vld [vmem:[%s3610 + $0xa8] sm:$0xff]
      %v3626 = vld [vmem:[%s3610 + $0xb0] sm:$0xff]
      %v3627 = vpack.c.bf16 %v3611, %v3611
      %v3628 = vpack.c.bf16 %v3612, %v3612
      %v3629 = vpack.c.bf16 %v3613, %v3613
      %v3630 = vpack.c.bf16 %v3614, %v3614
      %v3631 = vpack.c.bf16 %v3615, %v3615
      %v3632 = vpack.c.bf16 %v3616, %v3616
      %v3633 = vpack.c.bf16 %v3617, %v3617
      %v3634 = vpack.c.bf16 %v3618, %v3618
      %v3635 = vpack.c.bf16 %v3619, %v3619
      %v3636 = vpack.c.bf16 %v3620, %v3620
      %v3637 = vpack.c.bf16 %v3621, %v3621
      %v3638 = vpack.c.bf16 %v3622, %v3622
      %v3639 = vpack.c.bf16 %v3623, %v3623
      %v3640 = vpack.c.bf16 %v3624, %v3624
      %v3641 = vpack.c.bf16 %v3625, %v3625
      %v3642 = vpack.c.bf16 %v3626, %v3626
      %v3643 = vld [vmem:[%s3610 + $0x1] sm:$0xff]
      %v3644 = vld [vmem:[%s3610 + $0x9] sm:$0xff]
      %v3645 = vld [vmem:[%s3610 + $0x19] sm:$0xff]
      %v3646 = vld [vmem:[%s3610 + $0x21] sm:$0xff]
      %v3647 = vld [vmem:[%s3610 + $0x31] sm:$0xff]
      %v3648 = vld [vmem:[%s3610 + $0x39] sm:$0xff]
      %v3649 = vld [vmem:[%s3610 + $0x49] sm:$0xff]
      %v3650 = vld [vmem:[%s3610 + $0x51] sm:$0xff]
      %v3651 = vld [vmem:[%s3610 + $0x61] sm:$0xff]
      %v3652 = vld [vmem:[%s3610 + $0x69] sm:$0xff]
      %v3653 = vld [vmem:[%s3610 + $0x79] sm:$0xff]
      %v3654 = vld [vmem:[%s3610 + $0x81] sm:$0xff]
      %v3655 = vld [vmem:[%s3610 + $0x91] sm:$0xff]
      %v3656 = vld [vmem:[%s3610 + $0x99] sm:$0xff]
      %v3657 = vld [vmem:[%s3610 + $0xa9] sm:$0xff]
      %v3658 = vld [vmem:[%s3610 + $0xb1] sm:$0xff]
      %v3659 = vpack.c.bf16 %v3643, %v3643
      %v3660 = vpack.c.bf16 %v3644, %v3644
      %v3661 = vpack.c.bf16 %v3645, %v3645
      %v3662 = vpack.c.bf16 %v3646, %v3646
      %v3663 = vpack.c.bf16 %v3647, %v3647
      %v3664 = vpack.c.bf16 %v3648, %v3648
      %v3665 = vpack.c.bf16 %v3649, %v3649
      %v3666 = vpack.c.bf16 %v3650, %v3650
      %v3667 = vpack.c.bf16 %v3651, %v3651
      %v3668 = vpack.c.bf16 %v3652, %v3652
      %v3669 = vpack.c.bf16 %v3653, %v3653
      %v3670 = vpack.c.bf16 %v3654, %v3654
      %v3671 = vpack.c.bf16 %v3655, %v3655
      %v3672 = vpack.c.bf16 %v3656, %v3656
      %v3673 = vpack.c.bf16 %v3657, %v3657
      %v3674 = vpack.c.bf16 %v3658, %v3658
      %v3675 = vld [vmem:[%s3610 + $0x2] sm:$0xff]
      %v3676 = vld [vmem:[%s3610 + $0xa] sm:$0xff]
      %v3677 = vld [vmem:[%s3610 + $0x1a] sm:$0xff]
      %v3678 = vld [vmem:[%s3610 + $0x22] sm:$0xff]
      %v3679 = vld [vmem:[%s3610 + $0x32] sm:$0xff]
      %v3680 = vld [vmem:[%s3610 + $0x3a] sm:$0xff]
      %v3681 = vld [vmem:[%s3610 + $0x4a] sm:$0xff]
      %v3682 = vld [vmem:[%s3610 + $0x52] sm:$0xff]
      %v3683 = vld [vmem:[%s3610 + $0x62] sm:$0xff]
      %v3684 = vld [vmem:[%s3610 + $0x6a] sm:$0xff]
      %v3685 = vld [vmem:[%s3610 + $0x7a] sm:$0xff]
      %v3686 = vld [vmem:[%s3610 + $0x82] sm:$0xff]
      %v3687 = vld [vmem:[%s3610 + $0x92] sm:$0xff]
      %v3688 = vld [vmem:[%s3610 + $0x9a] sm:$0xff]
      %v3689 = vld [vmem:[%s3610 + $0xaa] sm:$0xff]
      %v3690 = vld [vmem:[%s3610 + $0xb2] sm:$0xff]
      %v3691 = vpack.c.bf16 %v3675, %v3675
      %v3692 = vpack.c.bf16 %v3676, %v3676
      %v3693 = vpack.c.bf16 %v3677, %v3677
      %v3694 = vpack.c.bf16 %v3678, %v3678
      %v3695 = vpack.c.bf16 %v3679, %v3679
      %v3696 = vpack.c.bf16 %v3680, %v3680
      %v3697 = vpack.c.bf16 %v3681, %v3681
      %v3698 = vpack.c.bf16 %v3682, %v3682
      %v3699 = vpack.c.bf16 %v3683, %v3683
      %v3700 = vpack.c.bf16 %v3684, %v3684
      %v3701 = vpack.c.bf16 %v3685, %v3685
      %v3702 = vpack.c.bf16 %v3686, %v3686
      %v3703 = vpack.c.bf16 %v3687, %v3687
      %v3704 = vpack.c.bf16 %v3688, %v3688
      %v3705 = vpack.c.bf16 %v3689, %v3689
      %v3706 = vpack.c.bf16 %v3690, %v3690
      %v3723 = vunpack.c.l.b16 %v3627
      %v3724 = vunpack.c.l.b16 %v3628
      %v3725 = vunpack.c.l.b16 %v3629
      %v3726 = vunpack.c.l.b16 %v3630
      %v3727 = vunpack.c.l.b16 %v3631
      %v3728 = vunpack.c.l.b16 %v3632
      %v3729 = vunpack.c.l.b16 %v3633
      %v3730 = vunpack.c.l.b16 %v3634
      %v3731 = vunpack.c.l.b16 %v3635
      %v3732 = vunpack.c.l.b16 %v3636
      %v3733 = vunpack.c.l.b16 %v3637
      %v3734 = vunpack.c.l.b16 %v3638
      %v3735 = vunpack.c.l.b16 %v3639
      %v3736 = vunpack.c.l.b16 %v3640
      %v3737 = vunpack.c.l.b16 %v3641
      %v3738 = vunpack.c.l.b16 %v3642
      %v3739 = vpack.c.b16 %v3724, %v3723
      %v3740 = vpack.c.b16 %v3726, %v3725
      %v3741 = vpack.c.b16 %v3728, %v3727
      %v3742 = vpack.c.b16 %v3730, %v3729
      %v3743 = vpack.c.b16 %v3732, %v3731
      %v3744 = vpack.c.b16 %v3734, %v3733
      %v3745 = vpack.c.b16 %v3736, %v3735
      %v3746 = vpack.c.b16 %v3738, %v3737
      %v3771 = vunpack.c.l.b16 %v3659
      %v3772 = vunpack.c.l.b16 %v3660
      %v3773 = vunpack.c.l.b16 %v3661
      %v3774 = vunpack.c.l.b16 %v3662
      %v3775 = vunpack.c.l.b16 %v3663
      %v3776 = vunpack.c.l.b16 %v3664
      %v3777 = vunpack.c.l.b16 %v3665
      %v3778 = vunpack.c.l.b16 %v3666
      %v3779 = vunpack.c.l.b16 %v3667
      %v3780 = vunpack.c.l.b16 %v3668
      %v3781 = vunpack.c.l.b16 %v3669
      %v3782 = vunpack.c.l.b16 %v3670
      %v3783 = vunpack.c.l.b16 %v3671
      %v3784 = vunpack.c.l.b16 %v3672
      %v3785 = vunpack.c.l.b16 %v3673
      %v3786 = vunpack.c.l.b16 %v3674
      %v3787 = vpack.c.b16 %v3772, %v3771
      %v3788 = vpack.c.b16 %v3774, %v3773
      %v3789 = vpack.c.b16 %v3776, %v3775
      %v3790 = vpack.c.b16 %v3778, %v3777
      %v3791 = vpack.c.b16 %v3780, %v3779
      %v3792 = vpack.c.b16 %v3782, %v3781
      %v3793 = vpack.c.b16 %v3784, %v3783
      %v3794 = vpack.c.b16 %v3786, %v3785
      %v3819 = vunpack.c.l.b16 %v3691
      %v3820 = vunpack.c.l.b16 %v3692
      %v3821 = vunpack.c.l.b16 %v3693
      %v3822 = vunpack.c.l.b16 %v3694
      %v3823 = vunpack.c.l.b16 %v3695
      %v3824 = vunpack.c.l.b16 %v3696
      %v3825 = vunpack.c.l.b16 %v3697
      %v3826 = vunpack.c.l.b16 %v3698
      %v3827 = vunpack.c.l.b16 %v3699
      %v3828 = vunpack.c.l.b16 %v3700
      %v3829 = vunpack.c.l.b16 %v3701
      %v3830 = vunpack.c.l.b16 %v3702
      %v3831 = vunpack.c.l.b16 %v3703
      %v3832 = vunpack.c.l.b16 %v3704
      %v3833 = vunpack.c.l.b16 %v3705
      %v3834 = vunpack.c.l.b16 %v3706
      %v3835 = vpack.c.b16 %v3820, %v3819
      %v3836 = vpack.c.b16 %v3822, %v3821
      %v3837 = vpack.c.b16 %v3824, %v3823
      %v3838 = vpack.c.b16 %v3826, %v3825
      %v3839 = vpack.c.b16 %v3828, %v3827
      %v3840 = vpack.c.b16 %v3830, %v3829
      %v3841 = vpack.c.b16 %v3832, %v3831
      %v3842 = vpack.c.b16 %v3834, %v3833
      %v3851 = vld [vmem:[%s1801] sm:$0xf]
      %v3852 = vld [vmem:[%s1801 + $0x4] sm:$0xf]
      %v3853 = vld [vmem:[%s1801 + $0x8] sm:$0xf]
      %v3854 = vld [vmem:[%s1801 + $0xc] sm:$0xf]
      %v3855 = vld [vmem:[%s1801 + $0x10] sm:$0xf]
      %v3856 = vld [vmem:[%s1801 + $0x14] sm:$0xf]
      %v3857 = vld [vmem:[%s1801 + $0x18] sm:$0xf]
      %v3858 = vld [vmem:[%s1801 + $0x1c] sm:$0xf]
      %v3859 = vld [vmem:[%s1801 + $0x20] sm:$0xf]
      %v3860 = vld [vmem:[%s1801 + $0x24] sm:$0xf]
      %v3861 = vld [vmem:[%s1801 + $0x28] sm:$0xf]
      %v3862 = vld [vmem:[%s1801 + $0x2c] sm:$0xf]
      %v3863 = vld [vmem:[%s1801 + $0x30] sm:$0xf]
      %v3864 = vld [vmem:[%s1801 + $0x34] sm:$0xf]
      %v3865 = vld [vmem:[%s1801 + $0x38] sm:$0xf]
      %v3866 = vld [vmem:[%s1801 + $0x3c] sm:$0xf]
      %v3867 = vld [vmem:[%s1801 + $0x40] sm:$0xf]
      %v3868 = vld [vmem:[%s1801 + $0x44] sm:$0xf]
      %v3869 = vld [vmem:[%s1801 + $0x48] sm:$0xf]
      %v3870 = vld [vmem:[%s1801 + $0x4c] sm:$0xf]
      %v3871 = vld [vmem:[%s1801 + $0x50] sm:$0xf]
      %v3872 = vld [vmem:[%s1801 + $0x54] sm:$0xf]
      %v3873 = vld [vmem:[%s1801 + $0x58] sm:$0xf]
      %v3874 = vld [vmem:[%s1801 + $0x5c] sm:$0xf]
      %v3875 = vld [vmem:[%s1801 + $0x60] sm:$0xf]
      %v3876 = vld [vmem:[%s1801 + $0x64] sm:$0xf]
      %v3877 = vld [vmem:[%s1801 + $0x68] sm:$0xf]
      %v3878 = vld [vmem:[%s1801 + $0x6c] sm:$0xf]
      %v3879 = vld [vmem:[%s1801 + $0x70] sm:$0xf]
      %v3880 = vld [vmem:[%s1801 + $0x74] sm:$0xf]
      %v3881 = vld [vmem:[%s1801 + $0x78] sm:$0xf]
      %v3882 = vld [vmem:[%s1801 + $0x7c] sm:$0xf]
      %v3883 = vld [vmem:[%s1801 + $0x80] sm:$0xf]
      %v3884 = vld [vmem:[%s1801 + $0x84] sm:$0xf]
      %v3885 = vld [vmem:[%s1801 + $0x88] sm:$0xf]
      %v3886 = vld [vmem:[%s1801 + $0x8c] sm:$0xf]
      %v3887 = vld [vmem:[%s1801 + $0x90] sm:$0xf]
      %v3888 = vld [vmem:[%s1801 + $0x94] sm:$0xf]
      %v3889 = vld [vmem:[%s1801 + $0x98] sm:$0xf]
      %v3890 = vld [vmem:[%s1801 + $0x9c] sm:$0xf]
      %v3891 = vld [vmem:[%s1801 + $0xa0] sm:$0xf]
      %v3892 = vld [vmem:[%s1801 + $0xa4] sm:$0xf]
      %v3893 = vld [vmem:[%s1801 + $0xa8] sm:$0xf]
      %v3894 = vld [vmem:[%s1801 + $0xac] sm:$0xf]
      %v3895 = vld [vmem:[%s1801 + $0xb0] sm:$0xf]
      %v3896 = vld [vmem:[%s1801 + $0xb4] sm:$0xf]
      %v3897 = vld [vmem:[%s1801 + $0xb8] sm:$0xf]
      %v3898 = vld [vmem:[%s1801 + $0xbc] sm:$0xf]
      %v3947 = vunpack.c.l.b16 %v3851
      %v3948 = vunpack.c.l.b16 %v3852
      %v3949 = vunpack.c.l.b16 %v3853
      %v3950 = vunpack.c.l.b16 %v3854
      %v3951 = vunpack.c.l.b16 %v3855
      %v3952 = vunpack.c.l.b16 %v3856
      %v3953 = vunpack.c.l.b16 %v3857
      %v3954 = vunpack.c.l.b16 %v3858
      %v3955 = vunpack.c.l.b16 %v3859
      %v3956 = vunpack.c.l.b16 %v3860
      %v3957 = vunpack.c.l.b16 %v3861
      %v3958 = vunpack.c.l.b16 %v3862
      %v3959 = vunpack.c.l.b16 %v3863
      %v3960 = vunpack.c.l.b16 %v3864
      %v3961 = vunpack.c.l.b16 %v3865
      %v3962 = vunpack.c.l.b16 %v3866
      %v3963 = vunpack.c.l.b16 %v3867
      %v3964 = vunpack.c.l.b16 %v3868
      %v3965 = vunpack.c.l.b16 %v3869
      %v3966 = vunpack.c.l.b16 %v3870
      %v3967 = vunpack.c.l.b16 %v3871
      %v3968 = vunpack.c.l.b16 %v3872
      %v3969 = vunpack.c.l.b16 %v3873
      %v3970 = vunpack.c.l.b16 %v3874
      %v3971 = vunpack.c.l.b16 %v3875
      %v3972 = vunpack.c.l.b16 %v3876
      %v3973 = vunpack.c.l.b16 %v3877
      %v3974 = vunpack.c.l.b16 %v3878
      %v3975 = vunpack.c.l.b16 %v3879
      %v3976 = vunpack.c.l.b16 %v3880
      %v3977 = vunpack.c.l.b16 %v3881
      %v3978 = vunpack.c.l.b16 %v3882
      %v3979 = vunpack.c.l.b16 %v3883
      %v3980 = vunpack.c.l.b16 %v3884
      %v3981 = vunpack.c.l.b16 %v3885
      %v3982 = vunpack.c.l.b16 %v3886
      %v3983 = vunpack.c.l.b16 %v3887
      %v3984 = vunpack.c.l.b16 %v3888
      %v3985 = vunpack.c.l.b16 %v3889
      %v3986 = vunpack.c.l.b16 %v3890
      %v3987 = vunpack.c.l.b16 %v3891
      %v3988 = vunpack.c.l.b16 %v3892
      %v3989 = vunpack.c.l.b16 %v3893
      %v3990 = vunpack.c.l.b16 %v3894
      %v3991 = vunpack.c.l.b16 %v3895
      %v3992 = vunpack.c.l.b16 %v3896
      %v3993 = vunpack.c.l.b16 %v3897
      %v3994 = vunpack.c.l.b16 %v3898
      %v3995 = vpack.c.b16 %v3948, %v3947
      %v3996 = vpack.c.b16 %v3950, %v3949
      %v3997 = vpack.c.b16 %v3952, %v3951
      %v3998 = vpack.c.b16 %v3954, %v3953
      %v3999 = vpack.c.b16 %v3956, %v3955
      %v4000 = vpack.c.b16 %v3958, %v3957
      %v4001 = vpack.c.b16 %v3960, %v3959
      %v4002 = vpack.c.b16 %v3962, %v3961
      %v4003 = vpack.c.b16 %v3964, %v3963
      %v4004 = vpack.c.b16 %v3966, %v3965
      %v4005 = vpack.c.b16 %v3968, %v3967
      %v4006 = vpack.c.b16 %v3970, %v3969
      %v4007 = vpack.c.b16 %v3972, %v3971
      %v4008 = vpack.c.b16 %v3974, %v3973
      %v4009 = vpack.c.b16 %v3976, %v3975
      %v4010 = vpack.c.b16 %v3978, %v3977
      %v4011 = vpack.c.b16 %v3980, %v3979
      %v4012 = vpack.c.b16 %v3982, %v3981
      %v4013 = vpack.c.b16 %v3984, %v3983
      %v4014 = vpack.c.b16 %v3986, %v3985
      %v4015 = vpack.c.b16 %v3988, %v3987
      %v4016 = vpack.c.b16 %v3990, %v3989
      %v4017 = vpack.c.b16 %v3992, %v3991
      %v4018 = vpack.c.b16 %v3994, %v3993
      %4043 = vmatpush.bf16.msra.mxu0 %v4002
      %4044 = vmatpush.bf16.msra.mxu0 %v4001
      %4045 = vmatpush.bf16.msra.mxu0 %v4000
      %4046 = vmatpush.bf16.msra.mxu0 %v3999
      %4047 = vmatpush.bf16.msra.mxu0 %v3998
      %4048 = vmatpush.bf16.msra.mxu0 %v3997
      %4049 = vmatpush.bf16.msra.mxu0 %v3996
      %4050 = vmatpush.bf16.msra.mxu0 %v3995
      %4051 = vmatmul.bf16.gmra.mxu0 %v3739
      %v4052 = vpop.f32.mrf.mxu0
      %v4053 = vadd.f32 0.0, %v4052
      %v4054 = vpop.f32.mrf.mxu0
      %v4055 = vadd.f32 0.0, %v4054
      %4056 = vmatmul.bf16.gmra.mxu0 %v3740
      %v4057 = vpop.f32.mrf.mxu0
      %v4058 = vadd.f32 0.0, %v4057
      %v4059 = vpop.f32.mrf.mxu0
      %v4060 = vadd.f32 0.0, %v4059
      %4061 = vmatmul.bf16.gmra.mxu0 %v3741
      %v4062 = vpop.f32.mrf.mxu0
      %v4063 = vadd.f32 0.0, %v4062
      %v4064 = vpop.f32.mrf.mxu0
      %v4065 = vadd.f32 0.0, %v4064
      %4066 = vmatmul.bf16.gmra.mxu0 %v3742
      %v4067 = vpop.f32.mrf.mxu0
      %v4068 = vadd.f32 0.0, %v4067
      %v4069 = vpop.f32.mrf.mxu0
      %v4070 = vadd.f32 0.0, %v4069
      %4071 = vmatmul.bf16.gmra.mxu0 %v3743
      %v4072 = vpop.f32.mrf.mxu0
      %v4073 = vadd.f32 0.0, %v4072
      %v4074 = vpop.f32.mrf.mxu0
      %v4075 = vadd.f32 0.0, %v4074
      %4076 = vmatmul.bf16.gmra.mxu0 %v3744
      %v4077 = vpop.f32.mrf.mxu0
      %v4078 = vadd.f32 0.0, %v4077
      %v4079 = vpop.f32.mrf.mxu0
      %v4080 = vadd.f32 0.0, %v4079
      %4081 = vmatmul.bf16.gmra.mxu0 %v3745
      %v4082 = vpop.f32.mrf.mxu0
      %v4083 = vadd.f32 0.0, %v4082
      %v4084 = vpop.f32.mrf.mxu0
      %v4085 = vadd.f32 0.0, %v4084
      %4086 = vmatmul.bf16.gmra.mxu0 %v3746
      %v4087 = vpop.f32.mrf.mxu0
      %v4088 = vadd.f32 0.0, %v4087
      %v4089 = vpop.f32.mrf.mxu0
      %v4090 = vadd.f32 0.0, %v4089
      %4091 = vdwg.mxu0
      %4092 = vmatpush.bf16.msra.mxu0 %v4010
      %4093 = vmatpush.bf16.msra.mxu0 %v4009
      %4094 = vmatpush.bf16.msra.mxu0 %v4008
      %4095 = vmatpush.bf16.msra.mxu0 %v4007
      %4096 = vmatpush.bf16.msra.mxu0 %v4006
      %4097 = vmatpush.bf16.msra.mxu0 %v4005
      %4098 = vmatpush.bf16.msra.mxu0 %v4004
      %4099 = vmatpush.bf16.msra.mxu0 %v4003
      %4100 = vmatmul.bf16.gmra.mxu0 %v3787
      %v4101 = vpop.f32.mrf.mxu0
      %v4102 = vadd.f32 %v4053, %v4101
      %v4103 = vpop.f32.mrf.mxu0
      %v4104 = vadd.f32 %v4055, %v4103
      %4105 = vmatmul.bf16.gmra.mxu0 %v3788
      %v4106 = vpop.f32.mrf.mxu0
      %v4107 = vadd.f32 %v4058, %v4106
      %v4108 = vpop.f32.mrf.mxu0
      %v4109 = vadd.f32 %v4060, %v4108
      %4110 = vmatmul.bf16.gmra.mxu0 %v3789
      %v4111 = vpop.f32.mrf.mxu0
      %v4112 = vadd.f32 %v4063, %v4111
      %v4113 = vpop.f32.mrf.mxu0
      %v4114 = vadd.f32 %v4065, %v4113
      %4115 = vmatmul.bf16.gmra.mxu0 %v3790
      %v4116 = vpop.f32.mrf.mxu0
      %v4117 = vadd.f32 %v4068, %v4116
      %v4118 = vpop.f32.mrf.mxu0
      %v4119 = vadd.f32 %v4070, %v4118
      %4120 = vmatmul.bf16.gmra.mxu0 %v3791
      %v4121 = vpop.f32.mrf.mxu0
      %v4122 = vadd.f32 %v4073, %v4121
      %v4123 = vpop.f32.mrf.mxu0
      %v4124 = vadd.f32 %v4075, %v4123
      %4125 = vmatmul.bf16.gmra.mxu0 %v3792
      %v4126 = vpop.f32.mrf.mxu0
      %v4127 = vadd.f32 %v4078, %v4126
      %v4128 = vpop.f32.mrf.mxu0
      %v4129 = vadd.f32 %v4080, %v4128
      %4130 = vmatmul.bf16.gmra.mxu0 %v3793
      %v4131 = vpop.f32.mrf.mxu0
      %v4132 = vadd.f32 %v4083, %v4131
      %v4133 = vpop.f32.mrf.mxu0
      %v4134 = vadd.f32 %v4085, %v4133
      %4135 = vmatmul.bf16.gmra.mxu0 %v3794
      %v4136 = vpop.f32.mrf.mxu0
      %v4137 = vadd.f32 %v4088, %v4136
      %v4138 = vpop.f32.mrf.mxu0
      %v4139 = vadd.f32 %v4090, %v4138
      %4140 = vdwg.mxu0
      %4141 = vmatpush.bf16.msra.mxu0 %v4018
      %4142 = vmatpush.bf16.msra.mxu0 %v4017
      %4143 = vmatpush.bf16.msra.mxu0 %v4016
      %4144 = vmatpush.bf16.msra.mxu0 %v4015
      %4145 = vmatpush.bf16.msra.mxu0 %v4014
      %4146 = vmatpush.bf16.msra.mxu0 %v4013
      %4147 = vmatpush.bf16.msra.mxu0 %v4012
      %4148 = vmatpush.bf16.msra.mxu0 %v4011
      %4149 = vmatmul.bf16.gmra.mxu0 %v3835
      %v4150 = vpop.f32.mrf.mxu0
      %v4151 = vadd.f32 %v4102, %v4150
      %v4152 = vpop.f32.mrf.mxu0
      %v4153 = vadd.f32 %v4104, %v4152
      %4154 = vmatmul.bf16.gmra.mxu0 %v3836
      %v4155 = vpop.f32.mrf.mxu0
      %v4156 = vadd.f32 %v4107, %v4155
      %v4157 = vpop.f32.mrf.mxu0
      %v4158 = vadd.f32 %v4109, %v4157
      %4159 = vmatmul.bf16.gmra.mxu0 %v3837
      %v4160 = vpop.f32.mrf.mxu0
      %v4161 = vadd.f32 %v4112, %v4160
      %v4162 = vpop.f32.mrf.mxu0
      %v4163 = vadd.f32 %v4114, %v4162
      %4164 = vmatmul.bf16.gmra.mxu0 %v3838
      %v4165 = vpop.f32.mrf.mxu0
      %v4166 = vadd.f32 %v4117, %v4165
      %v4167 = vpop.f32.mrf.mxu0
      %v4168 = vadd.f32 %v4119, %v4167
      %4169 = vmatmul.bf16.gmra.mxu0 %v3839
      %v4170 = vpop.f32.mrf.mxu0
      %v4171 = vadd.f32 %v4122, %v4170
      %v4172 = vpop.f32.mrf.mxu0
      %v4173 = vadd.f32 %v4124, %v4172
      %4174 = vmatmul.bf16.gmra.mxu0 %v3840
      %v4175 = vpop.f32.mrf.mxu0
      %v4176 = vadd.f32 %v4127, %v4175
      %v4177 = vpop.f32.mrf.mxu0
      %v4178 = vadd.f32 %v4129, %v4177
      %4179 = vmatmul.bf16.gmra.mxu0 %v3841
      %v4180 = vpop.f32.mrf.mxu0
      %v4181 = vadd.f32 %v4132, %v4180
      %v4182 = vpop.f32.mrf.mxu0
      %v4183 = vadd.f32 %v4134, %v4182
      %4184 = vmatmul.bf16.gmra.mxu0 %v3842
      %v4185 = vpop.f32.mrf.mxu0
      %v4186 = vadd.f32 %v4137, %v4185
      %v4187 = vpop.f32.mrf.mxu0
      %v4188 = vadd.f32 %v4139, %v4187
      %4189 = vdwg.mxu0
      %v4190 = vadd.f32 %v3571, %v4151
      %v4191 = vadd.f32 %v3573, %v4153
      %v4192 = vadd.f32 %v3576, %v4156
      %v4193 = vadd.f32 %v3578, %v4158
      %v4194 = vadd.f32 %v3581, %v4161
      %v4195 = vadd.f32 %v3583, %v4163
      %v4196 = vadd.f32 %v3586, %v4166
      %v4197 = vadd.f32 %v3588, %v4168
      %v4198 = vadd.f32 %v3591, %v4171
      %v4199 = vadd.f32 %v3593, %v4173
      %v4200 = vadd.f32 %v3596, %v4176
      %v4201 = vadd.f32 %v3598, %v4178
      %v4202 = vadd.f32 %v3601, %v4181
      %v4203 = vadd.f32 %v3603, %v4183
      %v4204 = vadd.f32 %v3606, %v4186
      %v4205 = vadd.f32 %v3608, %v4188
      %v4206 = vld [vmem:[%s2] sm:$0x1]
      %v4208 = vperm.slane %v4206, 0
      %v4210 = vmul.f32 %v4190, %v4208
      %v4211 = vmul.f32 %v4191, %v4208
      %v4212 = vmul.f32 %v4192, %v4208
      %v4213 = vmul.f32 %v4193, %v4208
      %v4214 = vmul.f32 %v4194, %v4208
      %v4215 = vmul.f32 %v4195, %v4208
      %v4216 = vmul.f32 %v4196, %v4208
      %v4217 = vmul.f32 %v4197, %v4208
      %v4218 = vmul.f32 %v4198, %v4208
      %v4219 = vmul.f32 %v4199, %v4208
      %v4220 = vmul.f32 %v4200, %v4208
      %v4221 = vmul.f32 %v4201, %v4208
      %v4222 = vmul.f32 %v4202, %v4208
      %v4223 = vmul.f32 %v4203, %v4208
      %v4224 = vmul.f32 %v4204, %v4208
      %v4225 = vmul.f32 %v4205, %v4208
      %v4226 = vld [vmem:[%s3] sm:$0x1]
      %v4228 = vperm.slane %v4226, 0
      %v4230 = vadd.f32 %v4210, %v4228
      %v4231 = vadd.f32 %v4211, %v4228
      %v4232 = vadd.f32 %v4212, %v4228
      %v4233 = vadd.f32 %v4213, %v4228
      %v4234 = vadd.f32 %v4214, %v4228
      %v4235 = vadd.f32 %v4215, %v4228
      %v4236 = vadd.f32 %v4216, %v4228
      %v4237 = vadd.f32 %v4217, %v4228
      %v4238 = vadd.f32 %v4218, %v4228
      %v4239 = vadd.f32 %v4219, %v4228
      %v4240 = vadd.f32 %v4220, %v4228
      %v4241 = vadd.f32 %v4221, %v4228
      %v4242 = vadd.f32 %v4222, %v4228
      %v4243 = vadd.f32 %v4223, %v4228
      %v4244 = vadd.f32 %v4224, %v4228
      %v4245 = vadd.f32 %v4225, %v4228
      %v4246 = vmax.f32 %v4230, 0.0
      %v4247 = vmax.f32 %v4231, 0.0
      %v4248 = vmax.f32 %v4232, 0.0
      %v4249 = vmax.f32 %v4233, 0.0
      %v4250 = vmax.f32 %v4234, 0.0
      %v4251 = vmax.f32 %v4235, 0.0
      %v4252 = vmax.f32 %v4236, 0.0
      %v4253 = vmax.f32 %v4237, 0.0
      %v4254 = vmax.f32 %v4238, 0.0
      %v4255 = vmax.f32 %v4239, 0.0
      %v4256 = vmax.f32 %v4240, 0.0
      %v4257 = vmax.f32 %v4241, 0.0
      %v4258 = vmax.f32 %v4242, 0.0
      %v4259 = vmax.f32 %v4243, 0.0
      %v4260 = vmax.f32 %v4244, 0.0
      %v4261 = vmax.f32 %v4245, 0.0
      %v4262 = vpack.c.bf16 %v4246, %v4246
      %v4263 = vpack.c.bf16 %v4247, %v4247
      %v4264 = vpack.c.bf16 %v4248, %v4248
      %v4265 = vpack.c.bf16 %v4249, %v4249
      %v4266 = vpack.c.bf16 %v4250, %v4250
      %v4267 = vpack.c.bf16 %v4251, %v4251
      %v4268 = vpack.c.bf16 %v4252, %v4252
      %v4269 = vpack.c.bf16 %v4253, %v4253
      %v4270 = vpack.c.bf16 %v4254, %v4254
      %v4271 = vpack.c.bf16 %v4255, %v4255
      %v4272 = vpack.c.bf16 %v4256, %v4256
      %v4273 = vpack.c.bf16 %v4257, %v4257
      %v4274 = vpack.c.bf16 %v4258, %v4258
      %v4275 = vpack.c.bf16 %v4259, %v4259
      %v4276 = vpack.c.bf16 %v4260, %v4260
      %v4277 = vpack.c.bf16 %v4261, %v4261
      %v4279 = vshrl.u32 %v4262, 16
      %v4281 = vrot.slane %v4279, 7
      %v4282 = vshll.u32 %v4262, 16
      %v4284 = vor.u32 %v4281, %v4282
      %v4285 = vrot.slane %v4281, 4
      %v4287 = vshrl.u32 %v4263, 16
      %v4289 = vrot.slane %v4287, 7
      %v4290 = vshll.u32 %v4263, 16
      %v4292 = vor.u32 %v4289, %v4290
      %v4293 = vsel %vm2230, %v4285, %v4292
      %v4294 = vrot.slane %v4289, 4
      %v4296 = vshrl.u32 %v4264, 16
      %v4298 = vrot.slane %v4296, 7
      %v4299 = vshll.u32 %v4264, 16
      %v4301 = vor.u32 %v4298, %v4299
      %v4302 = vrot.slane %v4298, 4
      %v4304 = vshrl.u32 %v4265, 16
      %v4306 = vrot.slane %v4304, 7
      %v4307 = vshll.u32 %v4265, 16
      %v4309 = vor.u32 %v4306, %v4307
      %v4310 = vsel %vm2230, %v4302, %v4309
      %v4311 = vrot.slane %v4306, 4
      %v4313 = vshrl.u32 %v4266, 16
      %v4315 = vrot.slane %v4313, 7
      %v4316 = vshll.u32 %v4266, 16
      %v4318 = vor.u32 %v4315, %v4316
      %v4319 = vrot.slane %v4315, 4
      %v4321 = vshrl.u32 %v4267, 16
      %v4323 = vrot.slane %v4321, 7
      %v4324 = vshll.u32 %v4267, 16
      %v4326 = vor.u32 %v4323, %v4324
      %v4327 = vsel %vm2230, %v4319, %v4326
      %v4328 = vrot.slane %v4323, 4
      %v4330 = vshrl.u32 %v4268, 16
      %v4332 = vrot.slane %v4330, 7
      %v4333 = vshll.u32 %v4268, 16
      %v4335 = vor.u32 %v4332, %v4333
      %v4336 = vrot.slane %v4332, 4
      %v4338 = vshrl.u32 %v4269, 16
      %v4340 = vrot.slane %v4338, 7
      %v4341 = vshll.u32 %v4269, 16
      %v4343 = vor.u32 %v4340, %v4341
      %v4344 = vsel %vm2230, %v4336, %v4343
      %v4345 = vrot.slane %v4340, 4
      %v4347 = vshrl.u32 %v4270, 16
      %v4349 = vrot.slane %v4347, 7
      %v4350 = vshll.u32 %v4270, 16
      %v4352 = vor.u32 %v4349, %v4350
      %v4353 = vrot.slane %v4349, 4
      %v4355 = vshrl.u32 %v4271, 16
      %v4357 = vrot.slane %v4355, 7
      %v4358 = vshll.u32 %v4271, 16
      %v4360 = vor.u32 %v4357, %v4358
      %v4361 = vsel %vm2230, %v4353, %v4360
      %v4362 = vrot.slane %v4357, 4
      %v4364 = vshrl.u32 %v4272, 16
      %v4366 = vrot.slane %v4364, 7
      %v4367 = vshll.u32 %v4272, 16
      %v4369 = vor.u32 %v4366, %v4367
      %v4370 = vrot.slane %v4366, 4
      %v4372 = vshrl.u32 %v4273, 16
      %v4374 = vrot.slane %v4372, 7
      %v4375 = vshll.u32 %v4273, 16
      %v4377 = vor.u32 %v4374, %v4375
      %v4378 = vsel %vm2230, %v4370, %v4377
      %v4379 = vrot.slane %v4374, 4
      %v4381 = vshrl.u32 %v4274, 16
      %v4383 = vrot.slane %v4381, 7
      %v4384 = vshll.u32 %v4274, 16
      %v4386 = vor.u32 %v4383, %v4384
      %v4387 = vrot.slane %v4383, 4
      %v4389 = vshrl.u32 %v4275, 16
      %v4391 = vrot.slane %v4389, 7
      %v4392 = vshll.u32 %v4275, 16
      %v4394 = vor.u32 %v4391, %v4392
      %v4395 = vsel %vm2230, %v4387, %v4394
      %v4396 = vrot.slane %v4391, 4
      %v4398 = vshrl.u32 %v4276, 16
      %v4400 = vrot.slane %v4398, 7
      %v4401 = vshll.u32 %v4276, 16
      %v4403 = vor.u32 %v4400, %v4401
      %v4404 = vrot.slane %v4400, 4
      %v4406 = vshrl.u32 %v4277, 16
      %v4408 = vrot.slane %v4406, 7
      %v4409 = vshll.u32 %v4277, 16
      %v4411 = vor.u32 %v4408, %v4409
      %v4412 = vsel %vm2230, %v4404, %v4411
      %v4413 = vrot.slane %v4408, 4
      %s4438 = scalar_lea.vmem [#allocation2], 108
      %v4439 = vld [vmem:[%s4438] sm:$0xf]
      %v4440 = vsel %vm2393, %v4284, %v4439
      %4441 = vst [vmem:[%s4438] sm:$0xf] %v4440
      %4442 = vst [vmem:[%s4438 + $0x4] sm:$0xf] %v4293
      %v4443 = vld [vmem:[%s4438 + $0x8] sm:$0x1]
      %v4444 = vsel %vm289, %v4294, %v4443
      %4445 = vst [vmem:[%s4438 + $0x8] sm:$0x1] %v4444
      %v4446 = vld [vmem:[%s4438 + $0xc] sm:$0xf]
      %v4447 = vsel %vm2393, %v4301, %v4446
      %4448 = vst [vmem:[%s4438 + $0xc] sm:$0xf] %v4447
      %4449 = vst [vmem:[%s4438 + $0x10] sm:$0xf] %v4310
      %v4450 = vld [vmem:[%s4438 + $0x14] sm:$0x1]
      %v4451 = vsel %vm289, %v4311, %v4450
      %4452 = vst [vmem:[%s4438 + $0x14] sm:$0x1] %v4451
      %v4453 = vld [vmem:[%s4438 + $0x18] sm:$0xf]
      %v4454 = vsel %vm2393, %v4318, %v4453
      %4455 = vst [vmem:[%s4438 + $0x18] sm:$0xf] %v4454
      %4456 = vst [vmem:[%s4438 + $0x1c] sm:$0xf] %v4327
      %v4457 = vld [vmem:[%s4438 + $0x20] sm:$0x1]
      %v4458 = vsel %vm289, %v4328, %v4457
      %4459 = vst [vmem:[%s4438 + $0x20] sm:$0x1] %v4458
      %v4460 = vld [vmem:[%s4438 + $0x24] sm:$0xf]
      %v4461 = vsel %vm2393, %v4335, %v4460
      %4462 = vst [vmem:[%s4438 + $0x24] sm:$0xf] %v4461
      %4463 = vst [vmem:[%s4438 + $0x28] sm:$0xf] %v4344
      %v4464 = vld [vmem:[%s4438 + $0x2c] sm:$0x1]
      %v4465 = vsel %vm289, %v4345, %v4464
      %4466 = vst [vmem:[%s4438 + $0x2c] sm:$0x1] %v4465
      %v4467 = vld [vmem:[%s4438 + $0x30] sm:$0xf]
      %v4468 = vsel %vm2393, %v4352, %v4467
      %4469 = vst [vmem:[%s4438 + $0x30] sm:$0xf] %v4468
      %4470 = vst [vmem:[%s4438 + $0x34] sm:$0xf] %v4361
      %v4471 = vld [vmem:[%s4438 + $0x38] sm:$0x1]
      %v4472 = vsel %vm289, %v4362, %v4471
      %4473 = vst [vmem:[%s4438 + $0x38] sm:$0x1] %v4472
      %v4474 = vld [vmem:[%s4438 + $0x3c] sm:$0xf]
      %v4475 = vsel %vm2393, %v4369, %v4474
      %4476 = vst [vmem:[%s4438 + $0x3c] sm:$0xf] %v4475
      %4477 = vst [vmem:[%s4438 + $0x40] sm:$0xf] %v4378
      %v4478 = vld [vmem:[%s4438 + $0x44] sm:$0x1]
      %v4479 = vsel %vm289, %v4379, %v4478
      %4480 = vst [vmem:[%s4438 + $0x44] sm:$0x1] %v4479
      %v4481 = vld [vmem:[%s4438 + $0x48] sm:$0xf]
      %v4482 = vsel %vm2393, %v4386, %v4481
      %4483 = vst [vmem:[%s4438 + $0x48] sm:$0xf] %v4482
      %4484 = vst [vmem:[%s4438 + $0x4c] sm:$0xf] %v4395
      %v4485 = vld [vmem:[%s4438 + $0x50] sm:$0x1]
      %v4486 = vsel %vm289, %v4396, %v4485
      %4487 = vst [vmem:[%s4438 + $0x50] sm:$0x1] %v4486
      %v4488 = vld [vmem:[%s4438 + $0x54] sm:$0xf]
      %v4489 = vsel %vm2393, %v4403, %v4488
      %4490 = vst [vmem:[%s4438 + $0x54] sm:$0xf] %v4489
      %4491 = vst [vmem:[%s4438 + $0x58] sm:$0xf] %v4412
      %v4492 = vld [vmem:[%s4438 + $0x5c] sm:$0x1]
      %v4493 = vsel %vm289, %v4413, %v4492
      %4494 = vst [vmem:[%s4438 + $0x5c] sm:$0x1] %v4493
      %v4495 = vld [vmem:[#allocation2] sm:$0xf]
      %v4496 = vld [vmem:[#allocation2 + $0x4] sm:$0xf]
      %v4497 = vld [vmem:[#allocation2 + $0xc] sm:$0xf]
      %v4498 = vld [vmem:[#allocation2 + $0x10] sm:$0xf]
      %v4499 = vld [vmem:[#allocation2 + $0x18] sm:$0xf]
      %v4500 = vld [vmem:[#allocation2 + $0x1c] sm:$0xf]
      %v4501 = vld [vmem:[#allocation2 + $0x24] sm:$0xf]
      %v4502 = vld [vmem:[#allocation2 + $0x28] sm:$0xf]
      %v4503 = vld [vmem:[#allocation2 + $0x30] sm:$0xf]
      %v4504 = vld [vmem:[#allocation2 + $0x34] sm:$0xf]
      %v4505 = vld [vmem:[#allocation2 + $0x3c] sm:$0xf]
      %v4506 = vld [vmem:[#allocation2 + $0x40] sm:$0xf]
      %v4507 = vld [vmem:[#allocation2 + $0x48] sm:$0xf]
      %v4508 = vld [vmem:[#allocation2 + $0x4c] sm:$0xf]
      %v4509 = vld [vmem:[#allocation2 + $0x54] sm:$0xf]
      %v4510 = vld [vmem:[#allocation2 + $0x58] sm:$0xf]
      %v4511 = vld [vmem:[#allocation2 + $0x8] sm:$0x1]
      %v4512 = vld [vmem:[#allocation2 + $0x14] sm:$0x1]
      %v4513 = vld [vmem:[#allocation2 + $0x20] sm:$0x1]
      %v4514 = vld [vmem:[#allocation2 + $0x2c] sm:$0x1]
      %v4515 = vld [vmem:[#allocation2 + $0x38] sm:$0x1]
      %v4516 = vld [vmem:[#allocation2 + $0x44] sm:$0x1]
      %v4517 = vld [vmem:[#allocation2 + $0x50] sm:$0x1]
      %v4518 = vld [vmem:[#allocation2 + $0x5c] sm:$0x1]
      %v4519 = vld [vmem:[#allocation2] sm:$0xe]
      %v4520 = vld [vmem:[#allocation2 + $0xc] sm:$0xe]
      %v4521 = vld [vmem:[#allocation2 + $0x18] sm:$0xe]
      %v4522 = vld [vmem:[#allocation2 + $0x24] sm:$0xe]
      %v4523 = vld [vmem:[#allocation2 + $0x30] sm:$0xe]
      %v4524 = vld [vmem:[#allocation2 + $0x3c] sm:$0xe]
      %v4525 = vld [vmem:[#allocation2 + $0x48] sm:$0xe]
      %v4526 = vld [vmem:[#allocation2 + $0x54] sm:$0xe]
      %v4543 = vunpack.c.l.b16 %v4495
      %v4544 = vunpack.c.l.b16 %v4496
      %v4545 = vunpack.c.l.b16 %v4497
      %v4546 = vunpack.c.l.b16 %v4498
      %v4547 = vunpack.c.l.b16 %v4499
      %v4548 = vunpack.c.l.b16 %v4500
      %v4549 = vunpack.c.l.b16 %v4501
      %v4550 = vunpack.c.l.b16 %v4502
      %v4551 = vunpack.c.l.b16 %v4503
      %v4552 = vunpack.c.l.b16 %v4504
      %v4553 = vunpack.c.l.b16 %v4505
      %v4554 = vunpack.c.l.b16 %v4506
      %v4555 = vunpack.c.l.b16 %v4507
      %v4556 = vunpack.c.l.b16 %v4508
      %v4557 = vunpack.c.l.b16 %v4509
      %v4558 = vunpack.c.l.b16 %v4510
      %v4559 = vpack.c.b16 %v4544, %v4543
      %v4560 = vpack.c.b16 %v4546, %v4545
      %v4561 = vpack.c.b16 %v4548, %v4547
      %v4562 = vpack.c.b16 %v4550, %v4549
      %v4563 = vpack.c.b16 %v4552, %v4551
      %v4564 = vpack.c.b16 %v4554, %v4553
      %v4565 = vpack.c.b16 %v4556, %v4555
      %v4566 = vpack.c.b16 %v4558, %v4557
      %v4583 = vunpack.c.l.b16 %v4511
      %v4584 = vunpack.c.l.b16 %v4512
      %v4585 = vunpack.c.l.b16 %v4513
      %v4586 = vunpack.c.l.b16 %v4514
      %v4587 = vunpack.c.l.b16 %v4515
      %v4588 = vunpack.c.l.b16 %v4516
      %v4589 = vunpack.c.l.b16 %v4517
      %v4590 = vunpack.c.l.b16 %v4518
      %v4591 = vpack.c.b16 %v4583, %v4583
      %v4592 = vpack.c.b16 %v4584, %v4584
      %v4593 = vpack.c.b16 %v4585, %v4585
      %v4594 = vpack.c.b16 %v4586, %v4586
      %v4595 = vpack.c.b16 %v4587, %v4587
      %v4596 = vpack.c.b16 %v4588, %v4588
      %v4597 = vpack.c.b16 %v4589, %v4589
      %v4598 = vpack.c.b16 %v4590, %v4590
      %vm4599 = vsmask.f32 7424
      %v4601 = vshrl.u32 %v4559, 16
      %v4603 = vshll.u32 %v4559, 16
      %v4605 = vrot.slane %v4603, 1
      %v4606 = vor.u32 %v4601, %v4605
      %v4608 = vshll.u32 %v4591, 16
      %v4610 = vrot.slane %v4608, 1
      %v4611 = vsel %vm4599, %v4606, %v4610
      %v4613 = vshrl.u32 %v4560, 16
      %v4615 = vshll.u32 %v4560, 16
      %v4617 = vrot.slane %v4615, 1
      %v4618 = vor.u32 %v4613, %v4617
      %v4620 = vshll.u32 %v4592, 16
      %v4622 = vrot.slane %v4620, 1
      %v4623 = vsel %vm4599, %v4618, %v4622
      %v4625 = vshrl.u32 %v4561, 16
      %v4627 = vshll.u32 %v4561, 16
      %v4629 = vrot.slane %v4627, 1
      %v4630 = vor.u32 %v4625, %v4629
      %v4632 = vshll.u32 %v4593, 16
      %v4634 = vrot.slane %v4632, 1
      %v4635 = vsel %vm4599, %v4630, %v4634
      %v4637 = vshrl.u32 %v4562, 16
      %v4639 = vshll.u32 %v4562, 16
      %v4641 = vrot.slane %v4639, 1
      %v4642 = vor.u32 %v4637, %v4641
      %v4644 = vshll.u32 %v4594, 16
      %v4646 = vrot.slane %v4644, 1
      %v4647 = vsel %vm4599, %v4642, %v4646
      %v4649 = vshrl.u32 %v4563, 16
      %v4651 = vshll.u32 %v4563, 16
      %v4653 = vrot.slane %v4651, 1
      %v4654 = vor.u32 %v4649, %v4653
      %v4656 = vshll.u32 %v4595, 16
      %v4658 = vrot.slane %v4656, 1
      %v4659 = vsel %vm4599, %v4654, %v4658
      %v4661 = vshrl.u32 %v4564, 16
      %v4663 = vshll.u32 %v4564, 16
      %v4665 = vrot.slane %v4663, 1
      %v4666 = vor.u32 %v4661, %v4665
      %v4668 = vshll.u32 %v4596, 16
      %v4670 = vrot.slane %v4668, 1
      %v4671 = vsel %vm4599, %v4666, %v4670
      %v4673 = vshrl.u32 %v4565, 16
      %v4675 = vshll.u32 %v4565, 16
      %v4677 = vrot.slane %v4675, 1
      %v4678 = vor.u32 %v4673, %v4677
      %v4680 = vshll.u32 %v4597, 16
      %v4682 = vrot.slane %v4680, 1
      %v4683 = vsel %vm4599, %v4678, %v4682
      %v4685 = vshrl.u32 %v4566, 16
      %v4687 = vshll.u32 %v4566, 16
      %v4689 = vrot.slane %v4687, 1
      %v4690 = vor.u32 %v4685, %v4689
      %v4692 = vshll.u32 %v4598, 16
      %v4694 = vrot.slane %v4692, 1
      %v4695 = vsel %vm4599, %v4690, %v4694
      %v4712 = vunpack.c.l.b16 %v4519
      %v4713 = vunpack.c.l.b16 %v4520
      %v4714 = vunpack.c.l.b16 %v4521
      %v4715 = vunpack.c.l.b16 %v4522
      %v4716 = vunpack.c.l.b16 %v4523
      %v4717 = vunpack.c.l.b16 %v4524
      %v4718 = vunpack.c.l.b16 %v4525
      %v4719 = vunpack.c.l.b16 %v4526
      %v4720 = vpack.c.b16 %v4544, %v4712
      %v4721 = vpack.c.b16 %v4546, %v4713
      %v4722 = vpack.c.b16 %v4548, %v4714
      %v4723 = vpack.c.b16 %v4550, %v4715
      %v4724 = vpack.c.b16 %v4552, %v4716
      %v4725 = vpack.c.b16 %v4554, %v4717
      %v4726 = vpack.c.b16 %v4556, %v4718
      %v4727 = vpack.c.b16 %v4558, %v4719
      %vm4728 = vcmask 1046528
      %v4729 = vrot.slane %v4720, 1
      %v4730 = vrot.slane %v4591, 1
      %v4731 = vsel %vm4728, %v4729, %v4730
      %v4732 = vrot.slane %v4721, 1
      %v4733 = vrot.slane %v4592, 1
      %v4734 = vsel %vm4728, %v4732, %v4733
      %v4735 = vrot.slane %v4722, 1
      %v4736 = vrot.slane %v4593, 1
      %v4737 = vsel %vm4728, %v4735, %v4736
      %v4738 = vrot.slane %v4723, 1
      %v4739 = vrot.slane %v4594, 1
      %v4740 = vsel %vm4728, %v4738, %v4739
      %v4741 = vrot.slane %v4724, 1
      %v4742 = vrot.slane %v4595, 1
      %v4743 = vsel %vm4728, %v4741, %v4742
      %v4744 = vrot.slane %v4725, 1
      %v4745 = vrot.slane %v4596, 1
      %v4746 = vsel %vm4728, %v4744, %v4745
      %v4747 = vrot.slane %v4726, 1
      %v4748 = vrot.slane %v4597, 1
      %v4749 = vsel %vm4728, %v4747, %v4748
      %v4750 = vrot.slane %v4727, 1
      %v4751 = vrot.slane %v4598, 1
      %v4752 = vsel %vm4728, %v4750, %v4751
      %v4761 = vld [vmem:[%s4] sm:$0xf]
      %v4762 = vld [vmem:[%s4 + $0x4] sm:$0xf]
      %v4763 = vld [vmem:[%s4 + $0x8] sm:$0xf]
      %v4764 = vld [vmem:[%s4 + $0xc] sm:$0xf]
      %v4765 = vld [vmem:[%s4 + $0x10] sm:$0xf]
      %v4766 = vld [vmem:[%s4 + $0x14] sm:$0xf]
      %v4767 = vld [vmem:[%s4 + $0x18] sm:$0xf]
      %v4768 = vld [vmem:[%s4 + $0x1c] sm:$0xf]
      %v4769 = vld [vmem:[%s4 + $0x20] sm:$0xf]
      %v4770 = vld [vmem:[%s4 + $0x24] sm:$0xf]
      %v4771 = vld [vmem:[%s4 + $0x28] sm:$0xf]
      %v4772 = vld [vmem:[%s4 + $0x2c] sm:$0xf]
      %v4773 = vld [vmem:[%s4 + $0x30] sm:$0xf]
      %v4774 = vld [vmem:[%s4 + $0x34] sm:$0xf]
      %v4775 = vld [vmem:[%s4 + $0x38] sm:$0xf]
      %v4776 = vld [vmem:[%s4 + $0x3c] sm:$0xf]
      %v4777 = vld [vmem:[%s4 + $0x40] sm:$0xf]
      %v4778 = vld [vmem:[%s4 + $0x44] sm:$0xf]
      %v4779 = vld [vmem:[%s4 + $0x48] sm:$0xf]
      %v4780 = vld [vmem:[%s4 + $0x4c] sm:$0xf]
      %v4781 = vld [vmem:[%s4 + $0x50] sm:$0xf]
      %v4782 = vld [vmem:[%s4 + $0x54] sm:$0xf]
      %v4783 = vld [vmem:[%s4 + $0x58] sm:$0xf]
      %v4784 = vld [vmem:[%s4 + $0x5c] sm:$0xf]
      %v4785 = vld [vmem:[%s4 + $0x60] sm:$0xf]
      %v4786 = vld [vmem:[%s4 + $0x64] sm:$0xf]
      %v4787 = vld [vmem:[%s4 + $0x68] sm:$0xf]
      %v4788 = vld [vmem:[%s4 + $0x6c] sm:$0xf]
      %v4789 = vld [vmem:[%s4 + $0x70] sm:$0xf]
      %v4790 = vld [vmem:[%s4 + $0x74] sm:$0xf]
      %v4791 = vld [vmem:[%s4 + $0x78] sm:$0xf]
      %v4792 = vld [vmem:[%s4 + $0x7c] sm:$0xf]
      %v4793 = vld [vmem:[%s4 + $0x80] sm:$0xf]
      %v4794 = vld [vmem:[%s4 + $0x84] sm:$0xf]
      %v4795 = vld [vmem:[%s4 + $0x88] sm:$0xf]
      %v4796 = vld [vmem:[%s4 + $0x8c] sm:$0xf]
      %v4797 = vld [vmem:[%s4 + $0x90] sm:$0xf]
      %v4798 = vld [vmem:[%s4 + $0x94] sm:$0xf]
      %v4799 = vld [vmem:[%s4 + $0x98] sm:$0xf]
      %v4800 = vld [vmem:[%s4 + $0x9c] sm:$0xf]
      %v4801 = vld [vmem:[%s4 + $0xa0] sm:$0xf]
      %v4802 = vld [vmem:[%s4 + $0xa4] sm:$0xf]
      %v4803 = vld [vmem:[%s4 + $0xa8] sm:$0xf]
      %v4804 = vld [vmem:[%s4 + $0xac] sm:$0xf]
      %v4805 = vld [vmem:[%s4 + $0xb0] sm:$0xf]
      %v4806 = vld [vmem:[%s4 + $0xb4] sm:$0xf]
      %v4807 = vld [vmem:[%s4 + $0xb8] sm:$0xf]
      %v4808 = vld [vmem:[%s4 + $0xbc] sm:$0xf]
      %v4809 = vld [vmem:[%s2391] sm:$0xf]
      %v4810 = vld [vmem:[%s2391 + $0x4] sm:$0xf]
      %v4811 = vld [vmem:[%s2391 + $0xc] sm:$0xf]
      %v4812 = vld [vmem:[%s2391 + $0x10] sm:$0xf]
      %v4813 = vld [vmem:[%s2391 + $0x18] sm:$0xf]
      %v4814 = vld [vmem:[%s2391 + $0x1c] sm:$0xf]
      %v4815 = vld [vmem:[%s2391 + $0x24] sm:$0xf]
      %v4816 = vld [vmem:[%s2391 + $0x28] sm:$0xf]
      %v4817 = vld [vmem:[%s2391 + $0x30] sm:$0xf]
      %v4818 = vld [vmem:[%s2391 + $0x34] sm:$0xf]
      %v4819 = vld [vmem:[%s2391 + $0x3c] sm:$0xf]
      %v4820 = vld [vmem:[%s2391 + $0x40] sm:$0xf]
      %v4821 = vld [vmem:[%s2391 + $0x48] sm:$0xf]
      %v4822 = vld [vmem:[%s2391 + $0x4c] sm:$0xf]
      %v4823 = vld [vmem:[%s2391 + $0x54] sm:$0xf]
      %v4824 = vld [vmem:[%s2391 + $0x58] sm:$0xf]
      %v4825 = vld [vmem:[%s2391 + $0x8] sm:$0x1]
      %v4826 = vld [vmem:[%s2391 + $0x14] sm:$0x1]
      %v4827 = vld [vmem:[%s2391 + $0x20] sm:$0x1]
      %v4828 = vld [vmem:[%s2391 + $0x2c] sm:$0x1]
      %v4829 = vld [vmem:[%s2391 + $0x38] sm:$0x1]
      %v4830 = vld [vmem:[%s2391 + $0x44] sm:$0x1]
      %v4831 = vld [vmem:[%s2391 + $0x50] sm:$0x1]
      %v4832 = vld [vmem:[%s2391 + $0x5c] sm:$0x1]
      %v4833 = vld [vmem:[%s2391] sm:$0xe]
      %v4834 = vld [vmem:[%s2391 + $0xc] sm:$0xe]
      %v4835 = vld [vmem:[%s2391 + $0x18] sm:$0xe]
      %v4836 = vld [vmem:[%s2391 + $0x24] sm:$0xe]
      %v4837 = vld [vmem:[%s2391 + $0x30] sm:$0xe]
      %v4838 = vld [vmem:[%s2391 + $0x3c] sm:$0xe]
      %v4839 = vld [vmem:[%s2391 + $0x48] sm:$0xe]
      %v4840 = vld [vmem:[%s2391 + $0x54] sm:$0xe]
      %v4857 = vunpack.c.l.b16 %v4809
      %v4858 = vunpack.c.l.b16 %v4810
      %v4859 = vunpack.c.l.b16 %v4811
      %v4860 = vunpack.c.l.b16 %v4812
      %v4861 = vunpack.c.l.b16 %v4813
      %v4862 = vunpack.c.l.b16 %v4814
      %v4863 = vunpack.c.l.b16 %v4815
      %v4864 = vunpack.c.l.b16 %v4816
      %v4865 = vunpack.c.l.b16 %v4817
      %v4866 = vunpack.c.l.b16 %v4818
      %v4867 = vunpack.c.l.b16 %v4819
      %v4868 = vunpack.c.l.b16 %v4820
      %v4869 = vunpack.c.l.b16 %v4821
      %v4870 = vunpack.c.l.b16 %v4822
      %v4871 = vunpack.c.l.b16 %v4823
      %v4872 = vunpack.c.l.b16 %v4824
      %v4873 = vpack.c.b16 %v4858, %v4857
      %v4874 = vpack.c.b16 %v4860, %v4859
      %v4875 = vpack.c.b16 %v4862, %v4861
      %v4876 = vpack.c.b16 %v4864, %v4863
      %v4877 = vpack.c.b16 %v4866, %v4865
      %v4878 = vpack.c.b16 %v4868, %v4867
      %v4879 = vpack.c.b16 %v4870, %v4869
      %v4880 = vpack.c.b16 %v4872, %v4871
      %v4897 = vunpack.c.l.b16 %v4825
      %v4898 = vunpack.c.l.b16 %v4826
      %v4899 = vunpack.c.l.b16 %v4827
      %v4900 = vunpack.c.l.b16 %v4828
      %v4901 = vunpack.c.l.b16 %v4829
      %v4902 = vunpack.c.l.b16 %v4830
      %v4903 = vunpack.c.l.b16 %v4831
      %v4904 = vunpack.c.l.b16 %v4832
      %v4905 = vpack.c.b16 %v4897, %v4897
      %v4906 = vpack.c.b16 %v4898, %v4898
      %v4907 = vpack.c.b16 %v4899, %v4899
      %v4908 = vpack.c.b16 %v4900, %v4900
      %v4909 = vpack.c.b16 %v4901, %v4901
      %v4910 = vpack.c.b16 %v4902, %v4902
      %v4911 = vpack.c.b16 %v4903, %v4903
      %v4912 = vpack.c.b16 %v4904, %v4904
      %v4914 = vshrl.u32 %v4873, 16
      %v4916 = vshll.u32 %v4873, 16
      %v4918 = vrot.slane %v4916, 1
      %v4919 = vor.u32 %v4914, %v4918
      %v4921 = vshll.u32 %v4905, 16
      %v4923 = vrot.slane %v4921, 1
      %v4924 = vsel %vm4599, %v4919, %v4923
      %v4926 = vshrl.u32 %v4874, 16
      %v4928 = vshll.u32 %v4874, 16
      %v4930 = vrot.slane %v4928, 1
      %v4931 = vor.u32 %v4926, %v4930
      %v4933 = vshll.u32 %v4906, 16
      %v4935 = vrot.slane %v4933, 1
      %v4936 = vsel %vm4599, %v4931, %v4935
      %v4938 = vshrl.u32 %v4875, 16
      %v4940 = vshll.u32 %v4875, 16
      %v4942 = vrot.slane %v4940, 1
      %v4943 = vor.u32 %v4938, %v4942
      %v4945 = vshll.u32 %v4907, 16
      %v4947 = vrot.slane %v4945, 1
      %v4948 = vsel %vm4599, %v4943, %v4947
      %v4950 = vshrl.u32 %v4876, 16
      %v4952 = vshll.u32 %v4876, 16
      %v4954 = vrot.slane %v4952, 1
      %v4955 = vor.u32 %v4950, %v4954
      %v4957 = vshll.u32 %v4908, 16
      %v4959 = vrot.slane %v4957, 1
      %v4960 = vsel %vm4599, %v4955, %v4959
      %v4962 = vshrl.u32 %v4877, 16
      %v4964 = vshll.u32 %v4877, 16
      %v4966 = vrot.slane %v4964, 1
      %v4967 = vor.u32 %v4962, %v4966
      %v4969 = vshll.u32 %v4909, 16
      %v4971 = vrot.slane %v4969, 1
      %v4972 = vsel %vm4599, %v4967, %v4971
      %v4974 = vshrl.u32 %v4878, 16
      %v4976 = vshll.u32 %v4878, 16
      %v4978 = vrot.slane %v4976, 1
      %v4979 = vor.u32 %v4974, %v4978
      %v4981 = vshll.u32 %v4910, 16
      %v4983 = vrot.slane %v4981, 1
      %v4984 = vsel %vm4599, %v4979, %v4983
      %v4986 = vshrl.u32 %v4879, 16
      %v4988 = vshll.u32 %v4879, 16
      %v4990 = vrot.slane %v4988, 1
      %v4991 = vor.u32 %v4986, %v4990
      %v4993 = vshll.u32 %v4911, 16
      %v4995 = vrot.slane %v4993, 1
      %v4996 = vsel %vm4599, %v4991, %v4995
      %v4998 = vshrl.u32 %v4880, 16
      %v5000 = vshll.u32 %v4880, 16
      %v5002 = vrot.slane %v5000, 1
      %v5003 = vor.u32 %v4998, %v5002
      %v5005 = vshll.u32 %v4912, 16
      %v5007 = vrot.slane %v5005, 1
      %v5008 = vsel %vm4599, %v5003, %v5007
      %v5025 = vunpack.c.l.b16 %v4833
      %v5026 = vunpack.c.l.b16 %v4834
      %v5027 = vunpack.c.l.b16 %v4835
      %v5028 = vunpack.c.l.b16 %v4836
      %v5029 = vunpack.c.l.b16 %v4837
      %v5030 = vunpack.c.l.b16 %v4838
      %v5031 = vunpack.c.l.b16 %v4839
      %v5032 = vunpack.c.l.b16 %v4840
      %v5033 = vpack.c.b16 %v4858, %v5025
      %v5034 = vpack.c.b16 %v4860, %v5026
      %v5035 = vpack.c.b16 %v4862, %v5027
      %v5036 = vpack.c.b16 %v4864, %v5028
      %v5037 = vpack.c.b16 %v4866, %v5029
      %v5038 = vpack.c.b16 %v4868, %v5030
      %v5039 = vpack.c.b16 %v4870, %v5031
      %v5040 = vpack.c.b16 %v4872, %v5032
      %v5041 = vrot.slane %v5033, 1
      %v5042 = vrot.slane %v4905, 1
      %v5043 = vsel %vm4728, %v5041, %v5042
      %v5044 = vrot.slane %v5034, 1
      %v5045 = vrot.slane %v4906, 1
      %v5046 = vsel %vm4728, %v5044, %v5045
      %v5047 = vrot.slane %v5035, 1
      %v5048 = vrot.slane %v4907, 1
      %v5049 = vsel %vm4728, %v5047, %v5048
      %v5050 = vrot.slane %v5036, 1
      %v5051 = vrot.slane %v4908, 1
      %v5052 = vsel %vm4728, %v5050, %v5051
      %v5053 = vrot.slane %v5037, 1
      %v5054 = vrot.slane %v4909, 1
      %v5055 = vsel %vm4728, %v5053, %v5054
      %v5056 = vrot.slane %v5038, 1
      %v5057 = vrot.slane %v4910, 1
      %v5058 = vsel %vm4728, %v5056, %v5057
      %v5059 = vrot.slane %v5039, 1
      %v5060 = vrot.slane %v4911, 1
      %v5061 = vsel %vm4728, %v5059, %v5060
      %v5062 = vrot.slane %v5040, 1
      %v5063 = vrot.slane %v4912, 1
      %v5064 = vsel %vm4728, %v5062, %v5063
      %s5073 = scalar_lea.vmem %s4, 192
      %v5074 = vld [vmem:[%s5073] sm:$0xf]
      %v5075 = vld [vmem:[%s5073 + $0x4] sm:$0xf]
      %v5076 = vld [vmem:[%s5073 + $0x8] sm:$0xf]
      %v5077 = vld [vmem:[%s5073 + $0xc] sm:$0xf]
      %v5078 = vld [vmem:[%s5073 + $0x10] sm:$0xf]
      %v5079 = vld [vmem:[%s5073 + $0x14] sm:$0xf]
      %v5080 = vld [vmem:[%s5073 + $0x18] sm:$0xf]
      %v5081 = vld [vmem:[%s5073 + $0x1c] sm:$0xf]
      %v5082 = vld [vmem:[%s5073 + $0x20] sm:$0xf]
      %v5083 = vld [vmem:[%s5073 + $0x24] sm:$0xf]
      %v5084 = vld [vmem:[%s5073 + $0x28] sm:$0xf]
      %v5085 = vld [vmem:[%s5073 + $0x2c] sm:$0xf]
      %v5086 = vld [vmem:[%s5073 + $0x30] sm:$0xf]
      %v5087 = vld [vmem:[%s5073 + $0x34] sm:$0xf]
      %v5088 = vld [vmem:[%s5073 + $0x38] sm:$0xf]
      %v5089 = vld [vmem:[%s5073 + $0x3c] sm:$0xf]
      %v5090 = vld [vmem:[%s5073 + $0x40] sm:$0xf]
      %v5091 = vld [vmem:[%s5073 + $0x44] sm:$0xf]
      %v5092 = vld [vmem:[%s5073 + $0x48] sm:$0xf]
      %v5093 = vld [vmem:[%s5073 + $0x4c] sm:$0xf]
      %v5094 = vld [vmem:[%s5073 + $0x50] sm:$0xf]
      %v5095 = vld [vmem:[%s5073 + $0x54] sm:$0xf]
      %v5096 = vld [vmem:[%s5073 + $0x58] sm:$0xf]
      %v5097 = vld [vmem:[%s5073 + $0x5c] sm:$0xf]
      %v5098 = vld [vmem:[%s5073 + $0x60] sm:$0xf]
      %v5099 = vld [vmem:[%s5073 + $0x64] sm:$0xf]
      %v5100 = vld [vmem:[%s5073 + $0x68] sm:$0xf]
      %v5101 = vld [vmem:[%s5073 + $0x6c] sm:$0xf]
      %v5102 = vld [vmem:[%s5073 + $0x70] sm:$0xf]
      %v5103 = vld [vmem:[%s5073 + $0x74] sm:$0xf]
      %v5104 = vld [vmem:[%s5073 + $0x78] sm:$0xf]
      %v5105 = vld [vmem:[%s5073 + $0x7c] sm:$0xf]
      %v5106 = vld [vmem:[%s5073 + $0x80] sm:$0xf]
      %v5107 = vld [vmem:[%s5073 + $0x84] sm:$0xf]
      %v5108 = vld [vmem:[%s5073 + $0x88] sm:$0xf]
      %v5109 = vld [vmem:[%s5073 + $0x8c] sm:$0xf]
      %v5110 = vld [vmem:[%s5073 + $0x90] sm:$0xf]
      %v5111 = vld [vmem:[%s5073 + $0x94] sm:$0xf]
      %v5112 = vld [vmem:[%s5073 + $0x98] sm:$0xf]
      %v5113 = vld [vmem:[%s5073 + $0x9c] sm:$0xf]
      %v5114 = vld [vmem:[%s5073 + $0xa0] sm:$0xf]
      %v5115 = vld [vmem:[%s5073 + $0xa4] sm:$0xf]
      %v5116 = vld [vmem:[%s5073 + $0xa8] sm:$0xf]
      %v5117 = vld [vmem:[%s5073 + $0xac] sm:$0xf]
      %v5118 = vld [vmem:[%s5073 + $0xb0] sm:$0xf]
      %v5119 = vld [vmem:[%s5073 + $0xb4] sm:$0xf]
      %v5120 = vld [vmem:[%s5073 + $0xb8] sm:$0xf]
      %v5121 = vld [vmem:[%s5073 + $0xbc] sm:$0xf]
      %v5170 = vunpack.c.l.b16 %v5074
      %v5171 = vunpack.c.l.b16 %v5075
      %v5172 = vunpack.c.l.b16 %v5076
      %v5173 = vunpack.c.l.b16 %v5077
      %v5174 = vunpack.c.l.b16 %v5078
      %v5175 = vunpack.c.l.b16 %v5079
      %v5176 = vunpack.c.l.b16 %v5080
      %v5177 = vunpack.c.l.b16 %v5081
      %v5178 = vunpack.c.l.b16 %v5082
      %v5179 = vunpack.c.l.b16 %v5083
      %v5180 = vunpack.c.l.b16 %v5084
      %v5181 = vunpack.c.l.b16 %v5085
      %v5182 = vunpack.c.l.b16 %v5086
      %v5183 = vunpack.c.l.b16 %v5087
      %v5184 = vunpack.c.l.b16 %v5088
      %v5185 = vunpack.c.l.b16 %v5089
      %v5186 = vunpack.c.l.b16 %v5090
      %v5187 = vunpack.c.l.b16 %v5091
      %v5188 = vunpack.c.l.b16 %v5092
      %v5189 = vunpack.c.l.b16 %v5093
      %v5190 = vunpack.c.l.b16 %v5094
      %v5191 = vunpack.c.l.b16 %v5095
      %v5192 = vunpack.c.l.b16 %v5096
      %v5193 = vunpack.c.l.b16 %v5097
      %v5194 = vunpack.c.l.b16 %v5098
      %v5195 = vunpack.c.l.b16 %v5099
      %v5196 = vunpack.c.l.b16 %v5100
      %v5197 = vunpack.c.l.b16 %v5101
      %v5198 = vunpack.c.l.b16 %v5102
      %v5199 = vunpack.c.l.b16 %v5103
      %v5200 = vunpack.c.l.b16 %v5104
      %v5201 = vunpack.c.l.b16 %v5105
      %v5202 = vunpack.c.l.b16 %v5106
      %v5203 = vunpack.c.l.b16 %v5107
      %v5204 = vunpack.c.l.b16 %v5108
      %v5205 = vunpack.c.l.b16 %v5109
      %v5206 = vunpack.c.l.b16 %v5110
      %v5207 = vunpack.c.l.b16 %v5111
      %v5208 = vunpack.c.l.b16 %v5112
      %v5209 = vunpack.c.l.b16 %v5113
      %v5210 = vunpack.c.l.b16 %v5114
      %v5211 = vunpack.c.l.b16 %v5115
      %v5212 = vunpack.c.l.b16 %v5116
      %v5213 = vunpack.c.l.b16 %v5117
      %v5214 = vunpack.c.l.b16 %v5118
      %v5215 = vunpack.c.l.b16 %v5119
      %v5216 = vunpack.c.l.b16 %v5120
      %v5217 = vunpack.c.l.b16 %v5121
      %v5218 = vpack.c.b16 %v5171, %v5170
      %v5219 = vpack.c.b16 %v5173, %v5172
      %v5220 = vpack.c.b16 %v5175, %v5174
      %v5221 = vpack.c.b16 %v5177, %v5176
      %v5222 = vpack.c.b16 %v5179, %v5178
      %v5223 = vpack.c.b16 %v5181, %v5180
      %v5224 = vpack.c.b16 %v5183, %v5182
      %v5225 = vpack.c.b16 %v5185, %v5184
      %v5226 = vpack.c.b16 %v5187, %v5186
      %v5227 = vpack.c.b16 %v5189, %v5188
      %v5228 = vpack.c.b16 %v5191, %v5190
      %v5229 = vpack.c.b16 %v5193, %v5192
      %v5230 = vpack.c.b16 %v5195, %v5194
      %v5231 = vpack.c.b16 %v5197, %v5196
      %v5232 = vpack.c.b16 %v5199, %v5198
      %v5233 = vpack.c.b16 %v5201, %v5200
      %v5234 = vpack.c.b16 %v5203, %v5202
      %v5235 = vpack.c.b16 %v5205, %v5204
      %v5236 = vpack.c.b16 %v5207, %v5206
      %v5237 = vpack.c.b16 %v5209, %v5208
      %v5238 = vpack.c.b16 %v5211, %v5210
      %v5239 = vpack.c.b16 %v5213, %v5212
      %v5240 = vpack.c.b16 %v5215, %v5214
      %v5241 = vpack.c.b16 %v5217, %v5216
      %5266 = vmatpush.bf16.msra.mxu0 %v5225
      %5267 = vmatpush.bf16.msra.mxu0 %v5224
      %5268 = vmatpush.bf16.msra.mxu0 %v5223
      %5269 = vmatpush.bf16.msra.mxu0 %v5222
      %5270 = vmatpush.bf16.msra.mxu0 %v5221
      %5271 = vmatpush.bf16.msra.mxu0 %v5220
      %5272 = vmatpush.bf16.msra.mxu0 %v5219
      %5273 = vmatpush.bf16.msra.mxu0 %v5218
      %5274 = vmatmul.bf16.gmra.mxu0 %v4873
      %v5275 = vpop.f32.mrf.mxu0
      %v5276 = vadd.f32 0.0, %v5275
      %v5277 = vpop.f32.mrf.mxu0
      %v5278 = vadd.f32 0.0, %v5277
      %5279 = vmatmul.bf16.gmra.mxu0 %v4874
      %v5280 = vpop.f32.mrf.mxu0
      %v5281 = vadd.f32 0.0, %v5280
      %v5282 = vpop.f32.mrf.mxu0
      %v5283 = vadd.f32 0.0, %v5282
      %5284 = vmatmul.bf16.gmra.mxu0 %v4875
      %v5285 = vpop.f32.mrf.mxu0
      %v5286 = vadd.f32 0.0, %v5285
      %v5287 = vpop.f32.mrf.mxu0
      %v5288 = vadd.f32 0.0, %v5287
      %5289 = vmatmul.bf16.gmra.mxu0 %v4876
      %v5290 = vpop.f32.mrf.mxu0
      %v5291 = vadd.f32 0.0, %v5290
      %v5292 = vpop.f32.mrf.mxu0
      %v5293 = vadd.f32 0.0, %v5292
      %5294 = vmatmul.bf16.gmra.mxu0 %v4877
      %v5295 = vpop.f32.mrf.mxu0
      %v5296 = vadd.f32 0.0, %v5295
      %v5297 = vpop.f32.mrf.mxu0
      %v5298 = vadd.f32 0.0, %v5297
      %5299 = vmatmul.bf16.gmra.mxu0 %v4878
      %v5300 = vpop.f32.mrf.mxu0
      %v5301 = vadd.f32 0.0, %v5300
      %v5302 = vpop.f32.mrf.mxu0
      %v5303 = vadd.f32 0.0, %v5302
      %5304 = vmatmul.bf16.gmra.mxu0 %v4879
      %v5305 = vpop.f32.mrf.mxu0
      %v5306 = vadd.f32 0.0, %v5305
      %v5307 = vpop.f32.mrf.mxu0
      %v5308 = vadd.f32 0.0, %v5307
      %5309 = vmatmul.bf16.gmra.mxu0 %v4880
      %v5310 = vpop.f32.mrf.mxu0
      %v5311 = vadd.f32 0.0, %v5310
      %v5312 = vpop.f32.mrf.mxu0
      %v5313 = vadd.f32 0.0, %v5312
      %5314 = vdwg.mxu0
      %5315 = vmatpush.bf16.msra.mxu0 %v5233
      %5316 = vmatpush.bf16.msra.mxu0 %v5232
      %5317 = vmatpush.bf16.msra.mxu0 %v5231
      %5318 = vmatpush.bf16.msra.mxu0 %v5230
      %5319 = vmatpush.bf16.msra.mxu0 %v5229
      %5320 = vmatpush.bf16.msra.mxu0 %v5228
      %5321 = vmatpush.bf16.msra.mxu0 %v5227
      %5322 = vmatpush.bf16.msra.mxu0 %v5226
      %5323 = vmatmul.bf16.gmra.mxu0 %v4924
      %v5324 = vpop.f32.mrf.mxu0
      %v5325 = vadd.f32 %v5276, %v5324
      %v5326 = vpop.f32.mrf.mxu0
      %v5327 = vadd.f32 %v5278, %v5326
      %5328 = vmatmul.bf16.gmra.mxu0 %v4936
      %v5329 = vpop.f32.mrf.mxu0
      %v5330 = vadd.f32 %v5281, %v5329
      %v5331 = vpop.f32.mrf.mxu0
      %v5332 = vadd.f32 %v5283, %v5331
      %5333 = vmatmul.bf16.gmra.mxu0 %v4948
      %v5334 = vpop.f32.mrf.mxu0
      %v5335 = vadd.f32 %v5286, %v5334
      %v5336 = vpop.f32.mrf.mxu0
      %v5337 = vadd.f32 %v5288, %v5336
      %5338 = vmatmul.bf16.gmra.mxu0 %v4960
      %v5339 = vpop.f32.mrf.mxu0
      %v5340 = vadd.f32 %v5291, %v5339
      %v5341 = vpop.f32.mrf.mxu0
      %v5342 = vadd.f32 %v5293, %v5341
      %5343 = vmatmul.bf16.gmra.mxu0 %v4972
      %v5344 = vpop.f32.mrf.mxu0
      %v5345 = vadd.f32 %v5296, %v5344
      %v5346 = vpop.f32.mrf.mxu0
      %v5347 = vadd.f32 %v5298, %v5346
      %5348 = vmatmul.bf16.gmra.mxu0 %v4984
      %v5349 = vpop.f32.mrf.mxu0
      %v5350 = vadd.f32 %v5301, %v5349
      %v5351 = vpop.f32.mrf.mxu0
      %v5352 = vadd.f32 %v5303, %v5351
      %5353 = vmatmul.bf16.gmra.mxu0 %v4996
      %v5354 = vpop.f32.mrf.mxu0
      %v5355 = vadd.f32 %v5306, %v5354
      %v5356 = vpop.f32.mrf.mxu0
      %v5357 = vadd.f32 %v5308, %v5356
      %5358 = vmatmul.bf16.gmra.mxu0 %v5008
      %v5359 = vpop.f32.mrf.mxu0
      %v5360 = vadd.f32 %v5311, %v5359
      %v5361 = vpop.f32.mrf.mxu0
      %v5362 = vadd.f32 %v5313, %v5361
      %5363 = vdwg.mxu0
      %5364 = vmatpush.bf16.msra.mxu0 %v5241
      %5365 = vmatpush.bf16.msra.mxu0 %v5240
      %5366 = vmatpush.bf16.msra.mxu0 %v5239
      %5367 = vmatpush.bf16.msra.mxu0 %v5238
      %5368 = vmatpush.bf16.msra.mxu0 %v5237
      %5369 = vmatpush.bf16.msra.mxu0 %v5236
      %5370 = vmatpush.bf16.msra.mxu0 %v5235
      %5371 = vmatpush.bf16.msra.mxu0 %v5234
      %5372 = vmatmul.bf16.gmra.mxu0 %v5043
      %v5373 = vpop.f32.mrf.mxu0
      %v5374 = vadd.f32 %v5325, %v5373
      %v5375 = vpop.f32.mrf.mxu0
      %v5376 = vadd.f32 %v5327, %v5375
      %5377 = vmatmul.bf16.gmra.mxu0 %v5046
      %v5378 = vpop.f32.mrf.mxu0
      %v5379 = vadd.f32 %v5330, %v5378
      %v5380 = vpop.f32.mrf.mxu0
      %v5381 = vadd.f32 %v5332, %v5380
      %5382 = vmatmul.bf16.gmra.mxu0 %v5049
      %v5383 = vpop.f32.mrf.mxu0
      %v5384 = vadd.f32 %v5335, %v5383
      %v5385 = vpop.f32.mrf.mxu0
      %v5386 = vadd.f32 %v5337, %v5385
      %5387 = vmatmul.bf16.gmra.mxu0 %v5052
      %v5388 = vpop.f32.mrf.mxu0
      %v5389 = vadd.f32 %v5340, %v5388
      %v5390 = vpop.f32.mrf.mxu0
      %v5391 = vadd.f32 %v5342, %v5390
      %5392 = vmatmul.bf16.gmra.mxu0 %v5055
      %v5393 = vpop.f32.mrf.mxu0
      %v5394 = vadd.f32 %v5345, %v5393
      %v5395 = vpop.f32.mrf.mxu0
      %v5396 = vadd.f32 %v5347, %v5395
      %5397 = vmatmul.bf16.gmra.mxu0 %v5058
      %v5398 = vpop.f32.mrf.mxu0
      %v5399 = vadd.f32 %v5350, %v5398
      %v5400 = vpop.f32.mrf.mxu0
      %v5401 = vadd.f32 %v5352, %v5400
      %5402 = vmatmul.bf16.gmra.mxu0 %v5061
      %v5403 = vpop.f32.mrf.mxu0
      %v5404 = vadd.f32 %v5355, %v5403
      %v5405 = vpop.f32.mrf.mxu0
      %v5406 = vadd.f32 %v5357, %v5405
      %5407 = vmatmul.bf16.gmra.mxu0 %v5064
      %v5408 = vpop.f32.mrf.mxu0
      %v5409 = vadd.f32 %v5360, %v5408
      %v5410 = vpop.f32.mrf.mxu0
      %v5411 = vadd.f32 %v5362, %v5410
      %5412 = vdwg.mxu0
      %v5461 = vunpack.c.l.b16 %v4761
      %v5462 = vunpack.c.l.b16 %v4762
      %v5463 = vunpack.c.l.b16 %v4763
      %v5464 = vunpack.c.l.b16 %v4764
      %v5465 = vunpack.c.l.b16 %v4765
      %v5466 = vunpack.c.l.b16 %v4766
      %v5467 = vunpack.c.l.b16 %v4767
      %v5468 = vunpack.c.l.b16 %v4768
      %v5469 = vunpack.c.l.b16 %v4769
      %v5470 = vunpack.c.l.b16 %v4770
      %v5471 = vunpack.c.l.b16 %v4771
      %v5472 = vunpack.c.l.b16 %v4772
      %v5473 = vunpack.c.l.b16 %v4773
      %v5474 = vunpack.c.l.b16 %v4774
      %v5475 = vunpack.c.l.b16 %v4775
      %v5476 = vunpack.c.l.b16 %v4776
      %v5477 = vunpack.c.l.b16 %v4777
      %v5478 = vunpack.c.l.b16 %v4778
      %v5479 = vunpack.c.l.b16 %v4779
      %v5480 = vunpack.c.l.b16 %v4780
      %v5481 = vunpack.c.l.b16 %v4781
      %v5482 = vunpack.c.l.b16 %v4782
      %v5483 = vunpack.c.l.b16 %v4783
      %v5484 = vunpack.c.l.b16 %v4784
      %v5485 = vunpack.c.l.b16 %v4785
      %v5486 = vunpack.c.l.b16 %v4786
      %v5487 = vunpack.c.l.b16 %v4787
      %v5488 = vunpack.c.l.b16 %v4788
      %v5489 = vunpack.c.l.b16 %v4789
      %v5490 = vunpack.c.l.b16 %v4790
      %v5491 = vunpack.c.l.b16 %v4791
      %v5492 = vunpack.c.l.b16 %v4792
      %v5493 = vunpack.c.l.b16 %v4793
      %v5494 = vunpack.c.l.b16 %v4794
      %v5495 = vunpack.c.l.b16 %v4795
      %v5496 = vunpack.c.l.b16 %v4796
      %v5497 = vunpack.c.l.b16 %v4797
      %v5498 = vunpack.c.l.b16 %v4798
      %v5499 = vunpack.c.l.b16 %v4799
      %v5500 = vunpack.c.l.b16 %v4800
      %v5501 = vunpack.c.l.b16 %v4801
      %v5502 = vunpack.c.l.b16 %v4802
      %v5503 = vunpack.c.l.b16 %v4803
      %v5504 = vunpack.c.l.b16 %v4804
      %v5505 = vunpack.c.l.b16 %v4805
      %v5506 = vunpack.c.l.b16 %v4806
      %v5507 = vunpack.c.l.b16 %v4807
      %v5508 = vunpack.c.l.b16 %v4808
      %v5509 = vpack.c.b16 %v5462, %v5461
      %v5510 = vpack.c.b16 %v5464, %v5463
      %v5511 = vpack.c.b16 %v5466, %v5465
      %v5512 = vpack.c.b16 %v5468, %v5467
      %v5513 = vpack.c.b16 %v5470, %v5469
      %v5514 = vpack.c.b16 %v5472, %v5471
      %v5515 = vpack.c.b16 %v5474, %v5473
      %v5516 = vpack.c.b16 %v5476, %v5475
      %v5517 = vpack.c.b16 %v5478, %v5477
      %v5518 = vpack.c.b16 %v5480, %v5479
      %v5519 = vpack.c.b16 %v5482, %v5481
      %v5520 = vpack.c.b16 %v5484, %v5483
      %v5521 = vpack.c.b16 %v5486, %v5485
      %v5522 = vpack.c.b16 %v5488, %v5487
      %v5523 = vpack.c.b16 %v5490, %v5489
      %v5524 = vpack.c.b16 %v5492, %v5491
      %v5525 = vpack.c.b16 %v5494, %v5493
      %v5526 = vpack.c.b16 %v5496, %v5495
      %v5527 = vpack.c.b16 %v5498, %v5497
      %v5528 = vpack.c.b16 %v5500, %v5499
      %v5529 = vpack.c.b16 %v5502, %v5501
      %v5530 = vpack.c.b16 %v5504, %v5503
      %v5531 = vpack.c.b16 %v5506, %v5505
      %v5532 = vpack.c.b16 %v5508, %v5507
      %5557 = vmatpush.bf16.msra.mxu0 %v5516
      %5558 = vmatpush.bf16.msra.mxu0 %v5515
      %5559 = vmatpush.bf16.msra.mxu0 %v5514
      %5560 = vmatpush.bf16.msra.mxu0 %v5513
      %5561 = vmatpush.bf16.msra.mxu0 %v5512
      %5562 = vmatpush.bf16.msra.mxu0 %v5511
      %5563 = vmatpush.bf16.msra.mxu0 %v5510
      %5564 = vmatpush.bf16.msra.mxu0 %v5509
      %5565 = vmatmul.bf16.gmra.mxu0 %v4559
      %v5566 = vpop.f32.mrf.mxu0
      %v5567 = vadd.f32 %v5374, %v5566
      %v5568 = vpop.f32.mrf.mxu0
      %v5569 = vadd.f32 %v5376, %v5568
      %5570 = vmatmul.bf16.gmra.mxu0 %v4560
      %v5571 = vpop.f32.mrf.mxu0
      %v5572 = vadd.f32 %v5379, %v5571
      %v5573 = vpop.f32.mrf.mxu0
      %v5574 = vadd.f32 %v5381, %v5573
      %5575 = vmatmul.bf16.gmra.mxu0 %v4561
      %v5576 = vpop.f32.mrf.mxu0
      %v5577 = vadd.f32 %v5384, %v5576
      %v5578 = vpop.f32.mrf.mxu0
      %v5579 = vadd.f32 %v5386, %v5578
      %5580 = vmatmul.bf16.gmra.mxu0 %v4562
      %v5581 = vpop.f32.mrf.mxu0
      %v5582 = vadd.f32 %v5389, %v5581
      %v5583 = vpop.f32.mrf.mxu0
      %v5584 = vadd.f32 %v5391, %v5583
      %5585 = vmatmul.bf16.gmra.mxu0 %v4563
      %v5586 = vpop.f32.mrf.mxu0
      %v5587 = vadd.f32 %v5394, %v5586
      %v5588 = vpop.f32.mrf.mxu0
      %v5589 = vadd.f32 %v5396, %v5588
      %5590 = vmatmul.bf16.gmra.mxu0 %v4564
      %v5591 = vpop.f32.mrf.mxu0
      %v5592 = vadd.f32 %v5399, %v5591
      %v5593 = vpop.f32.mrf.mxu0
      %v5594 = vadd.f32 %v5401, %v5593
      %5595 = vmatmul.bf16.gmra.mxu0 %v4565
      %v5596 = vpop.f32.mrf.mxu0
      %v5597 = vadd.f32 %v5404, %v5596
      %v5598 = vpop.f32.mrf.mxu0
      %v5599 = vadd.f32 %v5406, %v5598
      %5600 = vmatmul.bf16.gmra.mxu0 %v4566
      %v5601 = vpop.f32.mrf.mxu0
      %v5602 = vadd.f32 %v5409, %v5601
      %v5603 = vpop.f32.mrf.mxu0
      %v5604 = vadd.f32 %v5411, %v5603
      %5605 = vdwg.mxu0
      %5606 = vmatpush.bf16.msra.mxu0 %v5524
      %5607 = vmatpush.bf16.msra.mxu0 %v5523
      %5608 = vmatpush.bf16.msra.mxu0 %v5522
      %5609 = vmatpush.bf16.msra.mxu0 %v5521
      %5610 = vmatpush.bf16.msra.mxu0 %v5520
      %5611 = vmatpush.bf16.msra.mxu0 %v5519
      %5612 = vmatpush.bf16.msra.mxu0 %v5518
      %5613 = vmatpush.bf16.msra.mxu0 %v5517
      %5614 = vmatmul.bf16.gmra.mxu0 %v4611
      %v5615 = vpop.f32.mrf.mxu0
      %v5616 = vadd.f32 %v5567, %v5615
      %v5617 = vpop.f32.mrf.mxu0
      %v5618 = vadd.f32 %v5569, %v5617
      %5619 = vmatmul.bf16.gmra.mxu0 %v4623
      %v5620 = vpop.f32.mrf.mxu0
      %v5621 = vadd.f32 %v5572, %v5620
      %v5622 = vpop.f32.mrf.mxu0
      %v5623 = vadd.f32 %v5574, %v5622
      %5624 = vmatmul.bf16.gmra.mxu0 %v4635
      %v5625 = vpop.f32.mrf.mxu0
      %v5626 = vadd.f32 %v5577, %v5625
      %v5627 = vpop.f32.mrf.mxu0
      %v5628 = vadd.f32 %v5579, %v5627
      %5629 = vmatmul.bf16.gmra.mxu0 %v4647
      %v5630 = vpop.f32.mrf.mxu0
      %v5631 = vadd.f32 %v5582, %v5630
      %v5632 = vpop.f32.mrf.mxu0
      %v5633 = vadd.f32 %v5584, %v5632
      %5634 = vmatmul.bf16.gmra.mxu0 %v4659
      %v5635 = vpop.f32.mrf.mxu0
      %v5636 = vadd.f32 %v5587, %v5635
      %v5637 = vpop.f32.mrf.mxu0
      %v5638 = vadd.f32 %v5589, %v5637
      %5639 = vmatmul.bf16.gmra.mxu0 %v4671
      %v5640 = vpop.f32.mrf.mxu0
      %v5641 = vadd.f32 %v5592, %v5640
      %v5642 = vpop.f32.mrf.mxu0
      %v5643 = vadd.f32 %v5594, %v5642
      %5644 = vmatmul.bf16.gmra.mxu0 %v4683
      %v5645 = vpop.f32.mrf.mxu0
      %v5646 = vadd.f32 %v5597, %v5645
      %v5647 = vpop.f32.mrf.mxu0
      %v5648 = vadd.f32 %v5599, %v5647
      %5649 = vmatmul.bf16.gmra.mxu0 %v4695
      %v5650 = vpop.f32.mrf.mxu0
      %v5651 = vadd.f32 %v5602, %v5650
      %v5652 = vpop.f32.mrf.mxu0
      %v5653 = vadd.f32 %v5604, %v5652
      %5654 = vdwg.mxu0
      %5655 = vmatpush.bf16.msra.mxu0 %v5532
      %5656 = vmatpush.bf16.msra.mxu0 %v5531
      %5657 = vmatpush.bf16.msra.mxu0 %v5530
      %5658 = vmatpush.bf16.msra.mxu0 %v5529
      %5659 = vmatpush.bf16.msra.mxu0 %v5528
      %5660 = vmatpush.bf16.msra.mxu0 %v5527
      %5661 = vmatpush.bf16.msra.mxu0 %v5526
      %5662 = vmatpush.bf16.msra.mxu0 %v5525
      %5663 = vmatmul.bf16.gmra.mxu0 %v4731
      %v5664 = vpop.f32.mrf.mxu0
      %v5665 = vadd.f32 %v5616, %v5664
      %v5666 = vpop.f32.mrf.mxu0
      %v5667 = vadd.f32 %v5618, %v5666
      %5668 = vmatmul.bf16.gmra.mxu0 %v4734
      %v5669 = vpop.f32.mrf.mxu0
      %v5670 = vadd.f32 %v5621, %v5669
      %v5671 = vpop.f32.mrf.mxu0
      %v5672 = vadd.f32 %v5623, %v5671
      %5673 = vmatmul.bf16.gmra.mxu0 %v4737
      %v5674 = vpop.f32.mrf.mxu0
      %v5675 = vadd.f32 %v5626, %v5674
      %v5676 = vpop.f32.mrf.mxu0
      %v5677 = vadd.f32 %v5628, %v5676
      %5678 = vmatmul.bf16.gmra.mxu0 %v4740
      %v5679 = vpop.f32.mrf.mxu0
      %v5680 = vadd.f32 %v5631, %v5679
      %v5681 = vpop.f32.mrf.mxu0
      %v5682 = vadd.f32 %v5633, %v5681
      %5683 = vmatmul.bf16.gmra.mxu0 %v4743
      %v5684 = vpop.f32.mrf.mxu0
      %v5685 = vadd.f32 %v5636, %v5684
      %v5686 = vpop.f32.mrf.mxu0
      %v5687 = vadd.f32 %v5638, %v5686
      %5688 = vmatmul.bf16.gmra.mxu0 %v4746
      %v5689 = vpop.f32.mrf.mxu0
      %v5690 = vadd.f32 %v5641, %v5689
      %v5691 = vpop.f32.mrf.mxu0
      %v5692 = vadd.f32 %v5643, %v5691
      %5693 = vmatmul.bf16.gmra.mxu0 %v4749
      %v5694 = vpop.f32.mrf.mxu0
      %v5695 = vadd.f32 %v5646, %v5694
      %v5696 = vpop.f32.mrf.mxu0
      %v5697 = vadd.f32 %v5648, %v5696
      %5698 = vmatmul.bf16.gmra.mxu0 %v4752
      %v5699 = vpop.f32.mrf.mxu0
      %v5700 = vadd.f32 %v5651, %v5699
      %v5701 = vpop.f32.mrf.mxu0
      %v5702 = vadd.f32 %v5653, %v5701
      %5703 = vdwg.mxu0
      %s5704 = scalar_lea.vmem [#allocation2], 24
      %v5705 = vld [vmem:[%s5704] sm:$0xf]
      %v5706 = vld [vmem:[%s5704 + $0x4] sm:$0xf]
      %v5707 = vld [vmem:[%s5704 + $0xc] sm:$0xf]
      %v5708 = vld [vmem:[%s5704 + $0x10] sm:$0xf]
      %v5709 = vld [vmem:[%s5704 + $0x18] sm:$0xf]
      %v5710 = vld [vmem:[%s5704 + $0x1c] sm:$0xf]
      %v5711 = vld [vmem:[%s5704 + $0x24] sm:$0xf]
      %v5712 = vld [vmem:[%s5704 + $0x28] sm:$0xf]
      %v5713 = vld [vmem:[%s5704 + $0x30] sm:$0xf]
      %v5714 = vld [vmem:[%s5704 + $0x34] sm:$0xf]
      %v5715 = vld [vmem:[%s5704 + $0x3c] sm:$0xf]
      %v5716 = vld [vmem:[%s5704 + $0x40] sm:$0xf]
      %v5717 = vld [vmem:[%s5704 + $0x48] sm:$0xf]
      %v5718 = vld [vmem:[%s5704 + $0x4c] sm:$0xf]
      %v5719 = vld [vmem:[%s5704 + $0x54] sm:$0xf]
      %v5720 = vld [vmem:[%s5704 + $0x58] sm:$0xf]
      %v5721 = vld [vmem:[%s5704 + $0x8] sm:$0x1]
      %v5722 = vld [vmem:[%s5704 + $0x14] sm:$0x1]
      %v5723 = vld [vmem:[%s5704 + $0x20] sm:$0x1]
      %v5724 = vld [vmem:[%s5704 + $0x2c] sm:$0x1]
      %v5725 = vld [vmem:[%s5704 + $0x38] sm:$0x1]
      %v5726 = vld [vmem:[%s5704 + $0x44] sm:$0x1]
      %v5727 = vld [vmem:[%s5704 + $0x50] sm:$0x1]
      %v5728 = vld [vmem:[%s5704 + $0x5c] sm:$0x1]
      %v5729 = vld [vmem:[%s5704] sm:$0xe]
      %v5730 = vld [vmem:[%s5704 + $0xc] sm:$0xe]
      %v5731 = vld [vmem:[%s5704 + $0x18] sm:$0xe]
      %v5732 = vld [vmem:[%s5704 + $0x24] sm:$0xe]
      %v5733 = vld [vmem:[%s5704 + $0x30] sm:$0xe]
      %v5734 = vld [vmem:[%s5704 + $0x3c] sm:$0xe]
      %v5735 = vld [vmem:[%s5704 + $0x48] sm:$0xe]
      %v5736 = vld [vmem:[%s5704 + $0x54] sm:$0xe]
      %v5753 = vunpack.c.l.b16 %v5705
      %v5754 = vunpack.c.l.b16 %v5706
      %v5755 = vunpack.c.l.b16 %v5707
      %v5756 = vunpack.c.l.b16 %v5708
      %v5757 = vunpack.c.l.b16 %v5709
      %v5758 = vunpack.c.l.b16 %v5710
      %v5759 = vunpack.c.l.b16 %v5711
      %v5760 = vunpack.c.l.b16 %v5712
      %v5761 = vunpack.c.l.b16 %v5713
      %v5762 = vunpack.c.l.b16 %v5714
      %v5763 = vunpack.c.l.b16 %v5715
      %v5764 = vunpack.c.l.b16 %v5716
      %v5765 = vunpack.c.l.b16 %v5717
      %v5766 = vunpack.c.l.b16 %v5718
      %v5767 = vunpack.c.l.b16 %v5719
      %v5768 = vunpack.c.l.b16 %v5720
      %v5769 = vpack.c.b16 %v5754, %v5753
      %v5770 = vpack.c.b16 %v5756, %v5755
      %v5771 = vpack.c.b16 %v5758, %v5757
      %v5772 = vpack.c.b16 %v5760, %v5759
      %v5773 = vpack.c.b16 %v5762, %v5761
      %v5774 = vpack.c.b16 %v5764, %v5763
      %v5775 = vpack.c.b16 %v5766, %v5765
      %v5776 = vpack.c.b16 %v5768, %v5767
      %v5793 = vunpack.c.l.b16 %v5721
      %v5794 = vunpack.c.l.b16 %v5722
      %v5795 = vunpack.c.l.b16 %v5723
      %v5796 = vunpack.c.l.b16 %v5724
      %v5797 = vunpack.c.l.b16 %v5725
      %v5798 = vunpack.c.l.b16 %v5726
      %v5799 = vunpack.c.l.b16 %v5727
      %v5800 = vunpack.c.l.b16 %v5728
      %v5801 = vpack.c.b16 %v5793, %v5793
      %v5802 = vpack.c.b16 %v5794, %v5794
      %v5803 = vpack.c.b16 %v5795, %v5795
      %v5804 = vpack.c.b16 %v5796, %v5796
      %v5805 = vpack.c.b16 %v5797, %v5797
      %v5806 = vpack.c.b16 %v5798, %v5798
      %v5807 = vpack.c.b16 %v5799, %v5799
      %v5808 = vpack.c.b16 %v5800, %v5800
      %v5810 = vshrl.u32 %v5769, 16
      %v5812 = vshll.u32 %v5769, 16
      %v5814 = vrot.slane %v5812, 1
      %v5815 = vor.u32 %v5810, %v5814
      %v5817 = vshll.u32 %v5801, 16
      %v5819 = vrot.slane %v5817, 1
      %v5820 = vsel %vm4599, %v5815, %v5819
      %v5822 = vshrl.u32 %v5770, 16
      %v5824 = vshll.u32 %v5770, 16
      %v5826 = vrot.slane %v5824, 1
      %v5827 = vor.u32 %v5822, %v5826
      %v5829 = vshll.u32 %v5802, 16
      %v5831 = vrot.slane %v5829, 1
      %v5832 = vsel %vm4599, %v5827, %v5831
      %v5834 = vshrl.u32 %v5771, 16
      %v5836 = vshll.u32 %v5771, 16
      %v5838 = vrot.slane %v5836, 1
      %v5839 = vor.u32 %v5834, %v5838
      %v5841 = vshll.u32 %v5803, 16
      %v5843 = vrot.slane %v5841, 1
      %v5844 = vsel %vm4599, %v5839, %v5843
      %v5846 = vshrl.u32 %v5772, 16
      %v5848 = vshll.u32 %v5772, 16
      %v5850 = vrot.slane %v5848, 1
      %v5851 = vor.u32 %v5846, %v5850
      %v5853 = vshll.u32 %v5804, 16
      %v5855 = vrot.slane %v5853, 1
      %v5856 = vsel %vm4599, %v5851, %v5855
      %v5858 = vshrl.u32 %v5773, 16
      %v5860 = vshll.u32 %v5773, 16
      %v5862 = vrot.slane %v5860, 1
      %v5863 = vor.u32 %v5858, %v5862
      %v5865 = vshll.u32 %v5805, 16
      %v5867 = vrot.slane %v5865, 1
      %v5868 = vsel %vm4599, %v5863, %v5867
      %v5870 = vshrl.u32 %v5774, 16
      %v5872 = vshll.u32 %v5774, 16
      %v5874 = vrot.slane %v5872, 1
      %v5875 = vor.u32 %v5870, %v5874
      %v5877 = vshll.u32 %v5806, 16
      %v5879 = vrot.slane %v5877, 1
      %v5880 = vsel %vm4599, %v5875, %v5879
      %v5882 = vshrl.u32 %v5775, 16
      %v5884 = vshll.u32 %v5775, 16
      %v5886 = vrot.slane %v5884, 1
      %v5887 = vor.u32 %v5882, %v5886
      %v5889 = vshll.u32 %v5807, 16
      %v5891 = vrot.slane %v5889, 1
      %v5892 = vsel %vm4599, %v5887, %v5891
      %v5894 = vshrl.u32 %v5776, 16
      %v5896 = vshll.u32 %v5776, 16
      %v5898 = vrot.slane %v5896, 1
      %v5899 = vor.u32 %v5894, %v5898
      %v5901 = vshll.u32 %v5808, 16
      %v5903 = vrot.slane %v5901, 1
      %v5904 = vsel %vm4599, %v5899, %v5903
      %v5921 = vunpack.c.l.b16 %v5729
      %v5922 = vunpack.c.l.b16 %v5730
      %v5923 = vunpack.c.l.b16 %v5731
      %v5924 = vunpack.c.l.b16 %v5732
      %v5925 = vunpack.c.l.b16 %v5733
      %v5926 = vunpack.c.l.b16 %v5734
      %v5927 = vunpack.c.l.b16 %v5735
      %v5928 = vunpack.c.l.b16 %v5736
      %v5929 = vpack.c.b16 %v5754, %v5921
      %v5930 = vpack.c.b16 %v5756, %v5922
      %v5931 = vpack.c.b16 %v5758, %v5923
      %v5932 = vpack.c.b16 %v5760, %v5924
      %v5933 = vpack.c.b16 %v5762, %v5925
      %v5934 = vpack.c.b16 %v5764, %v5926
      %v5935 = vpack.c.b16 %v5766, %v5927
      %v5936 = vpack.c.b16 %v5768, %v5928
      %v5937 = vrot.slane %v5929, 1
      %v5938 = vrot.slane %v5801, 1
      %v5939 = vsel %vm4728, %v5937, %v5938
      %v5940 = vrot.slane %v5930, 1
      %v5941 = vrot.slane %v5802, 1
      %v5942 = vsel %vm4728, %v5940, %v5941
      %v5943 = vrot.slane %v5931, 1
      %v5944 = vrot.slane %v5803, 1
      %v5945 = vsel %vm4728, %v5943, %v5944
      %v5946 = vrot.slane %v5932, 1
      %v5947 = vrot.slane %v5804, 1
      %v5948 = vsel %vm4728, %v5946, %v5947
      %v5949 = vrot.slane %v5933, 1
      %v5950 = vrot.slane %v5805, 1
      %v5951 = vsel %vm4728, %v5949, %v5950
      %v5952 = vrot.slane %v5934, 1
      %v5953 = vrot.slane %v5806, 1
      %v5954 = vsel %vm4728, %v5952, %v5953
      %v5955 = vrot.slane %v5935, 1
      %v5956 = vrot.slane %v5807, 1
      %v5957 = vsel %vm4728, %v5955, %v5956
      %v5958 = vrot.slane %v5936, 1
      %v5959 = vrot.slane %v5808, 1
      %v5960 = vsel %vm4728, %v5958, %v5959
      %s5969 = scalar_lea.vmem %s4, 384
      %v5970 = vld [vmem:[%s5969] sm:$0xf]
      %v5971 = vld [vmem:[%s5969 + $0x4] sm:$0xf]
      %v5972 = vld [vmem:[%s5969 + $0x8] sm:$0xf]
      %v5973 = vld [vmem:[%s5969 + $0xc] sm:$0xf]
      %v5974 = vld [vmem:[%s5969 + $0x10] sm:$0xf]
      %v5975 = vld [vmem:[%s5969 + $0x14] sm:$0xf]
      %v5976 = vld [vmem:[%s5969 + $0x18] sm:$0xf]
      %v5977 = vld [vmem:[%s5969 + $0x1c] sm:$0xf]
      %v5978 = vld [vmem:[%s5969 + $0x20] sm:$0xf]
      %v5979 = vld [vmem:[%s5969 + $0x24] sm:$0xf]
      %v5980 = vld [vmem:[%s5969 + $0x28] sm:$0xf]
      %v5981 = vld [vmem:[%s5969 + $0x2c] sm:$0xf]
      %v5982 = vld [vmem:[%s5969 + $0x30] sm:$0xf]
      %v5983 = vld [vmem:[%s5969 + $0x34] sm:$0xf]
      %v5984 = vld [vmem:[%s5969 + $0x38] sm:$0xf]
      %v5985 = vld [vmem:[%s5969 + $0x3c] sm:$0xf]
      %v5986 = vld [vmem:[%s5969 + $0x40] sm:$0xf]
      %v5987 = vld [vmem:[%s5969 + $0x44] sm:$0xf]
      %v5988 = vld [vmem:[%s5969 + $0x48] sm:$0xf]
      %v5989 = vld [vmem:[%s5969 + $0x4c] sm:$0xf]
      %v5990 = vld [vmem:[%s5969 + $0x50] sm:$0xf]
      %v5991 = vld [vmem:[%s5969 + $0x54] sm:$0xf]
      %v5992 = vld [vmem:[%s5969 + $0x58] sm:$0xf]
      %v5993 = vld [vmem:[%s5969 + $0x5c] sm:$0xf]
      %v5994 = vld [vmem:[%s5969 + $0x60] sm:$0xf]
      %v5995 = vld [vmem:[%s5969 + $0x64] sm:$0xf]
      %v5996 = vld [vmem:[%s5969 + $0x68] sm:$0xf]
      %v5997 = vld [vmem:[%s5969 + $0x6c] sm:$0xf]
      %v5998 = vld [vmem:[%s5969 + $0x70] sm:$0xf]
      %v5999 = vld [vmem:[%s5969 + $0x74] sm:$0xf]
      %v6000 = vld [vmem:[%s5969 + $0x78] sm:$0xf]
      %v6001 = vld [vmem:[%s5969 + $0x7c] sm:$0xf]
      %v6002 = vld [vmem:[%s5969 + $0x80] sm:$0xf]
      %v6003 = vld [vmem:[%s5969 + $0x84] sm:$0xf]
      %v6004 = vld [vmem:[%s5969 + $0x88] sm:$0xf]
      %v6005 = vld [vmem:[%s5969 + $0x8c] sm:$0xf]
      %v6006 = vld [vmem:[%s5969 + $0x90] sm:$0xf]
      %v6007 = vld [vmem:[%s5969 + $0x94] sm:$0xf]
      %v6008 = vld [vmem:[%s5969 + $0x98] sm:$0xf]
      %v6009 = vld [vmem:[%s5969 + $0x9c] sm:$0xf]
      %v6010 = vld [vmem:[%s5969 + $0xa0] sm:$0xf]
      %v6011 = vld [vmem:[%s5969 + $0xa4] sm:$0xf]
      %v6012 = vld [vmem:[%s5969 + $0xa8] sm:$0xf]
      %v6013 = vld [vmem:[%s5969 + $0xac] sm:$0xf]
      %v6014 = vld [vmem:[%s5969 + $0xb0] sm:$0xf]
      %v6015 = vld [vmem:[%s5969 + $0xb4] sm:$0xf]
      %v6016 = vld [vmem:[%s5969 + $0xb8] sm:$0xf]
      %v6017 = vld [vmem:[%s5969 + $0xbc] sm:$0xf]
      %v6066 = vunpack.c.l.b16 %v5970
      %v6067 = vunpack.c.l.b16 %v5971
      %v6068 = vunpack.c.l.b16 %v5972
      %v6069 = vunpack.c.l.b16 %v5973
      %v6070 = vunpack.c.l.b16 %v5974
      %v6071 = vunpack.c.l.b16 %v5975
      %v6072 = vunpack.c.l.b16 %v5976
      %v6073 = vunpack.c.l.b16 %v5977
      %v6074 = vunpack.c.l.b16 %v5978
      %v6075 = vunpack.c.l.b16 %v5979
      %v6076 = vunpack.c.l.b16 %v5980
      %v6077 = vunpack.c.l.b16 %v5981
      %v6078 = vunpack.c.l.b16 %v5982
      %v6079 = vunpack.c.l.b16 %v5983
      %v6080 = vunpack.c.l.b16 %v5984
      %v6081 = vunpack.c.l.b16 %v5985
      %v6082 = vunpack.c.l.b16 %v5986
      %v6083 = vunpack.c.l.b16 %v5987
      %v6084 = vunpack.c.l.b16 %v5988
      %v6085 = vunpack.c.l.b16 %v5989
      %v6086 = vunpack.c.l.b16 %v5990
      %v6087 = vunpack.c.l.b16 %v5991
      %v6088 = vunpack.c.l.b16 %v5992
      %v6089 = vunpack.c.l.b16 %v5993
      %v6090 = vunpack.c.l.b16 %v5994
      %v6091 = vunpack.c.l.b16 %v5995
      %v6092 = vunpack.c.l.b16 %v5996
      %v6093 = vunpack.c.l.b16 %v5997
      %v6094 = vunpack.c.l.b16 %v5998
      %v6095 = vunpack.c.l.b16 %v5999
      %v6096 = vunpack.c.l.b16 %v6000
      %v6097 = vunpack.c.l.b16 %v6001
      %v6098 = vunpack.c.l.b16 %v6002
      %v6099 = vunpack.c.l.b16 %v6003
      %v6100 = vunpack.c.l.b16 %v6004
      %v6101 = vunpack.c.l.b16 %v6005
      %v6102 = vunpack.c.l.b16 %v6006
      %v6103 = vunpack.c.l.b16 %v6007
      %v6104 = vunpack.c.l.b16 %v6008
      %v6105 = vunpack.c.l.b16 %v6009
      %v6106 = vunpack.c.l.b16 %v6010
      %v6107 = vunpack.c.l.b16 %v6011
      %v6108 = vunpack.c.l.b16 %v6012
      %v6109 = vunpack.c.l.b16 %v6013
      %v6110 = vunpack.c.l.b16 %v6014
      %v6111 = vunpack.c.l.b16 %v6015
      %v6112 = vunpack.c.l.b16 %v6016
      %v6113 = vunpack.c.l.b16 %v6017
      %v6114 = vpack.c.b16 %v6067, %v6066
      %v6115 = vpack.c.b16 %v6069, %v6068
      %v6116 = vpack.c.b16 %v6071, %v6070
      %v6117 = vpack.c.b16 %v6073, %v6072
      %v6118 = vpack.c.b16 %v6075, %v6074
      %v6119 = vpack.c.b16 %v6077, %v6076
      %v6120 = vpack.c.b16 %v6079, %v6078
      %v6121 = vpack.c.b16 %v6081, %v6080
      %v6122 = vpack.c.b16 %v6083, %v6082
      %v6123 = vpack.c.b16 %v6085, %v6084
      %v6124 = vpack.c.b16 %v6087, %v6086
      %v6125 = vpack.c.b16 %v6089, %v6088
      %v6126 = vpack.c.b16 %v6091, %v6090
      %v6127 = vpack.c.b16 %v6093, %v6092
      %v6128 = vpack.c.b16 %v6095, %v6094
      %v6129 = vpack.c.b16 %v6097, %v6096
      %v6130 = vpack.c.b16 %v6099, %v6098
      %v6131 = vpack.c.b16 %v6101, %v6100
      %v6132 = vpack.c.b16 %v6103, %v6102
      %v6133 = vpack.c.b16 %v6105, %v6104
      %v6134 = vpack.c.b16 %v6107, %v6106
      %v6135 = vpack.c.b16 %v6109, %v6108
      %v6136 = vpack.c.b16 %v6111, %v6110
      %v6137 = vpack.c.b16 %v6113, %v6112
      %6162 = vmatpush.bf16.msra.mxu0 %v6121
      %6163 = vmatpush.bf16.msra.mxu0 %v6120
      %6164 = vmatpush.bf16.msra.mxu0 %v6119
      %6165 = vmatpush.bf16.msra.mxu0 %v6118
      %6166 = vmatpush.bf16.msra.mxu0 %v6117
      %6167 = vmatpush.bf16.msra.mxu0 %v6116
      %6168 = vmatpush.bf16.msra.mxu0 %v6115
      %6169 = vmatpush.bf16.msra.mxu0 %v6114
      %6170 = vmatmul.bf16.gmra.mxu0 %v5769
      %v6171 = vpop.f32.mrf.mxu0
      %v6172 = vadd.f32 0.0, %v6171
      %v6173 = vpop.f32.mrf.mxu0
      %v6174 = vadd.f32 0.0, %v6173
      %6175 = vmatmul.bf16.gmra.mxu0 %v5770
      %v6176 = vpop.f32.mrf.mxu0
      %v6177 = vadd.f32 0.0, %v6176
      %v6178 = vpop.f32.mrf.mxu0
      %v6179 = vadd.f32 0.0, %v6178
      %6180 = vmatmul.bf16.gmra.mxu0 %v5771
      %v6181 = vpop.f32.mrf.mxu0
      %v6182 = vadd.f32 0.0, %v6181
      %v6183 = vpop.f32.mrf.mxu0
      %v6184 = vadd.f32 0.0, %v6183
      %6185 = vmatmul.bf16.gmra.mxu0 %v5772
      %v6186 = vpop.f32.mrf.mxu0
      %v6187 = vadd.f32 0.0, %v6186
      %v6188 = vpop.f32.mrf.mxu0
      %v6189 = vadd.f32 0.0, %v6188
      %6190 = vmatmul.bf16.gmra.mxu0 %v5773
      %v6191 = vpop.f32.mrf.mxu0
      %v6192 = vadd.f32 0.0, %v6191
      %v6193 = vpop.f32.mrf.mxu0
      %v6194 = vadd.f32 0.0, %v6193
      %6195 = vmatmul.bf16.gmra.mxu0 %v5774
      %v6196 = vpop.f32.mrf.mxu0
      %v6197 = vadd.f32 0.0, %v6196
      %v6198 = vpop.f32.mrf.mxu0
      %v6199 = vadd.f32 0.0, %v6198
      %6200 = vmatmul.bf16.gmra.mxu0 %v5775
      %v6201 = vpop.f32.mrf.mxu0
      %v6202 = vadd.f32 0.0, %v6201
      %v6203 = vpop.f32.mrf.mxu0
      %v6204 = vadd.f32 0.0, %v6203
      %6205 = vmatmul.bf16.gmra.mxu0 %v5776
      %v6206 = vpop.f32.mrf.mxu0
      %v6207 = vadd.f32 0.0, %v6206
      %v6208 = vpop.f32.mrf.mxu0
      %v6209 = vadd.f32 0.0, %v6208
      %6210 = vdwg.mxu0
      %6211 = vmatpush.bf16.msra.mxu0 %v6129
      %6212 = vmatpush.bf16.msra.mxu0 %v6128
      %6213 = vmatpush.bf16.msra.mxu0 %v6127
      %6214 = vmatpush.bf16.msra.mxu0 %v6126
      %6215 = vmatpush.bf16.msra.mxu0 %v6125
      %6216 = vmatpush.bf16.msra.mxu0 %v6124
      %6217 = vmatpush.bf16.msra.mxu0 %v6123
      %6218 = vmatpush.bf16.msra.mxu0 %v6122
      %6219 = vmatmul.bf16.gmra.mxu0 %v5820
      %v6220 = vpop.f32.mrf.mxu0
      %v6221 = vadd.f32 %v6172, %v6220
      %v6222 = vpop.f32.mrf.mxu0
      %v6223 = vadd.f32 %v6174, %v6222
      %6224 = vmatmul.bf16.gmra.mxu0 %v5832
      %v6225 = vpop.f32.mrf.mxu0
      %v6226 = vadd.f32 %v6177, %v6225
      %v6227 = vpop.f32.mrf.mxu0
      %v6228 = vadd.f32 %v6179, %v6227
      %6229 = vmatmul.bf16.gmra.mxu0 %v5844
      %v6230 = vpop.f32.mrf.mxu0
      %v6231 = vadd.f32 %v6182, %v6230
      %v6232 = vpop.f32.mrf.mxu0
      %v6233 = vadd.f32 %v6184, %v6232
      %6234 = vmatmul.bf16.gmra.mxu0 %v5856
      %v6235 = vpop.f32.mrf.mxu0
      %v6236 = vadd.f32 %v6187, %v6235
      %v6237 = vpop.f32.mrf.mxu0
      %v6238 = vadd.f32 %v6189, %v6237
      %6239 = vmatmul.bf16.gmra.mxu0 %v5868
      %v6240 = vpop.f32.mrf.mxu0
      %v6241 = vadd.f32 %v6192, %v6240
      %v6242 = vpop.f32.mrf.mxu0
      %v6243 = vadd.f32 %v6194, %v6242
      %6244 = vmatmul.bf16.gmra.mxu0 %v5880
      %v6245 = vpop.f32.mrf.mxu0
      %v6246 = vadd.f32 %v6197, %v6245
      %v6247 = vpop.f32.mrf.mxu0
      %v6248 = vadd.f32 %v6199, %v6247
      %6249 = vmatmul.bf16.gmra.mxu0 %v5892
      %v6250 = vpop.f32.mrf.mxu0
      %v6251 = vadd.f32 %v6202, %v6250
      %v6252 = vpop.f32.mrf.mxu0
      %v6253 = vadd.f32 %v6204, %v6252
      %6254 = vmatmul.bf16.gmra.mxu0 %v5904
      %v6255 = vpop.f32.mrf.mxu0
      %v6256 = vadd.f32 %v6207, %v6255
      %v6257 = vpop.f32.mrf.mxu0
      %v6258 = vadd.f32 %v6209, %v6257
      %6259 = vdwg.mxu0
      %6260 = vmatpush.bf16.msra.mxu0 %v6137
      %6261 = vmatpush.bf16.msra.mxu0 %v6136
      %6262 = vmatpush.bf16.msra.mxu0 %v6135
      %6263 = vmatpush.bf16.msra.mxu0 %v6134
      %6264 = vmatpush.bf16.msra.mxu0 %v6133
      %6265 = vmatpush.bf16.msra.mxu0 %v6132
      %6266 = vmatpush.bf16.msra.mxu0 %v6131
      %6267 = vmatpush.bf16.msra.mxu0 %v6130
      %6268 = vmatmul.bf16.gmra.mxu0 %v5939
      %v6269 = vpop.f32.mrf.mxu0
      %v6270 = vadd.f32 %v6221, %v6269
      %v6271 = vpop.f32.mrf.mxu0
      %v6272 = vadd.f32 %v6223, %v6271
      %6273 = vmatmul.bf16.gmra.mxu0 %v5942
      %v6274 = vpop.f32.mrf.mxu0
      %v6275 = vadd.f32 %v6226, %v6274
      %v6276 = vpop.f32.mrf.mxu0
      %v6277 = vadd.f32 %v6228, %v6276
      %6278 = vmatmul.bf16.gmra.mxu0 %v5945
      %v6279 = vpop.f32.mrf.mxu0
      %v6280 = vadd.f32 %v6231, %v6279
      %v6281 = vpop.f32.mrf.mxu0
      %v6282 = vadd.f32 %v6233, %v6281
      %6283 = vmatmul.bf16.gmra.mxu0 %v5948
      %v6284 = vpop.f32.mrf.mxu0
      %v6285 = vadd.f32 %v6236, %v6284
      %v6286 = vpop.f32.mrf.mxu0
      %v6287 = vadd.f32 %v6238, %v6286
      %6288 = vmatmul.bf16.gmra.mxu0 %v5951
      %v6289 = vpop.f32.mrf.mxu0
      %v6290 = vadd.f32 %v6241, %v6289
      %v6291 = vpop.f32.mrf.mxu0
      %v6292 = vadd.f32 %v6243, %v6291
      %6293 = vmatmul.bf16.gmra.mxu0 %v5954
      %v6294 = vpop.f32.mrf.mxu0
      %v6295 = vadd.f32 %v6246, %v6294
      %v6296 = vpop.f32.mrf.mxu0
      %v6297 = vadd.f32 %v6248, %v6296
      %6298 = vmatmul.bf16.gmra.mxu0 %v5957
      %v6299 = vpop.f32.mrf.mxu0
      %v6300 = vadd.f32 %v6251, %v6299
      %v6301 = vpop.f32.mrf.mxu0
      %v6302 = vadd.f32 %v6253, %v6301
      %6303 = vmatmul.bf16.gmra.mxu0 %v5960
      %v6304 = vpop.f32.mrf.mxu0
      %v6305 = vadd.f32 %v6256, %v6304
      %v6306 = vpop.f32.mrf.mxu0
      %v6307 = vadd.f32 %v6258, %v6306
      %6308 = vdwg.mxu0
      %v6309 = vadd.f32 %v5665, %v6270
      %v6310 = vadd.f32 %v5667, %v6272
      %v6311 = vadd.f32 %v5670, %v6275
      %v6312 = vadd.f32 %v5672, %v6277
      %v6313 = vadd.f32 %v5675, %v6280
      %v6314 = vadd.f32 %v5677, %v6282
      %v6315 = vadd.f32 %v5680, %v6285
      %v6316 = vadd.f32 %v5682, %v6287
      %v6317 = vadd.f32 %v5685, %v6290
      %v6318 = vadd.f32 %v5687, %v6292
      %v6319 = vadd.f32 %v5690, %v6295
      %v6320 = vadd.f32 %v5692, %v6297
      %v6321 = vadd.f32 %v5695, %v6300
      %v6322 = vadd.f32 %v5697, %v6302
      %v6323 = vadd.f32 %v5700, %v6305
      %v6324 = vadd.f32 %v5702, %v6307
      %v6325 = vld [vmem:[%s688 + $0x1] sm:$0xff]
      %v6326 = vld [vmem:[%s688 + $0x9] sm:$0xff]
      %v6327 = vld [vmem:[%s688 + $0x19] sm:$0xff]
      %v6328 = vld [vmem:[%s688 + $0x21] sm:$0xff]
      %v6329 = vld [vmem:[%s688 + $0x31] sm:$0xff]
      %v6330 = vld [vmem:[%s688 + $0x39] sm:$0xff]
      %v6331 = vld [vmem:[%s688 + $0x49] sm:$0xff]
      %v6332 = vld [vmem:[%s688 + $0x51] sm:$0xff]
      %v6333 = vld [vmem:[%s688 + $0x61] sm:$0xff]
      %v6334 = vld [vmem:[%s688 + $0x69] sm:$0xff]
      %v6335 = vld [vmem:[%s688 + $0x79] sm:$0xff]
      %v6336 = vld [vmem:[%s688 + $0x81] sm:$0xff]
      %v6337 = vld [vmem:[%s688 + $0x91] sm:$0xff]
      %v6338 = vld [vmem:[%s688 + $0x99] sm:$0xff]
      %v6339 = vld [vmem:[%s688 + $0xa9] sm:$0xff]
      %v6340 = vld [vmem:[%s688 + $0xb1] sm:$0xff]
      %v6341 = vld [vmem:[%s5] sm:$0x1]
      %v6343 = vperm.slane %v6341, 0
      %v6345 = vmul.f32 %v6309, %v6343
      %v6346 = vmul.f32 %v6310, %v6343
      %v6347 = vmul.f32 %v6311, %v6343
      %v6348 = vmul.f32 %v6312, %v6343
      %v6349 = vmul.f32 %v6313, %v6343
      %v6350 = vmul.f32 %v6314, %v6343
      %v6351 = vmul.f32 %v6315, %v6343
      %v6352 = vmul.f32 %v6316, %v6343
      %v6353 = vmul.f32 %v6317, %v6343
      %v6354 = vmul.f32 %v6318, %v6343
      %v6355 = vmul.f32 %v6319, %v6343
      %v6356 = vmul.f32 %v6320, %v6343
      %v6357 = vmul.f32 %v6321, %v6343
      %v6358 = vmul.f32 %v6322, %v6343
      %v6359 = vmul.f32 %v6323, %v6343
      %v6360 = vmul.f32 %v6324, %v6343
      %v6361 = vld [vmem:[%s6] sm:$0x1]
      %v6363 = vperm.slane %v6361, 0
      %v6365 = vadd.f32 %v6345, %v6363
      %v6366 = vadd.f32 %v6346, %v6363
      %v6367 = vadd.f32 %v6347, %v6363
      %v6368 = vadd.f32 %v6348, %v6363
      %v6369 = vadd.f32 %v6349, %v6363
      %v6370 = vadd.f32 %v6350, %v6363
      %v6371 = vadd.f32 %v6351, %v6363
      %v6372 = vadd.f32 %v6352, %v6363
      %v6373 = vadd.f32 %v6353, %v6363
      %v6374 = vadd.f32 %v6354, %v6363
      %v6375 = vadd.f32 %v6355, %v6363
      %v6376 = vadd.f32 %v6356, %v6363
      %v6377 = vadd.f32 %v6357, %v6363
      %v6378 = vadd.f32 %v6358, %v6363
      %v6379 = vadd.f32 %v6359, %v6363
      %v6380 = vadd.f32 %v6360, %v6363
      %v6381 = vadd.f32 %v6365, %v6325
      %v6382 = vadd.f32 %v6366, %v6326
      %v6383 = vadd.f32 %v6367, %v6327
      %v6384 = vadd.f32 %v6368, %v6328
      %v6385 = vadd.f32 %v6369, %v6329
      %v6386 = vadd.f32 %v6370, %v6330
      %v6387 = vadd.f32 %v6371, %v6331
      %v6388 = vadd.f32 %v6372, %v6332
      %v6389 = vadd.f32 %v6373, %v6333
      %v6390 = vadd.f32 %v6374, %v6334
      %v6391 = vadd.f32 %v6375, %v6335
      %v6392 = vadd.f32 %v6376, %v6336
      %v6393 = vadd.f32 %v6377, %v6337
      %v6394 = vadd.f32 %v6378, %v6338
      %v6395 = vadd.f32 %v6379, %v6339
      %v6396 = vadd.f32 %v6380, %v6340
      %6397 = vst [vmem:[%s278] sm:$0xff] %v6381
      %6398 = vst [vmem:[%s278 + $0x8] sm:$0xff] %v6382
      %6399 = vst [vmem:[%s278 + $0x10] sm:$0xff] %v6383
      %6400 = vst [vmem:[%s278 + $0x18] sm:$0xff] %v6384
      %6401 = vst [vmem:[%s278 + $0x20] sm:$0xff] %v6385
      %6402 = vst [vmem:[%s278 + $0x28] sm:$0xff] %v6386
      %6403 = vst [vmem:[%s278 + $0x30] sm:$0xff] %v6387
      %6404 = vst [vmem:[%s278 + $0x38] sm:$0xff] %v6388
      %6405 = vst [vmem:[%s278 + $0x40] sm:$0xff] %v6389
      %6406 = vst [vmem:[%s278 + $0x48] sm:$0xff] %v6390
      %6407 = vst [vmem:[%s278 + $0x50] sm:$0xff] %v6391
      %6408 = vst [vmem:[%s278 + $0x58] sm:$0xff] %v6392
      %6409 = vst [vmem:[%s278 + $0x60] sm:$0xff] %v6393
      %6410 = vst [vmem:[%s278 + $0x68] sm:$0xff] %v6394
      %6411 = vst [vmem:[%s278 + $0x70] sm:$0xff] %v6395
      %6412 = vst [vmem:[%s278 + $0x78] sm:$0xff] %v6396
      %s6413 = scalar_lea.vmem [#allocation2], 96
      %v6414 = vld [vmem:[%s6413] sm:$0xf]
      %v6415 = vld [vmem:[%s6413 + $0x4] sm:$0xf]
      %v6416 = vld [vmem:[%s6413 + $0xc] sm:$0xf]
      %v6417 = vld [vmem:[%s6413 + $0x10] sm:$0xf]
      %v6418 = vld [vmem:[%s6413 + $0x18] sm:$0xf]
      %v6419 = vld [vmem:[%s6413 + $0x1c] sm:$0xf]
      %v6420 = vld [vmem:[%s6413 + $0x24] sm:$0xf]
      %v6421 = vld [vmem:[%s6413 + $0x28] sm:$0xf]
      %v6422 = vld [vmem:[%s6413 + $0x30] sm:$0xf]
      %v6423 = vld [vmem:[%s6413 + $0x34] sm:$0xf]
      %v6424 = vld [vmem:[%s6413 + $0x3c] sm:$0xf]
      %v6425 = vld [vmem:[%s6413 + $0x40] sm:$0xf]
      %v6426 = vld [vmem:[%s6413 + $0x48] sm:$0xf]
      %v6427 = vld [vmem:[%s6413 + $0x4c] sm:$0xf]
      %v6428 = vld [vmem:[%s6413 + $0x54] sm:$0xf]
      %v6429 = vld [vmem:[%s6413 + $0x58] sm:$0xf]
      %v6430 = vld [vmem:[%s6413 + $0x8] sm:$0x1]
      %v6431 = vld [vmem:[%s6413 + $0x14] sm:$0x1]
      %v6432 = vld [vmem:[%s6413 + $0x20] sm:$0x1]
      %v6433 = vld [vmem:[%s6413 + $0x2c] sm:$0x1]
      %v6434 = vld [vmem:[%s6413 + $0x38] sm:$0x1]
      %v6435 = vld [vmem:[%s6413 + $0x44] sm:$0x1]
      %v6436 = vld [vmem:[%s6413 + $0x50] sm:$0x1]
      %v6437 = vld [vmem:[%s6413 + $0x5c] sm:$0x1]
      %v6438 = vld [vmem:[%s6413] sm:$0xe]
      %v6439 = vld [vmem:[%s6413 + $0xc] sm:$0xe]
      %v6440 = vld [vmem:[%s6413 + $0x18] sm:$0xe]
      %v6441 = vld [vmem:[%s6413 + $0x24] sm:$0xe]
      %v6442 = vld [vmem:[%s6413 + $0x30] sm:$0xe]
      %v6443 = vld [vmem:[%s6413 + $0x3c] sm:$0xe]
      %v6444 = vld [vmem:[%s6413 + $0x48] sm:$0xe]
      %v6445 = vld [vmem:[%s6413 + $0x54] sm:$0xe]
      %v6462 = vunpack.c.l.b16 %v6414
      %v6463 = vunpack.c.l.b16 %v6415
      %v6464 = vunpack.c.l.b16 %v6416
      %v6465 = vunpack.c.l.b16 %v6417
      %v6466 = vunpack.c.l.b16 %v6418
      %v6467 = vunpack.c.l.b16 %v6419
      %v6468 = vunpack.c.l.b16 %v6420
      %v6469 = vunpack.c.l.b16 %v6421
      %v6470 = vunpack.c.l.b16 %v6422
      %v6471 = vunpack.c.l.b16 %v6423
      %v6472 = vunpack.c.l.b16 %v6424
      %v6473 = vunpack.c.l.b16 %v6425
      %v6474 = vunpack.c.l.b16 %v6426
      %v6475 = vunpack.c.l.b16 %v6427
      %v6476 = vunpack.c.l.b16 %v6428
      %v6477 = vunpack.c.l.b16 %v6429
      %v6478 = vpack.c.b16 %v6463, %v6462
      %v6479 = vpack.c.b16 %v6465, %v6464
      %v6480 = vpack.c.b16 %v6467, %v6466
      %v6481 = vpack.c.b16 %v6469, %v6468
      %v6482 = vpack.c.b16 %v6471, %v6470
      %v6483 = vpack.c.b16 %v6473, %v6472
      %v6484 = vpack.c.b16 %v6475, %v6474
      %v6485 = vpack.c.b16 %v6477, %v6476
      %v6502 = vunpack.c.l.b16 %v6430
      %v6503 = vunpack.c.l.b16 %v6431
      %v6504 = vunpack.c.l.b16 %v6432
      %v6505 = vunpack.c.l.b16 %v6433
      %v6506 = vunpack.c.l.b16 %v6434
      %v6507 = vunpack.c.l.b16 %v6435
      %v6508 = vunpack.c.l.b16 %v6436
      %v6509 = vunpack.c.l.b16 %v6437
      %v6510 = vpack.c.b16 %v6502, %v6502
      %v6511 = vpack.c.b16 %v6503, %v6503
      %v6512 = vpack.c.b16 %v6504, %v6504
      %v6513 = vpack.c.b16 %v6505, %v6505
      %v6514 = vpack.c.b16 %v6506, %v6506
      %v6515 = vpack.c.b16 %v6507, %v6507
      %v6516 = vpack.c.b16 %v6508, %v6508
      %v6517 = vpack.c.b16 %v6509, %v6509
      %v6519 = vshrl.u32 %v6478, 16
      %v6521 = vshll.u32 %v6478, 16
      %v6523 = vrot.slane %v6521, 1
      %v6524 = vor.u32 %v6519, %v6523
      %v6526 = vshll.u32 %v6510, 16
      %v6528 = vrot.slane %v6526, 1
      %v6529 = vsel %vm4599, %v6524, %v6528
      %v6531 = vshrl.u32 %v6479, 16
      %v6533 = vshll.u32 %v6479, 16
      %v6535 = vrot.slane %v6533, 1
      %v6536 = vor.u32 %v6531, %v6535
      %v6538 = vshll.u32 %v6511, 16
      %v6540 = vrot.slane %v6538, 1
      %v6541 = vsel %vm4599, %v6536, %v6540
      %v6543 = vshrl.u32 %v6480, 16
      %v6545 = vshll.u32 %v6480, 16
      %v6547 = vrot.slane %v6545, 1
      %v6548 = vor.u32 %v6543, %v6547
      %v6550 = vshll.u32 %v6512, 16
      %v6552 = vrot.slane %v6550, 1
      %v6553 = vsel %vm4599, %v6548, %v6552
      %v6555 = vshrl.u32 %v6481, 16
      %v6557 = vshll.u32 %v6481, 16
      %v6559 = vrot.slane %v6557, 1
      %v6560 = vor.u32 %v6555, %v6559
      %v6562 = vshll.u32 %v6513, 16
      %v6564 = vrot.slane %v6562, 1
      %v6565 = vsel %vm4599, %v6560, %v6564
      %v6567 = vshrl.u32 %v6482, 16
      %v6569 = vshll.u32 %v6482, 16
      %v6571 = vrot.slane %v6569, 1
      %v6572 = vor.u32 %v6567, %v6571
      %v6574 = vshll.u32 %v6514, 16
      %v6576 = vrot.slane %v6574, 1
      %v6577 = vsel %vm4599, %v6572, %v6576
      %v6579 = vshrl.u32 %v6483, 16
      %v6581 = vshll.u32 %v6483, 16
      %v6583 = vrot.slane %v6581, 1
      %v6584 = vor.u32 %v6579, %v6583
      %v6586 = vshll.u32 %v6515, 16
      %v6588 = vrot.slane %v6586, 1
      %v6589 = vsel %vm4599, %v6584, %v6588
      %v6591 = vshrl.u32 %v6484, 16
      %v6593 = vshll.u32 %v6484, 16
      %v6595 = vrot.slane %v6593, 1
      %v6596 = vor.u32 %v6591, %v6595
      %v6598 = vshll.u32 %v6516, 16
      %v6600 = vrot.slane %v6598, 1
      %v6601 = vsel %vm4599, %v6596, %v6600
      %v6603 = vshrl.u32 %v6485, 16
      %v6605 = vshll.u32 %v6485, 16
      %v6607 = vrot.slane %v6605, 1
      %v6608 = vor.u32 %v6603, %v6607
      %v6610 = vshll.u32 %v6517, 16
      %v6612 = vrot.slane %v6610, 1
      %v6613 = vsel %vm4599, %v6608, %v6612
      %v6630 = vunpack.c.l.b16 %v6438
      %v6631 = vunpack.c.l.b16 %v6439
      %v6632 = vunpack.c.l.b16 %v6440
      %v6633 = vunpack.c.l.b16 %v6441
      %v6634 = vunpack.c.l.b16 %v6442
      %v6635 = vunpack.c.l.b16 %v6443
      %v6636 = vunpack.c.l.b16 %v6444
      %v6637 = vunpack.c.l.b16 %v6445
      %v6638 = vpack.c.b16 %v6463, %v6630
      %v6639 = vpack.c.b16 %v6465, %v6631
      %v6640 = vpack.c.b16 %v6467, %v6632
      %v6641 = vpack.c.b16 %v6469, %v6633
      %v6642 = vpack.c.b16 %v6471, %v6634
      %v6643 = vpack.c.b16 %v6473, %v6635
      %v6644 = vpack.c.b16 %v6475, %v6636
      %v6645 = vpack.c.b16 %v6477, %v6637
      %v6646 = vrot.slane %v6638, 1
      %v6647 = vrot.slane %v6510, 1
      %v6648 = vsel %vm4728, %v6646, %v6647
      %v6649 = vrot.slane %v6639, 1
      %v6650 = vrot.slane %v6511, 1
      %v6651 = vsel %vm4728, %v6649, %v6650
      %v6652 = vrot.slane %v6640, 1
      %v6653 = vrot.slane %v6512, 1
      %v6654 = vsel %vm4728, %v6652, %v6653
      %v6655 = vrot.slane %v6641, 1
      %v6656 = vrot.slane %v6513, 1
      %v6657 = vsel %vm4728, %v6655, %v6656
      %v6658 = vrot.slane %v6642, 1
      %v6659 = vrot.slane %v6514, 1
      %v6660 = vsel %vm4728, %v6658, %v6659
      %v6661 = vrot.slane %v6643, 1
      %v6662 = vrot.slane %v6515, 1
      %v6663 = vsel %vm4728, %v6661, %v6662
      %v6664 = vrot.slane %v6644, 1
      %v6665 = vrot.slane %v6516, 1
      %v6666 = vsel %vm4728, %v6664, %v6665
      %v6667 = vrot.slane %v6645, 1
      %v6668 = vrot.slane %v6517, 1
      %v6669 = vsel %vm4728, %v6667, %v6668
      %v6678 = vld [vmem:[%s4] sm:$0xf]
      %v6679 = vld [vmem:[%s4 + $0x4] sm:$0xf]
      %v6680 = vld [vmem:[%s4 + $0x8] sm:$0xf]
      %v6681 = vld [vmem:[%s4 + $0xc] sm:$0xf]
      %v6682 = vld [vmem:[%s4 + $0x10] sm:$0xf]
      %v6683 = vld [vmem:[%s4 + $0x14] sm:$0xf]
      %v6684 = vld [vmem:[%s4 + $0x18] sm:$0xf]
      %v6685 = vld [vmem:[%s4 + $0x1c] sm:$0xf]
      %v6686 = vld [vmem:[%s4 + $0x20] sm:$0xf]
      %v6687 = vld [vmem:[%s4 + $0x24] sm:$0xf]
      %v6688 = vld [vmem:[%s4 + $0x28] sm:$0xf]
      %v6689 = vld [vmem:[%s4 + $0x2c] sm:$0xf]
      %v6690 = vld [vmem:[%s4 + $0x30] sm:$0xf]
      %v6691 = vld [vmem:[%s4 + $0x34] sm:$0xf]
      %v6692 = vld [vmem:[%s4 + $0x38] sm:$0xf]
      %v6693 = vld [vmem:[%s4 + $0x3c] sm:$0xf]
      %v6694 = vld [vmem:[%s4 + $0x40] sm:$0xf]
      %v6695 = vld [vmem:[%s4 + $0x44] sm:$0xf]
      %v6696 = vld [vmem:[%s4 + $0x48] sm:$0xf]
      %v6697 = vld [vmem:[%s4 + $0x4c] sm:$0xf]
      %v6698 = vld [vmem:[%s4 + $0x50] sm:$0xf]
      %v6699 = vld [vmem:[%s4 + $0x54] sm:$0xf]
      %v6700 = vld [vmem:[%s4 + $0x58] sm:$0xf]
      %v6701 = vld [vmem:[%s4 + $0x5c] sm:$0xf]
      %v6702 = vld [vmem:[%s4 + $0x60] sm:$0xf]
      %v6703 = vld [vmem:[%s4 + $0x64] sm:$0xf]
      %v6704 = vld [vmem:[%s4 + $0x68] sm:$0xf]
      %v6705 = vld [vmem:[%s4 + $0x6c] sm:$0xf]
      %v6706 = vld [vmem:[%s4 + $0x70] sm:$0xf]
      %v6707 = vld [vmem:[%s4 + $0x74] sm:$0xf]
      %v6708 = vld [vmem:[%s4 + $0x78] sm:$0xf]
      %v6709 = vld [vmem:[%s4 + $0x7c] sm:$0xf]
      %v6710 = vld [vmem:[%s4 + $0x80] sm:$0xf]
      %v6711 = vld [vmem:[%s4 + $0x84] sm:$0xf]
      %v6712 = vld [vmem:[%s4 + $0x88] sm:$0xf]
      %v6713 = vld [vmem:[%s4 + $0x8c] sm:$0xf]
      %v6714 = vld [vmem:[%s4 + $0x90] sm:$0xf]
      %v6715 = vld [vmem:[%s4 + $0x94] sm:$0xf]
      %v6716 = vld [vmem:[%s4 + $0x98] sm:$0xf]
      %v6717 = vld [vmem:[%s4 + $0x9c] sm:$0xf]
      %v6718 = vld [vmem:[%s4 + $0xa0] sm:$0xf]
      %v6719 = vld [vmem:[%s4 + $0xa4] sm:$0xf]
      %v6720 = vld [vmem:[%s4 + $0xa8] sm:$0xf]
      %v6721 = vld [vmem:[%s4 + $0xac] sm:$0xf]
      %v6722 = vld [vmem:[%s4 + $0xb0] sm:$0xf]
      %v6723 = vld [vmem:[%s4 + $0xb4] sm:$0xf]
      %v6724 = vld [vmem:[%s4 + $0xb8] sm:$0xf]
      %v6725 = vld [vmem:[%s4 + $0xbc] sm:$0xf]
      %v6726 = vld [vmem:[%s4438] sm:$0xf]
      %v6727 = vld [vmem:[%s4438 + $0x4] sm:$0xf]
      %v6728 = vld [vmem:[%s4438 + $0xc] sm:$0xf]
      %v6729 = vld [vmem:[%s4438 + $0x10] sm:$0xf]
      %v6730 = vld [vmem:[%s4438 + $0x18] sm:$0xf]
      %v6731 = vld [vmem:[%s4438 + $0x1c] sm:$0xf]
      %v6732 = vld [vmem:[%s4438 + $0x24] sm:$0xf]
      %v6733 = vld [vmem:[%s4438 + $0x28] sm:$0xf]
      %v6734 = vld [vmem:[%s4438 + $0x30] sm:$0xf]
      %v6735 = vld [vmem:[%s4438 + $0x34] sm:$0xf]
      %v6736 = vld [vmem:[%s4438 + $0x3c] sm:$0xf]
      %v6737 = vld [vmem:[%s4438 + $0x40] sm:$0xf]
      %v6738 = vld [vmem:[%s4438 + $0x48] sm:$0xf]
      %v6739 = vld [vmem:[%s4438 + $0x4c] sm:$0xf]
      %v6740 = vld [vmem:[%s4438 + $0x54] sm:$0xf]
      %v6741 = vld [vmem:[%s4438 + $0x58] sm:$0xf]
      %v6742 = vld [vmem:[%s4438 + $0x8] sm:$0x1]
      %v6743 = vld [vmem:[%s4438 + $0x14] sm:$0x1]
      %v6744 = vld [vmem:[%s4438 + $0x20] sm:$0x1]
      %v6745 = vld [vmem:[%s4438 + $0x2c] sm:$0x1]
      %v6746 = vld [vmem:[%s4438 + $0x38] sm:$0x1]
      %v6747 = vld [vmem:[%s4438 + $0x44] sm:$0x1]
      %v6748 = vld [vmem:[%s4438 + $0x50] sm:$0x1]
      %v6749 = vld [vmem:[%s4438 + $0x5c] sm:$0x1]
      %v6750 = vld [vmem:[%s4438] sm:$0xe]
      %v6751 = vld [vmem:[%s4438 + $0xc] sm:$0xe]
      %v6752 = vld [vmem:[%s4438 + $0x18] sm:$0xe]
      %v6753 = vld [vmem:[%s4438 + $0x24] sm:$0xe]
      %v6754 = vld [vmem:[%s4438 + $0x30] sm:$0xe]
      %v6755 = vld [vmem:[%s4438 + $0x3c] sm:$0xe]
      %v6756 = vld [vmem:[%s4438 + $0x48] sm:$0xe]
      %v6757 = vld [vmem:[%s4438 + $0x54] sm:$0xe]
      %v6774 = vunpack.c.l.b16 %v6726
      %v6775 = vunpack.c.l.b16 %v6727
      %v6776 = vunpack.c.l.b16 %v6728
      %v6777 = vunpack.c.l.b16 %v6729
      %v6778 = vunpack.c.l.b16 %v6730
      %v6779 = vunpack.c.l.b16 %v6731
      %v6780 = vunpack.c.l.b16 %v6732
      %v6781 = vunpack.c.l.b16 %v6733
      %v6782 = vunpack.c.l.b16 %v6734
      %v6783 = vunpack.c.l.b16 %v6735
      %v6784 = vunpack.c.l.b16 %v6736
      %v6785 = vunpack.c.l.b16 %v6737
      %v6786 = vunpack.c.l.b16 %v6738
      %v6787 = vunpack.c.l.b16 %v6739
      %v6788 = vunpack.c.l.b16 %v6740
      %v6789 = vunpack.c.l.b16 %v6741
      %v6790 = vpack.c.b16 %v6775, %v6774
      %v6791 = vpack.c.b16 %v6777, %v6776
      %v6792 = vpack.c.b16 %v6779, %v6778
      %v6793 = vpack.c.b16 %v6781, %v6780
      %v6794 = vpack.c.b16 %v6783, %v6782
      %v6795 = vpack.c.b16 %v6785, %v6784
      %v6796 = vpack.c.b16 %v6787, %v6786
      %v6797 = vpack.c.b16 %v6789, %v6788
      %v6814 = vunpack.c.l.b16 %v6742
      %v6815 = vunpack.c.l.b16 %v6743
      %v6816 = vunpack.c.l.b16 %v6744
      %v6817 = vunpack.c.l.b16 %v6745
      %v6818 = vunpack.c.l.b16 %v6746
      %v6819 = vunpack.c.l.b16 %v6747
      %v6820 = vunpack.c.l.b16 %v6748
      %v6821 = vunpack.c.l.b16 %v6749
      %v6822 = vpack.c.b16 %v6814, %v6814
      %v6823 = vpack.c.b16 %v6815, %v6815
      %v6824 = vpack.c.b16 %v6816, %v6816
      %v6825 = vpack.c.b16 %v6817, %v6817
      %v6826 = vpack.c.b16 %v6818, %v6818
      %v6827 = vpack.c.b16 %v6819, %v6819
      %v6828 = vpack.c.b16 %v6820, %v6820
      %v6829 = vpack.c.b16 %v6821, %v6821
      %v6831 = vshrl.u32 %v6790, 16
      %v6833 = vshll.u32 %v6790, 16
      %v6835 = vrot.slane %v6833, 1
      %v6836 = vor.u32 %v6831, %v6835
      %v6838 = vshll.u32 %v6822, 16
      %v6840 = vrot.slane %v6838, 1
      %v6841 = vsel %vm4599, %v6836, %v6840
      %v6843 = vshrl.u32 %v6791, 16
      %v6845 = vshll.u32 %v6791, 16
      %v6847 = vrot.slane %v6845, 1
      %v6848 = vor.u32 %v6843, %v6847
      %v6850 = vshll.u32 %v6823, 16
      %v6852 = vrot.slane %v6850, 1
      %v6853 = vsel %vm4599, %v6848, %v6852
      %v6855 = vshrl.u32 %v6792, 16
      %v6857 = vshll.u32 %v6792, 16
      %v6859 = vrot.slane %v6857, 1
      %v6860 = vor.u32 %v6855, %v6859
      %v6862 = vshll.u32 %v6824, 16
      %v6864 = vrot.slane %v6862, 1
      %v6865 = vsel %vm4599, %v6860, %v6864
      %v6867 = vshrl.u32 %v6793, 16
      %v6869 = vshll.u32 %v6793, 16
      %v6871 = vrot.slane %v6869, 1
      %v6872 = vor.u32 %v6867, %v6871
      %v6874 = vshll.u32 %v6825, 16
      %v6876 = vrot.slane %v6874, 1
      %v6877 = vsel %vm4599, %v6872, %v6876
      %v6879 = vshrl.u32 %v6794, 16
      %v6881 = vshll.u32 %v6794, 16
      %v6883 = vrot.slane %v6881, 1
      %v6884 = vor.u32 %v6879, %v6883
      %v6886 = vshll.u32 %v6826, 16
      %v6888 = vrot.slane %v6886, 1
      %v6889 = vsel %vm4599, %v6884, %v6888
      %v6891 = vshrl.u32 %v6795, 16
      %v6893 = vshll.u32 %v6795, 16
      %v6895 = vrot.slane %v6893, 1
      %v6896 = vor.u32 %v6891, %v6895
      %v6898 = vshll.u32 %v6827, 16
      %v6900 = vrot.slane %v6898, 1
      %v6901 = vsel %vm4599, %v6896, %v6900
      %v6903 = vshrl.u32 %v6796, 16
      %v6905 = vshll.u32 %v6796, 16
      %v6907 = vrot.slane %v6905, 1
      %v6908 = vor.u32 %v6903, %v6907
      %v6910 = vshll.u32 %v6828, 16
      %v6912 = vrot.slane %v6910, 1
      %v6913 = vsel %vm4599, %v6908, %v6912
      %v6915 = vshrl.u32 %v6797, 16
      %v6917 = vshll.u32 %v6797, 16
      %v6919 = vrot.slane %v6917, 1
      %v6920 = vor.u32 %v6915, %v6919
      %v6922 = vshll.u32 %v6829, 16
      %v6924 = vrot.slane %v6922, 1
      %v6925 = vsel %vm4599, %v6920, %v6924
      %v6942 = vunpack.c.l.b16 %v6750
      %v6943 = vunpack.c.l.b16 %v6751
      %v6944 = vunpack.c.l.b16 %v6752
      %v6945 = vunpack.c.l.b16 %v6753
      %v6946 = vunpack.c.l.b16 %v6754
      %v6947 = vunpack.c.l.b16 %v6755
      %v6948 = vunpack.c.l.b16 %v6756
      %v6949 = vunpack.c.l.b16 %v6757
      %v6950 = vpack.c.b16 %v6775, %v6942
      %v6951 = vpack.c.b16 %v6777, %v6943
      %v6952 = vpack.c.b16 %v6779, %v6944
      %v6953 = vpack.c.b16 %v6781, %v6945
      %v6954 = vpack.c.b16 %v6783, %v6946
      %v6955 = vpack.c.b16 %v6785, %v6947
      %v6956 = vpack.c.b16 %v6787, %v6948
      %v6957 = vpack.c.b16 %v6789, %v6949
      %v6958 = vrot.slane %v6950, 1
      %v6959 = vrot.slane %v6822, 1
      %v6960 = vsel %vm4728, %v6958, %v6959
      %v6961 = vrot.slane %v6951, 1
      %v6962 = vrot.slane %v6823, 1
      %v6963 = vsel %vm4728, %v6961, %v6962
      %v6964 = vrot.slane %v6952, 1
      %v6965 = vrot.slane %v6824, 1
      %v6966 = vsel %vm4728, %v6964, %v6965
      %v6967 = vrot.slane %v6953, 1
      %v6968 = vrot.slane %v6825, 1
      %v6969 = vsel %vm4728, %v6967, %v6968
      %v6970 = vrot.slane %v6954, 1
      %v6971 = vrot.slane %v6826, 1
      %v6972 = vsel %vm4728, %v6970, %v6971
      %v6973 = vrot.slane %v6955, 1
      %v6974 = vrot.slane %v6827, 1
      %v6975 = vsel %vm4728, %v6973, %v6974
      %v6976 = vrot.slane %v6956, 1
      %v6977 = vrot.slane %v6828, 1
      %v6978 = vsel %vm4728, %v6976, %v6977
      %v6979 = vrot.slane %v6957, 1
      %v6980 = vrot.slane %v6829, 1
      %v6981 = vsel %vm4728, %v6979, %v6980
      %v6990 = vld [vmem:[%s5073] sm:$0xf]
      %v6991 = vld [vmem:[%s5073 + $0x4] sm:$0xf]
      %v6992 = vld [vmem:[%s5073 + $0x8] sm:$0xf]
      %v6993 = vld [vmem:[%s5073 + $0xc] sm:$0xf]
      %v6994 = vld [vmem:[%s5073 + $0x10] sm:$0xf]
      %v6995 = vld [vmem:[%s5073 + $0x14] sm:$0xf]
      %v6996 = vld [vmem:[%s5073 + $0x18] sm:$0xf]
      %v6997 = vld [vmem:[%s5073 + $0x1c] sm:$0xf]
      %v6998 = vld [vmem:[%s5073 + $0x20] sm:$0xf]
      %v6999 = vld [vmem:[%s5073 + $0x24] sm:$0xf]
      %v7000 = vld [vmem:[%s5073 + $0x28] sm:$0xf]
      %v7001 = vld [vmem:[%s5073 + $0x2c] sm:$0xf]
      %v7002 = vld [vmem:[%s5073 + $0x30] sm:$0xf]
      %v7003 = vld [vmem:[%s5073 + $0x34] sm:$0xf]
      %v7004 = vld [vmem:[%s5073 + $0x38] sm:$0xf]
      %v7005 = vld [vmem:[%s5073 + $0x3c] sm:$0xf]
      %v7006 = vld [vmem:[%s5073 + $0x40] sm:$0xf]
      %v7007 = vld [vmem:[%s5073 + $0x44] sm:$0xf]
      %v7008 = vld [vmem:[%s5073 + $0x48] sm:$0xf]
      %v7009 = vld [vmem:[%s5073 + $0x4c] sm:$0xf]
      %v7010 = vld [vmem:[%s5073 + $0x50] sm:$0xf]
      %v7011 = vld [vmem:[%s5073 + $0x54] sm:$0xf]
      %v7012 = vld [vmem:[%s5073 + $0x58] sm:$0xf]
      %v7013 = vld [vmem:[%s5073 + $0x5c] sm:$0xf]
      %v7014 = vld [vmem:[%s5073 + $0x60] sm:$0xf]
      %v7015 = vld [vmem:[%s5073 + $0x64] sm:$0xf]
      %v7016 = vld [vmem:[%s5073 + $0x68] sm:$0xf]
      %v7017 = vld [vmem:[%s5073 + $0x6c] sm:$0xf]
      %v7018 = vld [vmem:[%s5073 + $0x70] sm:$0xf]
      %v7019 = vld [vmem:[%s5073 + $0x74] sm:$0xf]
      %v7020 = vld [vmem:[%s5073 + $0x78] sm:$0xf]
      %v7021 = vld [vmem:[%s5073 + $0x7c] sm:$0xf]
      %v7022 = vld [vmem:[%s5073 + $0x80] sm:$0xf]
      %v7023 = vld [vmem:[%s5073 + $0x84] sm:$0xf]
      %v7024 = vld [vmem:[%s5073 + $0x88] sm:$0xf]
      %v7025 = vld [vmem:[%s5073 + $0x8c] sm:$0xf]
      %v7026 = vld [vmem:[%s5073 + $0x90] sm:$0xf]
      %v7027 = vld [vmem:[%s5073 + $0x94] sm:$0xf]
      %v7028 = vld [vmem:[%s5073 + $0x98] sm:$0xf]
      %v7029 = vld [vmem:[%s5073 + $0x9c] sm:$0xf]
      %v7030 = vld [vmem:[%s5073 + $0xa0] sm:$0xf]
      %v7031 = vld [vmem:[%s5073 + $0xa4] sm:$0xf]
      %v7032 = vld [vmem:[%s5073 + $0xa8] sm:$0xf]
      %v7033 = vld [vmem:[%s5073 + $0xac] sm:$0xf]
      %v7034 = vld [vmem:[%s5073 + $0xb0] sm:$0xf]
      %v7035 = vld [vmem:[%s5073 + $0xb4] sm:$0xf]
      %v7036 = vld [vmem:[%s5073 + $0xb8] sm:$0xf]
      %v7037 = vld [vmem:[%s5073 + $0xbc] sm:$0xf]
      %v7086 = vunpack.c.l.b16 %v6990
      %v7087 = vunpack.c.l.b16 %v6991
      %v7088 = vunpack.c.l.b16 %v6992
      %v7089 = vunpack.c.l.b16 %v6993
      %v7090 = vunpack.c.l.b16 %v6994
      %v7091 = vunpack.c.l.b16 %v6995
      %v7092 = vunpack.c.l.b16 %v6996
      %v7093 = vunpack.c.l.b16 %v6997
      %v7094 = vunpack.c.l.b16 %v6998
      %v7095 = vunpack.c.l.b16 %v6999
      %v7096 = vunpack.c.l.b16 %v7000
      %v7097 = vunpack.c.l.b16 %v7001
      %v7098 = vunpack.c.l.b16 %v7002
      %v7099 = vunpack.c.l.b16 %v7003
      %v7100 = vunpack.c.l.b16 %v7004
      %v7101 = vunpack.c.l.b16 %v7005
      %v7102 = vunpack.c.l.b16 %v7006
      %v7103 = vunpack.c.l.b16 %v7007
      %v7104 = vunpack.c.l.b16 %v7008
      %v7105 = vunpack.c.l.b16 %v7009
      %v7106 = vunpack.c.l.b16 %v7010
      %v7107 = vunpack.c.l.b16 %v7011
      %v7108 = vunpack.c.l.b16 %v7012
      %v7109 = vunpack.c.l.b16 %v7013
      %v7110 = vunpack.c.l.b16 %v7014
      %v7111 = vunpack.c.l.b16 %v7015
      %v7112 = vunpack.c.l.b16 %v7016
      %v7113 = vunpack.c.l.b16 %v7017
      %v7114 = vunpack.c.l.b16 %v7018
      %v7115 = vunpack.c.l.b16 %v7019
      %v7116 = vunpack.c.l.b16 %v7020
      %v7117 = vunpack.c.l.b16 %v7021
      %v7118 = vunpack.c.l.b16 %v7022
      %v7119 = vunpack.c.l.b16 %v7023
      %v7120 = vunpack.c.l.b16 %v7024
      %v7121 = vunpack.c.l.b16 %v7025
      %v7122 = vunpack.c.l.b16 %v7026
      %v7123 = vunpack.c.l.b16 %v7027
      %v7124 = vunpack.c.l.b16 %v7028
      %v7125 = vunpack.c.l.b16 %v7029
      %v7126 = vunpack.c.l.b16 %v7030
      %v7127 = vunpack.c.l.b16 %v7031
      %v7128 = vunpack.c.l.b16 %v7032
      %v7129 = vunpack.c.l.b16 %v7033
      %v7130 = vunpack.c.l.b16 %v7034
      %v7131 = vunpack.c.l.b16 %v7035
      %v7132 = vunpack.c.l.b16 %v7036
      %v7133 = vunpack.c.l.b16 %v7037
      %v7134 = vpack.c.b16 %v7087, %v7086
      %v7135 = vpack.c.b16 %v7089, %v7088
      %v7136 = vpack.c.b16 %v7091, %v7090
      %v7137 = vpack.c.b16 %v7093, %v7092
      %v7138 = vpack.c.b16 %v7095, %v7094
      %v7139 = vpack.c.b16 %v7097, %v7096
      %v7140 = vpack.c.b16 %v7099, %v7098
      %v7141 = vpack.c.b16 %v7101, %v7100
      %v7142 = vpack.c.b16 %v7103, %v7102
      %v7143 = vpack.c.b16 %v7105, %v7104
      %v7144 = vpack.c.b16 %v7107, %v7106
      %v7145 = vpack.c.b16 %v7109, %v7108
      %v7146 = vpack.c.b16 %v7111, %v7110
      %v7147 = vpack.c.b16 %v7113, %v7112
      %v7148 = vpack.c.b16 %v7115, %v7114
      %v7149 = vpack.c.b16 %v7117, %v7116
      %v7150 = vpack.c.b16 %v7119, %v7118
      %v7151 = vpack.c.b16 %v7121, %v7120
      %v7152 = vpack.c.b16 %v7123, %v7122
      %v7153 = vpack.c.b16 %v7125, %v7124
      %v7154 = vpack.c.b16 %v7127, %v7126
      %v7155 = vpack.c.b16 %v7129, %v7128
      %v7156 = vpack.c.b16 %v7131, %v7130
      %v7157 = vpack.c.b16 %v7133, %v7132
      %7182 = vmatpush.bf16.msra.mxu0 %v7141
      %7183 = vmatpush.bf16.msra.mxu0 %v7140
      %7184 = vmatpush.bf16.msra.mxu0 %v7139
      %7185 = vmatpush.bf16.msra.mxu0 %v7138
      %7186 = vmatpush.bf16.msra.mxu0 %v7137
      %7187 = vmatpush.bf16.msra.mxu0 %v7136
      %7188 = vmatpush.bf16.msra.mxu0 %v7135
      %7189 = vmatpush.bf16.msra.mxu0 %v7134
      %7190 = vmatmul.bf16.gmra.mxu0 %v6790
      %v7191 = vpop.f32.mrf.mxu0
      %v7192 = vadd.f32 0.0, %v7191
      %v7193 = vpop.f32.mrf.mxu0
      %v7194 = vadd.f32 0.0, %v7193
      %7195 = vmatmul.bf16.gmra.mxu0 %v6791
      %v7196 = vpop.f32.mrf.mxu0
      %v7197 = vadd.f32 0.0, %v7196
      %v7198 = vpop.f32.mrf.mxu0
      %v7199 = vadd.f32 0.0, %v7198
      %7200 = vmatmul.bf16.gmra.mxu0 %v6792
      %v7201 = vpop.f32.mrf.mxu0
      %v7202 = vadd.f32 0.0, %v7201
      %v7203 = vpop.f32.mrf.mxu0
      %v7204 = vadd.f32 0.0, %v7203
      %7205 = vmatmul.bf16.gmra.mxu0 %v6793
      %v7206 = vpop.f32.mrf.mxu0
      %v7207 = vadd.f32 0.0, %v7206
      %v7208 = vpop.f32.mrf.mxu0
      %v7209 = vadd.f32 0.0, %v7208
      %7210 = vmatmul.bf16.gmra.mxu0 %v6794
      %v7211 = vpop.f32.mrf.mxu0
      %v7212 = vadd.f32 0.0, %v7211
      %v7213 = vpop.f32.mrf.mxu0
      %v7214 = vadd.f32 0.0, %v7213
      %7215 = vmatmul.bf16.gmra.mxu0 %v6795
      %v7216 = vpop.f32.mrf.mxu0
      %v7217 = vadd.f32 0.0, %v7216
      %v7218 = vpop.f32.mrf.mxu0
      %v7219 = vadd.f32 0.0, %v7218
      %7220 = vmatmul.bf16.gmra.mxu0 %v6796
      %v7221 = vpop.f32.mrf.mxu0
      %v7222 = vadd.f32 0.0, %v7221
      %v7223 = vpop.f32.mrf.mxu0
      %v7224 = vadd.f32 0.0, %v7223
      %7225 = vmatmul.bf16.gmra.mxu0 %v6797
      %v7226 = vpop.f32.mrf.mxu0
      %v7227 = vadd.f32 0.0, %v7226
      %v7228 = vpop.f32.mrf.mxu0
      %v7229 = vadd.f32 0.0, %v7228
      %7230 = vdwg.mxu0
      %7231 = vmatpush.bf16.msra.mxu0 %v7149
      %7232 = vmatpush.bf16.msra.mxu0 %v7148
      %7233 = vmatpush.bf16.msra.mxu0 %v7147
      %7234 = vmatpush.bf16.msra.mxu0 %v7146
      %7235 = vmatpush.bf16.msra.mxu0 %v7145
      %7236 = vmatpush.bf16.msra.mxu0 %v7144
      %7237 = vmatpush.bf16.msra.mxu0 %v7143
      %7238 = vmatpush.bf16.msra.mxu0 %v7142
      %7239 = vmatmul.bf16.gmra.mxu0 %v6841
      %v7240 = vpop.f32.mrf.mxu0
      %v7241 = vadd.f32 %v7192, %v7240
      %v7242 = vpop.f32.mrf.mxu0
      %v7243 = vadd.f32 %v7194, %v7242
      %7244 = vmatmul.bf16.gmra.mxu0 %v6853
      %v7245 = vpop.f32.mrf.mxu0
      %v7246 = vadd.f32 %v7197, %v7245
      %v7247 = vpop.f32.mrf.mxu0
      %v7248 = vadd.f32 %v7199, %v7247
      %7249 = vmatmul.bf16.gmra.mxu0 %v6865
      %v7250 = vpop.f32.mrf.mxu0
      %v7251 = vadd.f32 %v7202, %v7250
      %v7252 = vpop.f32.mrf.mxu0
      %v7253 = vadd.f32 %v7204, %v7252
      %7254 = vmatmul.bf16.gmra.mxu0 %v6877
      %v7255 = vpop.f32.mrf.mxu0
      %v7256 = vadd.f32 %v7207, %v7255
      %v7257 = vpop.f32.mrf.mxu0
      %v7258 = vadd.f32 %v7209, %v7257
      %7259 = vmatmul.bf16.gmra.mxu0 %v6889
      %v7260 = vpop.f32.mrf.mxu0
      %v7261 = vadd.f32 %v7212, %v7260
      %v7262 = vpop.f32.mrf.mxu0
      %v7263 = vadd.f32 %v7214, %v7262
      %7264 = vmatmul.bf16.gmra.mxu0 %v6901
      %v7265 = vpop.f32.mrf.mxu0
      %v7266 = vadd.f32 %v7217, %v7265
      %v7267 = vpop.f32.mrf.mxu0
      %v7268 = vadd.f32 %v7219, %v7267
      %7269 = vmatmul.bf16.gmra.mxu0 %v6913
      %v7270 = vpop.f32.mrf.mxu0
      %v7271 = vadd.f32 %v7222, %v7270
      %v7272 = vpop.f32.mrf.mxu0
      %v7273 = vadd.f32 %v7224, %v7272
      %7274 = vmatmul.bf16.gmra.mxu0 %v6925
      %v7275 = vpop.f32.mrf.mxu0
      %v7276 = vadd.f32 %v7227, %v7275
      %v7277 = vpop.f32.mrf.mxu0
      %v7278 = vadd.f32 %v7229, %v7277
      %7279 = vdwg.mxu0
      %7280 = vmatpush.bf16.msra.mxu0 %v7157
      %7281 = vmatpush.bf16.msra.mxu0 %v7156
      %7282 = vmatpush.bf16.msra.mxu0 %v7155
      %7283 = vmatpush.bf16.msra.mxu0 %v7154
      %7284 = vmatpush.bf16.msra.mxu0 %v7153
      %7285 = vmatpush.bf16.msra.mxu0 %v7152
      %7286 = vmatpush.bf16.msra.mxu0 %v7151
      %7287 = vmatpush.bf16.msra.mxu0 %v7150
      %7288 = vmatmul.bf16.gmra.mxu0 %v6960
      %v7289 = vpop.f32.mrf.mxu0
      %v7290 = vadd.f32 %v7241, %v7289
      %v7291 = vpop.f32.mrf.mxu0
      %v7292 = vadd.f32 %v7243, %v7291
      %7293 = vmatmul.bf16.gmra.mxu0 %v6963
      %v7294 = vpop.f32.mrf.mxu0
      %v7295 = vadd.f32 %v7246, %v7294
      %v7296 = vpop.f32.mrf.mxu0
      %v7297 = vadd.f32 %v7248, %v7296
      %7298 = vmatmul.bf16.gmra.mxu0 %v6966
      %v7299 = vpop.f32.mrf.mxu0
      %v7300 = vadd.f32 %v7251, %v7299
      %v7301 = vpop.f32.mrf.mxu0
      %v7302 = vadd.f32 %v7253, %v7301
      %7303 = vmatmul.bf16.gmra.mxu0 %v6969
      %v7304 = vpop.f32.mrf.mxu0
      %v7305 = vadd.f32 %v7256, %v7304
      %v7306 = vpop.f32.mrf.mxu0
      %v7307 = vadd.f32 %v7258, %v7306
      %7308 = vmatmul.bf16.gmra.mxu0 %v6972
      %v7309 = vpop.f32.mrf.mxu0
      %v7310 = vadd.f32 %v7261, %v7309
      %v7311 = vpop.f32.mrf.mxu0
      %v7312 = vadd.f32 %v7263, %v7311
      %7313 = vmatmul.bf16.gmra.mxu0 %v6975
      %v7314 = vpop.f32.mrf.mxu0
      %v7315 = vadd.f32 %v7266, %v7314
      %v7316 = vpop.f32.mrf.mxu0
      %v7317 = vadd.f32 %v7268, %v7316
      %7318 = vmatmul.bf16.gmra.mxu0 %v6978
      %v7319 = vpop.f32.mrf.mxu0
      %v7320 = vadd.f32 %v7271, %v7319
      %v7321 = vpop.f32.mrf.mxu0
      %v7322 = vadd.f32 %v7273, %v7321
      %7323 = vmatmul.bf16.gmra.mxu0 %v6981
      %v7324 = vpop.f32.mrf.mxu0
      %v7325 = vadd.f32 %v7276, %v7324
      %v7326 = vpop.f32.mrf.mxu0
      %v7327 = vadd.f32 %v7278, %v7326
      %7328 = vdwg.mxu0
      %v7377 = vunpack.c.l.b16 %v6678
      %v7378 = vunpack.c.l.b16 %v6679
      %v7379 = vunpack.c.l.b16 %v6680
      %v7380 = vunpack.c.l.b16 %v6681
      %v7381 = vunpack.c.l.b16 %v6682
      %v7382 = vunpack.c.l.b16 %v6683
      %v7383 = vunpack.c.l.b16 %v6684
      %v7384 = vunpack.c.l.b16 %v6685
      %v7385 = vunpack.c.l.b16 %v6686
      %v7386 = vunpack.c.l.b16 %v6687
      %v7387 = vunpack.c.l.b16 %v6688
      %v7388 = vunpack.c.l.b16 %v6689
      %v7389 = vunpack.c.l.b16 %v6690
      %v7390 = vunpack.c.l.b16 %v6691
      %v7391 = vunpack.c.l.b16 %v6692
      %v7392 = vunpack.c.l.b16 %v6693
      %v7393 = vunpack.c.l.b16 %v6694
      %v7394 = vunpack.c.l.b16 %v6695
      %v7395 = vunpack.c.l.b16 %v6696
      %v7396 = vunpack.c.l.b16 %v6697
      %v7397 = vunpack.c.l.b16 %v6698
      %v7398 = vunpack.c.l.b16 %v6699
      %v7399 = vunpack.c.l.b16 %v6700
      %v7400 = vunpack.c.l.b16 %v6701
      %v7401 = vunpack.c.l.b16 %v6702
      %v7402 = vunpack.c.l.b16 %v6703
      %v7403 = vunpack.c.l.b16 %v6704
      %v7404 = vunpack.c.l.b16 %v6705
      %v7405 = vunpack.c.l.b16 %v6706
      %v7406 = vunpack.c.l.b16 %v6707
      %v7407 = vunpack.c.l.b16 %v6708
      %v7408 = vunpack.c.l.b16 %v6709
      %v7409 = vunpack.c.l.b16 %v6710
      %v7410 = vunpack.c.l.b16 %v6711
      %v7411 = vunpack.c.l.b16 %v6712
      %v7412 = vunpack.c.l.b16 %v6713
      %v7413 = vunpack.c.l.b16 %v6714
      %v7414 = vunpack.c.l.b16 %v6715
      %v7415 = vunpack.c.l.b16 %v6716
      %v7416 = vunpack.c.l.b16 %v6717
      %v7417 = vunpack.c.l.b16 %v6718
      %v7418 = vunpack.c.l.b16 %v6719
      %v7419 = vunpack.c.l.b16 %v6720
      %v7420 = vunpack.c.l.b16 %v6721
      %v7421 = vunpack.c.l.b16 %v6722
      %v7422 = vunpack.c.l.b16 %v6723
      %v7423 = vunpack.c.l.b16 %v6724
      %v7424 = vunpack.c.l.b16 %v6725
      %v7425 = vpack.c.b16 %v7378, %v7377
      %v7426 = vpack.c.b16 %v7380, %v7379
      %v7427 = vpack.c.b16 %v7382, %v7381
      %v7428 = vpack.c.b16 %v7384, %v7383
      %v7429 = vpack.c.b16 %v7386, %v7385
      %v7430 = vpack.c.b16 %v7388, %v7387
      %v7431 = vpack.c.b16 %v7390, %v7389
      %v7432 = vpack.c.b16 %v7392, %v7391
      %v7433 = vpack.c.b16 %v7394, %v7393
      %v7434 = vpack.c.b16 %v7396, %v7395
      %v7435 = vpack.c.b16 %v7398, %v7397
      %v7436 = vpack.c.b16 %v7400, %v7399
      %v7437 = vpack.c.b16 %v7402, %v7401
      %v7438 = vpack.c.b16 %v7404, %v7403
      %v7439 = vpack.c.b16 %v7406, %v7405
      %v7440 = vpack.c.b16 %v7408, %v7407
      %v7441 = vpack.c.b16 %v7410, %v7409
      %v7442 = vpack.c.b16 %v7412, %v7411
      %v7443 = vpack.c.b16 %v7414, %v7413
      %v7444 = vpack.c.b16 %v7416, %v7415
      %v7445 = vpack.c.b16 %v7418, %v7417
      %v7446 = vpack.c.b16 %v7420, %v7419
      %v7447 = vpack.c.b16 %v7422, %v7421
      %v7448 = vpack.c.b16 %v7424, %v7423
      %7473 = vmatpush.bf16.msra.mxu0 %v7432
      %7474 = vmatpush.bf16.msra.mxu0 %v7431
      %7475 = vmatpush.bf16.msra.mxu0 %v7430
      %7476 = vmatpush.bf16.msra.mxu0 %v7429
      %7477 = vmatpush.bf16.msra.mxu0 %v7428
      %7478 = vmatpush.bf16.msra.mxu0 %v7427
      %7479 = vmatpush.bf16.msra.mxu0 %v7426
      %7480 = vmatpush.bf16.msra.mxu0 %v7425
      %7481 = vmatmul.bf16.gmra.mxu0 %v6478
      %v7482 = vpop.f32.mrf.mxu0
      %v7483 = vadd.f32 %v7290, %v7482
      %v7484 = vpop.f32.mrf.mxu0
      %v7485 = vadd.f32 %v7292, %v7484
      %7486 = vmatmul.bf16.gmra.mxu0 %v6479
      %v7487 = vpop.f32.mrf.mxu0
      %v7488 = vadd.f32 %v7295, %v7487
      %v7489 = vpop.f32.mrf.mxu0
      %v7490 = vadd.f32 %v7297, %v7489
      %7491 = vmatmul.bf16.gmra.mxu0 %v6480
      %v7492 = vpop.f32.mrf.mxu0
      %v7493 = vadd.f32 %v7300, %v7492
      %v7494 = vpop.f32.mrf.mxu0
      %v7495 = vadd.f32 %v7302, %v7494
      %7496 = vmatmul.bf16.gmra.mxu0 %v6481
      %v7497 = vpop.f32.mrf.mxu0
      %v7498 = vadd.f32 %v7305, %v7497
      %v7499 = vpop.f32.mrf.mxu0
      %v7500 = vadd.f32 %v7307, %v7499
      %7501 = vmatmul.bf16.gmra.mxu0 %v6482
      %v7502 = vpop.f32.mrf.mxu0
      %v7503 = vadd.f32 %v7310, %v7502
      %v7504 = vpop.f32.mrf.mxu0
      %v7505 = vadd.f32 %v7312, %v7504
      %7506 = vmatmul.bf16.gmra.mxu0 %v6483
      %v7507 = vpop.f32.mrf.mxu0
      %v7508 = vadd.f32 %v7315, %v7507
      %v7509 = vpop.f32.mrf.mxu0
      %v7510 = vadd.f32 %v7317, %v7509
      %7511 = vmatmul.bf16.gmra.mxu0 %v6484
      %v7512 = vpop.f32.mrf.mxu0
      %v7513 = vadd.f32 %v7320, %v7512
      %v7514 = vpop.f32.mrf.mxu0
      %v7515 = vadd.f32 %v7322, %v7514
      %7516 = vmatmul.bf16.gmra.mxu0 %v6485
      %v7517 = vpop.f32.mrf.mxu0
      %v7518 = vadd.f32 %v7325, %v7517
      %v7519 = vpop.f32.mrf.mxu0
      %v7520 = vadd.f32 %v7327, %v7519
      %7521 = vdwg.mxu0
      %7522 = vmatpush.bf16.msra.mxu0 %v7440
      %7523 = vmatpush.bf16.msra.mxu0 %v7439
      %7524 = vmatpush.bf16.msra.mxu0 %v7438
      %7525 = vmatpush.bf16.msra.mxu0 %v7437
      %7526 = vmatpush.bf16.msra.mxu0 %v7436
      %7527 = vmatpush.bf16.msra.mxu0 %v7435
      %7528 = vmatpush.bf16.msra.mxu0 %v7434
      %7529 = vmatpush.bf16.msra.mxu0 %v7433
      %7530 = vmatmul.bf16.gmra.mxu0 %v6529
      %v7531 = vpop.f32.mrf.mxu0
      %v7532 = vadd.f32 %v7483, %v7531
      %v7533 = vpop.f32.mrf.mxu0
      %v7534 = vadd.f32 %v7485, %v7533
      %7535 = vmatmul.bf16.gmra.mxu0 %v6541
      %v7536 = vpop.f32.mrf.mxu0
      %v7537 = vadd.f32 %v7488, %v7536
      %v7538 = vpop.f32.mrf.mxu0
      %v7539 = vadd.f32 %v7490, %v7538
      %7540 = vmatmul.bf16.gmra.mxu0 %v6553
      %v7541 = vpop.f32.mrf.mxu0
      %v7542 = vadd.f32 %v7493, %v7541
      %v7543 = vpop.f32.mrf.mxu0
      %v7544 = vadd.f32 %v7495, %v7543
      %7545 = vmatmul.bf16.gmra.mxu0 %v6565
      %v7546 = vpop.f32.mrf.mxu0
      %v7547 = vadd.f32 %v7498, %v7546
      %v7548 = vpop.f32.mrf.mxu0
      %v7549 = vadd.f32 %v7500, %v7548
      %7550 = vmatmul.bf16.gmra.mxu0 %v6577
      %v7551 = vpop.f32.mrf.mxu0
      %v7552 = vadd.f32 %v7503, %v7551
      %v7553 = vpop.f32.mrf.mxu0
      %v7554 = vadd.f32 %v7505, %v7553
      %7555 = vmatmul.bf16.gmra.mxu0 %v6589
      %v7556 = vpop.f32.mrf.mxu0
      %v7557 = vadd.f32 %v7508, %v7556
      %v7558 = vpop.f32.mrf.mxu0
      %v7559 = vadd.f32 %v7510, %v7558
      %7560 = vmatmul.bf16.gmra.mxu0 %v6601
      %v7561 = vpop.f32.mrf.mxu0
      %v7562 = vadd.f32 %v7513, %v7561
      %v7563 = vpop.f32.mrf.mxu0
      %v7564 = vadd.f32 %v7515, %v7563
      %7565 = vmatmul.bf16.gmra.mxu0 %v6613
      %v7566 = vpop.f32.mrf.mxu0
      %v7567 = vadd.f32 %v7518, %v7566
      %v7568 = vpop.f32.mrf.mxu0
      %v7569 = vadd.f32 %v7520, %v7568
      %7570 = vdwg.mxu0
      %7571 = vmatpush.bf16.msra.mxu0 %v7448
      %7572 = vmatpush.bf16.msra.mxu0 %v7447
      %7573 = vmatpush.bf16.msra.mxu0 %v7446
      %7574 = vmatpush.bf16.msra.mxu0 %v7445
      %7575 = vmatpush.bf16.msra.mxu0 %v7444
      %7576 = vmatpush.bf16.msra.mxu0 %v7443
      %7577 = vmatpush.bf16.msra.mxu0 %v7442
      %7578 = vmatpush.bf16.msra.mxu0 %v7441
      %7579 = vmatmul.bf16.gmra.mxu0 %v6648
      %v7580 = vpop.f32.mrf.mxu0
      %v7581 = vadd.f32 %v7532, %v7580
      %v7582 = vpop.f32.mrf.mxu0
      %v7583 = vadd.f32 %v7534, %v7582
      %7584 = vmatmul.bf16.gmra.mxu0 %v6651
      %v7585 = vpop.f32.mrf.mxu0
      %v7586 = vadd.f32 %v7537, %v7585
      %v7587 = vpop.f32.mrf.mxu0
      %v7588 = vadd.f32 %v7539, %v7587
      %7589 = vmatmul.bf16.gmra.mxu0 %v6654
      %v7590 = vpop.f32.mrf.mxu0
      %v7591 = vadd.f32 %v7542, %v7590
      %v7592 = vpop.f32.mrf.mxu0
      %v7593 = vadd.f32 %v7544, %v7592
      %7594 = vmatmul.bf16.gmra.mxu0 %v6657
      %v7595 = vpop.f32.mrf.mxu0
      %v7596 = vadd.f32 %v7547, %v7595
      %v7597 = vpop.f32.mrf.mxu0
      %v7598 = vadd.f32 %v7549, %v7597
      %7599 = vmatmul.bf16.gmra.mxu0 %v6660
      %v7600 = vpop.f32.mrf.mxu0
      %v7601 = vadd.f32 %v7552, %v7600
      %v7602 = vpop.f32.mrf.mxu0
      %v7603 = vadd.f32 %v7554, %v7602
      %7604 = vmatmul.bf16.gmra.mxu0 %v6663
      %v7605 = vpop.f32.mrf.mxu0
      %v7606 = vadd.f32 %v7557, %v7605
      %v7607 = vpop.f32.mrf.mxu0
      %v7608 = vadd.f32 %v7559, %v7607
      %7609 = vmatmul.bf16.gmra.mxu0 %v6666
      %v7610 = vpop.f32.mrf.mxu0
      %v7611 = vadd.f32 %v7562, %v7610
      %v7612 = vpop.f32.mrf.mxu0
      %v7613 = vadd.f32 %v7564, %v7612
      %7614 = vmatmul.bf16.gmra.mxu0 %v6669
      %v7615 = vpop.f32.mrf.mxu0
      %v7616 = vadd.f32 %v7567, %v7615
      %v7617 = vpop.f32.mrf.mxu0
      %v7618 = vadd.f32 %v7569, %v7617
      %7619 = vdwg.mxu0
      %s7620 = scalar_lea.vmem [#allocation2], 120
      %v7621 = vld [vmem:[%s7620] sm:$0xf]
      %v7622 = vld [vmem:[%s7620 + $0x4] sm:$0xf]
      %v7623 = vld [vmem:[%s7620 + $0xc] sm:$0xf]
      %v7624 = vld [vmem:[%s7620 + $0x10] sm:$0xf]
      %v7625 = vld [vmem:[%s7620 + $0x18] sm:$0xf]
      %v7626 = vld [vmem:[%s7620 + $0x1c] sm:$0xf]
      %v7627 = vld [vmem:[%s7620 + $0x24] sm:$0xf]
      %v7628 = vld [vmem:[%s7620 + $0x28] sm:$0xf]
      %v7629 = vld [vmem:[%s7620 + $0x30] sm:$0xf]
      %v7630 = vld [vmem:[%s7620 + $0x34] sm:$0xf]
      %v7631 = vld [vmem:[%s7620 + $0x3c] sm:$0xf]
      %v7632 = vld [vmem:[%s7620 + $0x40] sm:$0xf]
      %v7633 = vld [vmem:[%s7620 + $0x48] sm:$0xf]
      %v7634 = vld [vmem:[%s7620 + $0x4c] sm:$0xf]
      %v7635 = vld [vmem:[%s7620 + $0x54] sm:$0xf]
      %v7636 = vld [vmem:[%s7620 + $0x58] sm:$0xf]
      %v7637 = vld [vmem:[%s7620 + $0x8] sm:$0x1]
      %v7638 = vld [vmem:[%s7620 + $0x14] sm:$0x1]
      %v7639 = vld [vmem:[%s7620 + $0x20] sm:$0x1]
      %v7640 = vld [vmem:[%s7620 + $0x2c] sm:$0x1]
      %v7641 = vld [vmem:[%s7620 + $0x38] sm:$0x1]
      %v7642 = vld [vmem:[%s7620 + $0x44] sm:$0x1]
      %v7643 = vld [vmem:[%s7620 + $0x50] sm:$0x1]
      %v7644 = vld [vmem:[%s7620 + $0x5c] sm:$0x1]
      %v7645 = vld [vmem:[%s7620] sm:$0xe]
      %v7646 = vld [vmem:[%s7620 + $0xc] sm:$0xe]
      %v7647 = vld [vmem:[%s7620 + $0x18] sm:$0xe]
      %v7648 = vld [vmem:[%s7620 + $0x24] sm:$0xe]
      %v7649 = vld [vmem:[%s7620 + $0x30] sm:$0xe]
      %v7650 = vld [vmem:[%s7620 + $0x3c] sm:$0xe]
      %v7651 = vld [vmem:[%s7620 + $0x48] sm:$0xe]
      %v7652 = vld [vmem:[%s7620 + $0x54] sm:$0xe]
      %v7669 = vunpack.c.l.b16 %v7621
      %v7670 = vunpack.c.l.b16 %v7622
      %v7671 = vunpack.c.l.b16 %v7623
      %v7672 = vunpack.c.l.b16 %v7624
      %v7673 = vunpack.c.l.b16 %v7625
      %v7674 = vunpack.c.l.b16 %v7626
      %v7675 = vunpack.c.l.b16 %v7627
      %v7676 = vunpack.c.l.b16 %v7628
      %v7677 = vunpack.c.l.b16 %v7629
      %v7678 = vunpack.c.l.b16 %v7630
      %v7679 = vunpack.c.l.b16 %v7631
      %v7680 = vunpack.c.l.b16 %v7632
      %v7681 = vunpack.c.l.b16 %v7633
      %v7682 = vunpack.c.l.b16 %v7634
      %v7683 = vunpack.c.l.b16 %v7635
      %v7684 = vunpack.c.l.b16 %v7636
      %v7685 = vpack.c.b16 %v7670, %v7669
      %v7686 = vpack.c.b16 %v7672, %v7671
      %v7687 = vpack.c.b16 %v7674, %v7673
      %v7688 = vpack.c.b16 %v7676, %v7675
      %v7689 = vpack.c.b16 %v7678, %v7677
      %v7690 = vpack.c.b16 %v7680, %v7679
      %v7691 = vpack.c.b16 %v7682, %v7681
      %v7692 = vpack.c.b16 %v7684, %v7683
      %v7709 = vunpack.c.l.b16 %v7637
      %v7710 = vunpack.c.l.b16 %v7638
      %v7711 = vunpack.c.l.b16 %v7639
      %v7712 = vunpack.c.l.b16 %v7640
      %v7713 = vunpack.c.l.b16 %v7641
      %v7714 = vunpack.c.l.b16 %v7642
      %v7715 = vunpack.c.l.b16 %v7643
      %v7716 = vunpack.c.l.b16 %v7644
      %v7717 = vpack.c.b16 %v7709, %v7709
      %v7718 = vpack.c.b16 %v7710, %v7710
      %v7719 = vpack.c.b16 %v7711, %v7711
      %v7720 = vpack.c.b16 %v7712, %v7712
      %v7721 = vpack.c.b16 %v7713, %v7713
      %v7722 = vpack.c.b16 %v7714, %v7714
      %v7723 = vpack.c.b16 %v7715, %v7715
      %v7724 = vpack.c.b16 %v7716, %v7716
      %v7726 = vshrl.u32 %v7685, 16
      %v7728 = vshll.u32 %v7685, 16
      %v7730 = vrot.slane %v7728, 1
      %v7731 = vor.u32 %v7726, %v7730
      %v7733 = vshll.u32 %v7717, 16
      %v7735 = vrot.slane %v7733, 1
      %v7736 = vsel %vm4599, %v7731, %v7735
      %v7738 = vshrl.u32 %v7686, 16
      %v7740 = vshll.u32 %v7686, 16
      %v7742 = vrot.slane %v7740, 1
      %v7743 = vor.u32 %v7738, %v7742
      %v7745 = vshll.u32 %v7718, 16
      %v7747 = vrot.slane %v7745, 1
      %v7748 = vsel %vm4599, %v7743, %v7747
      %v7750 = vshrl.u32 %v7687, 16
      %v7752 = vshll.u32 %v7687, 16
      %v7754 = vrot.slane %v7752, 1
      %v7755 = vor.u32 %v7750, %v7754
      %v7757 = vshll.u32 %v7719, 16
      %v7759 = vrot.slane %v7757, 1
      %v7760 = vsel %vm4599, %v7755, %v7759
      %v7762 = vshrl.u32 %v7688, 16
      %v7764 = vshll.u32 %v7688, 16
      %v7766 = vrot.slane %v7764, 1
      %v7767 = vor.u32 %v7762, %v7766
      %v7769 = vshll.u32 %v7720, 16
      %v7771 = vrot.slane %v7769, 1
      %v7772 = vsel %vm4599, %v7767, %v7771
      %v7774 = vshrl.u32 %v7689, 16
      %v7776 = vshll.u32 %v7689, 16
      %v7778 = vrot.slane %v7776, 1
      %v7779 = vor.u32 %v7774, %v7778
      %v7781 = vshll.u32 %v7721, 16
      %v7783 = vrot.slane %v7781, 1
      %v7784 = vsel %vm4599, %v7779, %v7783
      %v7786 = vshrl.u32 %v7690, 16
      %v7788 = vshll.u32 %v7690, 16
      %v7790 = vrot.slane %v7788, 1
      %v7791 = vor.u32 %v7786, %v7790
      %v7793 = vshll.u32 %v7722, 16
      %v7795 = vrot.slane %v7793, 1
      %v7796 = vsel %vm4599, %v7791, %v7795
      %v7798 = vshrl.u32 %v7691, 16
      %v7800 = vshll.u32 %v7691, 16
      %v7802 = vrot.slane %v7800, 1
      %v7803 = vor.u32 %v7798, %v7802
      %v7805 = vshll.u32 %v7723, 16
      %v7807 = vrot.slane %v7805, 1
      %v7808 = vsel %vm4599, %v7803, %v7807
      %v7810 = vshrl.u32 %v7692, 16
      %v7812 = vshll.u32 %v7692, 16
      %v7814 = vrot.slane %v7812, 1
      %v7815 = vor.u32 %v7810, %v7814
      %v7817 = vshll.u32 %v7724, 16
      %v7819 = vrot.slane %v7817, 1
      %v7820 = vsel %vm4599, %v7815, %v7819
      %v7837 = vunpack.c.l.b16 %v7645
      %v7838 = vunpack.c.l.b16 %v7646
      %v7839 = vunpack.c.l.b16 %v7647
      %v7840 = vunpack.c.l.b16 %v7648
      %v7841 = vunpack.c.l.b16 %v7649
      %v7842 = vunpack.c.l.b16 %v7650
      %v7843 = vunpack.c.l.b16 %v7651
      %v7844 = vunpack.c.l.b16 %v7652
      %v7845 = vpack.c.b16 %v7670, %v7837
      %v7846 = vpack.c.b16 %v7672, %v7838
      %v7847 = vpack.c.b16 %v7674, %v7839
      %v7848 = vpack.c.b16 %v7676, %v7840
      %v7849 = vpack.c.b16 %v7678, %v7841
      %v7850 = vpack.c.b16 %v7680, %v7842
      %v7851 = vpack.c.b16 %v7682, %v7843
      %v7852 = vpack.c.b16 %v7684, %v7844
      %v7853 = vrot.slane %v7845, 1
      %v7854 = vrot.slane %v7717, 1
      %v7855 = vsel %vm4728, %v7853, %v7854
      %v7856 = vrot.slane %v7846, 1
      %v7857 = vrot.slane %v7718, 1
      %v7858 = vsel %vm4728, %v7856, %v7857
      %v7859 = vrot.slane %v7847, 1
      %v7860 = vrot.slane %v7719, 1
      %v7861 = vsel %vm4728, %v7859, %v7860
      %v7862 = vrot.slane %v7848, 1
      %v7863 = vrot.slane %v7720, 1
      %v7864 = vsel %vm4728, %v7862, %v7863
      %v7865 = vrot.slane %v7849, 1
      %v7866 = vrot.slane %v7721, 1
      %v7867 = vsel %vm4728, %v7865, %v7866
      %v7868 = vrot.slane %v7850, 1
      %v7869 = vrot.slane %v7722, 1
      %v7870 = vsel %vm4728, %v7868, %v7869
      %v7871 = vrot.slane %v7851, 1
      %v7872 = vrot.slane %v7723, 1
      %v7873 = vsel %vm4728, %v7871, %v7872
      %v7874 = vrot.slane %v7852, 1
      %v7875 = vrot.slane %v7724, 1
      %v7876 = vsel %vm4728, %v7874, %v7875
      %v7885 = vld [vmem:[%s5969] sm:$0xf]
      %v7886 = vld [vmem:[%s5969 + $0x4] sm:$0xf]
      %v7887 = vld [vmem:[%s5969 + $0x8] sm:$0xf]
      %v7888 = vld [vmem:[%s5969 + $0xc] sm:$0xf]
      %v7889 = vld [vmem:[%s5969 + $0x10] sm:$0xf]
      %v7890 = vld [vmem:[%s5969 + $0x14] sm:$0xf]
      %v7891 = vld [vmem:[%s5969 + $0x18] sm:$0xf]
      %v7892 = vld [vmem:[%s5969 + $0x1c] sm:$0xf]
      %v7893 = vld [vmem:[%s5969 + $0x20] sm:$0xf]
      %v7894 = vld [vmem:[%s5969 + $0x24] sm:$0xf]
      %v7895 = vld [vmem:[%s5969 + $0x28] sm:$0xf]
      %v7896 = vld [vmem:[%s5969 + $0x2c] sm:$0xf]
      %v7897 = vld [vmem:[%s5969 + $0x30] sm:$0xf]
      %v7898 = vld [vmem:[%s5969 + $0x34] sm:$0xf]
      %v7899 = vld [vmem:[%s5969 + $0x38] sm:$0xf]
      %v7900 = vld [vmem:[%s5969 + $0x3c] sm:$0xf]
      %v7901 = vld [vmem:[%s5969 + $0x40] sm:$0xf]
      %v7902 = vld [vmem:[%s5969 + $0x44] sm:$0xf]
      %v7903 = vld [vmem:[%s5969 + $0x48] sm:$0xf]
      %v7904 = vld [vmem:[%s5969 + $0x4c] sm:$0xf]
      %v7905 = vld [vmem:[%s5969 + $0x50] sm:$0xf]
      %v7906 = vld [vmem:[%s5969 + $0x54] sm:$0xf]
      %v7907 = vld [vmem:[%s5969 + $0x58] sm:$0xf]
      %v7908 = vld [vmem:[%s5969 + $0x5c] sm:$0xf]
      %v7909 = vld [vmem:[%s5969 + $0x60] sm:$0xf]
      %v7910 = vld [vmem:[%s5969 + $0x64] sm:$0xf]
      %v7911 = vld [vmem:[%s5969 + $0x68] sm:$0xf]
      %v7912 = vld [vmem:[%s5969 + $0x6c] sm:$0xf]
      %v7913 = vld [vmem:[%s5969 + $0x70] sm:$0xf]
      %v7914 = vld [vmem:[%s5969 + $0x74] sm:$0xf]
      %v7915 = vld [vmem:[%s5969 + $0x78] sm:$0xf]
      %v7916 = vld [vmem:[%s5969 + $0x7c] sm:$0xf]
      %v7917 = vld [vmem:[%s5969 + $0x80] sm:$0xf]
      %v7918 = vld [vmem:[%s5969 + $0x84] sm:$0xf]
      %v7919 = vld [vmem:[%s5969 + $0x88] sm:$0xf]
      %v7920 = vld [vmem:[%s5969 + $0x8c] sm:$0xf]
      %v7921 = vld [vmem:[%s5969 + $0x90] sm:$0xf]
      %v7922 = vld [vmem:[%s5969 + $0x94] sm:$0xf]
      %v7923 = vld [vmem:[%s5969 + $0x98] sm:$0xf]
      %v7924 = vld [vmem:[%s5969 + $0x9c] sm:$0xf]
      %v7925 = vld [vmem:[%s5969 + $0xa0] sm:$0xf]
      %v7926 = vld [vmem:[%s5969 + $0xa4] sm:$0xf]
      %v7927 = vld [vmem:[%s5969 + $0xa8] sm:$0xf]
      %v7928 = vld [vmem:[%s5969 + $0xac] sm:$0xf]
      %v7929 = vld [vmem:[%s5969 + $0xb0] sm:$0xf]
      %v7930 = vld [vmem:[%s5969 + $0xb4] sm:$0xf]
      %v7931 = vld [vmem:[%s5969 + $0xb8] sm:$0xf]
      %v7932 = vld [vmem:[%s5969 + $0xbc] sm:$0xf]
      %v7981 = vunpack.c.l.b16 %v7885
      %v7982 = vunpack.c.l.b16 %v7886
      %v7983 = vunpack.c.l.b16 %v7887
      %v7984 = vunpack.c.l.b16 %v7888
      %v7985 = vunpack.c.l.b16 %v7889
      %v7986 = vunpack.c.l.b16 %v7890
      %v7987 = vunpack.c.l.b16 %v7891
      %v7988 = vunpack.c.l.b16 %v7892
      %v7989 = vunpack.c.l.b16 %v7893
      %v7990 = vunpack.c.l.b16 %v7894
      %v7991 = vunpack.c.l.b16 %v7895
      %v7992 = vunpack.c.l.b16 %v7896
      %v7993 = vunpack.c.l.b16 %v7897
      %v7994 = vunpack.c.l.b16 %v7898
      %v7995 = vunpack.c.l.b16 %v7899
      %v7996 = vunpack.c.l.b16 %v7900
      %v7997 = vunpack.c.l.b16 %v7901
      %v7998 = vunpack.c.l.b16 %v7902
      %v7999 = vunpack.c.l.b16 %v7903
      %v8000 = vunpack.c.l.b16 %v7904
      %v8001 = vunpack.c.l.b16 %v7905
      %v8002 = vunpack.c.l.b16 %v7906
      %v8003 = vunpack.c.l.b16 %v7907
      %v8004 = vunpack.c.l.b16 %v7908
      %v8005 = vunpack.c.l.b16 %v7909
      %v8006 = vunpack.c.l.b16 %v7910
      %v8007 = vunpack.c.l.b16 %v7911
      %v8008 = vunpack.c.l.b16 %v7912
      %v8009 = vunpack.c.l.b16 %v7913
      %v8010 = vunpack.c.l.b16 %v7914
      %v8011 = vunpack.c.l.b16 %v7915
      %v8012 = vunpack.c.l.b16 %v7916
      %v8013 = vunpack.c.l.b16 %v7917
      %v8014 = vunpack.c.l.b16 %v7918
      %v8015 = vunpack.c.l.b16 %v7919
      %v8016 = vunpack.c.l.b16 %v7920
      %v8017 = vunpack.c.l.b16 %v7921
      %v8018 = vunpack.c.l.b16 %v7922
      %v8019 = vunpack.c.l.b16 %v7923
      %v8020 = vunpack.c.l.b16 %v7924
      %v8021 = vunpack.c.l.b16 %v7925
      %v8022 = vunpack.c.l.b16 %v7926
      %v8023 = vunpack.c.l.b16 %v7927
      %v8024 = vunpack.c.l.b16 %v7928
      %v8025 = vunpack.c.l.b16 %v7929
      %v8026 = vunpack.c.l.b16 %v7930
      %v8027 = vunpack.c.l.b16 %v7931
      %v8028 = vunpack.c.l.b16 %v7932
      %v8029 = vpack.c.b16 %v7982, %v7981
      %v8030 = vpack.c.b16 %v7984, %v7983
      %v8031 = vpack.c.b16 %v7986, %v7985
      %v8032 = vpack.c.b16 %v7988, %v7987
      %v8033 = vpack.c.b16 %v7990, %v7989
      %v8034 = vpack.c.b16 %v7992, %v7991
      %v8035 = vpack.c.b16 %v7994, %v7993
      %v8036 = vpack.c.b16 %v7996, %v7995
      %v8037 = vpack.c.b16 %v7998, %v7997
      %v8038 = vpack.c.b16 %v8000, %v7999
      %v8039 = vpack.c.b16 %v8002, %v8001
      %v8040 = vpack.c.b16 %v8004, %v8003
      %v8041 = vpack.c.b16 %v8006, %v8005
      %v8042 = vpack.c.b16 %v8008, %v8007
      %v8043 = vpack.c.b16 %v8010, %v8009
      %v8044 = vpack.c.b16 %v8012, %v8011
      %v8045 = vpack.c.b16 %v8014, %v8013
      %v8046 = vpack.c.b16 %v8016, %v8015
      %v8047 = vpack.c.b16 %v8018, %v8017
      %v8048 = vpack.c.b16 %v8020, %v8019
      %v8049 = vpack.c.b16 %v8022, %v8021
      %v8050 = vpack.c.b16 %v8024, %v8023
      %v8051 = vpack.c.b16 %v8026, %v8025
      %v8052 = vpack.c.b16 %v8028, %v8027
      %8077 = vmatpush.bf16.msra.mxu0 %v8036
      %8078 = vmatpush.bf16.msra.mxu0 %v8035
      %8079 = vmatpush.bf16.msra.mxu0 %v8034
      %8080 = vmatpush.bf16.msra.mxu0 %v8033
      %8081 = vmatpush.bf16.msra.mxu0 %v8032
      %8082 = vmatpush.bf16.msra.mxu0 %v8031
      %8083 = vmatpush.bf16.msra.mxu0 %v8030
      %8084 = vmatpush.bf16.msra.mxu0 %v8029
      %8085 = vmatmul.bf16.gmra.mxu0 %v7685
      %v8086 = vpop.f32.mrf.mxu0
      %v8087 = vadd.f32 0.0, %v8086
      %v8088 = vpop.f32.mrf.mxu0
      %v8089 = vadd.f32 0.0, %v8088
      %8090 = vmatmul.bf16.gmra.mxu0 %v7686
      %v8091 = vpop.f32.mrf.mxu0
      %v8092 = vadd.f32 0.0, %v8091
      %v8093 = vpop.f32.mrf.mxu0
      %v8094 = vadd.f32 0.0, %v8093
      %8095 = vmatmul.bf16.gmra.mxu0 %v7687
      %v8096 = vpop.f32.mrf.mxu0
      %v8097 = vadd.f32 0.0, %v8096
      %v8098 = vpop.f32.mrf.mxu0
      %v8099 = vadd.f32 0.0, %v8098
      %8100 = vmatmul.bf16.gmra.mxu0 %v7688
      %v8101 = vpop.f32.mrf.mxu0
      %v8102 = vadd.f32 0.0, %v8101
      %v8103 = vpop.f32.mrf.mxu0
      %v8104 = vadd.f32 0.0, %v8103
      %8105 = vmatmul.bf16.gmra.mxu0 %v7689
      %v8106 = vpop.f32.mrf.mxu0
      %v8107 = vadd.f32 0.0, %v8106
      %v8108 = vpop.f32.mrf.mxu0
      %v8109 = vadd.f32 0.0, %v8108
      %8110 = vmatmul.bf16.gmra.mxu0 %v7690
      %v8111 = vpop.f32.mrf.mxu0
      %v8112 = vadd.f32 0.0, %v8111
      %v8113 = vpop.f32.mrf.mxu0
      %v8114 = vadd.f32 0.0, %v8113
      %8115 = vmatmul.bf16.gmra.mxu0 %v7691
      %v8116 = vpop.f32.mrf.mxu0
      %v8117 = vadd.f32 0.0, %v8116
      %v8118 = vpop.f32.mrf.mxu0
      %v8119 = vadd.f32 0.0, %v8118
      %8120 = vmatmul.bf16.gmra.mxu0 %v7692
      %v8121 = vpop.f32.mrf.mxu0
      %v8122 = vadd.f32 0.0, %v8121
      %v8123 = vpop.f32.mrf.mxu0
      %v8124 = vadd.f32 0.0, %v8123
      %8125 = vdwg.mxu0
      %8126 = vmatpush.bf16.msra.mxu0 %v8044
      %8127 = vmatpush.bf16.msra.mxu0 %v8043
      %8128 = vmatpush.bf16.msra.mxu0 %v8042
      %8129 = vmatpush.bf16.msra.mxu0 %v8041
      %8130 = vmatpush.bf16.msra.mxu0 %v8040
      %8131 = vmatpush.bf16.msra.mxu0 %v8039
      %8132 = vmatpush.bf16.msra.mxu0 %v8038
      %8133 = vmatpush.bf16.msra.mxu0 %v8037
      %8134 = vmatmul.bf16.gmra.mxu0 %v7736
      %v8135 = vpop.f32.mrf.mxu0
      %v8136 = vadd.f32 %v8087, %v8135
      %v8137 = vpop.f32.mrf.mxu0
      %v8138 = vadd.f32 %v8089, %v8137
      %8139 = vmatmul.bf16.gmra.mxu0 %v7748
      %v8140 = vpop.f32.mrf.mxu0
      %v8141 = vadd.f32 %v8092, %v8140
      %v8142 = vpop.f32.mrf.mxu0
      %v8143 = vadd.f32 %v8094, %v8142
      %8144 = vmatmul.bf16.gmra.mxu0 %v7760
      %v8145 = vpop.f32.mrf.mxu0
      %v8146 = vadd.f32 %v8097, %v8145
      %v8147 = vpop.f32.mrf.mxu0
      %v8148 = vadd.f32 %v8099, %v8147
      %8149 = vmatmul.bf16.gmra.mxu0 %v7772
      %v8150 = vpop.f32.mrf.mxu0
      %v8151 = vadd.f32 %v8102, %v8150
      %v8152 = vpop.f32.mrf.mxu0
      %v8153 = vadd.f32 %v8104, %v8152
      %8154 = vmatmul.bf16.gmra.mxu0 %v7784
      %v8155 = vpop.f32.mrf.mxu0
      %v8156 = vadd.f32 %v8107, %v8155
      %v8157 = vpop.f32.mrf.mxu0
      %v8158 = vadd.f32 %v8109, %v8157
      %8159 = vmatmul.bf16.gmra.mxu0 %v7796
      %v8160 = vpop.f32.mrf.mxu0
      %v8161 = vadd.f32 %v8112, %v8160
      %v8162 = vpop.f32.mrf.mxu0
      %v8163 = vadd.f32 %v8114, %v8162
      %8164 = vmatmul.bf16.gmra.mxu0 %v7808
      %v8165 = vpop.f32.mrf.mxu0
      %v8166 = vadd.f32 %v8117, %v8165
      %v8167 = vpop.f32.mrf.mxu0
      %v8168 = vadd.f32 %v8119, %v8167
      %8169 = vmatmul.bf16.gmra.mxu0 %v7820
      %v8170 = vpop.f32.mrf.mxu0
      %v8171 = vadd.f32 %v8122, %v8170
      %v8172 = vpop.f32.mrf.mxu0
      %v8173 = vadd.f32 %v8124, %v8172
      %8174 = vdwg.mxu0
      %8175 = vmatpush.bf16.msra.mxu0 %v8052
      %8176 = vmatpush.bf16.msra.mxu0 %v8051
      %8177 = vmatpush.bf16.msra.mxu0 %v8050
      %8178 = vmatpush.bf16.msra.mxu0 %v8049
      %8179 = vmatpush.bf16.msra.mxu0 %v8048
      %8180 = vmatpush.bf16.msra.mxu0 %v8047
      %8181 = vmatpush.bf16.msra.mxu0 %v8046
      %8182 = vmatpush.bf16.msra.mxu0 %v8045
      %8183 = vmatmul.bf16.gmra.mxu0 %v7855
      %v8184 = vpop.f32.mrf.mxu0
      %v8185 = vadd.f32 %v8136, %v8184
      %v8186 = vpop.f32.mrf.mxu0
      %v8187 = vadd.f32 %v8138, %v8186
      %8188 = vmatmul.bf16.gmra.mxu0 %v7858
      %v8189 = vpop.f32.mrf.mxu0
      %v8190 = vadd.f32 %v8141, %v8189
      %v8191 = vpop.f32.mrf.mxu0
      %v8192 = vadd.f32 %v8143, %v8191
      %8193 = vmatmul.bf16.gmra.mxu0 %v7861
      %v8194 = vpop.f32.mrf.mxu0
      %v8195 = vadd.f32 %v8146, %v8194
      %v8196 = vpop.f32.mrf.mxu0
      %v8197 = vadd.f32 %v8148, %v8196
      %8198 = vmatmul.bf16.gmra.mxu0 %v7864
      %v8199 = vpop.f32.mrf.mxu0
      %v8200 = vadd.f32 %v8151, %v8199
      %v8201 = vpop.f32.mrf.mxu0
      %v8202 = vadd.f32 %v8153, %v8201
      %8203 = vmatmul.bf16.gmra.mxu0 %v7867
      %v8204 = vpop.f32.mrf.mxu0
      %v8205 = vadd.f32 %v8156, %v8204
      %v8206 = vpop.f32.mrf.mxu0
      %v8207 = vadd.f32 %v8158, %v8206
      %8208 = vmatmul.bf16.gmra.mxu0 %v7870
      %v8209 = vpop.f32.mrf.mxu0
      %v8210 = vadd.f32 %v8161, %v8209
      %v8211 = vpop.f32.mrf.mxu0
      %v8212 = vadd.f32 %v8163, %v8211
      %8213 = vmatmul.bf16.gmra.mxu0 %v7873
      %v8214 = vpop.f32.mrf.mxu0
      %v8215 = vadd.f32 %v8166, %v8214
      %v8216 = vpop.f32.mrf.mxu0
      %v8217 = vadd.f32 %v8168, %v8216
      %8218 = vmatmul.bf16.gmra.mxu0 %v7876
      %v8219 = vpop.f32.mrf.mxu0
      %v8220 = vadd.f32 %v8171, %v8219
      %v8221 = vpop.f32.mrf.mxu0
      %v8222 = vadd.f32 %v8173, %v8221
      %8223 = vdwg.mxu0
      %v8224 = vadd.f32 %v7581, %v8185
      %v8225 = vadd.f32 %v7583, %v8187
      %v8226 = vadd.f32 %v7586, %v8190
      %v8227 = vadd.f32 %v7588, %v8192
      %v8228 = vadd.f32 %v7591, %v8195
      %v8229 = vadd.f32 %v7593, %v8197
      %v8230 = vadd.f32 %v7596, %v8200
      %v8231 = vadd.f32 %v7598, %v8202
      %v8232 = vadd.f32 %v7601, %v8205
      %v8233 = vadd.f32 %v7603, %v8207
      %v8234 = vadd.f32 %v7606, %v8210
      %v8235 = vadd.f32 %v7608, %v8212
      %v8236 = vadd.f32 %v7611, %v8215
      %v8237 = vadd.f32 %v7613, %v8217
      %v8238 = vadd.f32 %v7616, %v8220
      %v8239 = vadd.f32 %v7618, %v8222
      %v8240 = vld [vmem:[%s2739 + $0x1] sm:$0xff]
      %v8241 = vld [vmem:[%s2739 + $0x9] sm:$0xff]
      %v8242 = vld [vmem:[%s2739 + $0x19] sm:$0xff]
      %v8243 = vld [vmem:[%s2739 + $0x21] sm:$0xff]
      %v8244 = vld [vmem:[%s2739 + $0x31] sm:$0xff]
      %v8245 = vld [vmem:[%s2739 + $0x39] sm:$0xff]
      %v8246 = vld [vmem:[%s2739 + $0x49] sm:$0xff]
      %v8247 = vld [vmem:[%s2739 + $0x51] sm:$0xff]
      %v8248 = vld [vmem:[%s2739 + $0x61] sm:$0xff]
      %v8249 = vld [vmem:[%s2739 + $0x69] sm:$0xff]
      %v8250 = vld [vmem:[%s2739 + $0x79] sm:$0xff]
      %v8251 = vld [vmem:[%s2739 + $0x81] sm:$0xff]
      %v8252 = vld [vmem:[%s2739 + $0x91] sm:$0xff]
      %v8253 = vld [vmem:[%s2739 + $0x99] sm:$0xff]
      %v8254 = vld [vmem:[%s2739 + $0xa9] sm:$0xff]
      %v8255 = vld [vmem:[%s2739 + $0xb1] sm:$0xff]
      %v8256 = vld [vmem:[%s5] sm:$0x1]
      %v8258 = vperm.slane %v8256, 0
      %v8260 = vmul.f32 %v8224, %v8258
      %v8261 = vmul.f32 %v8225, %v8258
      %v8262 = vmul.f32 %v8226, %v8258
      %v8263 = vmul.f32 %v8227, %v8258
      %v8264 = vmul.f32 %v8228, %v8258
      %v8265 = vmul.f32 %v8229, %v8258
      %v8266 = vmul.f32 %v8230, %v8258
      %v8267 = vmul.f32 %v8231, %v8258
      %v8268 = vmul.f32 %v8232, %v8258
      %v8269 = vmul.f32 %v8233, %v8258
      %v8270 = vmul.f32 %v8234, %v8258
      %v8271 = vmul.f32 %v8235, %v8258
      %v8272 = vmul.f32 %v8236, %v8258
      %v8273 = vmul.f32 %v8237, %v8258
      %v8274 = vmul.f32 %v8238, %v8258
      %v8275 = vmul.f32 %v8239, %v8258
      %v8276 = vld [vmem:[%s6] sm:$0x1]
      %v8278 = vperm.slane %v8276, 0
      %v8280 = vadd.f32 %v8260, %v8278
      %v8281 = vadd.f32 %v8261, %v8278
      %v8282 = vadd.f32 %v8262, %v8278
      %v8283 = vadd.f32 %v8263, %v8278
      %v8284 = vadd.f32 %v8264, %v8278
      %v8285 = vadd.f32 %v8265, %v8278
      %v8286 = vadd.f32 %v8266, %v8278
      %v8287 = vadd.f32 %v8267, %v8278
      %v8288 = vadd.f32 %v8268, %v8278
      %v8289 = vadd.f32 %v8269, %v8278
      %v8290 = vadd.f32 %v8270, %v8278
      %v8291 = vadd.f32 %v8271, %v8278
      %v8292 = vadd.f32 %v8272, %v8278
      %v8293 = vadd.f32 %v8273, %v8278
      %v8294 = vadd.f32 %v8274, %v8278
      %v8295 = vadd.f32 %v8275, %v8278
      %v8296 = vadd.f32 %v8280, %v8240
      %v8297 = vadd.f32 %v8281, %v8241
      %v8298 = vadd.f32 %v8282, %v8242
      %v8299 = vadd.f32 %v8283, %v8243
      %v8300 = vadd.f32 %v8284, %v8244
      %v8301 = vadd.f32 %v8285, %v8245
      %v8302 = vadd.f32 %v8286, %v8246
      %v8303 = vadd.f32 %v8287, %v8247
      %v8304 = vadd.f32 %v8288, %v8248
      %v8305 = vadd.f32 %v8289, %v8249
      %v8306 = vadd.f32 %v8290, %v8250
      %v8307 = vadd.f32 %v8291, %v8251
      %v8308 = vadd.f32 %v8292, %v8252
      %v8309 = vadd.f32 %v8293, %v8253
      %v8310 = vadd.f32 %v8294, %v8254
      %v8311 = vadd.f32 %v8295, %v8255
      %s8312 = scalar_lea.vmem %s278, 128
      %8313 = vst [vmem:[%s8312] sm:$0xff] %v8296
      %8314 = vst [vmem:[%s8312 + $0x8] sm:$0xff] %v8297
      %8315 = vst [vmem:[%s8312 + $0x10] sm:$0xff] %v8298
      %8316 = vst [vmem:[%s8312 + $0x18] sm:$0xff] %v8299
      %8317 = vst [vmem:[%s8312 + $0x20] sm:$0xff] %v8300
      %8318 = vst [vmem:[%s8312 + $0x28] sm:$0xff] %v8301
      %8319 = vst [vmem:[%s8312 + $0x30] sm:$0xff] %v8302
      %8320 = vst [vmem:[%s8312 + $0x38] sm:$0xff] %v8303
      %8321 = vst [vmem:[%s8312 + $0x40] sm:$0xff] %v8304
      %8322 = vst [vmem:[%s8312 + $0x48] sm:$0xff] %v8305
      %8323 = vst [vmem:[%s8312 + $0x50] sm:$0xff] %v8306
      %8324 = vst [vmem:[%s8312 + $0x58] sm:$0xff] %v8307
      %8325 = vst [vmem:[%s8312 + $0x60] sm:$0xff] %v8308
      %8326 = vst [vmem:[%s8312 + $0x68] sm:$0xff] %v8309
      %8327 = vst [vmem:[%s8312 + $0x70] sm:$0xff] %v8310
      %8328 = vst [vmem:[%s8312 + $0x78] sm:$0xff] %v8311
      %p8329 = scmp.lt.s32.totalorder %s18, 1
      %s8330 = scalar_select %p8329, %s18, 1
      %s8331 = smul.addr %s8330, 32
      %s8332 = smul.addr %s8331, 8
      %s8333 = scalar_lea.vmem %s7, %s8332
      // Predicated region
      $region49: #{resblock_pallas.1} parent=47 // pred_check
        %p8334 = pneg %p188
      $region50: #{resblock_pallas.1} parent=47 // pred_check_branch
        %8336 = sbr.rel (%p8334) target = $region52
      $region51: #{resblock_pallas.1} parent=47 // pred_region
        _
      $region52: #{resblock_pallas.1} parent=47 // pred_fallthru
        _
    $region48: #{resblock_pallas.1} parent=5 // pred_fallthru
      _
    %p8337 = scmp.le.s32.totalorder 2, %s13
    // Predicated region
    $region53: #{resblock_pallas.1} parent=5 // pred_check
      %p8338 = pneg %p8337
    $region54: #{resblock_pallas.1} parent=5 // pred_check_branch
      %8340 = sbr.rel (%p8338) target = $region56
    $region55: #{resblock_pallas.1} parent=5 // pred_region
      %s8341 = ssub.s32 %s13, 2
      // Predicated region
      $region57: #{resblock_pallas.1} parent=55 // pred_check
        %p8342 = pneg %p194
      $region58: #{resblock_pallas.1} parent=55 // pred_check_branch
        %8344 = sbr.rel (%p8342) target = $region60
      $region59: #{resblock_pallas.1} parent=55 // pred_region
        %p8345 = scmp.lt.s32.totalorder %s19, 1
        %s8346 = scalar_select %p8345, %s19, 1
        %s8347 = smul.addr %s8346, 32
        %s8348 = smul.addr %s8347, 8
        %s8349 = scalar_lea.vmem %s7, %s8348
      $region60: #{resblock_pallas.1} parent=55 // pred_fallthru
        _
    $region56: #{resblock_pallas.1} parent=5 // pred_fallthru
      _
  $region6: #{resblock_pallas.1} parent=0 // loop_footer
    %s17 = sadd.s32 1, %s13
  $region7: #{resblock_pallas.1} parent=0 // loop_footer_branch
    %12 = sbr.rel target = $region3
  $region8: #{resblock_pallas.1} parent=0 // loop_exit
    _

</llo_original>
